<compile_context>
chip_gen: v5e
topology: v5e:2x2
jax: 0.10.0
libtpu: 0.0.40
codegen_flags: <defaults>
</compile_context>

<pallas_src>
import functools

import jax
import jax.numpy as jnp
from jax.experimental import pallas as pl
from jax.experimental.pallas import tpu as pltpu


# ----------------------------------------------------------------------------
# Fully fused decoder kernel.
# ----------------------------------------------------------------------------
def _decoder_kernel(x_ref, w1_ref, b1_ref, w2_ref, b2_ref,
                    ws1_ref, bs1_ref, ws2_ref, bs2_ref, ws3_ref, bs3_ref,
                    wf_ref, bf_ref,
                    o_ref,
                    x0_ref, x1_ref, x2_ref, x3_ref,
                    *, B, fm, hidden, S):
    f32 = jnp.float32

    # ---- fc1 -> relu -> fc2 -> relu (dropout p=0 == identity) --------------
    h = jnp.dot(x_ref[...], w1_ref[...], preferred_element_type=f32) + b1_ref[...]
    h = jnp.maximum(h, 0.0)
    h = jnp.dot(h, w2_ref[...], preferred_element_type=f32) + b2_ref[...]
    h = jnp.maximum(h, 0.0)            # (B, fm*fm*hidden), columns in (i,j,c) order

    # Zero only the 1-px border of a padded NHWC scratch (interior is fully
    # overwritten afterwards).
    def zero_border(ref):
        b_, p_, _, c_ = ref.shape
        z_row = jnp.zeros((b_, 1, p_, c_), f32)
        z_col = jnp.zeros((b_, p_, 1, c_), f32)
        ref[:, 0:1, :, :] = z_row
        ref[:, p_ - 1:p_, :, :] = z_row
        ref[:, :, 0:1, :] = z_col
        ref[:, :, p_ - 1:p_, :] = z_col

    # ---- fc2 output -> zero-bordered NHWC feature map (one interior store) --
    zero_border(x0_ref)
    rows = []
    for i in range(fm):
        cols = [h[:, (i * fm + j) * hidden:(i * fm + j + 1) * hidden]
                for j in range(fm)]
        rows.append(jnp.stack(cols, axis=1))            # (B, fm, hidden)
    x0_ref[:, 1:1 + fm, 1:1 + fm, :] = jnp.stack(rows, axis=1)  # (B, fm, fm, hidden)

    # ---- fused ConvTranspose(4,2,1) + folded-BN + ReLU stage -----------------
    # Single 9-tap im2col patch, single matmul against the block-sparse
    # (9*Cin, 4*Cout) weight; output lane blocks ordered (pr, pc, cout).
    # TODO(synk): BatchNorm uses inference running stats (folded); training-mode
    # batch statistics are not implemented.
    def stage(in_ref, w_ref, b_ref, out_ref, Hin):
        Cin = in_ref.shape[-1]
        Cout = w_ref.shape[-1] // 4
        xp = in_ref[...]                                 # (B, Hin+2, Hin+2, Cin)
        taps = [xp[:, t:t + Hin, s:s + Hin, :]
                for t in range(3) for s in range(3)]
        pat = jnp.concatenate(taps, axis=-1).reshape(B * Hin * Hin, 9 * Cin)
        z = jnp.dot(pat, w_ref[...], preferred_element_type=f32) + b_ref[...]
        z = jnp.maximum(z, 0.0)                          # (B*Hin*Hin, 4*Cout)
        z4 = z.reshape(B, Hin, Hin, 4 * Cout)
        # Interleave the 4 parity phases spatially, then one bulk interior store.
        half = []
        for pr in range(2):
            cols = [z4[..., (pr * 2 + pc) * Cout:(pr * 2 + pc + 1) * Cout]
                    for pc in range(2)]
            half.append(jnp.stack(cols, axis=3).reshape(B, Hin, 2 * Hin, Cout))
        y = jnp.stack(half, axis=2).reshape(B, 2 * Hin, 2 * Hin, Cout)
        zero_border(out_ref)
        out_ref[:, 1:1 + 2 * Hin, 1:1 + 2 * Hin, :] = y

    stage(x0_ref, ws1_ref, bs1_ref, x1_ref, fm)
    stage(x1_ref, ws2_ref, bs2_ref, x2_ref, 2 * fm)
    stage(x2_ref, ws3_ref, bs3_ref, x3_ref, 4 * fm)

    # ---- final 3x3 conv (pad=1) + tanh: one batched matmul, lane-dense store -
    C3 = x3_ref.shape[-1]
    xp = x3_ref[...]                                     # (B, S+2, S+2, C3)
    taps = [xp[:, ky:ky + S, kx:kx + S, :]
            for ky in range(3) for kx in range(3)]
    pat = jnp.concatenate(taps, axis=-1).reshape(B * S * S, 9 * C3)
    zf = jax.lax.dot_general(wf_ref[...], pat, (((1,), (1,)), ((), ())),
                             preferred_element_type=f32)  # (cout, B*S*S)
    o_ref[...] = jnp.tanh(zf + bf_ref[...])


# ----------------------------------------------------------------------------
# Host-side parameter prep (exact algebra, done once).
# ----------------------------------------------------------------------------
def prepare_params(params, input_spatial_size, init_features):
    fm = input_spatial_size // 8
    hidden = int(init_features * 8)
    c1, c2, c3 = int(init_features * 4), int(init_features * 2), init_features
    flat = hidden * fm * fm
    n_fc1 = params["fc1_w"].shape[1]
    cout = params["final_w"].shape[0]
    eps = 1e-5

    # fc2 columns: NCHW-flat (c, i, j) -> NHWC-flat (i, j, c)
    w2p = (params["fc2_w"].reshape(n_fc1, hidden, fm, fm)
           .transpose(0, 2, 3, 1).reshape(n_fc1, flat))
    b2p = params["fc2_b"].reshape(hidden, fm, fm).transpose(1, 2, 0).reshape(1, flat)

    # Fused block-sparse ConvTranspose weights: patch tap (t, s) of the 1-padded
    # input feeds output parity (pr, pc) with kernel entry (3-2t+pr, 3-2s+pc)
    # when that index is valid, zero otherwise.  BN (eval) is folded in.
    def fold(i, cin, co):
        gamma, beta, mean, var = params[f"bn{i}"]
        scale = gamma / jnp.sqrt(var + eps)
        shift = beta - mean * scale
        wt = params[f"ct{i}_w"]                          # (cin, co, 4, 4)
        w = jnp.zeros((3, 3, cin, 2, 2, co), jnp.float32)
        for t in range(3):
            for s in range(3):
                for pr in range(2):
                    for pc in range(2):
                        ky, kx = 3 - 2 * t + pr, 3 - 2 * s + pc
                        if 0 <= ky <= 3 and 0 <= kx <= 3:
                            w = w.at[t, s, :, pr, pc, :].set(
                                wt[:, :, ky, kx] * scale[None, :])
        wfused = w.reshape(9 * cin, 4 * co)
        bias = jnp.tile(params[f"ct{i}_b"] * scale + shift, 4).reshape(1, 4 * co)
        return wfused.astype(jnp.float32), bias.astype(jnp.float32)

    ws1, bs1 = fold(1, hidden, c1)
    ws2, bs2 = fold(2, c1, c2)
    ws3, bs3 = fold(3, c2, c3)

    wf = params["final_w"].transpose(0, 2, 3, 1).reshape(cout, 9 * c3)
    bf = params["final_b"].reshape(cout, 1)

    return dict(
        w1=params["fc1_w"].astype(jnp.float32),
        b1=params["fc1_b"].reshape(1, n_fc1).astype(jnp.float32),
        w2=w2p.astype(jnp.float32), b2=b2p.astype(jnp.float32),
        ws1=ws1, bs1=bs1, ws2=ws2, bs2=bs2, ws3=ws3, bs3=bs3,
        wf=wf.astype(jnp.float32), bf=bf.astype(jnp.float32))


# ----------------------------------------------------------------------------
# Forward pass: one pallas_call + a cheap wrapper reshape/transpose to NCHW.
# ----------------------------------------------------------------------------
@functools.partial(jax.jit, static_argnums=(2, 3))
def decoder_apply(prepped, x, input_spatial_size, init_features):
    fm = input_spatial_size // 8
    hidden = int(init_features * 8)
    c1, c2, c3 = int(init_features * 4), int(init_features * 2), init_features
    S = input_spatial_size
    B = x.shape[0]
    cout = prepped["wf"].shape[0]

    kern = functools.partial(_decoder_kernel, B=B, fm=fm, hidden=hidden, S=S)
    vmem = pl.BlockSpec(memory_space=pltpu.MemorySpace.VMEM)
    out = pl.pallas_call(
        kern,
        out_shape=jax.ShapeDtypeStruct((cout, B * S * S), jnp.float32),
        in_specs=[vmem] * 13,
        out_specs=vmem,
        scratch_shapes=[
            pltpu.VMEM((B, fm + 2, fm + 2, hidden), jnp.float32),
            pltpu.VMEM((B, 2 * fm + 2, 2 * fm + 2, c1), jnp.float32),
            pltpu.VMEM((B, 4 * fm + 2, 4 * fm + 2, c2), jnp.float32),
            pltpu.VMEM((B, 8 * fm + 2, 8 * fm + 2, c3), jnp.float32),
        ],
    )(x.astype(jnp.float32),
      prepped["w1"], prepped["b1"], prepped["w2"], prepped["b2"],
      prepped["ws1"], prepped["bs1"], prepped["ws2"], prepped["bs2"],
      prepped["ws3"], prepped["bs3"], prepped["wf"], prepped["bf"])
    # (cout, B*S*S) lane-dense store -> NCHW in the wrapper (trivial for cout=1).
    return out.reshape(cout, B, S, S).transpose(1, 0, 2, 3)


# ----------------------------------------------------------------------------
# Pure-JAX reference (lax conv) for correctness checking.
# ----------------------------------------------------------------------------
def reference_forward(params, x, input_spatial_size, init_features):
    fm = input_spatial_size // 8
    hidden = int(init_features * 8)
    B = x.shape[0]
    h = jnp.maximum(x @ params["fc1_w"] + params["fc1_b"], 0.0)
    h = jnp.maximum(h @ params["fc2_w"] + params["fc2_b"], 0.0)
    h = h.reshape(B, hidden, fm, fm).transpose(0, 2, 3, 1)
    for i in (1, 2, 3):
        wt, b = params[f"ct{i}_w"], params[f"ct{i}_b"]
        gamma, beta, mean, var = params[f"bn{i}"]
        w_conv = jnp.transpose(wt[:, :, ::-1, ::-1], (2, 3, 0, 1))
        h = jax.lax.conv_general_dilated(
            h, w_conv, window_strides=(1, 1), padding=[(2, 2), (2, 2)],
            lhs_dilation=(2, 2),
            dimension_numbers=("NHWC", "HWIO", "NHWC")) + b
        scale = gamma / jnp.sqrt(var + 1e-5)
        shift = beta - mean * scale
        h = jnp.maximum(h * scale + shift, 0.0)
    w_conv = jnp.transpose(params["final_w"], (2, 3, 1, 0))
    y = jax.lax.conv_general_dilated(
        h, w_conv, window_strides=(1, 1), padding=[(1, 1), (1, 1)],
        dimension_numbers=("NHWC", "HWIO", "NHWC")) + params["final_b"]
    y = jnp.tanh(y)
    return jnp.transpose(y, (0, 3, 1, 2))


# ----------------------------------------------------------------------------
# Deterministic synthetic parameter init (shapes from the module __init__).
# ----------------------------------------------------------------------------
def init_params(key, latent_dim, init_features, fm, output_channels):
    hidden = int(init_features * 8)                     # channel_widths[0] = 8
    c1 = int(init_features * 4)                         # channel_widths[1] = 4
    c2 = int(init_features * 2)                         # channel_widths[2] = 2
    c3 = init_features
    flat = hidden * fm * fm
    keys = jax.random.split(key, 32)
    ki = iter(range(32))

    def w(shape, scale=0.05):
        return jax.random.normal(keys[next(ki)], shape, jnp.float32) * scale

    def bn(c):
        return (w((c,)) + 1.0,                                           # gamma
                w((c,)),                                                 # beta
                w((c,)),                                                 # running_mean
                jax.random.uniform(keys[next(ki)], (c,), jnp.float32,    # running_var
                                   0.5, 1.5))

    return {
        "fc1_w": w((latent_dim, 256)), "fc1_b": w((256,)),
        "fc2_w": w((256, flat)),       "fc2_b": w((flat,)),
        "ct1_w": w((hidden, c1, 4, 4)), "ct1_b": w((c1,)), "bn1": bn(c1),
        "ct2_w": w((c1, c2, 4, 4)),     "ct2_b": w((c2,)), "bn2": bn(c2),
        "ct3_w": w((c2, c3, 4, 4)),     "ct3_b": w((c3,)), "bn3": bn(c3),
        "final_w": w((output_channels, c3, 3, 3)), "final_b": w((output_channels,)),
    }


if __name__ == "__main__":
    latent_dim = 32
    init_features = 8
    output_channels = 1
    input_spatial_size = 16
    batch = 2
    fm = input_spatial_size // 8

    key = jax.random.PRNGKey(0)
    kx, kp = jax.random.split(key)
    x = jax.random.normal(kx, (batch, latent_dim), jnp.float32)
    params = init_params(kp, latent_dim, init_features, fm, output_channels)

    prepped = prepare_params(params, input_spatial_size, init_features)
    out = decoder_apply(prepped, x, input_spatial_size, init_features)
    out = jax.block_until_ready(out)

    assert out.shape == (batch, output_channels, input_spatial_size, input_spatial_size)
    ref = jax.block_until_ready(
        reference_forward(params, x, input_spatial_size, init_features))
    assert bool(jnp.all(jnp.isfinite(out)))
    assert bool(jnp.allclose(out, ref, atol=5e-3, rtol=1e-2)), "mismatch vs reference"

    print("KERNEL_OK")
</pallas_src>

<mosaic_0001>
module attributes {stable_mosaic.version = 11 : i64} {
  func.func @_decoder_kernel(%arg0: memref<2x32xf32, #tpu.memory_space<vmem>>, %arg1: memref<32x256xf32, #tpu.memory_space<vmem>>, %arg2: memref<1x256xf32, #tpu.memory_space<vmem>>, %arg3: memref<256x256xf32, #tpu.memory_space<vmem>>, %arg4: memref<1x256xf32, #tpu.memory_space<vmem>>, %arg5: memref<576x128xf32, #tpu.memory_space<vmem>>, %arg6: memref<1x128xf32, #tpu.memory_space<vmem>>, %arg7: memref<288x64xf32, #tpu.memory_space<vmem>>, %arg8: memref<1x64xf32, #tpu.memory_space<vmem>>, %arg9: memref<144x32xf32, #tpu.memory_space<vmem>>, %arg10: memref<1x32xf32, #tpu.memory_space<vmem>>, %arg11: memref<1x72xf32, #tpu.memory_space<vmem>>, %arg12: memref<1x1xf32, #tpu.memory_space<vmem>>, %arg13: memref<1x512xf32, #tpu.memory_space<vmem>>, %arg14: memref<2x4x4x64xf32, #tpu.memory_space<vmem>>, %arg15: memref<2x6x6x32xf32, #tpu.memory_space<vmem>>, %arg16: memref<2x10x10x16xf32, #tpu.memory_space<vmem>>, %arg17: memref<2x18x18x8xf32, #tpu.memory_space<vmem>>) attributes {dimension_semantics = [], scalar_prefetch = 0 : i64, scratch_operands = 4 : i64, tpu.core_type = #tpu.core_type<tc>} {
    %c0 = arith.constant 0 : index
    %c0_0 = arith.constant 0 : index
    %0 = vector.load %arg0[%c0, %c0_0] : memref<2x32xf32, #tpu.memory_space<vmem>>, vector<2x32xf32>
    %c0_1 = arith.constant 0 : index
    %c0_2 = arith.constant 0 : index
    %1 = vector.load %arg1[%c0_1, %c0_2] : memref<32x256xf32, #tpu.memory_space<vmem>>, vector<32x256xf32>
    %cst = arith.constant dense<0.000000e+00> : vector<2x256xf32>
    %2 = tpu.matmul %0, %1, %cst {dimension_numbers = #tpu.dot_dimension_numbers<[1], [0], [0], [1], [0, 0, 1, 1], [], []>} : vector<2x32xf32>, vector<32x256xf32>, vector<2x256xf32> -> vector<2x256xf32>
    %c0_3 = arith.constant 0 : index
    %c0_4 = arith.constant 0 : index
    %3 = vector.load %arg2[%c0_3, %c0_4] : memref<1x256xf32, #tpu.memory_space<vmem>>, vector<1x256xf32>
    %4 = vector.broadcast %3 : vector<1x256xf32> to vector<2x256xf32>
    %5 = arith.addf %2, %4 : vector<2x256xf32>
    %cst_5 = arith.constant 0.000000e+00 : f32
    %6 = vector.broadcast %cst_5 : f32 to vector<2x256xf32>
    %7 = arith.maximumf %5, %6 : vector<2x256xf32>
    %c0_6 = arith.constant 0 : index
    %c0_7 = arith.constant 0 : index
    %8 = vector.load %arg3[%c0_6, %c0_7] : memref<256x256xf32, #tpu.memory_space<vmem>>, vector<256x256xf32>
    %cst_8 = arith.constant dense<0.000000e+00> : vector<2x256xf32>
    %9 = tpu.matmul %7, %8, %cst_8 {dimension_numbers = #tpu.dot_dimension_numbers<[1], [0], [0], [1], [0, 0, 1, 1], [], []>} : vector<2x256xf32>, vector<256x256xf32>, vector<2x256xf32> -> vector<2x256xf32>
    %c0_9 = arith.constant 0 : index
    %c0_10 = arith.constant 0 : index
    %10 = vector.load %arg4[%c0_9, %c0_10] : memref<1x256xf32, #tpu.memory_space<vmem>>, vector<1x256xf32>
    %11 = vector.broadcast %10 : vector<1x256xf32> to vector<2x256xf32>
    %12 = arith.addf %9, %11 : vector<2x256xf32>
    %cst_11 = arith.constant 0.000000e+00 : f32
    %13 = vector.broadcast %cst_11 : f32 to vector<2x256xf32>
    %14 = arith.maximumf %12, %13 : vector<2x256xf32>
    %cst_12 = arith.constant 0.000000e+00 : f32
    %15 = vector.broadcast %cst_12 : f32 to vector<2x1x4x64xf32>
    %cst_13 = arith.constant 0.000000e+00 : f32
    %16 = vector.broadcast %cst_13 : f32 to vector<2x4x1x64xf32>
    %c0_14 = arith.constant 0 : index
    %c0_15 = arith.constant 0 : index
    %c0_16 = arith.constant 0 : index
    %c0_17 = arith.constant 0 : index
    %17 = vector.load %arg14[%c0_14, %c0_15, %c0_16, %c0_17] : memref<2x4x4x64xf32, #tpu.memory_space<vmem>>, vector<2x1x4x64xf32>
    tpu.vector_store %arg14[%c0_14, %c0_15, %c0_16, %c0_17], %15 {strides = array<i32>} : memref<2x4x4x64xf32, #tpu.memory_space<vmem>>, vector<2x1x4x64xf32>,
    %c0_18 = arith.constant 0 : index
    %c3 = arith.constant 3 : index
    %c0_19 = arith.constant 0 : index
    %c0_20 = arith.constant 0 : index
    %18 = vector.load %arg14[%c0_18, %c3, %c0_19, %c0_20] : memref<2x4x4x64xf32, #tpu.memory_space<vmem>>, vector<2x1x4x64xf32>
    tpu.vector_store %arg14[%c0_18, %c3, %c0_19, %c0_20], %15 {strides = array<i32>} : memref<2x4x4x64xf32, #tpu.memory_space<vmem>>, vector<2x1x4x64xf32>,
    %c0_21 = arith.constant 0 : index
    %c0_22 = arith.constant 0 : index
    %c0_23 = arith.constant 0 : index
    %c0_24 = arith.constant 0 : index
    %19 = vector.load %arg14[%c0_21, %c0_22, %c0_23, %c0_24] : memref<2x4x4x64xf32, #tpu.memory_space<vmem>>, vector<2x4x1x64xf32>
    tpu.vector_store %arg14[%c0_21, %c0_22, %c0_23, %c0_24], %16 {strides = array<i32>} : memref<2x4x4x64xf32, #tpu.memory_space<vmem>>, vector<2x4x1x64xf32>,
    %c0_25 = arith.constant 0 : index
    %c0_26 = arith.constant 0 : index
    %c3_27 = arith.constant 3 : index
    %c0_28 = arith.constant 0 : index
    %20 = vector.load %arg14[%c0_25, %c0_26, %c3_27, %c0_28] : memref<2x4x4x64xf32, #tpu.memory_space<vmem>>, vector<2x4x1x64xf32>
    tpu.vector_store %arg14[%c0_25, %c0_26, %c3_27, %c0_28], %16 {strides = array<i32>} : memref<2x4x4x64xf32, #tpu.memory_space<vmem>>, vector<2x4x1x64xf32>,
    %21 = vector.extract_strided_slice %14 {offsets = [0, 0], sizes = [2, 64], strides = [1, 1]} : vector<2x256xf32> to vector<2x64xf32>
    %22 = vector.extract_strided_slice %14 {offsets = [0, 64], sizes = [2, 64], strides = [1, 1]} : vector<2x256xf32> to vector<2x64xf32>
    %23 = vector.shape_cast %21 : vector<2x64xf32> to vector<2x1x64xf32>
    %24 = vector.shape_cast %22 : vector<2x64xf32> to vector<2x1x64xf32>
    %25 = tpu.concatenate %23, %24 in 1 : vector<2x1x64xf32>, vector<2x1x64xf32> -> vector<2x2x64xf32>
    %26 = vector.extract_strided_slice %14 {offsets = [0, 128], sizes = [2, 64], strides = [1, 1]} : vector<2x256xf32> to vector<2x64xf32>
    %27 = vector.extract_strided_slice %14 {offsets = [0, 192], sizes = [2, 64], strides = [1, 1]} : vector<2x256xf32> to vector<2x64xf32>
    %28 = vector.shape_cast %26 : vector<2x64xf32> to vector<2x1x64xf32>
    %29 = vector.shape_cast %27 : vector<2x64xf32> to vector<2x1x64xf32>
    %30 = tpu.concatenate %28, %29 in 1 : vector<2x1x64xf32>, vector<2x1x64xf32> -> vector<2x2x64xf32>
    %31 = vector.shape_cast %25 : vector<2x2x64xf32> to vector<2x1x2x64xf32>
    %32 = vector.shape_cast %30 : vector<2x2x64xf32> to vector<2x1x2x64xf32>
    %33 = tpu.concatenate %31, %32 in 1 : vector<2x1x2x64xf32>, vector<2x1x2x64xf32> -> vector<2x2x2x64xf32>
    %c0_29 = arith.constant 0 : index
    %c1 = arith.constant 1 : index
    %c1_30 = arith.constant 1 : index
    %c0_31 = arith.constant 0 : index
    %34 = vector.load %arg14[%c0_29, %c1, %c1_30, %c0_31] : memref<2x4x4x64xf32, #tpu.memory_space<vmem>>, vector<2x2x2x64xf32>
    tpu.vector_store %arg14[%c0_29, %c1, %c1_30, %c0_31], %33 {strides = array<i32>} : memref<2x4x4x64xf32, #tpu.memory_space<vmem>>, vector<2x2x2x64xf32>,
    %c0_32 = arith.constant 0 : index
    %c0_33 = arith.constant 0 : index
    %c0_34 = arith.constant 0 : index
    %c0_35 = arith.constant 0 : index
    %35 = vector.load %arg14[%c0_32, %c0_33, %c0_34, %c0_35] : memref<2x4x4x64xf32, #tpu.memory_space<vmem>>, vector<2x4x4x64xf32>
    %36 = vector.extract_strided_slice %35 {offsets = [0, 0, 0, 0], sizes = [2, 2, 2, 64], strides = [1, 1, 1, 1]} : vector<2x4x4x64xf32> to vector<2x2x2x64xf32>
    %37 = vector.extract_strided_slice %35 {offsets = [0, 0, 1, 0], sizes = [2, 2, 2, 64], strides = [1, 1, 1, 1]} : vector<2x4x4x64xf32> to vector<2x2x2x64xf32>
    %38 = vector.extract_strided_slice %35 {offsets = [0, 0, 2, 0], sizes = [2, 2, 2, 64], strides = [1, 1, 1, 1]} : vector<2x4x4x64xf32> to vector<2x2x2x64xf32>
    %39 = vector.extract_strided_slice %35 {offsets = [0, 1, 0, 0], sizes = [2, 2, 2, 64], strides = [1, 1, 1, 1]} : vector<2x4x4x64xf32> to vector<2x2x2x64xf32>
    %40 = vector.extract_strided_slice %35 {offsets = [0, 1, 1, 0], sizes = [2, 2, 2, 64], strides = [1, 1, 1, 1]} : vector<2x4x4x64xf32> to vector<2x2x2x64xf32>
    %41 = vector.extract_strided_slice %35 {offsets = [0, 1, 2, 0], sizes = [2, 2, 2, 64], strides = [1, 1, 1, 1]} : vector<2x4x4x64xf32> to vector<2x2x2x64xf32>
    %42 = vector.extract_strided_slice %35 {offsets = [0, 2, 0, 0], sizes = [2, 2, 2, 64], strides = [1, 1, 1, 1]} : vector<2x4x4x64xf32> to vector<2x2x2x64xf32>
    %43 = vector.extract_strided_slice %35 {offsets = [0, 2, 1, 0], sizes = [2, 2, 2, 64], strides = [1, 1, 1, 1]} : vector<2x4x4x64xf32> to vector<2x2x2x64xf32>
    %44 = vector.extract_strided_slice %35 {offsets = [0, 2, 2, 0], sizes = [2, 2, 2, 64], strides = [1, 1, 1, 1]} : vector<2x4x4x64xf32> to vector<2x2x2x64xf32>
    %45 = tpu.concatenate %36, %37, %38, %39, %40, %41, %42, %43, %44 in 3 : vector<2x2x2x64xf32>, vector<2x2x2x64xf32>, vector<2x2x2x64xf32>, vector<2x2x2x64xf32>, vector<2x2x2x64xf32>, vector<2x2x2x64xf32>, vector<2x2x2x64xf32>, vector<2x2x2x64xf32>, vector<2x2x2x64xf32> -> vector<2x2x2x576xf32>
    %46 = vector.shape_cast %45 : vector<2x2x2x576xf32> to vector<8x576xf32>
    %c0_36 = arith.constant 0 : index
    %c0_37 = arith.constant 0 : index
    %47 = vector.load %arg5[%c0_36, %c0_37] : memref<576x128xf32, #tpu.memory_space<vmem>>, vector<576x128xf32>
    %cst_38 = arith.constant dense<0.000000e+00> : vector<8x128xf32>
    %48 = tpu.matmul %46, %47, %cst_38 {dimension_numbers = #tpu.dot_dimension_numbers<[1], [0], [0], [1], [0, 0, 1, 1], [], []>} : vector<8x576xf32>, vector<576x128xf32>, vector<8x128xf32> -> vector<8x128xf32>
    %c0_39 = arith.constant 0 : index
    %c0_40 = arith.constant 0 : index
    %49 = vector.load %arg6[%c0_39, %c0_40] : memref<1x128xf32, #tpu.memory_space<vmem>>, vector<1x128xf32>
    %50 = vector.broadcast %49 : vector<1x128xf32> to vector<8x128xf32>
    %51 = arith.addf %48, %50 : vector<8x128xf32>
    %cst_41 = arith.constant 0.000000e+00 : f32
    %52 = vector.broadcast %cst_41 : f32 to vector<8x128xf32>
    %53 = arith.maximumf %51, %52 : vector<8x128xf32>
    %54 = vector.shape_cast %53 : vector<8x128xf32> to vector<2x2x2x128xf32>
    %55 = vector.extract_strided_slice %54 {offsets = [0, 0, 0, 0], sizes = [2, 2, 2, 32], strides = [1, 1, 1, 1]} : vector<2x2x2x128xf32> to vector<2x2x2x32xf32>
    %56 = vector.extract_strided_slice %54 {offsets = [0, 0, 0, 32], sizes = [2, 2, 2, 32], strides = [1, 1, 1, 1]} : vector<2x2x2x128xf32> to vector<2x2x2x32xf32>
    %57 = vector.shape_cast %55 : vector<2x2x2x32xf32> to vector<2x2x2x1x32xf32>
    %58 = vector.shape_cast %56 : vector<2x2x2x32xf32> to vector<2x2x2x1x32xf32>
    %59 = tpu.concatenate %57, %58 in 3 : vector<2x2x2x1x32xf32>, vector<2x2x2x1x32xf32> -> vector<2x2x2x2x32xf32>
    %60 = vector.shape_cast %59 : vector<2x2x2x2x32xf32> to vector<2x2x4x32xf32>
    %61 = vector.extract_strided_slice %54 {offsets = [0, 0, 0, 64], sizes = [2, 2, 2, 32], strides = [1, 1, 1, 1]} : vector<2x2x2x128xf32> to vector<2x2x2x32xf32>
    %62 = vector.extract_strided_slice %54 {offsets = [0, 0, 0, 96], sizes = [2, 2, 2, 32], strides = [1, 1, 1, 1]} : vector<2x2x2x128xf32> to vector<2x2x2x32xf32>
    %63 = vector.shape_cast %61 : vector<2x2x2x32xf32> to vector<2x2x2x1x32xf32>
    %64 = vector.shape_cast %62 : vector<2x2x2x32xf32> to vector<2x2x2x1x32xf32>
    %65 = tpu.concatenate %63, %64 in 3 : vector<2x2x2x1x32xf32>, vector<2x2x2x1x32xf32> -> vector<2x2x2x2x32xf32>
    %66 = vector.shape_cast %65 : vector<2x2x2x2x32xf32> to vector<2x2x4x32xf32>
    %67 = vector.shape_cast %60 : vector<2x2x4x32xf32> to vector<2x2x1x4x32xf32>
    %68 = vector.shape_cast %66 : vector<2x2x4x32xf32> to vector<2x2x1x4x32xf32>
    %69 = tpu.concatenate %67, %68 in 2 : vector<2x2x1x4x32xf32>, vector<2x2x1x4x32xf32> -> vector<2x2x2x4x32xf32>
    %70 = vector.shape_cast %69 : vector<2x2x2x4x32xf32> to vector<2x4x4x32xf32>
    %cst_42 = arith.constant 0.000000e+00 : f32
    %71 = vector.broadcast %cst_42 : f32 to vector<2x1x6x32xf32>
    %cst_43 = arith.constant 0.000000e+00 : f32
    %72 = vector.broadcast %cst_43 : f32 to vector<2x6x1x32xf32>
    %c0_44 = arith.constant 0 : index
    %c0_45 = arith.constant 0 : index
    %c0_46 = arith.constant 0 : index
    %c0_47 = arith.constant 0 : index
    %73 = vector.load %arg15[%c0_44, %c0_45, %c0_46, %c0_47] : memref<2x6x6x32xf32, #tpu.memory_space<vmem>>, vector<2x1x6x32xf32>
    tpu.vector_store %arg15[%c0_44, %c0_45, %c0_46, %c0_47], %71 {strides = array<i32>} : memref<2x6x6x32xf32, #tpu.memory_space<vmem>>, vector<2x1x6x32xf32>,
    %c0_48 = arith.constant 0 : index
    %c5 = arith.constant 5 : index
    %c0_49 = arith.constant 0 : index
    %c0_50 = arith.constant 0 : index
    %74 = vector.load %arg15[%c0_48, %c5, %c0_49, %c0_50] : memref<2x6x6x32xf32, #tpu.memory_space<vmem>>, vector<2x1x6x32xf32>
    tpu.vector_store %arg15[%c0_48, %c5, %c0_49, %c0_50], %71 {strides = array<i32>} : memref<2x6x6x32xf32, #tpu.memory_space<vmem>>, vector<2x1x6x32xf32>,
    %c0_51 = arith.constant 0 : index
    %c0_52 = arith.constant 0 : index
    %c0_53 = arith.constant 0 : index
    %c0_54 = arith.constant 0 : index
    %75 = vector.load %arg15[%c0_51, %c0_52, %c0_53, %c0_54] : memref<2x6x6x32xf32, #tpu.memory_space<vmem>>, vector<2x6x1x32xf32>
    tpu.vector_store %arg15[%c0_51, %c0_52, %c0_53, %c0_54], %72 {strides = array<i32>} : memref<2x6x6x32xf32, #tpu.memory_space<vmem>>, vector<2x6x1x32xf32>,
    %c0_55 = arith.constant 0 : index
    %c0_56 = arith.constant 0 : index
    %c5_57 = arith.constant 5 : index
    %c0_58 = arith.constant 0 : index
    %76 = vector.load %arg15[%c0_55, %c0_56, %c5_57, %c0_58] : memref<2x6x6x32xf32, #tpu.memory_space<vmem>>, vector<2x6x1x32xf32>
    tpu.vector_store %arg15[%c0_55, %c0_56, %c5_57, %c0_58], %72 {strides = array<i32>} : memref<2x6x6x32xf32, #tpu.memory_space<vmem>>, vector<2x6x1x32xf32>,
    %c0_59 = arith.constant 0 : index
    %c1_60 = arith.constant 1 : index
    %c1_61 = arith.constant 1 : index
    %c0_62 = arith.constant 0 : index
    %77 = vector.load %arg15[%c0_59, %c1_60, %c1_61, %c0_62] : memref<2x6x6x32xf32, #tpu.memory_space<vmem>>, vector<2x4x4x32xf32>
    tpu.vector_store %arg15[%c0_59, %c1_60, %c1_61, %c0_62], %70 {strides = array<i32>} : memref<2x6x6x32xf32, #tpu.memory_space<vmem>>, vector<2x4x4x32xf32>,
    %c0_63 = arith.constant 0 : index
    %c0_64 = arith.constant 0 : index
    %c0_65 = arith.constant 0 : index
    %c0_66 = arith.constant 0 : index
    %78 = vector.load %arg15[%c0_63, %c0_64, %c0_65, %c0_66] : memref<2x6x6x32xf32, #tpu.memory_space<vmem>>, vector<2x6x6x32xf32>
    %79 = vector.extract_strided_slice %78 {offsets = [0, 0, 0, 0], sizes = [2, 4, 4, 32], strides = [1, 1, 1, 1]} : vector<2x6x6x32xf32> to vector<2x4x4x32xf32>
    %80 = vector.extract_strided_slice %78 {offsets = [0, 0, 1, 0], sizes = [2, 4, 4, 32], strides = [1, 1, 1, 1]} : vector<2x6x6x32xf32> to vector<2x4x4x32xf32>
    %81 = vector.extract_strided_slice %78 {offsets = [0, 0, 2, 0], sizes = [2, 4, 4, 32], strides = [1, 1, 1, 1]} : vector<2x6x6x32xf32> to vector<2x4x4x32xf32>
    %82 = vector.extract_strided_slice %78 {offsets = [0, 1, 0, 0], sizes = [2, 4, 4, 32], strides = [1, 1, 1, 1]} : vector<2x6x6x32xf32> to vector<2x4x4x32xf32>
    %83 = vector.extract_strided_slice %78 {offsets = [0, 1, 1, 0], sizes = [2, 4, 4, 32], strides = [1, 1, 1, 1]} : vector<2x6x6x32xf32> to vector<2x4x4x32xf32>
    %84 = vector.extract_strided_slice %78 {offsets = [0, 1, 2, 0], sizes = [2, 4, 4, 32], strides = [1, 1, 1, 1]} : vector<2x6x6x32xf32> to vector<2x4x4x32xf32>
    %85 = vector.extract_strided_slice %78 {offsets = [0, 2, 0, 0], sizes = [2, 4, 4, 32], strides = [1, 1, 1, 1]} : vector<2x6x6x32xf32> to vector<2x4x4x32xf32>
    %86 = vector.extract_strided_slice %78 {offsets = [0, 2, 1, 0], sizes = [2, 4, 4, 32], strides = [1, 1, 1, 1]} : vector<2x6x6x32xf32> to vector<2x4x4x32xf32>
    %87 = vector.extract_strided_slice %78 {offsets = [0, 2, 2, 0], sizes = [2, 4, 4, 32], strides = [1, 1, 1, 1]} : vector<2x6x6x32xf32> to vector<2x4x4x32xf32>
    %88 = tpu.concatenate %79, %80, %81, %82, %83, %84, %85, %86, %87 in 3 : vector<2x4x4x32xf32>, vector<2x4x4x32xf32>, vector<2x4x4x32xf32>, vector<2x4x4x32xf32>, vector<2x4x4x32xf32>, vector<2x4x4x32xf32>, vector<2x4x4x32xf32>, vector<2x4x4x32xf32>, vector<2x4x4x32xf32> -> vector<2x4x4x288xf32>
    %89 = vector.shape_cast %88 : vector<2x4x4x288xf32> to vector<32x288xf32>
    %c0_67 = arith.constant 0 : index
    %c0_68 = arith.constant 0 : index
    %90 = vector.load %arg7[%c0_67, %c0_68] : memref<288x64xf32, #tpu.memory_space<vmem>>, vector<288x64xf32>
    %cst_69 = arith.constant dense<0.000000e+00> : vector<32x64xf32>
    %91 = tpu.matmul %89, %90, %cst_69 {dimension_numbers = #tpu.dot_dimension_numbers<[1], [0], [0], [1], [0, 0, 1, 1], [], []>} : vector<32x288xf32>, vector<288x64xf32>, vector<32x64xf32> -> vector<32x64xf32>
    %c0_70 = arith.constant 0 : index
    %c0_71 = arith.constant 0 : index
    %92 = vector.load %arg8[%c0_70, %c0_71] : memref<1x64xf32, #tpu.memory_space<vmem>>, vector<1x64xf32>
    %93 = vector.broadcast %92 : vector<1x64xf32> to vector<32x64xf32>
    %94 = arith.addf %91, %93 : vector<32x64xf32>
    %cst_72 = arith.constant 0.000000e+00 : f32
    %95 = vector.broadcast %cst_72 : f32 to vector<32x64xf32>
    %96 = arith.maximumf %94, %95 : vector<32x64xf32>
    %97 = vector.shape_cast %96 : vector<32x64xf32> to vector<2x4x4x64xf32>
    %98 = vector.extract_strided_slice %97 {offsets = [0, 0, 0, 0], sizes = [2, 4, 4, 16], strides = [1, 1, 1, 1]} : vector<2x4x4x64xf32> to vector<2x4x4x16xf32>
    %99 = vector.extract_strided_slice %97 {offsets = [0, 0, 0, 16], sizes = [2, 4, 4, 16], strides = [1, 1, 1, 1]} : vector<2x4x4x64xf32> to vector<2x4x4x16xf32>
    %100 = vector.shape_cast %98 : vector<2x4x4x16xf32> to vector<2x4x4x1x16xf32>
    %101 = vector.shape_cast %99 : vector<2x4x4x16xf32> to vector<2x4x4x1x16xf32>
    %102 = tpu.concatenate %100, %101 in 3 : vector<2x4x4x1x16xf32>, vector<2x4x4x1x16xf32> -> vector<2x4x4x2x16xf32>
    %103 = vector.shape_cast %102 : vector<2x4x4x2x16xf32> to vector<2x4x8x16xf32>
    %104 = vector.extract_strided_slice %97 {offsets = [0, 0, 0, 32], sizes = [2, 4, 4, 16], strides = [1, 1, 1, 1]} : vector<2x4x4x64xf32> to vector<2x4x4x16xf32>
    %105 = vector.extract_strided_slice %97 {offsets = [0, 0, 0, 48], sizes = [2, 4, 4, 16], strides = [1, 1, 1, 1]} : vector<2x4x4x64xf32> to vector<2x4x4x16xf32>
    %106 = vector.shape_cast %104 : vector<2x4x4x16xf32> to vector<2x4x4x1x16xf32>
    %107 = vector.shape_cast %105 : vector<2x4x4x16xf32> to vector<2x4x4x1x16xf32>
    %108 = tpu.concatenate %106, %107 in 3 : vector<2x4x4x1x16xf32>, vector<2x4x4x1x16xf32> -> vector<2x4x4x2x16xf32>
    %109 = vector.shape_cast %108 : vector<2x4x4x2x16xf32> to vector<2x4x8x16xf32>
    %110 = vector.shape_cast %103 : vector<2x4x8x16xf32> to vector<2x4x1x8x16xf32>
    %111 = vector.shape_cast %109 : vector<2x4x8x16xf32> to vector<2x4x1x8x16xf32>
    %112 = tpu.concatenate %110, %111 in 2 : vector<2x4x1x8x16xf32>, vector<2x4x1x8x16xf32> -> vector<2x4x2x8x16xf32>
    %113 = vector.shape_cast %112 : vector<2x4x2x8x16xf32> to vector<2x8x8x16xf32>
    %cst_73 = arith.constant 0.000000e+00 : f32
    %114 = vector.broadcast %cst_73 : f32 to vector<2x1x10x16xf32>
    %cst_74 = arith.constant 0.000000e+00 : f32
    %115 = vector.broadcast %cst_74 : f32 to vector<2x10x1x16xf32>
    %c0_75 = arith.constant 0 : index
    %c0_76 = arith.constant 0 : index
    %c0_77 = arith.constant 0 : index
    %c0_78 = arith.constant 0 : index
    %116 = vector.load %arg16[%c0_75, %c0_76, %c0_77, %c0_78] : memref<2x10x10x16xf32, #tpu.memory_space<vmem>>, vector<2x1x10x16xf32>
    tpu.vector_store %arg16[%c0_75, %c0_76, %c0_77, %c0_78], %114 {strides = array<i32>} : memref<2x10x10x16xf32, #tpu.memory_space<vmem>>, vector<2x1x10x16xf32>,
    %c0_79 = arith.constant 0 : index
    %c9 = arith.constant 9 : index
    %c0_80 = arith.constant 0 : index
    %c0_81 = arith.constant 0 : index
    %117 = vector.load %arg16[%c0_79, %c9, %c0_80, %c0_81] : memref<2x10x10x16xf32, #tpu.memory_space<vmem>>, vector<2x1x10x16xf32>
    tpu.vector_store %arg16[%c0_79, %c9, %c0_80, %c0_81], %114 {strides = array<i32>} : memref<2x10x10x16xf32, #tpu.memory_space<vmem>>, vector<2x1x10x16xf32>,
    %c0_82 = arith.constant 0 : index
    %c0_83 = arith.constant 0 : index
    %c0_84 = arith.constant 0 : index
    %c0_85 = arith.constant 0 : index
    %118 = vector.load %arg16[%c0_82, %c0_83, %c0_84, %c0_85] : memref<2x10x10x16xf32, #tpu.memory_space<vmem>>, vector<2x10x1x16xf32>
    tpu.vector_store %arg16[%c0_82, %c0_83, %c0_84, %c0_85], %115 {strides = array<i32>} : memref<2x10x10x16xf32, #tpu.memory_space<vmem>>, vector<2x10x1x16xf32>,
    %c0_86 = arith.constant 0 : index
    %c0_87 = arith.constant 0 : index
    %c9_88 = arith.constant 9 : index
    %c0_89 = arith.constant 0 : index
    %119 = vector.load %arg16[%c0_86, %c0_87, %c9_88, %c0_89] : memref<2x10x10x16xf32, #tpu.memory_space<vmem>>, vector<2x10x1x16xf32>
    tpu.vector_store %arg16[%c0_86, %c0_87, %c9_88, %c0_89], %115 {strides = array<i32>} : memref<2x10x10x16xf32, #tpu.memory_space<vmem>>, vector<2x10x1x16xf32>,
    %c0_90 = arith.constant 0 : index
    %c1_91 = arith.constant 1 : index
    %c1_92 = arith.constant 1 : index
    %c0_93 = arith.constant 0 : index
    %120 = vector.load %arg16[%c0_90, %c1_91, %c1_92, %c0_93] : memref<2x10x10x16xf32, #tpu.memory_space<vmem>>, vector<2x8x8x16xf32>
    tpu.vector_store %arg16[%c0_90, %c1_91, %c1_92, %c0_93], %113 {strides = array<i32>} : memref<2x10x10x16xf32, #tpu.memory_space<vmem>>, vector<2x8x8x16xf32>,
    %c0_94 = arith.constant 0 : index
    %c0_95 = arith.constant 0 : index
    %c0_96 = arith.constant 0 : index
    %c0_97 = arith.constant 0 : index
    %121 = vector.load %arg16[%c0_94, %c0_95, %c0_96, %c0_97] : memref<2x10x10x16xf32, #tpu.memory_space<vmem>>, vector<2x10x10x16xf32>
    %122 = vector.extract_strided_slice %121 {offsets = [0, 0, 0, 0], sizes = [2, 8, 8, 16], strides = [1, 1, 1, 1]} : vector<2x10x10x16xf32> to vector<2x8x8x16xf32>
    %123 = vector.extract_strided_slice %121 {offsets = [0, 0, 1, 0], sizes = [2, 8, 8, 16], strides = [1, 1, 1, 1]} : vector<2x10x10x16xf32> to vector<2x8x8x16xf32>
    %124 = vector.extract_strided_slice %121 {offsets = [0, 0, 2, 0], sizes = [2, 8, 8, 16], strides = [1, 1, 1, 1]} : vector<2x10x10x16xf32> to vector<2x8x8x16xf32>
    %125 = vector.extract_strided_slice %121 {offsets = [0, 1, 0, 0], sizes = [2, 8, 8, 16], strides = [1, 1, 1, 1]} : vector<2x10x10x16xf32> to vector<2x8x8x16xf32>
    %126 = vector.extract_strided_slice %121 {offsets = [0, 1, 1, 0], sizes = [2, 8, 8, 16], strides = [1, 1, 1, 1]} : vector<2x10x10x16xf32> to vector<2x8x8x16xf32>
    %127 = vector.extract_strided_slice %121 {offsets = [0, 1, 2, 0], sizes = [2, 8, 8, 16], strides = [1, 1, 1, 1]} : vector<2x10x10x16xf32> to vector<2x8x8x16xf32>
    %128 = vector.extract_strided_slice %121 {offsets = [0, 2, 0, 0], sizes = [2, 8, 8, 16], strides = [1, 1, 1, 1]} : vector<2x10x10x16xf32> to vector<2x8x8x16xf32>
    %129 = vector.extract_strided_slice %121 {offsets = [0, 2, 1, 0], sizes = [2, 8, 8, 16], strides = [1, 1, 1, 1]} : vector<2x10x10x16xf32> to vector<2x8x8x16xf32>
    %130 = vector.extract_strided_slice %121 {offsets = [0, 2, 2, 0], sizes = [2, 8, 8, 16], strides = [1, 1, 1, 1]} : vector<2x10x10x16xf32> to vector<2x8x8x16xf32>
    %131 = tpu.concatenate %122, %123, %124, %125, %126, %127, %128, %129, %130 in 3 : vector<2x8x8x16xf32>, vector<2x8x8x16xf32>, vector<2x8x8x16xf32>, vector<2x8x8x16xf32>, vector<2x8x8x16xf32>, vector<2x8x8x16xf32>, vector<2x8x8x16xf32>, vector<2x8x8x16xf32>, vector<2x8x8x16xf32> -> vector<2x8x8x144xf32>
    %132 = vector.shape_cast %131 : vector<2x8x8x144xf32> to vector<128x144xf32>
    %c0_98 = arith.constant 0 : index
    %c0_99 = arith.constant 0 : index
    %133 = vector.load %arg9[%c0_98, %c0_99] : memref<144x32xf32, #tpu.memory_space<vmem>>, vector<144x32xf32>
    %cst_100 = arith.constant dense<0.000000e+00> : vector<128x32xf32>
    %134 = tpu.matmul %132, %133, %cst_100 {dimension_numbers = #tpu.dot_dimension_numbers<[1], [0], [0], [1], [0, 0, 1, 1], [], []>} : vector<128x144xf32>, vector<144x32xf32>, vector<128x32xf32> -> vector<128x32xf32>
    %c0_101 = arith.constant 0 : index
    %c0_102 = arith.constant 0 : index
    %135 = vector.load %arg10[%c0_101, %c0_102] : memref<1x32xf32, #tpu.memory_space<vmem>>, vector<1x32xf32>
    %136 = vector.broadcast %135 : vector<1x32xf32> to vector<128x32xf32>
    %137 = arith.addf %134, %136 : vector<128x32xf32>
    %cst_103 = arith.constant 0.000000e+00 : f32
    %138 = vector.broadcast %cst_103 : f32 to vector<128x32xf32>
    %139 = arith.maximumf %137, %138 : vector<128x32xf32>
    %140 = vector.shape_cast %139 : vector<128x32xf32> to vector<2x8x8x32xf32>
    %141 = vector.extract_strided_slice %140 {offsets = [0, 0, 0, 0], sizes = [2, 8, 8, 8], strides = [1, 1, 1, 1]} : vector<2x8x8x32xf32> to vector<2x8x8x8xf32>
    %142 = vector.extract_strided_slice %140 {offsets = [0, 0, 0, 8], sizes = [2, 8, 8, 8], strides = [1, 1, 1, 1]} : vector<2x8x8x32xf32> to vector<2x8x8x8xf32>
    %143 = vector.shape_cast %141 : vector<2x8x8x8xf32> to vector<2x8x8x1x8xf32>
    %144 = vector.shape_cast %142 : vector<2x8x8x8xf32> to vector<2x8x8x1x8xf32>
    %145 = tpu.concatenate %143, %144 in 3 : vector<2x8x8x1x8xf32>, vector<2x8x8x1x8xf32> -> vector<2x8x8x2x8xf32>
    %146 = vector.shape_cast %145 : vector<2x8x8x2x8xf32> to vector<2x8x16x8xf32>
    %147 = vector.extract_strided_slice %140 {offsets = [0, 0, 0, 16], sizes = [2, 8, 8, 8], strides = [1, 1, 1, 1]} : vector<2x8x8x32xf32> to vector<2x8x8x8xf32>
    %148 = vector.extract_strided_slice %140 {offsets = [0, 0, 0, 24], sizes = [2, 8, 8, 8], strides = [1, 1, 1, 1]} : vector<2x8x8x32xf32> to vector<2x8x8x8xf32>
    %149 = vector.shape_cast %147 : vector<2x8x8x8xf32> to vector<2x8x8x1x8xf32>
    %150 = vector.shape_cast %148 : vector<2x8x8x8xf32> to vector<2x8x8x1x8xf32>
    %151 = tpu.concatenate %149, %150 in 3 : vector<2x8x8x1x8xf32>, vector<2x8x8x1x8xf32> -> vector<2x8x8x2x8xf32>
    %152 = vector.shape_cast %151 : vector<2x8x8x2x8xf32> to vector<2x8x16x8xf32>
    %153 = vector.shape_cast %146 : vector<2x8x16x8xf32> to vector<2x8x1x16x8xf32>
    %154 = vector.shape_cast %152 : vector<2x8x16x8xf32> to vector<2x8x1x16x8xf32>
    %155 = tpu.concatenate %153, %154 in 2 : vector<2x8x1x16x8xf32>, vector<2x8x1x16x8xf32> -> vector<2x8x2x16x8xf32>
    %156 = vector.shape_cast %155 : vector<2x8x2x16x8xf32> to vector<2x16x16x8xf32>
    %cst_104 = arith.constant 0.000000e+00 : f32
    %157 = vector.broadcast %cst_104 : f32 to vector<2x1x18x8xf32>
    %cst_105 = arith.constant 0.000000e+00 : f32
    %158 = vector.broadcast %cst_105 : f32 to vector<2x18x1x8xf32>
    %c0_106 = arith.constant 0 : index
    %c0_107 = arith.constant 0 : index
    %c0_108 = arith.constant 0 : index
    %c0_109 = arith.constant 0 : index
    %159 = vector.load %arg17[%c0_106, %c0_107, %c0_108, %c0_109] : memref<2x18x18x8xf32, #tpu.memory_space<vmem>>, vector<2x1x18x8xf32>
    tpu.vector_store %arg17[%c0_106, %c0_107, %c0_108, %c0_109], %157 {strides = array<i32>} : memref<2x18x18x8xf32, #tpu.memory_space<vmem>>, vector<2x1x18x8xf32>,
    %c0_110 = arith.constant 0 : index
    %c17 = arith.constant 17 : index
    %c0_111 = arith.constant 0 : index
    %c0_112 = arith.constant 0 : index
    %160 = vector.load %arg17[%c0_110, %c17, %c0_111, %c0_112] : memref<2x18x18x8xf32, #tpu.memory_space<vmem>>, vector<2x1x18x8xf32>
    tpu.vector_store %arg17[%c0_110, %c17, %c0_111, %c0_112], %157 {strides = array<i32>} : memref<2x18x18x8xf32, #tpu.memory_space<vmem>>, vector<2x1x18x8xf32>,
    %c0_113 = arith.constant 0 : index
    %c0_114 = arith.constant 0 : index
    %c0_115 = arith.constant 0 : index
    %c0_116 = arith.constant 0 : index
    %161 = vector.load %arg17[%c0_113, %c0_114, %c0_115, %c0_116] : memref<2x18x18x8xf32, #tpu.memory_space<vmem>>, vector<2x18x1x8xf32>
    tpu.vector_store %arg17[%c0_113, %c0_114, %c0_115, %c0_116], %158 {strides = array<i32>} : memref<2x18x18x8xf32, #tpu.memory_space<vmem>>, vector<2x18x1x8xf32>,
    %c0_117 = arith.constant 0 : index
    %c0_118 = arith.constant 0 : index
    %c17_119 = arith.constant 17 : index
    %c0_120 = arith.constant 0 : index
    %162 = vector.load %arg17[%c0_117, %c0_118, %c17_119, %c0_120] : memref<2x18x18x8xf32, #tpu.memory_space<vmem>>, vector<2x18x1x8xf32>
    tpu.vector_store %arg17[%c0_117, %c0_118, %c17_119, %c0_120], %158 {strides = array<i32>} : memref<2x18x18x8xf32, #tpu.memory_space<vmem>>, vector<2x18x1x8xf32>,
    %c0_121 = arith.constant 0 : index
    %c1_122 = arith.constant 1 : index
    %c1_123 = arith.constant 1 : index
    %c0_124 = arith.constant 0 : index
    %163 = vector.load %arg17[%c0_121, %c1_122, %c1_123, %c0_124] : memref<2x18x18x8xf32, #tpu.memory_space<vmem>>, vector<2x16x16x8xf32>
    tpu.vector_store %arg17[%c0_121, %c1_122, %c1_123, %c0_124], %156 {strides = array<i32>} : memref<2x18x18x8xf32, #tpu.memory_space<vmem>>, vector<2x16x16x8xf32>,
    %c0_125 = arith.constant 0 : index
    %c0_126 = arith.constant 0 : index
    %c0_127 = arith.constant 0 : index
    %c0_128 = arith.constant 0 : index
    %164 = vector.load %arg17[%c0_125, %c0_126, %c0_127, %c0_128] : memref<2x18x18x8xf32, #tpu.memory_space<vmem>>, vector<2x18x18x8xf32>
    %165 = vector.extract_strided_slice %164 {offsets = [0, 0, 0, 0], sizes = [2, 16, 16, 8], strides = [1, 1, 1, 1]} : vector<2x18x18x8xf32> to vector<2x16x16x8xf32>
    %166 = vector.extract_strided_slice %164 {offsets = [0, 0, 1, 0], sizes = [2, 16, 16, 8], strides = [1, 1, 1, 1]} : vector<2x18x18x8xf32> to vector<2x16x16x8xf32>
    %167 = vector.extract_strided_slice %164 {offsets = [0, 0, 2, 0], sizes = [2, 16, 16, 8], strides = [1, 1, 1, 1]} : vector<2x18x18x8xf32> to vector<2x16x16x8xf32>
    %168 = vector.extract_strided_slice %164 {offsets = [0, 1, 0, 0], sizes = [2, 16, 16, 8], strides = [1, 1, 1, 1]} : vector<2x18x18x8xf32> to vector<2x16x16x8xf32>
    %169 = vector.extract_strided_slice %164 {offsets = [0, 1, 1, 0], sizes = [2, 16, 16, 8], strides = [1, 1, 1, 1]} : vector<2x18x18x8xf32> to vector<2x16x16x8xf32>
    %170 = vector.extract_strided_slice %164 {offsets = [0, 1, 2, 0], sizes = [2, 16, 16, 8], strides = [1, 1, 1, 1]} : vector<2x18x18x8xf32> to vector<2x16x16x8xf32>
    %171 = vector.extract_strided_slice %164 {offsets = [0, 2, 0, 0], sizes = [2, 16, 16, 8], strides = [1, 1, 1, 1]} : vector<2x18x18x8xf32> to vector<2x16x16x8xf32>
    %172 = vector.extract_strided_slice %164 {offsets = [0, 2, 1, 0], sizes = [2, 16, 16, 8], strides = [1, 1, 1, 1]} : vector<2x18x18x8xf32> to vector<2x16x16x8xf32>
    %173 = vector.extract_strided_slice %164 {offsets = [0, 2, 2, 0], sizes = [2, 16, 16, 8], strides = [1, 1, 1, 1]} : vector<2x18x18x8xf32> to vector<2x16x16x8xf32>
    %174 = tpu.concatenate %165, %166, %167, %168, %169, %170, %171, %172, %173 in 3 : vector<2x16x16x8xf32>, vector<2x16x16x8xf32>, vector<2x16x16x8xf32>, vector<2x16x16x8xf32>, vector<2x16x16x8xf32>, vector<2x16x16x8xf32>, vector<2x16x16x8xf32>, vector<2x16x16x8xf32>, vector<2x16x16x8xf32> -> vector<2x16x16x72xf32>
    %175 = vector.shape_cast %174 : vector<2x16x16x72xf32> to vector<512x72xf32>
    %c0_129 = arith.constant 0 : index
    %c0_130 = arith.constant 0 : index
    %176 = vector.load %arg11[%c0_129, %c0_130] : memref<1x72xf32, #tpu.memory_space<vmem>>, vector<1x72xf32>
    %cst_131 = arith.constant dense<0.000000e+00> : vector<1x512xf32>
    %177 = tpu.matmul %176, %175, %cst_131 {dimension_numbers = #tpu.dot_dimension_numbers<[1], [1], [0], [0], [0, 0, 1, 0], [], []>} : vector<1x72xf32>, vector<512x72xf32>, vector<1x512xf32> -> vector<1x512xf32>
    %c0_132 = arith.constant 0 : index
    %c0_133 = arith.constant 0 : index
    %178 = vector.load %arg12[%c0_132, %c0_133] : memref<1x1xf32, #tpu.memory_space<vmem>>, vector<1x1xf32>
    %179 = vector.broadcast %178 : vector<1x1xf32> to vector<1x512xf32>
    %180 = arith.addf %177, %179 : vector<1x512xf32>
    %181 = math.tanh %180 : vector<1x512xf32>
    %c0_134 = arith.constant 0 : index
    %c0_135 = arith.constant 0 : index
    %182 = vector.load %arg13[%c0_134, %c0_135] : memref<1x512xf32, #tpu.memory_space<vmem>>, vector<1x512xf32>
    tpu.vector_store %arg13[%c0_134, %c0_135], %181 {strides = array<i32>} : memref<1x512xf32, #tpu.memory_space<vmem>>, vector<1x512xf32>,
    return
  }
}

</mosaic_0001>

<llo_original>
// kernel: decoder_apply.1
$region0: #{decoder_apply.1}
  #allocation0 [shape = 'u32[]', space=smem, size = 0x4, offset = 0x4, fixed_abs, tag = 'smem constant byte address 0x4 - core index']
  #allocation1 [shape = 'u32[72,128]{1,0:T(1,128)}', space=vmem, size = 0x9000, scoped, tag = 'internal scratch']
  #allocation2 [shape = 'f32[2,4,4,64]{3,2,1,0:T(4,128)}', space=vmem, size = 0x4000, scoped, tag = 'scratch operand']
  #allocation3 [shape = 'f32[2,6,6,32]{3,2,1,0:T(8,128)}', space=vmem, size = 0xc000, scoped, tag = 'scratch operand']
  #allocation4 [shape = 'f32[2,10,10,16]{3,2,1,0:T(8,128)}', space=vmem, size = 0x28000, scoped, tag = 'scratch operand']
  #allocation5 [shape = 'f32[2,18,18,8]{3,2,1,0:T(8,128)}', space=vmem, size = 0x6c000, scoped, tag = 'scratch operand']
  #allocation6 [shape = 'f32[1,1]{1,0:T(1,128)S(1)}', space=vmem, size = 0x200, scoped, tag = 'scoped memory for decoder_apply.1']
  %s0 = inlined_call_operand.vmem [shape: f32[2,32], index: 0, kind: input, shape index: {}]
  %s1 = inlined_call_operand.hbm [shape: f32[32,256], index: 1, kind: input, shape index: {}]
  %s2 = inlined_call_operand.vmem [shape: f32[1,256], index: 2, kind: input, shape index: {}]
  %s3 = inlined_call_operand.hbm [shape: f32[256,256], index: 3, kind: input, shape index: {}]
  %s4 = inlined_call_operand.vmem [shape: f32[1,256], index: 4, kind: input, shape index: {}]
  %s5 = inlined_call_operand.vmem [shape: f32[576,128], index: 5, kind: input, shape index: {}]
  %s6 = inlined_call_operand.vmem [shape: f32[1,128], index: 6, kind: input, shape index: {}]
  %s7 = inlined_call_operand.vmem [shape: f32[288,64], index: 7, kind: input, shape index: {}]
  %s8 = inlined_call_operand.vmem [shape: f32[1,64], index: 8, kind: input, shape index: {}]
  %s9 = inlined_call_operand.vmem [shape: f32[144,32], index: 9, kind: input, shape index: {}]
  %s10 = inlined_call_operand.vmem [shape: f32[1,32], index: 10, kind: input, shape index: {}]
  %s11 = inlined_call_operand.vmem [shape: f32[1,72], index: 11, kind: input, shape index: {}]
  %s12 = inlined_call_operand.<no memory space> [shape: f32[1,1], index: 12, kind: input, shape index: {}]
  %s13 = inlined_call_operand.vmem [shape: f32[1,512], index: 13, kind: output, shape index: {}]
  %s14 = sld [smem:[#allocation0]]
  $region70: #{decoder_apply.1} parent=0
    _
  %s16 = ssub.s32 1, %s14
  %s17 = scalar_select 0, %s16, %s14
  %v18 = vstv %s12
  %19 = vst [vmem:[#allocation6] sm:$0x1] %v18
  $region1: #{decoder_apply.1} parent=0
    #allocation7 [shape = 'u8[32768]{0}', space=vmem, size = 0x8000, scoped, tag = 'input window, operand 1, single buffered']
    #allocation8 [shape = 's32[1]{0}', space=sflag, size = 0x4, scoped, tag = 'scoped memory for decoder_apply.1']
    #allocation9 [shape = 'u8[262144]{0}', space=vmem, size = 0x40000, scoped, tag = 'input window, operand 3, single buffered']
    #allocation10 [shape = 's32[1]{0}', space=sflag, size = 0x4, scoped, tag = 'scoped memory for decoder_apply.1']
    %20 = vsyncpa [#allocation8], 0
    %21 = vsyncpa [#allocation10], 0
    // Predicated region
    $region2: #{decoder_apply.1} parent=1 // pred_check
      _
    $region3: #{decoder_apply.1} parent=1 // pred_check_branch
      %23 = sbr.rel (0) target = $region5
    $region4: #{decoder_apply.1} parent=1 // pred_region
      _
    $region5: #{decoder_apply.1} parent=1 // pred_fallthru
      _
    // Predicated region
    $region6: #{decoder_apply.1} parent=1 // pred_check
      _
    $region7: #{decoder_apply.1} parent=1 // pred_check_branch
      %25 = sbr.rel (0) target = $region9
    $region8: #{decoder_apply.1} parent=1 // pred_region
      %27 = vsyncadd [#allocation8], 0
      %s28 = sshll.u32 %s1, 4
      %s29 = int_to_ptr.hbm [resolvable:$true] %s28
      %s30 = sshll.u32 [#allocation7], 4
      %s31 = int_to_ptr.vmem [resolvable:$true] %s30
      %36 = dma.hbm_to_vmem [thread:$0]  %s29, 1024, %s31, [#allocation8], 256, 256, 16
    $region9: #{decoder_apply.1} parent=1 // pred_fallthru
      _
    // Predicated region
    $region10: #{decoder_apply.1} parent=1 // pred_check
      _
    $region11: #{decoder_apply.1} parent=1 // pred_check_branch
      %38 = sbr.rel (0) target = $region13
    $region12: #{decoder_apply.1} parent=1 // pred_region
      _
    $region13: #{decoder_apply.1} parent=1 // pred_fallthru
      _
    // Predicated region
    $region14: #{decoder_apply.1} parent=1 // pred_check
      _
    $region15: #{decoder_apply.1} parent=1 // pred_check_branch
      %40 = sbr.rel (0) target = $region17
    $region16: #{decoder_apply.1} parent=1 // pred_region
      %42 = vsyncadd [#allocation10], 0
      %s43 = sshll.u32 %s3, 4
      %s44 = int_to_ptr.hbm [resolvable:$true] %s43
      %s45 = sshll.u32 [#allocation9], 4
      %s46 = int_to_ptr.vmem [resolvable:$true] %s45
      %51 = dma.hbm_to_vmem [thread:$0]  %s44, 8192, %s46, [#allocation10], 256, 256, 16
    $region17: #{decoder_apply.1} parent=1 // pred_fallthru
      _
    // Predicated region
    $region18: #{decoder_apply.1} parent=1 // pred_check
      _
    $region19: #{decoder_apply.1} parent=1 // pred_check_branch
      %53 = sbr.rel (0) target = $region21
    $region20: #{decoder_apply.1} parent=1 // pred_region
      _
    $region21: #{decoder_apply.1} parent=1 // pred_fallthru
      _
    // Predicated region
    $region22: #{decoder_apply.1} parent=1 // pred_check
      _
    $region23: #{decoder_apply.1} parent=1 // pred_check_branch
      %55 = sbr.rel (0) target = $region25
    $region24: #{decoder_apply.1} parent=1 // pred_region
      _
    $region25: #{decoder_apply.1} parent=1 // pred_fallthru
      _
    // Predicated region
    $region26: #{decoder_apply.1} parent=1 // pred_check
      _
    $region27: #{decoder_apply.1} parent=1 // pred_check_branch
      %57 = sbr.rel (0) target = $region29
    $region28: #{decoder_apply.1} parent=1 // pred_region
      _
    $region29: #{decoder_apply.1} parent=1 // pred_fallthru
      _
    // Predicated region
    $region30: #{decoder_apply.1} parent=1 // pred_check
      _
    $region31: #{decoder_apply.1} parent=1 // pred_check_branch
      %59 = sbr.rel (0) target = $region33
    $region32: #{decoder_apply.1} parent=1 // pred_region
      _
    $region33: #{decoder_apply.1} parent=1 // pred_fallthru
      _
    // Predicated region
    $region34: #{decoder_apply.1} parent=1 // pred_check
      _
    $region35: #{decoder_apply.1} parent=1 // pred_check_branch
      %61 = sbr.rel (0) target = $region37
    $region36: #{decoder_apply.1} parent=1 // pred_region
      _
    $region37: #{decoder_apply.1} parent=1 // pred_fallthru
      _
    // Predicated region
    $region38: #{decoder_apply.1} parent=1 // pred_check
      _
    $region39: #{decoder_apply.1} parent=1 // pred_check_branch
      %63 = sbr.rel (0) target = $region41
    $region40: #{decoder_apply.1} parent=1 // pred_region
      _
    $region41: #{decoder_apply.1} parent=1 // pred_fallthru
      _
    // Predicated region
    $region42: #{decoder_apply.1} parent=1 // pred_check
      _
    $region43: #{decoder_apply.1} parent=1 // pred_check_branch
      %65 = sbr.rel (0) target = $region45
    $region44: #{decoder_apply.1} parent=1 // pred_region
      _
    $region45: #{decoder_apply.1} parent=1 // pred_fallthru
      _
    // Predicated region
    $region46: #{decoder_apply.1} parent=1 // pred_check
      _
    $region47: #{decoder_apply.1} parent=1 // pred_check_branch
      %67 = sbr.rel (0) target = $region49
    $region48: #{decoder_apply.1} parent=1 // pred_region
      _
    $region49: #{decoder_apply.1} parent=1 // pred_fallthru
      _
    // Predicated region
    $region50: #{decoder_apply.1} parent=1 // pred_check
      _
    $region51: #{decoder_apply.1} parent=1 // pred_check_branch
      %69 = sbr.rel (0) target = $region53
    $region52: #{decoder_apply.1} parent=1 // pred_region
      _
    $region53: #{decoder_apply.1} parent=1 // pred_fallthru
      _
    // Predicated region
    $region54: #{decoder_apply.1} parent=1 // pred_check
      _
    $region55: #{decoder_apply.1} parent=1 // pred_check_branch
      %71 = sbr.rel (0) target = $region57
    $region56: #{decoder_apply.1} parent=1 // pred_region
      %73 = dma.done [#allocation8], 1024
    $region57: #{decoder_apply.1} parent=1 // pred_fallthru
      _
    // Predicated region
    $region58: #{decoder_apply.1} parent=1 // pred_check
      _
    $region59: #{decoder_apply.1} parent=1 // pred_check_branch
      %75 = sbr.rel (0) target = $region61
    $region60: #{decoder_apply.1} parent=1 // pred_region
      %77 = dma.done [#allocation10], 8192
    $region61: #{decoder_apply.1} parent=1 // pred_fallthru
      _
    %v78 = vld [vmem:[%s0] sm:$0x3]
    %v79 = vld [vmem:[#allocation7] sm:$0xff]
    %v80 = vld [vmem:[#allocation7 + $0x8] sm:$0xff]
    %v81 = vld [vmem:[#allocation7 + $0x10] sm:$0xff]
    %v82 = vld [vmem:[#allocation7 + $0x18] sm:$0xff]
    %v83 = vld [vmem:[#allocation7 + $0x20] sm:$0xff]
    %v84 = vld [vmem:[#allocation7 + $0x28] sm:$0xff]
    %v85 = vld [vmem:[#allocation7 + $0x30] sm:$0xff]
    %v86 = vld [vmem:[#allocation7 + $0x38] sm:$0xff]
    %v87 = vld [vmem:[%s2] sm:$0x3]
    %v89 = vperm.slane %v87, 0
    %v90 = vperm.slane %v87, 1
    %vm93 = vcmask 261120
    %v95 = vsel %vm93, %v78, 0
    %97 = vmatpush.msra.mxu0 0.0
    %98 = vmatpush.msra.mxu0 0.0
    %99 = vmatpush.msra.mxu0 0.0
    %100 = vmatpush.msra.mxu0 0.0
    %101 = vmatpush.msra.mxu0 0.0
    %102 = vmatpush.msra.mxu0 0.0
    %103 = vmatpush.msra.mxu0 0.0
    %104 = vmatpush.msra.mxu0 0.0
    %105 = vmatpush.msra.mxu0 0.0
    %106 = vmatpush.msra.mxu0 0.0
    %107 = vmatpush.msra.mxu0 0.0
    %108 = vmatpush.msra.mxu0 0.0
    %109 = vmatpush.msra.mxu0 %v85
    %110 = vmatpush.msra.mxu0 %v83
    %111 = vmatpush.msra.mxu0 %v81
    %112 = vmatpush.msra.mxu0 %v79
    %113 = vmatmul.f32.gmra.mxu0 %v95
    %v114 = vpop.f32.mrf.mxu0
    %v115 = vadd.f32 %v89, %v114
    %116 = vdwg.mxu0
    %117 = vmatpush.msra.mxu0 0.0
    %118 = vmatpush.msra.mxu0 0.0
    %119 = vmatpush.msra.mxu0 0.0
    %120 = vmatpush.msra.mxu0 0.0
    %121 = vmatpush.msra.mxu0 0.0
    %122 = vmatpush.msra.mxu0 0.0
    %123 = vmatpush.msra.mxu0 0.0
    %124 = vmatpush.msra.mxu0 0.0
    %125 = vmatpush.msra.mxu0 0.0
    %126 = vmatpush.msra.mxu0 0.0
    %127 = vmatpush.msra.mxu0 0.0
    %128 = vmatpush.msra.mxu0 0.0
    %129 = vmatpush.msra.mxu0 %v86
    %130 = vmatpush.msra.mxu0 %v84
    %131 = vmatpush.msra.mxu0 %v82
    %132 = vmatpush.msra.mxu0 %v80
    %133 = vmatmul.f32.gmra.mxu0 %v95
    %v134 = vpop.f32.mrf.mxu0
    %v135 = vadd.f32 %v90, %v134
    %136 = vdwg.mxu0
    %v137 = vmax.f32 %v115, 0.0
    %v138 = vmax.f32 %v135, 0.0
    %v139 = vld [vmem:[#allocation9] sm:$0xff]
    %v140 = vld [vmem:[#allocation9 + $0x8] sm:$0xff]
    %v141 = vld [vmem:[#allocation9 + $0x10] sm:$0xff]
    %v142 = vld [vmem:[#allocation9 + $0x18] sm:$0xff]
    %v143 = vld [vmem:[#allocation9 + $0x20] sm:$0xff]
    %v144 = vld [vmem:[#allocation9 + $0x28] sm:$0xff]
    %v145 = vld [vmem:[#allocation9 + $0x30] sm:$0xff]
    %v146 = vld [vmem:[#allocation9 + $0x38] sm:$0xff]
    %v147 = vld [vmem:[#allocation9 + $0x40] sm:$0xff]
    %v148 = vld [vmem:[#allocation9 + $0x48] sm:$0xff]
    %v149 = vld [vmem:[#allocation9 + $0x50] sm:$0xff]
    %v150 = vld [vmem:[#allocation9 + $0x58] sm:$0xff]
    %v151 = vld [vmem:[#allocation9 + $0x60] sm:$0xff]
    %v152 = vld [vmem:[#allocation9 + $0x68] sm:$0xff]
    %v153 = vld [vmem:[#allocation9 + $0x70] sm:$0xff]
    %v154 = vld [vmem:[#allocation9 + $0x78] sm:$0xff]
    %v155 = vld [vmem:[#allocation9 + $0x80] sm:$0xff]
    %v156 = vld [vmem:[#allocation9 + $0x88] sm:$0xff]
    %v157 = vld [vmem:[#allocation9 + $0x90] sm:$0xff]
    %v158 = vld [vmem:[#allocation9 + $0x98] sm:$0xff]
    %v159 = vld [vmem:[#allocation9 + $0xa0] sm:$0xff]
    %v160 = vld [vmem:[#allocation9 + $0xa8] sm:$0xff]
    %v161 = vld [vmem:[#allocation9 + $0xb0] sm:$0xff]
    %v162 = vld [vmem:[#allocation9 + $0xb8] sm:$0xff]
    %v163 = vld [vmem:[#allocation9 + $0xc0] sm:$0xff]
    %v164 = vld [vmem:[#allocation9 + $0xc8] sm:$0xff]
    %v165 = vld [vmem:[#allocation9 + $0xd0] sm:$0xff]
    %v166 = vld [vmem:[#allocation9 + $0xd8] sm:$0xff]
    %v167 = vld [vmem:[#allocation9 + $0xe0] sm:$0xff]
    %v168 = vld [vmem:[#allocation9 + $0xe8] sm:$0xff]
    %v169 = vld [vmem:[#allocation9 + $0xf0] sm:$0xff]
    %v170 = vld [vmem:[#allocation9 + $0xf8] sm:$0xff]
    %v171 = vld [vmem:[#allocation9 + $0x100] sm:$0xff]
    %v172 = vld [vmem:[#allocation9 + $0x108] sm:$0xff]
    %v173 = vld [vmem:[#allocation9 + $0x110] sm:$0xff]
    %v174 = vld [vmem:[#allocation9 + $0x118] sm:$0xff]
    %v175 = vld [vmem:[#allocation9 + $0x120] sm:$0xff]
    %v176 = vld [vmem:[#allocation9 + $0x128] sm:$0xff]
    %v177 = vld [vmem:[#allocation9 + $0x130] sm:$0xff]
    %v178 = vld [vmem:[#allocation9 + $0x138] sm:$0xff]
    %v179 = vld [vmem:[#allocation9 + $0x140] sm:$0xff]
    %v180 = vld [vmem:[#allocation9 + $0x148] sm:$0xff]
    %v181 = vld [vmem:[#allocation9 + $0x150] sm:$0xff]
    %v182 = vld [vmem:[#allocation9 + $0x158] sm:$0xff]
    %v183 = vld [vmem:[#allocation9 + $0x160] sm:$0xff]
    %v184 = vld [vmem:[#allocation9 + $0x168] sm:$0xff]
    %v185 = vld [vmem:[#allocation9 + $0x170] sm:$0xff]
    %v186 = vld [vmem:[#allocation9 + $0x178] sm:$0xff]
    %v187 = vld [vmem:[#allocation9 + $0x180] sm:$0xff]
    %v188 = vld [vmem:[#allocation9 + $0x188] sm:$0xff]
    %v189 = vld [vmem:[#allocation9 + $0x190] sm:$0xff]
    %v190 = vld [vmem:[#allocation9 + $0x198] sm:$0xff]
    %v191 = vld [vmem:[#allocation9 + $0x1a0] sm:$0xff]
    %v192 = vld [vmem:[#allocation9 + $0x1a8] sm:$0xff]
    %v193 = vld [vmem:[#allocation9 + $0x1b0] sm:$0xff]
    %v194 = vld [vmem:[#allocation9 + $0x1b8] sm:$0xff]
    %v195 = vld [vmem:[#allocation9 + $0x1c0] sm:$0xff]
    %v196 = vld [vmem:[#allocation9 + $0x1c8] sm:$0xff]
    %v197 = vld [vmem:[#allocation9 + $0x1d0] sm:$0xff]
    %v198 = vld [vmem:[#allocation9 + $0x1d8] sm:$0xff]
    %v199 = vld [vmem:[#allocation9 + $0x1e0] sm:$0xff]
    %v200 = vld [vmem:[#allocation9 + $0x1e8] sm:$0xff]
    %v201 = vld [vmem:[#allocation9 + $0x1f0] sm:$0xff]
    %v202 = vld [vmem:[#allocation9 + $0x1f8] sm:$0xff]
    %v203 = vld [vmem:[%s4] sm:$0x3]
    %v205 = vperm.slane %v203, 0
    %v206 = vperm.slane %v203, 1
    %209 = vmatpush.msra.mxu0 %v169
    %210 = vmatpush.msra.mxu0 %v167
    %211 = vmatpush.msra.mxu0 %v165
    %212 = vmatpush.msra.mxu0 %v163
    %213 = vmatpush.msra.mxu0 %v161
    %214 = vmatpush.msra.mxu0 %v159
    %215 = vmatpush.msra.mxu0 %v157
    %216 = vmatpush.msra.mxu0 %v155
    %217 = vmatpush.msra.mxu0 %v153
    %218 = vmatpush.msra.mxu0 %v151
    %219 = vmatpush.msra.mxu0 %v149
    %220 = vmatpush.msra.mxu0 %v147
    %221 = vmatpush.msra.mxu0 %v145
    %222 = vmatpush.msra.mxu0 %v143
    %223 = vmatpush.msra.mxu0 %v141
    %224 = vmatpush.msra.mxu0 %v139
    %225 = vmatmul.f32.gmra.mxu0 %v137
    %v226 = vpop.f32.mrf.mxu0
    %v227 = vadd.f32 %v205, %v226
    %228 = vdwg.mxu0
    %229 = vmatpush.msra.mxu0 %v201
    %230 = vmatpush.msra.mxu0 %v199
    %231 = vmatpush.msra.mxu0 %v197
    %232 = vmatpush.msra.mxu0 %v195
    %233 = vmatpush.msra.mxu0 %v193
    %234 = vmatpush.msra.mxu0 %v191
    %235 = vmatpush.msra.mxu0 %v189
    %236 = vmatpush.msra.mxu0 %v187
    %237 = vmatpush.msra.mxu0 %v185
    %238 = vmatpush.msra.mxu0 %v183
    %239 = vmatpush.msra.mxu0 %v181
    %240 = vmatpush.msra.mxu0 %v179
    %241 = vmatpush.msra.mxu0 %v177
    %242 = vmatpush.msra.mxu0 %v175
    %243 = vmatpush.msra.mxu0 %v173
    %244 = vmatpush.msra.mxu0 %v171
    %245 = vmatmul.f32.gmra.mxu0 %v138
    %v246 = vpop.f32.mrf.mxu0
    %v247 = vadd.f32 %v227, %v246
    %248 = vdwg.mxu0
    %249 = vmatpush.msra.mxu0 %v170
    %250 = vmatpush.msra.mxu0 %v168
    %251 = vmatpush.msra.mxu0 %v166
    %252 = vmatpush.msra.mxu0 %v164
    %253 = vmatpush.msra.mxu0 %v162
    %254 = vmatpush.msra.mxu0 %v160
    %255 = vmatpush.msra.mxu0 %v158
    %256 = vmatpush.msra.mxu0 %v156
    %257 = vmatpush.msra.mxu0 %v154
    %258 = vmatpush.msra.mxu0 %v152
    %259 = vmatpush.msra.mxu0 %v150
    %260 = vmatpush.msra.mxu0 %v148
    %261 = vmatpush.msra.mxu0 %v146
    %262 = vmatpush.msra.mxu0 %v144
    %263 = vmatpush.msra.mxu0 %v142
    %264 = vmatpush.msra.mxu0 %v140
    %265 = vmatmul.f32.gmra.mxu0 %v137
    %v266 = vpop.f32.mrf.mxu0
    %v267 = vadd.f32 %v206, %v266
    %268 = vdwg.mxu0
    %269 = vmatpush.msra.mxu0 %v202
    %270 = vmatpush.msra.mxu0 %v200
    %271 = vmatpush.msra.mxu0 %v198
    %272 = vmatpush.msra.mxu0 %v196
    %273 = vmatpush.msra.mxu0 %v194
    %274 = vmatpush.msra.mxu0 %v192
    %275 = vmatpush.msra.mxu0 %v190
    %276 = vmatpush.msra.mxu0 %v188
    %277 = vmatpush.msra.mxu0 %v186
    %278 = vmatpush.msra.mxu0 %v184
    %279 = vmatpush.msra.mxu0 %v182
    %280 = vmatpush.msra.mxu0 %v180
    %281 = vmatpush.msra.mxu0 %v178
    %282 = vmatpush.msra.mxu0 %v176
    %283 = vmatpush.msra.mxu0 %v174
    %284 = vmatpush.msra.mxu0 %v172
    %285 = vmatmul.f32.gmra.mxu0 %v138
    %v286 = vpop.f32.mrf.mxu0
    %v287 = vadd.f32 %v267, %v286
    %288 = vdwg.mxu0
    %v289 = vmax.f32 %v247, 0.0
    %v290 = vmax.f32 %v287, 0.0
    %vm291 = vcmask 519168
    %292 = vst.msk [vmem:[#allocation2] sm:$0xf] %vm291, 0.0
    %293 = vst.msk [vmem:[#allocation2 + $0x10] sm:$0xf] %vm291, 0.0
    %s294 = scalar_lea.vmem [#allocation2], 12
    %295 = vst.msk [vmem:[%s294] sm:$0xf] %vm291, 0.0
    %296 = vst.msk [vmem:[%s294 + $0x10] sm:$0xf] %vm291, 0.0
    %vm297 = vcmask 516096
    %298 = vst.msk [vmem:[#allocation2] sm:$0x1] %vm297, 0.0
    %299 = vst.msk [vmem:[#allocation2 + $0x4] sm:$0x1] %vm297, 0.0
    %300 = vst.msk [vmem:[#allocation2 + $0x8] sm:$0x1] %vm297, 0.0
    %301 = vst.msk [vmem:[#allocation2 + $0xc] sm:$0x1] %vm297, 0.0
    %302 = vst.msk [vmem:[#allocation2 + $0x10] sm:$0x1] %vm297, 0.0
    %303 = vst.msk [vmem:[#allocation2 + $0x14] sm:$0x1] %vm297, 0.0
    %304 = vst.msk [vmem:[#allocation2 + $0x18] sm:$0x1] %vm297, 0.0
    %305 = vst.msk [vmem:[#allocation2 + $0x1c] sm:$0x1] %vm297, 0.0
    %306 = vst.msk [vmem:[#allocation2 + $0x3] sm:$0x1] %vm297, 0.0
    %307 = vst.msk [vmem:[#allocation2 + $0x7] sm:$0x1] %vm297, 0.0
    %308 = vst.msk [vmem:[#allocation2 + $0xb] sm:$0x1] %vm297, 0.0
    %309 = vst.msk [vmem:[#allocation2 + $0xf] sm:$0x1] %vm297, 0.0
    %310 = vst.msk [vmem:[#allocation2 + $0x13] sm:$0x1] %vm297, 0.0
    %311 = vst.msk [vmem:[#allocation2 + $0x17] sm:$0x1] %vm297, 0.0
    %312 = vst.msk [vmem:[#allocation2 + $0x1b] sm:$0x1] %vm297, 0.0
    %313 = vst.msk [vmem:[#allocation2 + $0x1f] sm:$0x1] %vm297, 0.0
    %v315 = vrot.slane %v289, 1
    %v317 = vperm.slane %v289, 0
    %v318 = vperm.slane %v315, 0
    %319 = vrot.lane.b32.xlu0 %v317, 64
    %v320 = vpop.permute.xlu0 %319
    %321 = vrot.lane.b32.xlu0 %v318, 64
    %v322 = vpop.permute.xlu0 %321
    %vm325 = vcmask 1040384
    %v326 = vsel %vm325, %v289, %v320
    %v327 = vsel %vm325, %v315, %v322
    %v329 = vrot.slane %v290, 1
    %v331 = vperm.slane %v290, 0
    %v332 = vperm.slane %v329, 0
    %333 = vrot.lane.b32.xlu0 %v331, 64
    %v334 = vpop.permute.xlu0 %333
    %335 = vrot.lane.b32.xlu0 %v332, 64
    %v336 = vpop.permute.xlu0 %335
    %v339 = vsel %vm325, %v290, %v334
    %v340 = vsel %vm325, %v329, %v336
    %s341 = scalar_lea.vmem [#allocation2], 4
    %vm342 = vcmask 517120
    %343 = vst.msk [vmem:[%s341 + $0x1] sm:$0x3] %vm342, %v326
    %344 = vst.msk [vmem:[%s341 + $0x5] sm:$0x3] %vm342, %v339
    %345 = vst.msk [vmem:[%s341 + $0x11] sm:$0x3] %vm342, %v327
    %346 = vst.msk [vmem:[%s341 + $0x15] sm:$0x3] %vm342, %v340
    %v347 = vld [vmem:[#allocation2] sm:$0xf]
    %v348 = vld [vmem:[#allocation2 + $0x4] sm:$0xf]
    %v349 = vld [vmem:[#allocation2 + $0x8] sm:$0xf]
    %v350 = vld [vmem:[#allocation2 + $0xc] sm:$0xf]
    %v351 = vld [vmem:[#allocation2 + $0x10] sm:$0xf]
    %v352 = vld [vmem:[#allocation2 + $0x14] sm:$0xf]
    %v353 = vld [vmem:[#allocation2 + $0x18] sm:$0xf]
    %v354 = vld [vmem:[#allocation2 + $0x1c] sm:$0xf]
    %v359 = vrot.slane %v347, 1
    %v360 = vrot.slane %v348, 1
    %v361 = vrot.slane %v351, 1
    %v362 = vrot.slane %v352, 1
    %363 = vrot.lane.b32.xlu0 %v359, 64
    %v364 = vpop.permute.xlu0 %363
    %365 = vrot.lane.b32.xlu0 %v360, 64
    %v366 = vpop.permute.xlu0 %365
    %367 = vrot.lane.b32.xlu0 %v361, 64
    %v368 = vpop.permute.xlu0 %367
    %369 = vrot.lane.b32.xlu0 %v362, 64
    %v370 = vpop.permute.xlu0 %369
    %v375 = vrot.slane %v347, 2
    %v376 = vrot.slane %v348, 2
    %v377 = vrot.slane %v351, 2
    %v378 = vrot.slane %v352, 2
    %385 = vrot.lane.b32.xlu0 %v348, 64
    %v386 = vpop.permute.xlu0 %385
    %387 = vrot.lane.b32.xlu0 %v349, 64
    %v388 = vpop.permute.xlu0 %387
    %389 = vrot.lane.b32.xlu0 %v352, 64
    %v390 = vpop.permute.xlu0 %389
    %391 = vrot.lane.b32.xlu0 %v353, 64
    %v392 = vpop.permute.xlu0 %391
    %v397 = vrot.slane %v349, 1
    %v398 = vrot.slane %v353, 1
    %v403 = vrot.slane %v349, 2
    %v404 = vrot.slane %v353, 2
    %405 = vrot.lane.b32.xlu0 %v376, 64
    %v406 = vpop.permute.xlu0 %405
    %407 = vrot.lane.b32.xlu0 %v403, 64
    %v408 = vpop.permute.xlu0 %407
    %409 = vrot.lane.b32.xlu0 %v378, 64
    %v410 = vpop.permute.xlu0 %409
    %411 = vrot.lane.b32.xlu0 %v404, 64
    %v412 = vpop.permute.xlu0 %411
    %v419 = vrot.slane %v350, 1
    %v420 = vrot.slane %v354, 1
    %421 = vrot.lane.b32.xlu0 %v397, 64
    %v422 = vpop.permute.xlu0 %421
    %423 = vrot.lane.b32.xlu0 %v419, 64
    %v424 = vpop.permute.xlu0 %423
    %425 = vrot.lane.b32.xlu0 %v398, 64
    %v426 = vpop.permute.xlu0 %425
    %427 = vrot.lane.b32.xlu0 %v420, 64
    %v428 = vpop.permute.xlu0 %427
    %v433 = vrot.slane %v350, 2
    %v434 = vrot.slane %v354, 2
    %vm435 = vcmask 523264
    %v436 = vsel %vm435, %v347, %v364
    %v437 = vsel %vm435, %v348, %v366
    %v438 = vsel %vm435, %v351, %v368
    %v439 = vsel %vm435, %v352, %v370
    %v440 = vsel %vm435, %v375, %v386
    %v441 = vsel %vm435, %v376, %v388
    %v442 = vsel %vm435, %v377, %v390
    %v443 = vsel %vm435, %v378, %v392
    %v444 = vsel %vm435, %v360, %v406
    %v445 = vsel %vm435, %v397, %v408
    %v446 = vsel %vm435, %v362, %v410
    %v447 = vsel %vm435, %v398, %v412
    %v448 = vsel %vm435, %v349, %v422
    %v449 = vsel %vm435, %v350, %v424
    %v450 = vsel %vm435, %v353, %v426
    %v451 = vsel %vm435, %v354, %v428
    %v468 = vrot.slane %v440, 6
    %v469 = vrot.slane %v444, 4
    %v470 = vrot.slane %v448, 2
    %v471 = vrot.slane %v441, 6
    %v472 = vrot.slane %v445, 4
    %v473 = vrot.slane %v449, 2
    %v474 = vrot.slane %v442, 6
    %v475 = vrot.slane %v446, 4
    %v476 = vrot.slane %v450, 2
    %v477 = vrot.slane %v443, 6
    %v478 = vrot.slane %v447, 4
    %v479 = vrot.slane %v451, 2
    %vm480 = vcmask 1041408
    %v481 = vsel %vm480, %v436, %v468
    %vm482 = vcmask 1045508
    %v483 = vsel %vm482, %v469, %v470
    %vm484 = vcmask 1043456
    %v485 = vsel %vm484, %v481, %v483
    %v486 = vsel %vm480, %v437, %v471
    %v487 = vsel %vm482, %v472, %v473
    %v488 = vsel %vm484, %v486, %v487
    %v489 = vsel %vm480, %v438, %v474
    %v490 = vsel %vm482, %v475, %v476
    %v491 = vsel %vm484, %v489, %v490
    %v492 = vsel %vm480, %v439, %v477
    %v493 = vsel %vm482, %v478, %v479
    %v494 = vsel %vm484, %v492, %v493
    %v495 = vld [vmem:[%s5] sm:$0xff]
    %v496 = vld [vmem:[%s5 + $0x8] sm:$0xff]
    %v497 = vld [vmem:[%s5 + $0x10] sm:$0xff]
    %v498 = vld [vmem:[%s5 + $0x18] sm:$0xff]
    %v499 = vld [vmem:[%s5 + $0x20] sm:$0xff]
    %v500 = vld [vmem:[%s5 + $0x28] sm:$0xff]
    %v501 = vld [vmem:[%s5 + $0x30] sm:$0xff]
    %v502 = vld [vmem:[%s5 + $0x38] sm:$0xff]
    %v503 = vld [vmem:[%s5 + $0x40] sm:$0xff]
    %v504 = vld [vmem:[%s5 + $0x48] sm:$0xff]
    %v505 = vld [vmem:[%s5 + $0x50] sm:$0xff]
    %v506 = vld [vmem:[%s5 + $0x58] sm:$0xff]
    %v507 = vld [vmem:[%s5 + $0x60] sm:$0xff]
    %v508 = vld [vmem:[%s5 + $0x68] sm:$0xff]
    %v509 = vld [vmem:[%s5 + $0x70] sm:$0xff]
    %v510 = vld [vmem:[%s5 + $0x78] sm:$0xff]
    %v511 = vld [vmem:[%s5 + $0x80] sm:$0xff]
    %v512 = vld [vmem:[%s5 + $0x88] sm:$0xff]
    %v513 = vld [vmem:[%s5 + $0x90] sm:$0xff]
    %v514 = vld [vmem:[%s5 + $0x98] sm:$0xff]
    %v515 = vld [vmem:[%s5 + $0xa0] sm:$0xff]
    %v516 = vld [vmem:[%s5 + $0xa8] sm:$0xff]
    %v517 = vld [vmem:[%s5 + $0xb0] sm:$0xff]
    %v518 = vld [vmem:[%s5 + $0xb8] sm:$0xff]
    %v519 = vld [vmem:[%s5 + $0xc0] sm:$0xff]
    %v520 = vld [vmem:[%s5 + $0xc8] sm:$0xff]
    %v521 = vld [vmem:[%s5 + $0xd0] sm:$0xff]
    %v522 = vld [vmem:[%s5 + $0xd8] sm:$0xff]
    %v523 = vld [vmem:[%s5 + $0xe0] sm:$0xff]
    %v524 = vld [vmem:[%s5 + $0xe8] sm:$0xff]
    %v525 = vld [vmem:[%s5 + $0xf0] sm:$0xff]
    %v526 = vld [vmem:[%s5 + $0xf8] sm:$0xff]
    %v527 = vld [vmem:[%s5 + $0x100] sm:$0xff]
    %v528 = vld [vmem:[%s5 + $0x108] sm:$0xff]
    %v529 = vld [vmem:[%s5 + $0x110] sm:$0xff]
    %v530 = vld [vmem:[%s5 + $0x118] sm:$0xff]
    %v531 = vld [vmem:[%s5 + $0x120] sm:$0xff]
    %v532 = vld [vmem:[%s5 + $0x128] sm:$0xff]
    %v533 = vld [vmem:[%s5 + $0x130] sm:$0xff]
    %v534 = vld [vmem:[%s5 + $0x138] sm:$0xff]
    %v535 = vld [vmem:[%s5 + $0x140] sm:$0xff]
    %v536 = vld [vmem:[%s5 + $0x148] sm:$0xff]
    %v537 = vld [vmem:[%s5 + $0x150] sm:$0xff]
    %v538 = vld [vmem:[%s5 + $0x158] sm:$0xff]
    %v539 = vld [vmem:[%s5 + $0x160] sm:$0xff]
    %v540 = vld [vmem:[%s5 + $0x168] sm:$0xff]
    %v541 = vld [vmem:[%s5 + $0x170] sm:$0xff]
    %v542 = vld [vmem:[%s5 + $0x178] sm:$0xff]
    %v543 = vld [vmem:[%s5 + $0x180] sm:$0xff]
    %v544 = vld [vmem:[%s5 + $0x188] sm:$0xff]
    %v545 = vld [vmem:[%s5 + $0x190] sm:$0xff]
    %v546 = vld [vmem:[%s5 + $0x198] sm:$0xff]
    %v547 = vld [vmem:[%s5 + $0x1a0] sm:$0xff]
    %v548 = vld [vmem:[%s5 + $0x1a8] sm:$0xff]
    %v549 = vld [vmem:[%s5 + $0x1b0] sm:$0xff]
    %v550 = vld [vmem:[%s5 + $0x1b8] sm:$0xff]
    %v551 = vld [vmem:[%s5 + $0x1c0] sm:$0xff]
    %v552 = vld [vmem:[%s5 + $0x1c8] sm:$0xff]
    %v553 = vld [vmem:[%s5 + $0x1d0] sm:$0xff]
    %v554 = vld [vmem:[%s5 + $0x1d8] sm:$0xff]
    %v555 = vld [vmem:[%s5 + $0x1e0] sm:$0xff]
    %v556 = vld [vmem:[%s5 + $0x1e8] sm:$0xff]
    %v557 = vld [vmem:[%s5 + $0x1f0] sm:$0xff]
    %v558 = vld [vmem:[%s5 + $0x1f8] sm:$0xff]
    %v559 = vld [vmem:[%s5 + $0x200] sm:$0xff]
    %v560 = vld [vmem:[%s5 + $0x208] sm:$0xff]
    %v561 = vld [vmem:[%s5 + $0x210] sm:$0xff]
    %v562 = vld [vmem:[%s5 + $0x218] sm:$0xff]
    %v563 = vld [vmem:[%s5 + $0x220] sm:$0xff]
    %v564 = vld [vmem:[%s5 + $0x228] sm:$0xff]
    %v565 = vld [vmem:[%s5 + $0x230] sm:$0xff]
    %v566 = vld [vmem:[%s5 + $0x238] sm:$0xff]
    %v567 = vld [vmem:[%s6] sm:$0x1]
    %v569 = vperm.slane %v567, 0
    %571 = vst [vmem:[#allocation1] ss:$4 sm:$0xff] %v485
    %s572 = scalar_lea.vmem [#allocation1], 1
    %573 = vst [vmem:[%s572] ss:$4 sm:$0xff] %v488
    %s574 = scalar_lea.vmem [#allocation1], 2
    %575 = vst [vmem:[%s574] ss:$4 sm:$0xff] %v491
    %s576 = scalar_lea.vmem [#allocation1], 3
    %577 = vst [vmem:[%s576] ss:$4 sm:$0xff] %v494
    %s578 = scalar_lea.vmem [#allocation1], 32
    %579 = vst [vmem:[%s578] ss:$4 sm:$0xff] %v403
    %s580 = scalar_lea.vmem [#allocation1], 33
    %581 = vst [vmem:[%s580] ss:$4 sm:$0xff] %v433
    %s582 = scalar_lea.vmem [#allocation1], 34
    %583 = vst [vmem:[%s582] ss:$4 sm:$0xff] %v404
    %s584 = scalar_lea.vmem [#allocation1], 35
    %585 = vst [vmem:[%s584] ss:$4 sm:$0xff] %v434
    %v586 = vld.sshfl [vmem:[#allocation1] sm:$0xff pattern:$0x73625140]
    %v587 = vld.sshfl [vmem:[#allocation1 + $0x8] sm:$0xff pattern:$0x73625140]
    %v588 = vld.sshfl [vmem:[#allocation1 + $0x10] sm:$0xff pattern:$0x73625140]
    %v589 = vld.sshfl [vmem:[#allocation1 + $0x18] sm:$0xff pattern:$0x73625140]
    %v590 = vld.sshfl [vmem:[#allocation1 + $0x20] sm:$0xff pattern:$0x73625140]
    %v595 = vsel %vm435, %v590, 0
    %597 = vmatpush.msra.mxu0 %v510
    %598 = vmatpush.msra.mxu0 %v509
    %599 = vmatpush.msra.mxu0 %v508
    %600 = vmatpush.msra.mxu0 %v507
    %601 = vmatpush.msra.mxu0 %v506
    %602 = vmatpush.msra.mxu0 %v505
    %603 = vmatpush.msra.mxu0 %v504
    %604 = vmatpush.msra.mxu0 %v503
    %605 = vmatpush.msra.mxu0 %v502
    %606 = vmatpush.msra.mxu0 %v501
    %607 = vmatpush.msra.mxu0 %v500
    %608 = vmatpush.msra.mxu0 %v499
    %609 = vmatpush.msra.mxu0 %v498
    %610 = vmatpush.msra.mxu0 %v497
    %611 = vmatpush.msra.mxu0 %v496
    %612 = vmatpush.msra.mxu0 %v495
    %613 = vmatmul.f32.gmra.mxu0 %v586
    %v614 = vpop.f32.mrf.mxu0
    %v615 = vadd.f32 %v569, %v614
    %616 = vdwg.mxu0
    %617 = vmatpush.msra.mxu0 %v526
    %618 = vmatpush.msra.mxu0 %v525
    %619 = vmatpush.msra.mxu0 %v524
    %620 = vmatpush.msra.mxu0 %v523
    %621 = vmatpush.msra.mxu0 %v522
    %622 = vmatpush.msra.mxu0 %v521
    %623 = vmatpush.msra.mxu0 %v520
    %624 = vmatpush.msra.mxu0 %v519
    %625 = vmatpush.msra.mxu0 %v518
    %626 = vmatpush.msra.mxu0 %v517
    %627 = vmatpush.msra.mxu0 %v516
    %628 = vmatpush.msra.mxu0 %v515
    %629 = vmatpush.msra.mxu0 %v514
    %630 = vmatpush.msra.mxu0 %v513
    %631 = vmatpush.msra.mxu0 %v512
    %632 = vmatpush.msra.mxu0 %v511
    %633 = vmatmul.f32.gmra.mxu0 %v587
    %v634 = vpop.f32.mrf.mxu0
    %v635 = vadd.f32 %v615, %v634
    %636 = vdwg.mxu0
    %637 = vmatpush.msra.mxu0 %v542
    %638 = vmatpush.msra.mxu0 %v541
    %639 = vmatpush.msra.mxu0 %v540
    %640 = vmatpush.msra.mxu0 %v539
    %641 = vmatpush.msra.mxu0 %v538
    %642 = vmatpush.msra.mxu0 %v537
    %643 = vmatpush.msra.mxu0 %v536
    %644 = vmatpush.msra.mxu0 %v535
    %645 = vmatpush.msra.mxu0 %v534
    %646 = vmatpush.msra.mxu0 %v533
    %647 = vmatpush.msra.mxu0 %v532
    %648 = vmatpush.msra.mxu0 %v531
    %649 = vmatpush.msra.mxu0 %v530
    %650 = vmatpush.msra.mxu0 %v529
    %651 = vmatpush.msra.mxu0 %v528
    %652 = vmatpush.msra.mxu0 %v527
    %653 = vmatmul.f32.gmra.mxu0 %v588
    %v654 = vpop.f32.mrf.mxu0
    %v655 = vadd.f32 %v635, %v654
    %656 = vdwg.mxu0
    %657 = vmatpush.msra.mxu0 %v558
    %658 = vmatpush.msra.mxu0 %v557
    %659 = vmatpush.msra.mxu0 %v556
    %660 = vmatpush.msra.mxu0 %v555
    %661 = vmatpush.msra.mxu0 %v554
    %662 = vmatpush.msra.mxu0 %v553
    %663 = vmatpush.msra.mxu0 %v552
    %664 = vmatpush.msra.mxu0 %v551
    %665 = vmatpush.msra.mxu0 %v550
    %666 = vmatpush.msra.mxu0 %v549
    %667 = vmatpush.msra.mxu0 %v548
    %668 = vmatpush.msra.mxu0 %v547
    %669 = vmatpush.msra.mxu0 %v546
    %670 = vmatpush.msra.mxu0 %v545
    %671 = vmatpush.msra.mxu0 %v544
    %672 = vmatpush.msra.mxu0 %v543
    %673 = vmatmul.f32.gmra.mxu0 %v589
    %v674 = vpop.f32.mrf.mxu0
    %v675 = vadd.f32 %v655, %v674
    %676 = vdwg.mxu0
    %677 = vmatpush.msra.mxu0 0.0
    %678 = vmatpush.msra.mxu0 0.0
    %679 = vmatpush.msra.mxu0 0.0
    %680 = vmatpush.msra.mxu0 0.0
    %681 = vmatpush.msra.mxu0 0.0
    %682 = vmatpush.msra.mxu0 0.0
    %683 = vmatpush.msra.mxu0 0.0
    %684 = vmatpush.msra.mxu0 0.0
    %685 = vmatpush.msra.mxu0 %v566
    %686 = vmatpush.msra.mxu0 %v565
    %687 = vmatpush.msra.mxu0 %v564
    %688 = vmatpush.msra.mxu0 %v563
    %689 = vmatpush.msra.mxu0 %v562
    %690 = vmatpush.msra.mxu0 %v561
    %691 = vmatpush.msra.mxu0 %v560
    %692 = vmatpush.msra.mxu0 %v559
    %693 = vmatmul.f32.gmra.mxu0 %v595
    %v694 = vpop.f32.mrf.mxu0
    %v695 = vadd.f32 %v675, %v694
    %696 = vdwg.mxu0
    %v697 = vmax.f32 %v695, 0.0
    %v699 = vrot.slane %v697, 2
    %v700 = vrot.slane %v697, 4
    %v701 = vrot.slane %v697, 6
    %v702 = vrot.slane %v697, 1
    %v703 = vrot.slane %v697, 3
    %v704 = vrot.slane %v699, 1
    %v705 = vrot.slane %v699, 2
    %v706 = vrot.slane %v699, 3
    %v707 = vrot.slane %v700, 1
    %v708 = vrot.slane %v700, 2
    %v709 = vrot.slane %v700, 3
    %v710 = vrot.slane %v701, 1
    %v711 = vrot.slane %v701, 2
    %v712 = vrot.slane %v701, 3
    %v713 = vsel %vm325, %v697, %v702
    %vm714 = vcmask 1042434
    %v715 = vsel %vm714, %v699, %v703
    %v716 = vsel %vm480, %v713, %v715
    %vm717 = vcmask 1041409
    %v718 = vsel %vm717, %v697, %v702
    %vm719 = vcmask 1043459
    %v720 = vsel %vm719, %v699, %v703
    %vm721 = vcmask 1042433
    %v722 = vsel %vm721, %v718, %v720
    %v723 = vrot.slane %v722, 1
    %v724 = vsel %vm325, %v699, %v704
    %v725 = vsel %vm714, %v705, %v706
    %v726 = vsel %vm480, %v724, %v725
    %v727 = vsel %vm717, %v699, %v704
    %v728 = vsel %vm719, %v705, %v706
    %v729 = vsel %vm721, %v727, %v728
    %v730 = vrot.slane %v729, 1
    %v731 = vsel %vm325, %v700, %v707
    %v732 = vsel %vm714, %v708, %v709
    %v733 = vsel %vm480, %v731, %v732
    %v734 = vsel %vm717, %v700, %v707
    %v735 = vsel %vm719, %v708, %v709
    %v736 = vsel %vm721, %v734, %v735
    %v737 = vrot.slane %v736, 1
    %v738 = vsel %vm325, %v701, %v710
    %v739 = vsel %vm714, %v711, %v712
    %v740 = vsel %vm480, %v738, %v739
    %v741 = vsel %vm717, %v701, %v710
    %v742 = vsel %vm719, %v711, %v712
    %v743 = vsel %vm721, %v741, %v742
    %v744 = vrot.slane %v743, 1
    %v753 = vperm.slane %v716, 0
    %v754 = vperm.slane %v723, 0
    %v755 = vperm.slane %v726, 0
    %v756 = vperm.slane %v730, 0
    %v757 = vperm.slane %v733, 0
    %v758 = vperm.slane %v737, 0
    %v759 = vperm.slane %v740, 0
    %v760 = vperm.slane %v744, 0
    %761 = vrot.lane.b32.xlu0 %v753, 96
    %v762 = vpop.permute.xlu0 %761
    %763 = vrot.lane.b32.xlu0 %v754, 96
    %v764 = vpop.permute.xlu0 %763
    %765 = vrot.lane.b32.xlu0 %v755, 96
    %v766 = vpop.permute.xlu0 %765
    %767 = vrot.lane.b32.xlu0 %v756, 96
    %v768 = vpop.permute.xlu0 %767
    %769 = vrot.lane.b32.xlu0 %v757, 96
    %v770 = vpop.permute.xlu0 %769
    %771 = vrot.lane.b32.xlu0 %v758, 96
    %v772 = vpop.permute.xlu0 %771
    %773 = vrot.lane.b32.xlu0 %v759, 96
    %v774 = vpop.permute.xlu0 %773
    %775 = vrot.lane.b32.xlu0 %v760, 96
    %v776 = vpop.permute.xlu0 %775
    %v785 = vsel %vm325, %v716, %v762
    %v786 = vsel %vm325, %v723, %v764
    %v787 = vsel %vm325, %v726, %v766
    %v788 = vsel %vm325, %v730, %v768
    %v789 = vsel %vm325, %v733, %v770
    %v790 = vsel %vm325, %v737, %v772
    %v791 = vsel %vm325, %v740, %v774
    %v792 = vsel %vm325, %v744, %v776
    %801 = vrot.lane.b32.xlu0 %v785, 64
    %v802 = vpop.permute.xlu0 %801
    %803 = vrot.lane.b32.xlu0 %v786, 64
    %v804 = vpop.permute.xlu0 %803
    %805 = vrot.lane.b32.xlu0 %v787, 64
    %v806 = vpop.permute.xlu0 %805
    %807 = vrot.lane.b32.xlu0 %v788, 64
    %v808 = vpop.permute.xlu0 %807
    %809 = vrot.lane.b32.xlu0 %v789, 64
    %v810 = vpop.permute.xlu0 %809
    %811 = vrot.lane.b32.xlu0 %v790, 64
    %v812 = vpop.permute.xlu0 %811
    %813 = vrot.lane.b32.xlu0 %v791, 64
    %v814 = vpop.permute.xlu0 %813
    %815 = vrot.lane.b32.xlu0 %v792, 64
    %v816 = vpop.permute.xlu0 %815
    %vm817 = vcmask 259072
    %818 = vst.msk [vmem:[#allocation3] sm:$0x3f] %vm817, 0.0
    %819 = vst.msk [vmem:[#allocation3 + $0x30] sm:$0x3f] %vm817, 0.0
    %s820 = scalar_lea.vmem [#allocation3], 40
    %821 = vst.msk [vmem:[%s820] sm:$0x3f] %vm817, 0.0
    %822 = vst.msk [vmem:[%s820 + $0x30] sm:$0x3f] %vm817, 0.0
    %vm823 = vcmask 253952
    %824 = vst.msk [vmem:[#allocation3] sm:$0x1] %vm823, 0.0
    %825 = vst.msk [vmem:[#allocation3 + $0x8] sm:$0x1] %vm823, 0.0
    %826 = vst.msk [vmem:[#allocation3 + $0x10] sm:$0x1] %vm823, 0.0
    %827 = vst.msk [vmem:[#allocation3 + $0x18] sm:$0x1] %vm823, 0.0
    %828 = vst.msk [vmem:[#allocation3 + $0x20] sm:$0x1] %vm823, 0.0
    %829 = vst.msk [vmem:[#allocation3 + $0x28] sm:$0x1] %vm823, 0.0
    %830 = vst.msk [vmem:[#allocation3 + $0x30] sm:$0x1] %vm823, 0.0
    %831 = vst.msk [vmem:[#allocation3 + $0x38] sm:$0x1] %vm823, 0.0
    %832 = vst.msk [vmem:[#allocation3 + $0x40] sm:$0x1] %vm823, 0.0
    %833 = vst.msk [vmem:[#allocation3 + $0x48] sm:$0x1] %vm823, 0.0
    %834 = vst.msk [vmem:[#allocation3 + $0x50] sm:$0x1] %vm823, 0.0
    %835 = vst.msk [vmem:[#allocation3 + $0x58] sm:$0x1] %vm823, 0.0
    %836 = vst.msk [vmem:[#allocation3 + $0x5] sm:$0x1] %vm823, 0.0
    %837 = vst.msk [vmem:[#allocation3 + $0xd] sm:$0x1] %vm823, 0.0
    %838 = vst.msk [vmem:[#allocation3 + $0x15] sm:$0x1] %vm823, 0.0
    %839 = vst.msk [vmem:[#allocation3 + $0x1d] sm:$0x1] %vm823, 0.0
    %840 = vst.msk [vmem:[#allocation3 + $0x25] sm:$0x1] %vm823, 0.0
    %841 = vst.msk [vmem:[#allocation3 + $0x2d] sm:$0x1] %vm823, 0.0
    %842 = vst.msk [vmem:[#allocation3 + $0x35] sm:$0x1] %vm823, 0.0
    %843 = vst.msk [vmem:[#allocation3 + $0x3d] sm:$0x1] %vm823, 0.0
    %844 = vst.msk [vmem:[#allocation3 + $0x45] sm:$0x1] %vm823, 0.0
    %845 = vst.msk [vmem:[#allocation3 + $0x4d] sm:$0x1] %vm823, 0.0
    %846 = vst.msk [vmem:[#allocation3 + $0x55] sm:$0x1] %vm823, 0.0
    %847 = vst.msk [vmem:[#allocation3 + $0x5d] sm:$0x1] %vm823, 0.0
    %848 = vst [vmem:[#allocation1] ss:$4 sm:$0xff] %v785
    %s849 = scalar_lea.vmem [#allocation1], 1
    %850 = vst [vmem:[%s849] ss:$4 sm:$0xff] %v786
    %v851 = vld.sshfl [vmem:[#allocation1] sm:$0xff pattern:$0x73625140]
    %s852 = scalar_lea.vmem [#allocation1], 32
    %853 = vst [vmem:[%s852] ss:$4 sm:$0xff] %v802
    %s854 = scalar_lea.vmem [#allocation1], 33
    %855 = vst [vmem:[%s854] ss:$4 sm:$0xff] %v804
    %v856 = vld.sshfl [vmem:[#allocation1 + $0x20] sm:$0xff pattern:$0x73625140]
    %857 = vst [vmem:[#allocation1] ss:$4 sm:$0xff] %v787
    %858 = vst [vmem:[%s849] ss:$4 sm:$0xff] %v788
    %v859 = vld.sshfl [vmem:[#allocation1] sm:$0xff pattern:$0x73625140]
    %860 = vst [vmem:[%s852] ss:$4 sm:$0xff] %v806
    %861 = vst [vmem:[%s854] ss:$4 sm:$0xff] %v808
    %v862 = vld.sshfl [vmem:[#allocation1 + $0x20] sm:$0xff pattern:$0x73625140]
    %863 = vst [vmem:[#allocation1] ss:$4 sm:$0xff] %v789
    %864 = vst [vmem:[%s849] ss:$4 sm:$0xff] %v790
    %v865 = vld.sshfl [vmem:[#allocation1] sm:$0xff pattern:$0x73625140]
    %866 = vst [vmem:[%s852] ss:$4 sm:$0xff] %v810
    %867 = vst [vmem:[%s854] ss:$4 sm:$0xff] %v812
    %v868 = vld.sshfl [vmem:[#allocation1 + $0x20] sm:$0xff pattern:$0x73625140]
    %869 = vst [vmem:[#allocation1] ss:$4 sm:$0xff] %v791
    %870 = vst [vmem:[%s849] ss:$4 sm:$0xff] %v792
    %v871 = vld.sshfl [vmem:[#allocation1] sm:$0xff pattern:$0x73625140]
    %872 = vst [vmem:[%s852] ss:$4 sm:$0xff] %v814
    %873 = vst [vmem:[%s854] ss:$4 sm:$0xff] %v816
    %v874 = vld.sshfl [vmem:[#allocation1 + $0x20] sm:$0xff pattern:$0x73625140]
    %s883 = scalar_lea.vmem [#allocation3], 8
    %vm884 = vcmask 257024
    %885 = vst.msk [vmem:[%s883 + $0x1] sm:$0xf] %vm884, %v851
    %886 = vst.msk [vmem:[%s883 + $0x9] sm:$0xf] %vm884, %v856
    %887 = vst.msk [vmem:[%s883 + $0x11] sm:$0xf] %vm884, %v859
    %888 = vst.msk [vmem:[%s883 + $0x19] sm:$0xf] %vm884, %v862
    %889 = vst.msk [vmem:[%s883 + $0x31] sm:$0xf] %vm884, %v865
    %890 = vst.msk [vmem:[%s883 + $0x39] sm:$0xf] %vm884, %v868
    %891 = vst.msk [vmem:[%s883 + $0x41] sm:$0xf] %vm884, %v871
    %892 = vst.msk [vmem:[%s883 + $0x49] sm:$0xf] %vm884, %v874
    %v893 = vld [vmem:[#allocation3] sm:$0x3f]
    %v894 = vld [vmem:[#allocation3 + $0x8] sm:$0x3f]
    %v895 = vld [vmem:[#allocation3 + $0x10] sm:$0x3f]
    %v896 = vld [vmem:[#allocation3 + $0x18] sm:$0x3f]
    %v897 = vld [vmem:[#allocation3 + $0x20] sm:$0x3f]
    %v898 = vld [vmem:[#allocation3 + $0x28] sm:$0x3f]
    %v899 = vld [vmem:[#allocation3 + $0x30] sm:$0x3f]
    %v900 = vld [vmem:[#allocation3 + $0x38] sm:$0x3f]
    %v901 = vld [vmem:[#allocation3 + $0x40] sm:$0x3f]
    %v902 = vld [vmem:[#allocation3 + $0x48] sm:$0x3f]
    %v903 = vld [vmem:[#allocation3 + $0x50] sm:$0x3f]
    %v904 = vld [vmem:[#allocation3 + $0x58] sm:$0x3f]
    %v913 = vrot.slane %v893, 1
    %v914 = vrot.slane %v894, 1
    %v915 = vrot.slane %v895, 1
    %v916 = vrot.slane %v896, 1
    %v917 = vrot.slane %v899, 1
    %v918 = vrot.slane %v900, 1
    %v919 = vrot.slane %v901, 1
    %v920 = vrot.slane %v902, 1
    %921 = vrot.lane.b32.xlu0 %v913, 32
    %v922 = vpop.permute.xlu0 %921
    %923 = vrot.lane.b32.xlu0 %v914, 32
    %v924 = vpop.permute.xlu0 %923
    %925 = vrot.lane.b32.xlu0 %v915, 32
    %v926 = vpop.permute.xlu0 %925
    %927 = vrot.lane.b32.xlu0 %v916, 32
    %v928 = vpop.permute.xlu0 %927
    %929 = vrot.lane.b32.xlu0 %v917, 32
    %v930 = vpop.permute.xlu0 %929
    %931 = vrot.lane.b32.xlu0 %v918, 32
    %v932 = vpop.permute.xlu0 %931
    %933 = vrot.lane.b32.xlu0 %v919, 32
    %v934 = vpop.permute.xlu0 %933
    %935 = vrot.lane.b32.xlu0 %v920, 32
    %v936 = vpop.permute.xlu0 %935
    %v945 = vrot.slane %v893, 2
    %v946 = vrot.slane %v894, 2
    %v947 = vrot.slane %v895, 2
    %v948 = vrot.slane %v896, 2
    %v949 = vrot.slane %v899, 2
    %v950 = vrot.slane %v900, 2
    %v951 = vrot.slane %v901, 2
    %v952 = vrot.slane %v902, 2
    %953 = vrot.lane.b32.xlu0 %v945, 64
    %v954 = vpop.permute.xlu0 %953
    %955 = vrot.lane.b32.xlu0 %v946, 64
    %v956 = vpop.permute.xlu0 %955
    %957 = vrot.lane.b32.xlu0 %v947, 64
    %v958 = vpop.permute.xlu0 %957
    %959 = vrot.lane.b32.xlu0 %v948, 64
    %v960 = vpop.permute.xlu0 %959
    %961 = vrot.lane.b32.xlu0 %v949, 64
    %v962 = vpop.permute.xlu0 %961
    %963 = vrot.lane.b32.xlu0 %v950, 64
    %v964 = vpop.permute.xlu0 %963
    %965 = vrot.lane.b32.xlu0 %v951, 64
    %v966 = vpop.permute.xlu0 %965
    %967 = vrot.lane.b32.xlu0 %v952, 64
    %v968 = vpop.permute.xlu0 %967
    %979 = vrot.lane.b32.xlu0 %v894, 96
    %v980 = vpop.permute.xlu0 %979
    %981 = vrot.lane.b32.xlu0 %v895, 96
    %v982 = vpop.permute.xlu0 %981
    %983 = vrot.lane.b32.xlu0 %v896, 96
    %v984 = vpop.permute.xlu0 %983
    %985 = vrot.lane.b32.xlu0 %v897, 96
    %v986 = vpop.permute.xlu0 %985
    %987 = vrot.lane.b32.xlu0 %v900, 96
    %v988 = vpop.permute.xlu0 %987
    %989 = vrot.lane.b32.xlu0 %v901, 96
    %v990 = vpop.permute.xlu0 %989
    %991 = vrot.lane.b32.xlu0 %v902, 96
    %v992 = vpop.permute.xlu0 %991
    %993 = vrot.lane.b32.xlu0 %v903, 96
    %v994 = vpop.permute.xlu0 %993
    %v1003 = vrot.slane %v897, 1
    %v1004 = vrot.slane %v903, 1
    %v1013 = vrot.slane %v897, 2
    %v1014 = vrot.slane %v903, 2
    %1015 = vrot.lane.b32.xlu0 %v946, 32
    %v1016 = vpop.permute.xlu0 %1015
    %1017 = vrot.lane.b32.xlu0 %v947, 32
    %v1018 = vpop.permute.xlu0 %1017
    %1019 = vrot.lane.b32.xlu0 %v948, 32
    %v1020 = vpop.permute.xlu0 %1019
    %1021 = vrot.lane.b32.xlu0 %v1013, 32
    %v1022 = vpop.permute.xlu0 %1021
    %1023 = vrot.lane.b32.xlu0 %v950, 32
    %v1024 = vpop.permute.xlu0 %1023
    %1025 = vrot.lane.b32.xlu0 %v951, 32
    %v1026 = vpop.permute.xlu0 %1025
    %1027 = vrot.lane.b32.xlu0 %v952, 32
    %v1028 = vpop.permute.xlu0 %1027
    %1029 = vrot.lane.b32.xlu0 %v1014, 32
    %v1030 = vpop.permute.xlu0 %1029
    %1041 = vrot.lane.b32.xlu0 %v895, 64
    %v1042 = vpop.permute.xlu0 %1041
    %1043 = vrot.lane.b32.xlu0 %v896, 64
    %v1044 = vpop.permute.xlu0 %1043
    %1045 = vrot.lane.b32.xlu0 %v897, 64
    %v1046 = vpop.permute.xlu0 %1045
    %1047 = vrot.lane.b32.xlu0 %v898, 64
    %v1048 = vpop.permute.xlu0 %1047
    %1049 = vrot.lane.b32.xlu0 %v901, 64
    %v1050 = vpop.permute.xlu0 %1049
    %1051 = vrot.lane.b32.xlu0 %v902, 64
    %v1052 = vpop.permute.xlu0 %1051
    %1053 = vrot.lane.b32.xlu0 %v903, 64
    %v1054 = vpop.permute.xlu0 %1053
    %1055 = vrot.lane.b32.xlu0 %v904, 64
    %v1056 = vpop.permute.xlu0 %1055
    %v1065 = vrot.slane %v898, 1
    %v1066 = vrot.slane %v904, 1
    %1067 = vrot.lane.b32.xlu0 %v915, 96
    %v1068 = vpop.permute.xlu0 %1067
    %1069 = vrot.lane.b32.xlu0 %v916, 96
    %v1070 = vpop.permute.xlu0 %1069
    %1071 = vrot.lane.b32.xlu0 %v1003, 96
    %v1072 = vpop.permute.xlu0 %1071
    %1073 = vrot.lane.b32.xlu0 %v1065, 96
    %v1074 = vpop.permute.xlu0 %1073
    %1075 = vrot.lane.b32.xlu0 %v919, 96
    %v1076 = vpop.permute.xlu0 %1075
    %1077 = vrot.lane.b32.xlu0 %v920, 96
    %v1078 = vpop.permute.xlu0 %1077
    %1079 = vrot.lane.b32.xlu0 %v1004, 96
    %v1080 = vpop.permute.xlu0 %1079
    %1081 = vrot.lane.b32.xlu0 %v1066, 96
    %v1082 = vpop.permute.xlu0 %1081
    %v1091 = vrot.slane %v898, 2
    %v1092 = vrot.slane %v904, 2
    %v1093 = vsel %vm93, %v893, %v922
    %v1094 = vsel %vm93, %v894, %v924
    %v1095 = vsel %vm93, %v895, %v926
    %v1096 = vsel %vm93, %v896, %v928
    %v1097 = vsel %vm93, %v899, %v930
    %v1098 = vsel %vm93, %v900, %v932
    %v1099 = vsel %vm93, %v901, %v934
    %v1100 = vsel %vm93, %v902, %v936
    %v1101 = vsel %vm435, %v1093, %v954
    %v1102 = vsel %vm435, %v1094, %v956
    %v1103 = vsel %vm435, %v1095, %v958
    %v1104 = vsel %vm435, %v1096, %v960
    %v1105 = vsel %vm435, %v1097, %v962
    %v1106 = vsel %vm435, %v1098, %v964
    %v1107 = vsel %vm435, %v1099, %v966
    %v1108 = vsel %vm435, %v1100, %v968
    %vm1109 = vcmask 785408
    %v1110 = vsel %vm1109, %v1101, %v980
    %v1111 = vsel %vm1109, %v1102, %v982
    %v1112 = vsel %vm1109, %v1103, %v984
    %v1113 = vsel %vm1109, %v1104, %v986
    %v1114 = vsel %vm1109, %v1105, %v988
    %v1115 = vsel %vm1109, %v1106, %v990
    %v1116 = vsel %vm1109, %v1107, %v992
    %v1117 = vsel %vm1109, %v1108, %v994
    %v1118 = vsel %vm93, %v914, %v1016
    %v1119 = vsel %vm93, %v915, %v1018
    %v1120 = vsel %vm93, %v916, %v1020
    %v1121 = vsel %vm93, %v1003, %v1022
    %v1122 = vsel %vm93, %v918, %v1024
    %v1123 = vsel %vm93, %v919, %v1026
    %v1124 = vsel %vm93, %v920, %v1028
    %v1125 = vsel %vm93, %v1004, %v1030
    %v1126 = vsel %vm435, %v1118, %v1042
    %v1127 = vsel %vm435, %v1119, %v1044
    %v1128 = vsel %vm435, %v1120, %v1046
    %v1129 = vsel %vm435, %v1121, %v1048
    %v1130 = vsel %vm435, %v1122, %v1050
    %v1131 = vsel %vm435, %v1123, %v1052
    %v1132 = vsel %vm435, %v1124, %v1054
    %v1133 = vsel %vm435, %v1125, %v1056
    %v1134 = vsel %vm1109, %v1126, %v1068
    %v1135 = vsel %vm1109, %v1127, %v1070
    %v1136 = vsel %vm1109, %v1128, %v1072
    %v1137 = vsel %vm1109, %v1129, %v1074
    %v1138 = vsel %vm1109, %v1130, %v1076
    %v1139 = vsel %vm1109, %v1131, %v1078
    %v1140 = vsel %vm1109, %v1132, %v1080
    %v1141 = vsel %vm1109, %v1133, %v1082
    %v1158 = vrot.slane %v1134, 4
    %v1159 = vrot.slane %v1135, 4
    %v1160 = vrot.slane %v1136, 4
    %v1161 = vrot.slane %v1137, 4
    %v1162 = vrot.slane %v1138, 4
    %v1163 = vrot.slane %v1139, 4
    %v1164 = vrot.slane %v1140, 4
    %v1165 = vrot.slane %v1141, 4
    %v1166 = vsel %vm484, %v1110, %v1158
    %v1167 = vsel %vm484, %v1111, %v1159
    %v1168 = vsel %vm484, %v1112, %v1160
    %v1169 = vsel %vm484, %v1113, %v1161
    %v1170 = vsel %vm484, %v1114, %v1162
    %v1171 = vsel %vm484, %v1115, %v1163
    %v1172 = vsel %vm484, %v1116, %v1164
    %v1173 = vsel %vm484, %v1117, %v1165
    %v1174 = vld [vmem:[%s7] sm:$0xff]
    %v1175 = vld [vmem:[%s7 + $0x8] sm:$0xff]
    %v1176 = vld [vmem:[%s7 + $0x10] sm:$0xff]
    %v1177 = vld [vmem:[%s7 + $0x18] sm:$0xff]
    %v1178 = vld [vmem:[%s7 + $0x20] sm:$0xff]
    %v1179 = vld [vmem:[%s7 + $0x28] sm:$0xff]
    %v1180 = vld [vmem:[%s7 + $0x30] sm:$0xff]
    %v1181 = vld [vmem:[%s7 + $0x38] sm:$0xff]
    %v1182 = vld [vmem:[%s7 + $0x40] sm:$0xff]
    %v1183 = vld [vmem:[%s7 + $0x48] sm:$0xff]
    %v1184 = vld [vmem:[%s7 + $0x50] sm:$0xff]
    %v1185 = vld [vmem:[%s7 + $0x58] sm:$0xff]
    %v1186 = vld [vmem:[%s7 + $0x60] sm:$0xff]
    %v1187 = vld [vmem:[%s7 + $0x68] sm:$0xff]
    %v1188 = vld [vmem:[%s7 + $0x70] sm:$0xff]
    %v1189 = vld [vmem:[%s7 + $0x78] sm:$0xff]
    %v1190 = vld [vmem:[%s7 + $0x80] sm:$0xff]
    %v1191 = vld [vmem:[%s7 + $0x88] sm:$0xff]
    %v1192 = vld [vmem:[%s7 + $0x90] sm:$0xff]
    %v1193 = vld [vmem:[%s7 + $0x98] sm:$0xff]
    %v1194 = vld [vmem:[%s7 + $0xa0] sm:$0xff]
    %v1195 = vld [vmem:[%s7 + $0xa8] sm:$0xff]
    %v1196 = vld [vmem:[%s7 + $0xb0] sm:$0xff]
    %v1197 = vld [vmem:[%s7 + $0xb8] sm:$0xff]
    %v1198 = vld [vmem:[%s7 + $0xc0] sm:$0xff]
    %v1199 = vld [vmem:[%s7 + $0xc8] sm:$0xff]
    %v1200 = vld [vmem:[%s7 + $0xd0] sm:$0xff]
    %v1201 = vld [vmem:[%s7 + $0xd8] sm:$0xff]
    %v1202 = vld [vmem:[%s7 + $0xe0] sm:$0xff]
    %v1203 = vld [vmem:[%s7 + $0xe8] sm:$0xff]
    %v1204 = vld [vmem:[%s7 + $0xf0] sm:$0xff]
    %v1205 = vld [vmem:[%s7 + $0xf8] sm:$0xff]
    %v1206 = vld [vmem:[%s7 + $0x100] sm:$0xff]
    %v1207 = vld [vmem:[%s7 + $0x108] sm:$0xff]
    %v1208 = vld [vmem:[%s7 + $0x110] sm:$0xff]
    %v1209 = vld [vmem:[%s7 + $0x118] sm:$0xff]
    %v1210 = vld [vmem:[%s8] sm:$0x1]
    %v1212 = vperm.slane %v1210, 0
    %1214 = vst [vmem:[#allocation1] ss:$2 sm:$0xff] %v1166
    %s1215 = scalar_lea.vmem [#allocation1], 1
    %1216 = vst [vmem:[%s1215] ss:$2 sm:$0xff] %v1167
    %s1217 = scalar_lea.vmem [#allocation1], 16
    %1218 = vst [vmem:[%s1217] ss:$2 sm:$0xff] %v947
    %s1219 = scalar_lea.vmem [#allocation1], 17
    %1220 = vst [vmem:[%s1219] ss:$2 sm:$0xff] %v948
    %s1221 = scalar_lea.vmem [#allocation1], 32
    %1222 = vst [vmem:[%s1221] ss:$2 sm:$0xff] %v1168
    %s1223 = scalar_lea.vmem [#allocation1], 33
    %1224 = vst [vmem:[%s1223] ss:$2 sm:$0xff] %v1169
    %s1225 = scalar_lea.vmem [#allocation1], 48
    %1226 = vst [vmem:[%s1225] ss:$2 sm:$0xff] %v1013
    %s1227 = scalar_lea.vmem [#allocation1], 49
    %1228 = vst [vmem:[%s1227] ss:$2 sm:$0xff] %v1091
    %v1229 = vld.sshfl [vmem:[#allocation1] sm:$0xff pattern:$0x75316420]
    %v1230 = vld.sshfl [vmem:[#allocation1 + $0x8] sm:$0xff pattern:$0x75316420]
    %v1231 = vld.sshfl [vmem:[#allocation1 + $0x10] sm:$0xff pattern:$0x75316420]
    %v1232 = vld.sshfl [vmem:[#allocation1 + $0x20] sm:$0xff pattern:$0x75316420]
    %v1233 = vld.sshfl [vmem:[#allocation1 + $0x28] sm:$0xff pattern:$0x75316420]
    %v1234 = vld.sshfl [vmem:[#allocation1 + $0x30] sm:$0xff pattern:$0x75316420]
    %1235 = vst [vmem:[#allocation1] ss:$2 sm:$0xff] %v1170
    %1236 = vst [vmem:[%s1215] ss:$2 sm:$0xff] %v1171
    %1237 = vst [vmem:[%s1217] ss:$2 sm:$0xff] %v951
    %1238 = vst [vmem:[%s1219] ss:$2 sm:$0xff] %v952
    %1239 = vst [vmem:[%s1221] ss:$2 sm:$0xff] %v1172
    %1240 = vst [vmem:[%s1223] ss:$2 sm:$0xff] %v1173
    %1241 = vst [vmem:[%s1225] ss:$2 sm:$0xff] %v1014
    %1242 = vst [vmem:[%s1227] ss:$2 sm:$0xff] %v1092
    %v1243 = vld.sshfl [vmem:[#allocation1] sm:$0xff pattern:$0x75316420]
    %v1244 = vld.sshfl [vmem:[#allocation1 + $0x8] sm:$0xff pattern:$0x75316420]
    %v1245 = vld.sshfl [vmem:[#allocation1 + $0x10] sm:$0xff pattern:$0x75316420]
    %v1246 = vld.sshfl [vmem:[#allocation1 + $0x20] sm:$0xff pattern:$0x75316420]
    %v1247 = vld.sshfl [vmem:[#allocation1 + $0x28] sm:$0xff pattern:$0x75316420]
    %v1248 = vld.sshfl [vmem:[#allocation1 + $0x30] sm:$0xff pattern:$0x75316420]
    %v1257 = vsel %vm93, %v1231, 0
    %v1259 = vsel %vm93, %v1234, 0
    %v1261 = vsel %vm93, %v1245, 0
    %v1263 = vsel %vm93, %v1248, 0
    %1265 = vmatpush.msra.mxu0 %v1189
    %1266 = vmatpush.msra.mxu0 %v1188
    %1267 = vmatpush.msra.mxu0 %v1187
    %1268 = vmatpush.msra.mxu0 %v1186
    %1269 = vmatpush.msra.mxu0 %v1185
    %1270 = vmatpush.msra.mxu0 %v1184
    %1271 = vmatpush.msra.mxu0 %v1183
    %1272 = vmatpush.msra.mxu0 %v1182
    %1273 = vmatpush.msra.mxu0 %v1181
    %1274 = vmatpush.msra.mxu0 %v1180
    %1275 = vmatpush.msra.mxu0 %v1179
    %1276 = vmatpush.msra.mxu0 %v1178
    %1277 = vmatpush.msra.mxu0 %v1177
    %1278 = vmatpush.msra.mxu0 %v1176
    %1279 = vmatpush.msra.mxu0 %v1175
    %1280 = vmatpush.msra.mxu0 %v1174
    %1281 = vmatmul.f32.gmra.mxu0 %v1229
    %v1282 = vpop.f32.mrf.mxu0
    %v1283 = vadd.f32 %v1212, %v1282
    %1284 = vmatmul.f32.gmra.mxu0 %v1232
    %v1285 = vpop.f32.mrf.mxu0
    %v1286 = vadd.f32 %v1212, %v1285
    %1287 = vmatmul.f32.gmra.mxu0 %v1243
    %v1288 = vpop.f32.mrf.mxu0
    %v1289 = vadd.f32 %v1212, %v1288
    %1290 = vmatmul.f32.gmra.mxu0 %v1246
    %v1291 = vpop.f32.mrf.mxu0
    %v1292 = vadd.f32 %v1212, %v1291
    %1293 = vdwg.mxu0
    %1294 = vmatpush.msra.mxu0 %v1205
    %1295 = vmatpush.msra.mxu0 %v1204
    %1296 = vmatpush.msra.mxu0 %v1203
    %1297 = vmatpush.msra.mxu0 %v1202
    %1298 = vmatpush.msra.mxu0 %v1201
    %1299 = vmatpush.msra.mxu0 %v1200
    %1300 = vmatpush.msra.mxu0 %v1199
    %1301 = vmatpush.msra.mxu0 %v1198
    %1302 = vmatpush.msra.mxu0 %v1197
    %1303 = vmatpush.msra.mxu0 %v1196
    %1304 = vmatpush.msra.mxu0 %v1195
    %1305 = vmatpush.msra.mxu0 %v1194
    %1306 = vmatpush.msra.mxu0 %v1193
    %1307 = vmatpush.msra.mxu0 %v1192
    %1308 = vmatpush.msra.mxu0 %v1191
    %1309 = vmatpush.msra.mxu0 %v1190
    %1310 = vmatmul.f32.gmra.mxu0 %v1230
    %v1311 = vpop.f32.mrf.mxu0
    %v1312 = vadd.f32 %v1283, %v1311
    %1313 = vmatmul.f32.gmra.mxu0 %v1233
    %v1314 = vpop.f32.mrf.mxu0
    %v1315 = vadd.f32 %v1286, %v1314
    %1316 = vmatmul.f32.gmra.mxu0 %v1244
    %v1317 = vpop.f32.mrf.mxu0
    %v1318 = vadd.f32 %v1289, %v1317
    %1319 = vmatmul.f32.gmra.mxu0 %v1247
    %v1320 = vpop.f32.mrf.mxu0
    %v1321 = vadd.f32 %v1292, %v1320
    %1322 = vdwg.mxu0
    %1323 = vmatpush.msra.mxu0 0.0
    %1324 = vmatpush.msra.mxu0 0.0
    %1325 = vmatpush.msra.mxu0 0.0
    %1326 = vmatpush.msra.mxu0 0.0
    %1327 = vmatpush.msra.mxu0 0.0
    %1328 = vmatpush.msra.mxu0 0.0
    %1329 = vmatpush.msra.mxu0 0.0
    %1330 = vmatpush.msra.mxu0 0.0
    %1331 = vmatpush.msra.mxu0 0.0
    %1332 = vmatpush.msra.mxu0 0.0
    %1333 = vmatpush.msra.mxu0 0.0
    %1334 = vmatpush.msra.mxu0 0.0
    %1335 = vmatpush.msra.mxu0 %v1209
    %1336 = vmatpush.msra.mxu0 %v1208
    %1337 = vmatpush.msra.mxu0 %v1207
    %1338 = vmatpush.msra.mxu0 %v1206
    %1339 = vmatmul.f32.gmra.mxu0 %v1257
    %v1340 = vpop.f32.mrf.mxu0
    %v1341 = vadd.f32 %v1312, %v1340
    %1342 = vmatmul.f32.gmra.mxu0 %v1259
    %v1343 = vpop.f32.mrf.mxu0
    %v1344 = vadd.f32 %v1315, %v1343
    %1345 = vmatmul.f32.gmra.mxu0 %v1261
    %v1346 = vpop.f32.mrf.mxu0
    %v1347 = vadd.f32 %v1318, %v1346
    %1348 = vmatmul.f32.gmra.mxu0 %v1263
    %v1349 = vpop.f32.mrf.mxu0
    %v1350 = vadd.f32 %v1321, %v1349
    %1351 = vdwg.mxu0
    %v1352 = vmax.f32 %v1341, 0.0
    %v1353 = vmax.f32 %v1344, 0.0
    %v1354 = vmax.f32 %v1347, 0.0
    %v1355 = vmax.f32 %v1350, 0.0
    %v1360 = vrot.slane %v1352, 4
    %v1361 = vrot.slane %v1353, 4
    %v1362 = vrot.slane %v1354, 4
    %v1363 = vrot.slane %v1355, 4
    %v1364 = vrot.slane %v1352, 3
    %v1365 = vrot.slane %v1360, 3
    %v1366 = vrot.slane %v1353, 3
    %v1367 = vrot.slane %v1361, 3
    %v1368 = vrot.slane %v1354, 3
    %v1369 = vrot.slane %v1362, 3
    %v1370 = vrot.slane %v1355, 3
    %v1371 = vrot.slane %v1363, 3
    %v1372 = vsel %vm325, %v1352, %v1364
    %v1373 = vsel %vm717, %v1352, %v1364
    %v1374 = vrot.slane %v1373, 1
    %v1375 = vsel %vm714, %v1352, %v1364
    %v1376 = vrot.slane %v1375, 2
    %v1377 = vsel %vm719, %v1352, %v1364
    %v1378 = vrot.slane %v1377, 3
    %v1379 = vsel %vm325, %v1360, %v1365
    %v1380 = vsel %vm717, %v1360, %v1365
    %v1381 = vrot.slane %v1380, 1
    %v1382 = vsel %vm714, %v1360, %v1365
    %v1383 = vrot.slane %v1382, 2
    %v1384 = vsel %vm719, %v1360, %v1365
    %v1385 = vrot.slane %v1384, 3
    %v1386 = vsel %vm325, %v1353, %v1366
    %v1387 = vsel %vm717, %v1353, %v1366
    %v1388 = vrot.slane %v1387, 1
    %v1389 = vsel %vm714, %v1353, %v1366
    %v1390 = vrot.slane %v1389, 2
    %v1391 = vsel %vm719, %v1353, %v1366
    %v1392 = vrot.slane %v1391, 3
    %v1393 = vsel %vm325, %v1361, %v1367
    %v1394 = vsel %vm717, %v1361, %v1367
    %v1395 = vrot.slane %v1394, 1
    %v1396 = vsel %vm714, %v1361, %v1367
    %v1397 = vrot.slane %v1396, 2
    %v1398 = vsel %vm719, %v1361, %v1367
    %v1399 = vrot.slane %v1398, 3
    %v1400 = vsel %vm325, %v1354, %v1368
    %v1401 = vsel %vm717, %v1354, %v1368
    %v1402 = vrot.slane %v1401, 1
    %v1403 = vsel %vm714, %v1354, %v1368
    %v1404 = vrot.slane %v1403, 2
    %v1405 = vsel %vm719, %v1354, %v1368
    %v1406 = vrot.slane %v1405, 3
    %v1407 = vsel %vm325, %v1362, %v1369
    %v1408 = vsel %vm717, %v1362, %v1369
    %v1409 = vrot.slane %v1408, 1
    %v1410 = vsel %vm714, %v1362, %v1369
    %v1411 = vrot.slane %v1410, 2
    %v1412 = vsel %vm719, %v1362, %v1369
    %v1413 = vrot.slane %v1412, 3
    %v1414 = vsel %vm325, %v1355, %v1370
    %v1415 = vsel %vm717, %v1355, %v1370
    %v1416 = vrot.slane %v1415, 1
    %v1417 = vsel %vm714, %v1355, %v1370
    %v1418 = vrot.slane %v1417, 2
    %v1419 = vsel %vm719, %v1355, %v1370
    %v1420 = vrot.slane %v1419, 3
    %v1421 = vsel %vm325, %v1363, %v1371
    %v1422 = vsel %vm717, %v1363, %v1371
    %v1423 = vrot.slane %v1422, 1
    %v1424 = vsel %vm714, %v1363, %v1371
    %v1425 = vrot.slane %v1424, 2
    %v1426 = vsel %vm719, %v1363, %v1371
    %v1427 = vrot.slane %v1426, 3
    %v1460 = vperm.slane %v1372, 0
    %v1461 = vperm.slane %v1374, 0
    %v1462 = vperm.slane %v1376, 0
    %v1463 = vperm.slane %v1378, 0
    %v1464 = vperm.slane %v1379, 0
    %v1465 = vperm.slane %v1381, 0
    %v1466 = vperm.slane %v1383, 0
    %v1467 = vperm.slane %v1385, 0
    %v1468 = vperm.slane %v1386, 0
    %v1469 = vperm.slane %v1388, 0
    %v1470 = vperm.slane %v1390, 0
    %v1471 = vperm.slane %v1392, 0
    %v1472 = vperm.slane %v1393, 0
    %v1473 = vperm.slane %v1395, 0
    %v1474 = vperm.slane %v1397, 0
    %v1475 = vperm.slane %v1399, 0
    %v1476 = vperm.slane %v1400, 0
    %v1477 = vperm.slane %v1402, 0
    %v1478 = vperm.slane %v1404, 0
    %v1479 = vperm.slane %v1406, 0
    %v1480 = vperm.slane %v1407, 0
    %v1481 = vperm.slane %v1409, 0
    %v1482 = vperm.slane %v1411, 0
    %v1483 = vperm.slane %v1413, 0
    %v1484 = vperm.slane %v1414, 0
    %v1485 = vperm.slane %v1416, 0
    %v1486 = vperm.slane %v1418, 0
    %v1487 = vperm.slane %v1420, 0
    %v1488 = vperm.slane %v1421, 0
    %v1489 = vperm.slane %v1423, 0
    %v1490 = vperm.slane %v1425, 0
    %v1491 = vperm.slane %v1427, 0
    %1492 = vrot.lane.b32.xlu0 %v1460, 112
    %v1493 = vpop.permute.xlu0 %1492
    %1494 = vrot.lane.b32.xlu0 %v1461, 112
    %v1495 = vpop.permute.xlu0 %1494
    %1496 = vrot.lane.b32.xlu0 %v1462, 112
    %v1497 = vpop.permute.xlu0 %1496
    %1498 = vrot.lane.b32.xlu0 %v1463, 112
    %v1499 = vpop.permute.xlu0 %1498
    %1500 = vrot.lane.b32.xlu0 %v1464, 112
    %v1501 = vpop.permute.xlu0 %1500
    %1502 = vrot.lane.b32.xlu0 %v1465, 112
    %v1503 = vpop.permute.xlu0 %1502
    %1504 = vrot.lane.b32.xlu0 %v1466, 112
    %v1505 = vpop.permute.xlu0 %1504
    %1506 = vrot.lane.b32.xlu0 %v1467, 112
    %v1507 = vpop.permute.xlu0 %1506
    %1508 = vrot.lane.b32.xlu0 %v1468, 112
    %v1509 = vpop.permute.xlu0 %1508
    %1510 = vrot.lane.b32.xlu0 %v1469, 112
    %v1511 = vpop.permute.xlu0 %1510
    %1512 = vrot.lane.b32.xlu0 %v1470, 112
    %v1513 = vpop.permute.xlu0 %1512
    %1514 = vrot.lane.b32.xlu0 %v1471, 112
    %v1515 = vpop.permute.xlu0 %1514
    %1516 = vrot.lane.b32.xlu0 %v1472, 112
    %v1517 = vpop.permute.xlu0 %1516
    %1518 = vrot.lane.b32.xlu0 %v1473, 112
    %v1519 = vpop.permute.xlu0 %1518
    %1520 = vrot.lane.b32.xlu0 %v1474, 112
    %v1521 = vpop.permute.xlu0 %1520
    %1522 = vrot.lane.b32.xlu0 %v1475, 112
    %v1523 = vpop.permute.xlu0 %1522
    %1524 = vrot.lane.b32.xlu0 %v1476, 112
    %v1525 = vpop.permute.xlu0 %1524
    %1526 = vrot.lane.b32.xlu0 %v1477, 112
    %v1527 = vpop.permute.xlu0 %1526
    %1528 = vrot.lane.b32.xlu0 %v1478, 112
    %v1529 = vpop.permute.xlu0 %1528
    %1530 = vrot.lane.b32.xlu0 %v1479, 112
    %v1531 = vpop.permute.xlu0 %1530
    %1532 = vrot.lane.b32.xlu0 %v1480, 112
    %v1533 = vpop.permute.xlu0 %1532
    %1534 = vrot.lane.b32.xlu0 %v1481, 112
    %v1535 = vpop.permute.xlu0 %1534
    %1536 = vrot.lane.b32.xlu0 %v1482, 112
    %v1537 = vpop.permute.xlu0 %1536
    %1538 = vrot.lane.b32.xlu0 %v1483, 112
    %v1539 = vpop.permute.xlu0 %1538
    %1540 = vrot.lane.b32.xlu0 %v1484, 112
    %v1541 = vpop.permute.xlu0 %1540
    %1542 = vrot.lane.b32.xlu0 %v1485, 112
    %v1543 = vpop.permute.xlu0 %1542
    %1544 = vrot.lane.b32.xlu0 %v1486, 112
    %v1545 = vpop.permute.xlu0 %1544
    %1546 = vrot.lane.b32.xlu0 %v1487, 112
    %v1547 = vpop.permute.xlu0 %1546
    %1548 = vrot.lane.b32.xlu0 %v1488, 112
    %v1549 = vpop.permute.xlu0 %1548
    %1550 = vrot.lane.b32.xlu0 %v1489, 112
    %v1551 = vpop.permute.xlu0 %1550
    %1552 = vrot.lane.b32.xlu0 %v1490, 112
    %v1553 = vpop.permute.xlu0 %1552
    %1554 = vrot.lane.b32.xlu0 %v1491, 112
    %v1555 = vpop.permute.xlu0 %1554
    %v1588 = vsel %vm325, %v1372, %v1493
    %v1589 = vsel %vm325, %v1374, %v1495
    %v1590 = vsel %vm325, %v1376, %v1497
    %v1591 = vsel %vm325, %v1378, %v1499
    %v1592 = vsel %vm325, %v1379, %v1501
    %v1593 = vsel %vm325, %v1381, %v1503
    %v1594 = vsel %vm325, %v1383, %v1505
    %v1595 = vsel %vm325, %v1385, %v1507
    %v1596 = vsel %vm325, %v1386, %v1509
    %v1597 = vsel %vm325, %v1388, %v1511
    %v1598 = vsel %vm325, %v1390, %v1513
    %v1599 = vsel %vm325, %v1392, %v1515
    %v1600 = vsel %vm325, %v1393, %v1517
    %v1601 = vsel %vm325, %v1395, %v1519
    %v1602 = vsel %vm325, %v1397, %v1521
    %v1603 = vsel %vm325, %v1399, %v1523
    %v1604 = vsel %vm325, %v1400, %v1525
    %v1605 = vsel %vm325, %v1402, %v1527
    %v1606 = vsel %vm325, %v1404, %v1529
    %v1607 = vsel %vm325, %v1406, %v1531
    %v1608 = vsel %vm325, %v1407, %v1533
    %v1609 = vsel %vm325, %v1409, %v1535
    %v1610 = vsel %vm325, %v1411, %v1537
    %v1611 = vsel %vm325, %v1413, %v1539
    %v1612 = vsel %vm325, %v1414, %v1541
    %v1613 = vsel %vm325, %v1416, %v1543
    %v1614 = vsel %vm325, %v1418, %v1545
    %v1615 = vsel %vm325, %v1420, %v1547
    %v1616 = vsel %vm325, %v1421, %v1549
    %v1617 = vsel %vm325, %v1423, %v1551
    %v1618 = vsel %vm325, %v1425, %v1553
    %v1619 = vsel %vm325, %v1427, %v1555
    %1652 = vrot.lane.b32.xlu0 %v1588, 96
    %v1653 = vpop.permute.xlu0 %1652
    %1654 = vrot.lane.b32.xlu0 %v1589, 96
    %v1655 = vpop.permute.xlu0 %1654
    %1656 = vrot.lane.b32.xlu0 %v1590, 96
    %v1657 = vpop.permute.xlu0 %1656
    %1658 = vrot.lane.b32.xlu0 %v1591, 96
    %v1659 = vpop.permute.xlu0 %1658
    %1660 = vrot.lane.b32.xlu0 %v1592, 96
    %v1661 = vpop.permute.xlu0 %1660
    %1662 = vrot.lane.b32.xlu0 %v1593, 96
    %v1663 = vpop.permute.xlu0 %1662
    %1664 = vrot.lane.b32.xlu0 %v1594, 96
    %v1665 = vpop.permute.xlu0 %1664
    %1666 = vrot.lane.b32.xlu0 %v1595, 96
    %v1667 = vpop.permute.xlu0 %1666
    %1668 = vrot.lane.b32.xlu0 %v1596, 96
    %v1669 = vpop.permute.xlu0 %1668
    %1670 = vrot.lane.b32.xlu0 %v1597, 96
    %v1671 = vpop.permute.xlu0 %1670
    %1672 = vrot.lane.b32.xlu0 %v1598, 96
    %v1673 = vpop.permute.xlu0 %1672
    %1674 = vrot.lane.b32.xlu0 %v1599, 96
    %v1675 = vpop.permute.xlu0 %1674
    %1676 = vrot.lane.b32.xlu0 %v1600, 96
    %v1677 = vpop.permute.xlu0 %1676
    %1678 = vrot.lane.b32.xlu0 %v1601, 96
    %v1679 = vpop.permute.xlu0 %1678
    %1680 = vrot.lane.b32.xlu0 %v1602, 96
    %v1681 = vpop.permute.xlu0 %1680
    %1682 = vrot.lane.b32.xlu0 %v1603, 96
    %v1683 = vpop.permute.xlu0 %1682
    %1684 = vrot.lane.b32.xlu0 %v1604, 96
    %v1685 = vpop.permute.xlu0 %1684
    %1686 = vrot.lane.b32.xlu0 %v1605, 96
    %v1687 = vpop.permute.xlu0 %1686
    %1688 = vrot.lane.b32.xlu0 %v1606, 96
    %v1689 = vpop.permute.xlu0 %1688
    %1690 = vrot.lane.b32.xlu0 %v1607, 96
    %v1691 = vpop.permute.xlu0 %1690
    %1692 = vrot.lane.b32.xlu0 %v1608, 96
    %v1693 = vpop.permute.xlu0 %1692
    %1694 = vrot.lane.b32.xlu0 %v1609, 96
    %v1695 = vpop.permute.xlu0 %1694
    %1696 = vrot.lane.b32.xlu0 %v1610, 96
    %v1697 = vpop.permute.xlu0 %1696
    %1698 = vrot.lane.b32.xlu0 %v1611, 96
    %v1699 = vpop.permute.xlu0 %1698
    %1700 = vrot.lane.b32.xlu0 %v1612, 96
    %v1701 = vpop.permute.xlu0 %1700
    %1702 = vrot.lane.b32.xlu0 %v1613, 96
    %v1703 = vpop.permute.xlu0 %1702
    %1704 = vrot.lane.b32.xlu0 %v1614, 96
    %v1705 = vpop.permute.xlu0 %1704
    %1706 = vrot.lane.b32.xlu0 %v1615, 96
    %v1707 = vpop.permute.xlu0 %1706
    %1708 = vrot.lane.b32.xlu0 %v1616, 96
    %v1709 = vpop.permute.xlu0 %1708
    %1710 = vrot.lane.b32.xlu0 %v1617, 96
    %v1711 = vpop.permute.xlu0 %1710
    %1712 = vrot.lane.b32.xlu0 %v1618, 96
    %v1713 = vpop.permute.xlu0 %1712
    %1714 = vrot.lane.b32.xlu0 %v1619, 96
    %v1715 = vpop.permute.xlu0 %1714
    %vm1716 = vcmask 130048
    %1717 = vst.msk [vmem:[#allocation4] sm:$0xff] %vm1716, 0.0
    %vm1718 = vcmask 123904
    %1719 = vst.msk [vmem:[#allocation4 + $0x8] sm:$0x3] %vm1718, 0.0
    %1720 = vst.msk [vmem:[#allocation4 + $0xa0] sm:$0xff] %vm1716, 0.0
    %1721 = vst.msk [vmem:[#allocation4 + $0xa8] sm:$0x3] %vm1718, 0.0
    %s1722 = scalar_lea.vmem [#allocation4], 144
    %1723 = vst.msk [vmem:[%s1722] sm:$0xff] %vm1716, 0.0
    %1724 = vst.msk [vmem:[%s1722 + $0x8] sm:$0x3] %vm1718, 0.0
    %1725 = vst.msk [vmem:[%s1722 + $0xa0] sm:$0xff] %vm1716, 0.0
    %1726 = vst.msk [vmem:[%s1722 + $0xa8] sm:$0x3] %vm1718, 0.0
    %vm1727 = vcmask 122880
    %1728 = vst.msk [vmem:[#allocation4] sm:$0x1] %vm1727, 0.0
    %1729 = vst.msk [vmem:[#allocation4 + $0x10] sm:$0x1] %vm1727, 0.0
    %1730 = vst.msk [vmem:[#allocation4 + $0x20] sm:$0x1] %vm1727, 0.0
    %1731 = vst.msk [vmem:[#allocation4 + $0x30] sm:$0x1] %vm1727, 0.0
    %1732 = vst.msk [vmem:[#allocation4 + $0x40] sm:$0x1] %vm1727, 0.0
    %1733 = vst.msk [vmem:[#allocation4 + $0x50] sm:$0x1] %vm1727, 0.0
    %1734 = vst.msk [vmem:[#allocation4 + $0x60] sm:$0x1] %vm1727, 0.0
    %1735 = vst.msk [vmem:[#allocation4 + $0x70] sm:$0x1] %vm1727, 0.0
    %1736 = vst.msk [vmem:[#allocation4 + $0x80] sm:$0x1] %vm1727, 0.0
    %1737 = vst.msk [vmem:[#allocation4 + $0x90] sm:$0x1] %vm1727, 0.0
    %1738 = vst.msk [vmem:[#allocation4 + $0xa0] sm:$0x1] %vm1727, 0.0
    %1739 = vst.msk [vmem:[#allocation4 + $0xb0] sm:$0x1] %vm1727, 0.0
    %1740 = vst.msk [vmem:[#allocation4 + $0xc0] sm:$0x1] %vm1727, 0.0
    %1741 = vst.msk [vmem:[#allocation4 + $0xd0] sm:$0x1] %vm1727, 0.0
    %1742 = vst.msk [vmem:[#allocation4 + $0xe0] sm:$0x1] %vm1727, 0.0
    %1743 = vst.msk [vmem:[#allocation4 + $0xf0] sm:$0x1] %vm1727, 0.0
    %1744 = vst.msk [vmem:[#allocation4 + $0x100] sm:$0x1] %vm1727, 0.0
    %1745 = vst.msk [vmem:[#allocation4 + $0x110] sm:$0x1] %vm1727, 0.0
    %1746 = vst.msk [vmem:[#allocation4 + $0x120] sm:$0x1] %vm1727, 0.0
    %1747 = vst.msk [vmem:[#allocation4 + $0x130] sm:$0x1] %vm1727, 0.0
    %1748 = vst.msk [vmem:[#allocation4 + $0x9] sm:$0x1] %vm1727, 0.0
    %1749 = vst.msk [vmem:[#allocation4 + $0x19] sm:$0x1] %vm1727, 0.0
    %1750 = vst.msk [vmem:[#allocation4 + $0x29] sm:$0x1] %vm1727, 0.0
    %1751 = vst.msk [vmem:[#allocation4 + $0x39] sm:$0x1] %vm1727, 0.0
    %1752 = vst.msk [vmem:[#allocation4 + $0x49] sm:$0x1] %vm1727, 0.0
    %1753 = vst.msk [vmem:[#allocation4 + $0x59] sm:$0x1] %vm1727, 0.0
    %1754 = vst.msk [vmem:[#allocation4 + $0x69] sm:$0x1] %vm1727, 0.0
    %1755 = vst.msk [vmem:[#allocation4 + $0x79] sm:$0x1] %vm1727, 0.0
    %1756 = vst.msk [vmem:[#allocation4 + $0x89] sm:$0x1] %vm1727, 0.0
    %1757 = vst.msk [vmem:[#allocation4 + $0x99] sm:$0x1] %vm1727, 0.0
    %1758 = vst.msk [vmem:[#allocation4 + $0xa9] sm:$0x1] %vm1727, 0.0
    %1759 = vst.msk [vmem:[#allocation4 + $0xb9] sm:$0x1] %vm1727, 0.0
    %1760 = vst.msk [vmem:[#allocation4 + $0xc9] sm:$0x1] %vm1727, 0.0
    %1761 = vst.msk [vmem:[#allocation4 + $0xd9] sm:$0x1] %vm1727, 0.0
    %1762 = vst.msk [vmem:[#allocation4 + $0xe9] sm:$0x1] %vm1727, 0.0
    %1763 = vst.msk [vmem:[#allocation4 + $0xf9] sm:$0x1] %vm1727, 0.0
    %1764 = vst.msk [vmem:[#allocation4 + $0x109] sm:$0x1] %vm1727, 0.0
    %1765 = vst.msk [vmem:[#allocation4 + $0x119] sm:$0x1] %vm1727, 0.0
    %1766 = vst.msk [vmem:[#allocation4 + $0x129] sm:$0x1] %vm1727, 0.0
    %1767 = vst.msk [vmem:[#allocation4 + $0x139] sm:$0x1] %vm1727, 0.0
    %1768 = vst [vmem:[#allocation1] ss:$4 sm:$0xff] %v1588
    %s1769 = scalar_lea.vmem [#allocation1], 1
    %1770 = vst [vmem:[%s1769] ss:$4 sm:$0xff] %v1589
    %s1771 = scalar_lea.vmem [#allocation1], 2
    %1772 = vst [vmem:[%s1771] ss:$4 sm:$0xff] %v1590
    %s1773 = scalar_lea.vmem [#allocation1], 3
    %1774 = vst [vmem:[%s1773] ss:$4 sm:$0xff] %v1591
    %v1775 = vld.sshfl [vmem:[#allocation1] sm:$0xff pattern:$0x73625140]
    %s1776 = scalar_lea.vmem [#allocation1], 32
    %1777 = vst [vmem:[%s1776] ss:$4 sm:$0xff] %v1653
    %s1778 = scalar_lea.vmem [#allocation1], 33
    %1779 = vst [vmem:[%s1778] ss:$4 sm:$0xff] %v1655
    %s1780 = scalar_lea.vmem [#allocation1], 34
    %1781 = vst [vmem:[%s1780] ss:$4 sm:$0xff] %v1657
    %s1782 = scalar_lea.vmem [#allocation1], 35
    %1783 = vst [vmem:[%s1782] ss:$4 sm:$0xff] %v1659
    %v1784 = vld.sshfl [vmem:[#allocation1 + $0x20] sm:$0xff pattern:$0x73625140]
    %1785 = vst [vmem:[#allocation1] ss:$4 sm:$0xff] %v1592
    %1786 = vst [vmem:[%s1769] ss:$4 sm:$0xff] %v1593
    %1787 = vst [vmem:[%s1771] ss:$4 sm:$0xff] %v1594
    %1788 = vst [vmem:[%s1773] ss:$4 sm:$0xff] %v1595
    %v1789 = vld.sshfl [vmem:[#allocation1] sm:$0xff pattern:$0x73625140]
    %1790 = vst [vmem:[%s1776] ss:$4 sm:$0xff] %v1661
    %1791 = vst [vmem:[%s1778] ss:$4 sm:$0xff] %v1663
    %1792 = vst [vmem:[%s1780] ss:$4 sm:$0xff] %v1665
    %1793 = vst [vmem:[%s1782] ss:$4 sm:$0xff] %v1667
    %v1794 = vld.sshfl [vmem:[#allocation1 + $0x20] sm:$0xff pattern:$0x73625140]
    %1795 = vst [vmem:[#allocation1] ss:$4 sm:$0xff] %v1596
    %1796 = vst [vmem:[%s1769] ss:$4 sm:$0xff] %v1597
    %1797 = vst [vmem:[%s1771] ss:$4 sm:$0xff] %v1598
    %1798 = vst [vmem:[%s1773] ss:$4 sm:$0xff] %v1599
    %v1799 = vld.sshfl [vmem:[#allocation1] sm:$0xff pattern:$0x73625140]
    %1800 = vst [vmem:[%s1776] ss:$4 sm:$0xff] %v1669
    %1801 = vst [vmem:[%s1778] ss:$4 sm:$0xff] %v1671
    %1802 = vst [vmem:[%s1780] ss:$4 sm:$0xff] %v1673
    %1803 = vst [vmem:[%s1782] ss:$4 sm:$0xff] %v1675
    %v1804 = vld.sshfl [vmem:[#allocation1 + $0x20] sm:$0xff pattern:$0x73625140]
    %1805 = vst [vmem:[#allocation1] ss:$4 sm:$0xff] %v1600
    %1806 = vst [vmem:[%s1769] ss:$4 sm:$0xff] %v1601
    %1807 = vst [vmem:[%s1771] ss:$4 sm:$0xff] %v1602
    %1808 = vst [vmem:[%s1773] ss:$4 sm:$0xff] %v1603
    %v1809 = vld.sshfl [vmem:[#allocation1] sm:$0xff pattern:$0x73625140]
    %1810 = vst [vmem:[%s1776] ss:$4 sm:$0xff] %v1677
    %1811 = vst [vmem:[%s1778] ss:$4 sm:$0xff] %v1679
    %1812 = vst [vmem:[%s1780] ss:$4 sm:$0xff] %v1681
    %1813 = vst [vmem:[%s1782] ss:$4 sm:$0xff] %v1683
    %v1814 = vld.sshfl [vmem:[#allocation1 + $0x20] sm:$0xff pattern:$0x73625140]
    %1815 = vst [vmem:[#allocation1] ss:$4 sm:$0xff] %v1604
    %1816 = vst [vmem:[%s1769] ss:$4 sm:$0xff] %v1605
    %1817 = vst [vmem:[%s1771] ss:$4 sm:$0xff] %v1606
    %1818 = vst [vmem:[%s1773] ss:$4 sm:$0xff] %v1607
    %v1819 = vld.sshfl [vmem:[#allocation1] sm:$0xff pattern:$0x73625140]
    %1820 = vst [vmem:[%s1776] ss:$4 sm:$0xff] %v1685
    %1821 = vst [vmem:[%s1778] ss:$4 sm:$0xff] %v1687
    %1822 = vst [vmem:[%s1780] ss:$4 sm:$0xff] %v1689
    %1823 = vst [vmem:[%s1782] ss:$4 sm:$0xff] %v1691
    %v1824 = vld.sshfl [vmem:[#allocation1 + $0x20] sm:$0xff pattern:$0x73625140]
    %1825 = vst [vmem:[#allocation1] ss:$4 sm:$0xff] %v1608
    %1826 = vst [vmem:[%s1769] ss:$4 sm:$0xff] %v1609
    %1827 = vst [vmem:[%s1771] ss:$4 sm:$0xff] %v1610
    %1828 = vst [vmem:[%s1773] ss:$4 sm:$0xff] %v1611
    %v1829 = vld.sshfl [vmem:[#allocation1] sm:$0xff pattern:$0x73625140]
    %1830 = vst [vmem:[%s1776] ss:$4 sm:$0xff] %v1693
    %1831 = vst [vmem:[%s1778] ss:$4 sm:$0xff] %v1695
    %1832 = vst [vmem:[%s1780] ss:$4 sm:$0xff] %v1697
    %1833 = vst [vmem:[%s1782] ss:$4 sm:$0xff] %v1699
    %v1834 = vld.sshfl [vmem:[#allocation1 + $0x20] sm:$0xff pattern:$0x73625140]
    %1835 = vst [vmem:[#allocation1] ss:$4 sm:$0xff] %v1612
    %1836 = vst [vmem:[%s1769] ss:$4 sm:$0xff] %v1613
    %1837 = vst [vmem:[%s1771] ss:$4 sm:$0xff] %v1614
    %1838 = vst [vmem:[%s1773] ss:$4 sm:$0xff] %v1615
    %v1839 = vld.sshfl [vmem:[#allocation1] sm:$0xff pattern:$0x73625140]
    %1840 = vst [vmem:[%s1776] ss:$4 sm:$0xff] %v1701
    %1841 = vst [vmem:[%s1778] ss:$4 sm:$0xff] %v1703
    %1842 = vst [vmem:[%s1780] ss:$4 sm:$0xff] %v1705
    %1843 = vst [vmem:[%s1782] ss:$4 sm:$0xff] %v1707
    %v1844 = vld.sshfl [vmem:[#allocation1 + $0x20] sm:$0xff pattern:$0x73625140]
    %1845 = vst [vmem:[#allocation1] ss:$4 sm:$0xff] %v1616
    %1846 = vst [vmem:[%s1769] ss:$4 sm:$0xff] %v1617
    %1847 = vst [vmem:[%s1771] ss:$4 sm:$0xff] %v1618
    %1848 = vst [vmem:[%s1773] ss:$4 sm:$0xff] %v1619
    %v1849 = vld.sshfl [vmem:[#allocation1] sm:$0xff pattern:$0x73625140]
    %1850 = vst [vmem:[%s1776] ss:$4 sm:$0xff] %v1709
    %1851 = vst [vmem:[%s1778] ss:$4 sm:$0xff] %v1711
    %1852 = vst [vmem:[%s1780] ss:$4 sm:$0xff] %v1713
    %1853 = vst [vmem:[%s1782] ss:$4 sm:$0xff] %v1715
    %v1854 = vld.sshfl [vmem:[#allocation1 + $0x20] sm:$0xff pattern:$0x73625140]
    %s1871 = scalar_lea.vmem [#allocation4], 16
    %1872 = vst.msk [vmem:[%s1871 + $0x1] sm:$0xff] %vm1716, %v1775
    %1873 = vst.msk [vmem:[%s1871 + $0x11] sm:$0xff] %vm1716, %v1784
    %1874 = vst.msk [vmem:[%s1871 + $0x21] sm:$0xff] %vm1716, %v1789
    %1875 = vst.msk [vmem:[%s1871 + $0x31] sm:$0xff] %vm1716, %v1794
    %1876 = vst.msk [vmem:[%s1871 + $0x41] sm:$0xff] %vm1716, %v1799
    %1877 = vst.msk [vmem:[%s1871 + $0x51] sm:$0xff] %vm1716, %v1804
    %1878 = vst.msk [vmem:[%s1871 + $0x61] sm:$0xff] %vm1716, %v1809
    %1879 = vst.msk [vmem:[%s1871 + $0x71] sm:$0xff] %vm1716, %v1814
    %1880 = vst.msk [vmem:[%s1871 + $0xa1] sm:$0xff] %vm1716, %v1819
    %1881 = vst.msk [vmem:[%s1871 + $0xb1] sm:$0xff] %vm1716, %v1824
    %1882 = vst.msk [vmem:[%s1871 + $0xc1] sm:$0xff] %vm1716, %v1829
    %1883 = vst.msk [vmem:[%s1871 + $0xd1] sm:$0xff] %vm1716, %v1834
    %1884 = vst.msk [vmem:[%s1871 + $0xe1] sm:$0xff] %vm1716, %v1839
    %1885 = vst.msk [vmem:[%s1871 + $0xf1] sm:$0xff] %vm1716, %v1844
    %1886 = vst.msk [vmem:[%s1871 + $0x101] sm:$0xff] %vm1716, %v1849
    %1887 = vst.msk [vmem:[%s1871 + $0x111] sm:$0xff] %vm1716, %v1854
    %v1888 = vld [vmem:[#allocation4] sm:$0xff]
    %v1889 = vld [vmem:[#allocation4 + $0x8] sm:$0x3]
    %v1890 = vld [vmem:[#allocation4 + $0x10] sm:$0xff]
    %v1891 = vld [vmem:[#allocation4 + $0x18] sm:$0x3]
    %v1892 = vld [vmem:[#allocation4 + $0x20] sm:$0xff]
    %v1893 = vld [vmem:[#allocation4 + $0x28] sm:$0x3]
    %v1894 = vld [vmem:[#allocation4 + $0x30] sm:$0xff]
    %v1895 = vld [vmem:[#allocation4 + $0x38] sm:$0x3]
    %v1896 = vld [vmem:[#allocation4 + $0x40] sm:$0xff]
    %v1897 = vld [vmem:[#allocation4 + $0x48] sm:$0x3]
    %v1898 = vld [vmem:[#allocation4 + $0x50] sm:$0xff]
    %v1899 = vld [vmem:[#allocation4 + $0x58] sm:$0x3]
    %v1900 = vld [vmem:[#allocation4 + $0x60] sm:$0xff]
    %v1901 = vld [vmem:[#allocation4 + $0x68] sm:$0x3]
    %v1902 = vld [vmem:[#allocation4 + $0x70] sm:$0xff]
    %v1903 = vld [vmem:[#allocation4 + $0x78] sm:$0x3]
    %v1904 = vld [vmem:[#allocation4 + $0x80] sm:$0xff]
    %v1905 = vld [vmem:[#allocation4 + $0x88] sm:$0x3]
    %v1906 = vld [vmem:[#allocation4 + $0x90] sm:$0xff]
    %v1907 = vld [vmem:[#allocation4 + $0x98] sm:$0x3]
    %v1908 = vld [vmem:[#allocation4 + $0xa0] sm:$0xff]
    %v1909 = vld [vmem:[#allocation4 + $0xa8] sm:$0x3]
    %v1910 = vld [vmem:[#allocation4 + $0xb0] sm:$0xff]
    %v1911 = vld [vmem:[#allocation4 + $0xb8] sm:$0x3]
    %v1912 = vld [vmem:[#allocation4 + $0xc0] sm:$0xff]
    %v1913 = vld [vmem:[#allocation4 + $0xc8] sm:$0x3]
    %v1914 = vld [vmem:[#allocation4 + $0xd0] sm:$0xff]
    %v1915 = vld [vmem:[#allocation4 + $0xd8] sm:$0x3]
    %v1916 = vld [vmem:[#allocation4 + $0xe0] sm:$0xff]
    %v1917 = vld [vmem:[#allocation4 + $0xe8] sm:$0x3]
    %v1918 = vld [vmem:[#allocation4 + $0xf0] sm:$0xff]
    %v1919 = vld [vmem:[#allocation4 + $0xf8] sm:$0x3]
    %v1920 = vld [vmem:[#allocation4 + $0x100] sm:$0xff]
    %v1921 = vld [vmem:[#allocation4 + $0x108] sm:$0x3]
    %v1922 = vld [vmem:[#allocation4 + $0x110] sm:$0xff]
    %v1923 = vld [vmem:[#allocation4 + $0x118] sm:$0x3]
    %v1924 = vld [vmem:[#allocation4 + $0x120] sm:$0xff]
    %v1925 = vld [vmem:[#allocation4 + $0x128] sm:$0x3]
    %v1926 = vld [vmem:[#allocation4 + $0x130] sm:$0xff]
    %v1927 = vld [vmem:[#allocation4 + $0x138] sm:$0x3]
    %vm1960 = vcmask 1046528
    %v1961 = vrot.slane %v1888, 1
    %v1962 = vrot.slane %v1889, 1
    %v1963 = vsel %vm1960, %v1961, %v1962
    %v1964 = vrot.slane %v1890, 1
    %v1965 = vrot.slane %v1891, 1
    %v1966 = vsel %vm1960, %v1964, %v1965
    %v1967 = vrot.slane %v1892, 1
    %v1968 = vrot.slane %v1893, 1
    %v1969 = vsel %vm1960, %v1967, %v1968
    %v1970 = vrot.slane %v1894, 1
    %v1971 = vrot.slane %v1895, 1
    %v1972 = vsel %vm1960, %v1970, %v1971
    %v1973 = vrot.slane %v1896, 1
    %v1974 = vrot.slane %v1897, 1
    %v1975 = vsel %vm1960, %v1973, %v1974
    %v1976 = vrot.slane %v1898, 1
    %v1977 = vrot.slane %v1899, 1
    %v1978 = vsel %vm1960, %v1976, %v1977
    %v1979 = vrot.slane %v1900, 1
    %v1980 = vrot.slane %v1901, 1
    %v1981 = vsel %vm1960, %v1979, %v1980
    %v1982 = vrot.slane %v1902, 1
    %v1983 = vrot.slane %v1903, 1
    %v1984 = vsel %vm1960, %v1982, %v1983
    %v1985 = vrot.slane %v1908, 1
    %v1986 = vrot.slane %v1909, 1
    %v1987 = vsel %vm1960, %v1985, %v1986
    %v1988 = vrot.slane %v1910, 1
    %v1989 = vrot.slane %v1911, 1
    %v1990 = vsel %vm1960, %v1988, %v1989
    %v1991 = vrot.slane %v1912, 1
    %v1992 = vrot.slane %v1913, 1
    %v1993 = vsel %vm1960, %v1991, %v1992
    %v1994 = vrot.slane %v1914, 1
    %v1995 = vrot.slane %v1915, 1
    %v1996 = vsel %vm1960, %v1994, %v1995
    %v1997 = vrot.slane %v1916, 1
    %v1998 = vrot.slane %v1917, 1
    %v1999 = vsel %vm1960, %v1997, %v1998
    %v2000 = vrot.slane %v1918, 1
    %v2001 = vrot.slane %v1919, 1
    %v2002 = vsel %vm1960, %v2000, %v2001
    %v2003 = vrot.slane %v1920, 1
    %v2004 = vrot.slane %v1921, 1
    %v2005 = vsel %vm1960, %v2003, %v2004
    %v2006 = vrot.slane %v1922, 1
    %v2007 = vrot.slane %v1923, 1
    %v2008 = vsel %vm1960, %v2006, %v2007
    %2009 = vrot.lane.b32.xlu0 %v1963, 16
    %v2010 = vpop.permute.xlu0 %2009
    %2011 = vrot.lane.b32.xlu0 %v1966, 16
    %v2012 = vpop.permute.xlu0 %2011
    %2013 = vrot.lane.b32.xlu0 %v1969, 16
    %v2014 = vpop.permute.xlu0 %2013
    %2015 = vrot.lane.b32.xlu0 %v1972, 16
    %v2016 = vpop.permute.xlu0 %2015
    %2017 = vrot.lane.b32.xlu0 %v1975, 16
    %v2018 = vpop.permute.xlu0 %2017
    %2019 = vrot.lane.b32.xlu0 %v1978, 16
    %v2020 = vpop.permute.xlu0 %2019
    %2021 = vrot.lane.b32.xlu0 %v1981, 16
    %v2022 = vpop.permute.xlu0 %2021
    %2023 = vrot.lane.b32.xlu0 %v1984, 16
    %v2024 = vpop.permute.xlu0 %2023
    %2025 = vrot.lane.b32.xlu0 %v1987, 16
    %v2026 = vpop.permute.xlu0 %2025
    %2027 = vrot.lane.b32.xlu0 %v1990, 16
    %v2028 = vpop.permute.xlu0 %2027
    %2029 = vrot.lane.b32.xlu0 %v1993, 16
    %v2030 = vpop.permute.xlu0 %2029
    %2031 = vrot.lane.b32.xlu0 %v1996, 16
    %v2032 = vpop.permute.xlu0 %2031
    %2033 = vrot.lane.b32.xlu0 %v1999, 16
    %v2034 = vpop.permute.xlu0 %2033
    %2035 = vrot.lane.b32.xlu0 %v2002, 16
    %v2036 = vpop.permute.xlu0 %2035
    %2037 = vrot.lane.b32.xlu0 %v2005, 16
    %v2038 = vpop.permute.xlu0 %2037
    %2039 = vrot.lane.b32.xlu0 %v2008, 16
    %v2040 = vpop.permute.xlu0 %2039
    %vm2057 = vcmask 1045504
    %v2058 = vrot.slane %v1888, 2
    %v2059 = vrot.slane %v1889, 2
    %v2060 = vsel %vm2057, %v2058, %v2059
    %v2061 = vrot.slane %v1890, 2
    %v2062 = vrot.slane %v1891, 2
    %v2063 = vsel %vm2057, %v2061, %v2062
    %v2064 = vrot.slane %v1892, 2
    %v2065 = vrot.slane %v1893, 2
    %v2066 = vsel %vm2057, %v2064, %v2065
    %v2067 = vrot.slane %v1894, 2
    %v2068 = vrot.slane %v1895, 2
    %v2069 = vsel %vm2057, %v2067, %v2068
    %v2070 = vrot.slane %v1896, 2
    %v2071 = vrot.slane %v1897, 2
    %v2072 = vsel %vm2057, %v2070, %v2071
    %v2073 = vrot.slane %v1898, 2
    %v2074 = vrot.slane %v1899, 2
    %v2075 = vsel %vm2057, %v2073, %v2074
    %v2076 = vrot.slane %v1900, 2
    %v2077 = vrot.slane %v1901, 2
    %v2078 = vsel %vm2057, %v2076, %v2077
    %v2079 = vrot.slane %v1902, 2
    %v2080 = vrot.slane %v1903, 2
    %v2081 = vsel %vm2057, %v2079, %v2080
    %v2082 = vrot.slane %v1908, 2
    %v2083 = vrot.slane %v1909, 2
    %v2084 = vsel %vm2057, %v2082, %v2083
    %v2085 = vrot.slane %v1910, 2
    %v2086 = vrot.slane %v1911, 2
    %v2087 = vsel %vm2057, %v2085, %v2086
    %v2088 = vrot.slane %v1912, 2
    %v2089 = vrot.slane %v1913, 2
    %v2090 = vsel %vm2057, %v2088, %v2089
    %v2091 = vrot.slane %v1914, 2
    %v2092 = vrot.slane %v1915, 2
    %v2093 = vsel %vm2057, %v2091, %v2092
    %v2094 = vrot.slane %v1916, 2
    %v2095 = vrot.slane %v1917, 2
    %v2096 = vsel %vm2057, %v2094, %v2095
    %v2097 = vrot.slane %v1918, 2
    %v2098 = vrot.slane %v1919, 2
    %v2099 = vsel %vm2057, %v2097, %v2098
    %v2100 = vrot.slane %v1920, 2
    %v2101 = vrot.slane %v1921, 2
    %v2102 = vsel %vm2057, %v2100, %v2101
    %v2103 = vrot.slane %v1922, 2
    %v2104 = vrot.slane %v1923, 2
    %v2105 = vsel %vm2057, %v2103, %v2104
    %2106 = vrot.lane.b32.xlu0 %v2060, 32
    %v2107 = vpop.permute.xlu0 %2106
    %2108 = vrot.lane.b32.xlu0 %v2063, 32
    %v2109 = vpop.permute.xlu0 %2108
    %2110 = vrot.lane.b32.xlu0 %v2066, 32
    %v2111 = vpop.permute.xlu0 %2110
    %2112 = vrot.lane.b32.xlu0 %v2069, 32
    %v2113 = vpop.permute.xlu0 %2112
    %2114 = vrot.lane.b32.xlu0 %v2072, 32
    %v2115 = vpop.permute.xlu0 %2114
    %2116 = vrot.lane.b32.xlu0 %v2075, 32
    %v2117 = vpop.permute.xlu0 %2116
    %2118 = vrot.lane.b32.xlu0 %v2078, 32
    %v2119 = vpop.permute.xlu0 %2118
    %2120 = vrot.lane.b32.xlu0 %v2081, 32
    %v2121 = vpop.permute.xlu0 %2120
    %2122 = vrot.lane.b32.xlu0 %v2084, 32
    %v2123 = vpop.permute.xlu0 %2122
    %2124 = vrot.lane.b32.xlu0 %v2087, 32
    %v2125 = vpop.permute.xlu0 %2124
    %2126 = vrot.lane.b32.xlu0 %v2090, 32
    %v2127 = vpop.permute.xlu0 %2126
    %2128 = vrot.lane.b32.xlu0 %v2093, 32
    %v2129 = vpop.permute.xlu0 %2128
    %2130 = vrot.lane.b32.xlu0 %v2096, 32
    %v2131 = vpop.permute.xlu0 %2130
    %2132 = vrot.lane.b32.xlu0 %v2099, 32
    %v2133 = vpop.permute.xlu0 %2132
    %2134 = vrot.lane.b32.xlu0 %v2102, 32
    %v2135 = vpop.permute.xlu0 %2134
    %2136 = vrot.lane.b32.xlu0 %v2105, 32
    %v2137 = vpop.permute.xlu0 %2136
    %2156 = vrot.lane.b32.xlu0 %v1890, 48
    %v2157 = vpop.permute.xlu0 %2156
    %2158 = vrot.lane.b32.xlu0 %v1892, 48
    %v2159 = vpop.permute.xlu0 %2158
    %2160 = vrot.lane.b32.xlu0 %v1894, 48
    %v2161 = vpop.permute.xlu0 %2160
    %2162 = vrot.lane.b32.xlu0 %v1896, 48
    %v2163 = vpop.permute.xlu0 %2162
    %2164 = vrot.lane.b32.xlu0 %v1898, 48
    %v2165 = vpop.permute.xlu0 %2164
    %2166 = vrot.lane.b32.xlu0 %v1900, 48
    %v2167 = vpop.permute.xlu0 %2166
    %2168 = vrot.lane.b32.xlu0 %v1902, 48
    %v2169 = vpop.permute.xlu0 %2168
    %2170 = vrot.lane.b32.xlu0 %v1904, 48
    %v2171 = vpop.permute.xlu0 %2170
    %2172 = vrot.lane.b32.xlu0 %v1910, 48
    %v2173 = vpop.permute.xlu0 %2172
    %2174 = vrot.lane.b32.xlu0 %v1912, 48
    %v2175 = vpop.permute.xlu0 %2174
    %2176 = vrot.lane.b32.xlu0 %v1914, 48
    %v2177 = vpop.permute.xlu0 %2176
    %2178 = vrot.lane.b32.xlu0 %v1916, 48
    %v2179 = vpop.permute.xlu0 %2178
    %2180 = vrot.lane.b32.xlu0 %v1918, 48
    %v2181 = vpop.permute.xlu0 %2180
    %2182 = vrot.lane.b32.xlu0 %v1920, 48
    %v2183 = vpop.permute.xlu0 %2182
    %2184 = vrot.lane.b32.xlu0 %v1922, 48
    %v2185 = vpop.permute.xlu0 %2184
    %2186 = vrot.lane.b32.xlu0 %v1924, 48
    %v2187 = vpop.permute.xlu0 %2186
    %v2206 = vrot.slane %v1904, 1
    %v2207 = vrot.slane %v1905, 1
    %v2208 = vsel %vm1960, %v2206, %v2207
    %v2209 = vrot.slane %v1924, 1
    %v2210 = vrot.slane %v1925, 1
    %v2211 = vsel %vm1960, %v2209, %v2210
    %2212 = vrot.lane.b32.xlu0 %v1966, 64
    %v2213 = vpop.permute.xlu0 %2212
    %2214 = vrot.lane.b32.xlu0 %v1969, 64
    %v2215 = vpop.permute.xlu0 %2214
    %2216 = vrot.lane.b32.xlu0 %v1972, 64
    %v2217 = vpop.permute.xlu0 %2216
    %2218 = vrot.lane.b32.xlu0 %v1975, 64
    %v2219 = vpop.permute.xlu0 %2218
    %2220 = vrot.lane.b32.xlu0 %v1978, 64
    %v2221 = vpop.permute.xlu0 %2220
    %2222 = vrot.lane.b32.xlu0 %v1981, 64
    %v2223 = vpop.permute.xlu0 %2222
    %2224 = vrot.lane.b32.xlu0 %v1984, 64
    %v2225 = vpop.permute.xlu0 %2224
    %2226 = vrot.lane.b32.xlu0 %v2208, 64
    %v2227 = vpop.permute.xlu0 %2226
    %2228 = vrot.lane.b32.xlu0 %v1990, 64
    %v2229 = vpop.permute.xlu0 %2228
    %2230 = vrot.lane.b32.xlu0 %v1993, 64
    %v2231 = vpop.permute.xlu0 %2230
    %2232 = vrot.lane.b32.xlu0 %v1996, 64
    %v2233 = vpop.permute.xlu0 %2232
    %2234 = vrot.lane.b32.xlu0 %v1999, 64
    %v2235 = vpop.permute.xlu0 %2234
    %2236 = vrot.lane.b32.xlu0 %v2002, 64
    %v2237 = vpop.permute.xlu0 %2236
    %2238 = vrot.lane.b32.xlu0 %v2005, 64
    %v2239 = vpop.permute.xlu0 %2238
    %2240 = vrot.lane.b32.xlu0 %v2008, 64
    %v2241 = vpop.permute.xlu0 %2240
    %2242 = vrot.lane.b32.xlu0 %v2211, 64
    %v2243 = vpop.permute.xlu0 %2242
    %v2260 = vrot.slane %v1904, 2
    %v2261 = vrot.slane %v1905, 2
    %v2262 = vsel %vm2057, %v2260, %v2261
    %v2263 = vrot.slane %v1924, 2
    %v2264 = vrot.slane %v1925, 2
    %v2265 = vsel %vm2057, %v2263, %v2264
    %2266 = vrot.lane.b32.xlu0 %v2063, 80
    %v2267 = vpop.permute.xlu0 %2266
    %2268 = vrot.lane.b32.xlu0 %v2066, 80
    %v2269 = vpop.permute.xlu0 %2268
    %2270 = vrot.lane.b32.xlu0 %v2069, 80
    %v2271 = vpop.permute.xlu0 %2270
    %2272 = vrot.lane.b32.xlu0 %v2072, 80
    %v2273 = vpop.permute.xlu0 %2272
    %2274 = vrot.lane.b32.xlu0 %v2075, 80
    %v2275 = vpop.permute.xlu0 %2274
    %2276 = vrot.lane.b32.xlu0 %v2078, 80
    %v2277 = vpop.permute.xlu0 %2276
    %2278 = vrot.lane.b32.xlu0 %v2081, 80
    %v2279 = vpop.permute.xlu0 %2278
    %2280 = vrot.lane.b32.xlu0 %v2262, 80
    %v2281 = vpop.permute.xlu0 %2280
    %2282 = vrot.lane.b32.xlu0 %v2087, 80
    %v2283 = vpop.permute.xlu0 %2282
    %2284 = vrot.lane.b32.xlu0 %v2090, 80
    %v2285 = vpop.permute.xlu0 %2284
    %2286 = vrot.lane.b32.xlu0 %v2093, 80
    %v2287 = vpop.permute.xlu0 %2286
    %2288 = vrot.lane.b32.xlu0 %v2096, 80
    %v2289 = vpop.permute.xlu0 %2288
    %2290 = vrot.lane.b32.xlu0 %v2099, 80
    %v2291 = vpop.permute.xlu0 %2290
    %2292 = vrot.lane.b32.xlu0 %v2102, 80
    %v2293 = vpop.permute.xlu0 %2292
    %2294 = vrot.lane.b32.xlu0 %v2105, 80
    %v2295 = vpop.permute.xlu0 %2294
    %2296 = vrot.lane.b32.xlu0 %v2265, 80
    %v2297 = vpop.permute.xlu0 %2296
    %2316 = vrot.lane.b32.xlu0 %v1892, 96
    %v2317 = vpop.permute.xlu0 %2316
    %2318 = vrot.lane.b32.xlu0 %v1894, 96
    %v2319 = vpop.permute.xlu0 %2318
    %2320 = vrot.lane.b32.xlu0 %v1896, 96
    %v2321 = vpop.permute.xlu0 %2320
    %2322 = vrot.lane.b32.xlu0 %v1898, 96
    %v2323 = vpop.permute.xlu0 %2322
    %2324 = vrot.lane.b32.xlu0 %v1900, 96
    %v2325 = vpop.permute.xlu0 %2324
    %2326 = vrot.lane.b32.xlu0 %v1902, 96
    %v2327 = vpop.permute.xlu0 %2326
    %2328 = vrot.lane.b32.xlu0 %v1904, 96
    %v2329 = vpop.permute.xlu0 %2328
    %2330 = vrot.lane.b32.xlu0 %v1906, 96
    %v2331 = vpop.permute.xlu0 %2330
    %2332 = vrot.lane.b32.xlu0 %v1912, 96
    %v2333 = vpop.permute.xlu0 %2332
    %2334 = vrot.lane.b32.xlu0 %v1914, 96
    %v2335 = vpop.permute.xlu0 %2334
    %2336 = vrot.lane.b32.xlu0 %v1916, 96
    %v2337 = vpop.permute.xlu0 %2336
    %2338 = vrot.lane.b32.xlu0 %v1918, 96
    %v2339 = vpop.permute.xlu0 %2338
    %2340 = vrot.lane.b32.xlu0 %v1920, 96
    %v2341 = vpop.permute.xlu0 %2340
    %2342 = vrot.lane.b32.xlu0 %v1922, 96
    %v2343 = vpop.permute.xlu0 %2342
    %2344 = vrot.lane.b32.xlu0 %v1924, 96
    %v2345 = vpop.permute.xlu0 %2344
    %2346 = vrot.lane.b32.xlu0 %v1926, 96
    %v2347 = vpop.permute.xlu0 %2346
    %v2366 = vrot.slane %v1906, 1
    %v2367 = vrot.slane %v1907, 1
    %v2368 = vsel %vm1960, %v2366, %v2367
    %v2369 = vrot.slane %v1926, 1
    %v2370 = vrot.slane %v1927, 1
    %v2371 = vsel %vm1960, %v2369, %v2370
    %2372 = vrot.lane.b32.xlu0 %v1969, 112
    %v2373 = vpop.permute.xlu0 %2372
    %2374 = vrot.lane.b32.xlu0 %v1972, 112
    %v2375 = vpop.permute.xlu0 %2374
    %2376 = vrot.lane.b32.xlu0 %v1975, 112
    %v2377 = vpop.permute.xlu0 %2376
    %2378 = vrot.lane.b32.xlu0 %v1978, 112
    %v2379 = vpop.permute.xlu0 %2378
    %2380 = vrot.lane.b32.xlu0 %v1981, 112
    %v2381 = vpop.permute.xlu0 %2380
    %2382 = vrot.lane.b32.xlu0 %v1984, 112
    %v2383 = vpop.permute.xlu0 %2382
    %2384 = vrot.lane.b32.xlu0 %v2208, 112
    %v2385 = vpop.permute.xlu0 %2384
    %2386 = vrot.lane.b32.xlu0 %v2368, 112
    %v2387 = vpop.permute.xlu0 %2386
    %2388 = vrot.lane.b32.xlu0 %v1993, 112
    %v2389 = vpop.permute.xlu0 %2388
    %2390 = vrot.lane.b32.xlu0 %v1996, 112
    %v2391 = vpop.permute.xlu0 %2390
    %2392 = vrot.lane.b32.xlu0 %v1999, 112
    %v2393 = vpop.permute.xlu0 %2392
    %2394 = vrot.lane.b32.xlu0 %v2002, 112
    %v2395 = vpop.permute.xlu0 %2394
    %2396 = vrot.lane.b32.xlu0 %v2005, 112
    %v2397 = vpop.permute.xlu0 %2396
    %2398 = vrot.lane.b32.xlu0 %v2008, 112
    %v2399 = vpop.permute.xlu0 %2398
    %2400 = vrot.lane.b32.xlu0 %v2211, 112
    %v2401 = vpop.permute.xlu0 %2400
    %2402 = vrot.lane.b32.xlu0 %v2371, 112
    %v2403 = vpop.permute.xlu0 %2402
    %v2420 = vrot.slane %v1906, 2
    %v2421 = vrot.slane %v1907, 2
    %v2422 = vsel %vm2057, %v2420, %v2421
    %v2423 = vrot.slane %v1926, 2
    %v2424 = vrot.slane %v1927, 2
    %v2425 = vsel %vm2057, %v2423, %v2424
    %v2426 = vsel %vm1716, %v1888, %v2010
    %v2427 = vsel %vm1716, %v1890, %v2012
    %v2428 = vsel %vm1716, %v1892, %v2014
    %v2429 = vsel %vm1716, %v1894, %v2016
    %v2430 = vsel %vm1716, %v1896, %v2018
    %v2431 = vsel %vm1716, %v1898, %v2020
    %v2432 = vsel %vm1716, %v1900, %v2022
    %v2433 = vsel %vm1716, %v1902, %v2024
    %v2434 = vsel %vm1716, %v1908, %v2026
    %v2435 = vsel %vm1716, %v1910, %v2028
    %v2436 = vsel %vm1716, %v1912, %v2030
    %v2437 = vsel %vm1716, %v1914, %v2032
    %v2438 = vsel %vm1716, %v1916, %v2034
    %v2439 = vsel %vm1716, %v1918, %v2036
    %v2440 = vsel %vm1716, %v1920, %v2038
    %v2441 = vsel %vm1716, %v1922, %v2040
    %v2442 = vsel %vm93, %v2426, %v2107
    %v2443 = vsel %vm93, %v2427, %v2109
    %v2444 = vsel %vm93, %v2428, %v2111
    %v2445 = vsel %vm93, %v2429, %v2113
    %v2446 = vsel %vm93, %v2430, %v2115
    %v2447 = vsel %vm93, %v2431, %v2117
    %v2448 = vsel %vm93, %v2432, %v2119
    %v2449 = vsel %vm93, %v2433, %v2121
    %v2450 = vsel %vm93, %v2434, %v2123
    %v2451 = vsel %vm93, %v2435, %v2125
    %v2452 = vsel %vm93, %v2436, %v2127
    %v2453 = vsel %vm93, %v2437, %v2129
    %v2454 = vsel %vm93, %v2438, %v2131
    %v2455 = vsel %vm93, %v2439, %v2133
    %v2456 = vsel %vm93, %v2440, %v2135
    %v2457 = vsel %vm93, %v2441, %v2137
    %vm2458 = vcmask 392192
    %v2459 = vsel %vm2458, %v2442, %v2157
    %v2460 = vsel %vm2458, %v2443, %v2159
    %v2461 = vsel %vm2458, %v2444, %v2161
    %v2462 = vsel %vm2458, %v2445, %v2163
    %v2463 = vsel %vm2458, %v2446, %v2165
    %v2464 = vsel %vm2458, %v2447, %v2167
    %v2465 = vsel %vm2458, %v2448, %v2169
    %v2466 = vsel %vm2458, %v2449, %v2171
    %v2467 = vsel %vm2458, %v2450, %v2173
    %v2468 = vsel %vm2458, %v2451, %v2175
    %v2469 = vsel %vm2458, %v2452, %v2177
    %v2470 = vsel %vm2458, %v2453, %v2179
    %v2471 = vsel %vm2458, %v2454, %v2181
    %v2472 = vsel %vm2458, %v2455, %v2183
    %v2473 = vsel %vm2458, %v2456, %v2185
    %v2474 = vsel %vm2458, %v2457, %v2187
    %v2475 = vsel %vm435, %v2459, %v2213
    %v2476 = vsel %vm435, %v2460, %v2215
    %v2477 = vsel %vm435, %v2461, %v2217
    %v2478 = vsel %vm435, %v2462, %v2219
    %v2479 = vsel %vm435, %v2463, %v2221
    %v2480 = vsel %vm435, %v2464, %v2223
    %v2481 = vsel %vm435, %v2465, %v2225
    %v2482 = vsel %vm435, %v2466, %v2227
    %v2483 = vsel %vm435, %v2467, %v2229
    %v2484 = vsel %vm435, %v2468, %v2231
    %v2485 = vsel %vm435, %v2469, %v2233
    %v2486 = vsel %vm435, %v2470, %v2235
    %v2487 = vsel %vm435, %v2471, %v2237
    %v2488 = vsel %vm435, %v2472, %v2239
    %v2489 = vsel %vm435, %v2473, %v2241
    %v2490 = vsel %vm435, %v2474, %v2243
    %vm2491 = vcmask 654336
    %v2492 = vsel %vm2491, %v2475, %v2267
    %v2493 = vsel %vm2491, %v2476, %v2269
    %v2494 = vsel %vm2491, %v2477, %v2271
    %v2495 = vsel %vm2491, %v2478, %v2273
    %v2496 = vsel %vm2491, %v2479, %v2275
    %v2497 = vsel %vm2491, %v2480, %v2277
    %v2498 = vsel %vm2491, %v2481, %v2279
    %v2499 = vsel %vm2491, %v2482, %v2281
    %v2500 = vsel %vm2491, %v2483, %v2283
    %v2501 = vsel %vm2491, %v2484, %v2285
    %v2502 = vsel %vm2491, %v2485, %v2287
    %v2503 = vsel %vm2491, %v2486, %v2289
    %v2504 = vsel %vm2491, %v2487, %v2291
    %v2505 = vsel %vm2491, %v2488, %v2293
    %v2506 = vsel %vm2491, %v2489, %v2295
    %v2507 = vsel %vm2491, %v2490, %v2297
    %v2508 = vsel %vm1109, %v2492, %v2317
    %v2509 = vsel %vm1109, %v2493, %v2319
    %v2510 = vsel %vm1109, %v2494, %v2321
    %v2511 = vsel %vm1109, %v2495, %v2323
    %v2512 = vsel %vm1109, %v2496, %v2325
    %v2513 = vsel %vm1109, %v2497, %v2327
    %v2514 = vsel %vm1109, %v2498, %v2329
    %v2515 = vsel %vm1109, %v2499, %v2331
    %v2516 = vsel %vm1109, %v2500, %v2333
    %v2517 = vsel %vm1109, %v2501, %v2335
    %v2518 = vsel %vm1109, %v2502, %v2337
    %v2519 = vsel %vm1109, %v2503, %v2339
    %v2520 = vsel %vm1109, %v2504, %v2341
    %v2521 = vsel %vm1109, %v2505, %v2343
    %v2522 = vsel %vm1109, %v2506, %v2345
    %v2523 = vsel %vm1109, %v2507, %v2347
    %vm2524 = vcmask 916480
    %v2525 = vsel %vm2524, %v2508, %v2373
    %v2526 = vsel %vm2524, %v2509, %v2375
    %v2527 = vsel %vm2524, %v2510, %v2377
    %v2528 = vsel %vm2524, %v2511, %v2379
    %v2529 = vsel %vm2524, %v2512, %v2381
    %v2530 = vsel %vm2524, %v2513, %v2383
    %v2531 = vsel %vm2524, %v2514, %v2385
    %v2532 = vsel %vm2524, %v2515, %v2387
    %v2533 = vsel %vm2524, %v2516, %v2389
    %v2534 = vsel %vm2524, %v2517, %v2391
    %v2535 = vsel %vm2524, %v2518, %v2393
    %v2536 = vsel %vm2524, %v2519, %v2395
    %v2537 = vsel %vm2524, %v2520, %v2397
    %v2538 = vsel %vm2524, %v2521, %v2399
    %v2539 = vsel %vm2524, %v2522, %v2401
    %v2540 = vsel %vm2524, %v2523, %v2403
    %v2541 = vld [vmem:[%s9] sm:$0xff]
    %v2542 = vld [vmem:[%s9 + $0x8] sm:$0xff]
    %v2543 = vld [vmem:[%s9 + $0x10] sm:$0xff]
    %v2544 = vld [vmem:[%s9 + $0x18] sm:$0xff]
    %v2545 = vld [vmem:[%s9 + $0x20] sm:$0xff]
    %v2546 = vld [vmem:[%s9 + $0x28] sm:$0xff]
    %v2547 = vld [vmem:[%s9 + $0x30] sm:$0xff]
    %v2548 = vld [vmem:[%s9 + $0x38] sm:$0xff]
    %v2549 = vld [vmem:[%s9 + $0x40] sm:$0xff]
    %v2550 = vld [vmem:[%s9 + $0x48] sm:$0xff]
    %v2551 = vld [vmem:[%s9 + $0x50] sm:$0xff]
    %v2552 = vld [vmem:[%s9 + $0x58] sm:$0xff]
    %v2553 = vld [vmem:[%s9 + $0x60] sm:$0xff]
    %v2554 = vld [vmem:[%s9 + $0x68] sm:$0xff]
    %v2555 = vld [vmem:[%s9 + $0x70] sm:$0xff]
    %v2556 = vld [vmem:[%s9 + $0x78] sm:$0xff]
    %v2557 = vld [vmem:[%s9 + $0x80] sm:$0xff]
    %v2558 = vld [vmem:[%s9 + $0x88] sm:$0xff]
    %v2559 = vld [vmem:[%s10] sm:$0x1]
    %v2561 = vperm.slane %v2559, 0
    %v2563 = vsel %vm1716, %v2066, 0
    %v2565 = vsel %vm1716, %v2069, 0
    %v2567 = vsel %vm1716, %v2072, 0
    %v2569 = vsel %vm1716, %v2075, 0
    %v2571 = vsel %vm1716, %v2078, 0
    %v2573 = vsel %vm1716, %v2081, 0
    %v2575 = vsel %vm1716, %v2262, 0
    %v2577 = vsel %vm1716, %v2422, 0
    %v2579 = vsel %vm1716, %v2090, 0
    %v2581 = vsel %vm1716, %v2093, 0
    %v2583 = vsel %vm1716, %v2096, 0
    %v2585 = vsel %vm1716, %v2099, 0
    %v2587 = vsel %vm1716, %v2102, 0
    %v2589 = vsel %vm1716, %v2105, 0
    %v2591 = vsel %vm1716, %v2265, 0
    %v2593 = vsel %vm1716, %v2425, 0
    %2595 = vmatpush.msra.mxu0 %v2556
    %2596 = vmatpush.msra.mxu0 %v2555
    %2597 = vmatpush.msra.mxu0 %v2554
    %2598 = vmatpush.msra.mxu0 %v2553
    %2599 = vmatpush.msra.mxu0 %v2552
    %2600 = vmatpush.msra.mxu0 %v2551
    %2601 = vmatpush.msra.mxu0 %v2550
    %2602 = vmatpush.msra.mxu0 %v2549
    %2603 = vmatpush.msra.mxu0 %v2548
    %2604 = vmatpush.msra.mxu0 %v2547
    %2605 = vmatpush.msra.mxu0 %v2546
    %2606 = vmatpush.msra.mxu0 %v2545
    %2607 = vmatpush.msra.mxu0 %v2544
    %2608 = vmatpush.msra.mxu0 %v2543
    %2609 = vmatpush.msra.mxu0 %v2542
    %2610 = vmatpush.msra.mxu0 %v2541
    %2611 = vmatmul.f32.gmra.mxu0 %v2525
    %v2612 = vpop.f32.mrf.mxu0
    %v2613 = vadd.f32 %v2561, %v2612
    %2614 = vmatmul.f32.gmra.mxu0 %v2526
    %v2615 = vpop.f32.mrf.mxu0
    %v2616 = vadd.f32 %v2561, %v2615
    %2617 = vmatmul.f32.gmra.mxu0 %v2527
    %v2618 = vpop.f32.mrf.mxu0
    %v2619 = vadd.f32 %v2561, %v2618
    %2620 = vmatmul.f32.gmra.mxu0 %v2528
    %v2621 = vpop.f32.mrf.mxu0
    %v2622 = vadd.f32 %v2561, %v2621
    %2623 = vmatmul.f32.gmra.mxu0 %v2529
    %v2624 = vpop.f32.mrf.mxu0
    %v2625 = vadd.f32 %v2561, %v2624
    %2626 = vmatmul.f32.gmra.mxu0 %v2530
    %v2627 = vpop.f32.mrf.mxu0
    %v2628 = vadd.f32 %v2561, %v2627
    %2629 = vmatmul.f32.gmra.mxu0 %v2531
    %v2630 = vpop.f32.mrf.mxu0
    %v2631 = vadd.f32 %v2561, %v2630
    %2632 = vmatmul.f32.gmra.mxu0 %v2532
    %v2633 = vpop.f32.mrf.mxu0
    %v2634 = vadd.f32 %v2561, %v2633
    %2635 = vmatmul.f32.gmra.mxu0 %v2533
    %v2636 = vpop.f32.mrf.mxu0
    %v2637 = vadd.f32 %v2561, %v2636
    %2638 = vmatmul.f32.gmra.mxu0 %v2534
    %v2639 = vpop.f32.mrf.mxu0
    %v2640 = vadd.f32 %v2561, %v2639
    %2641 = vmatmul.f32.gmra.mxu0 %v2535
    %v2642 = vpop.f32.mrf.mxu0
    %v2643 = vadd.f32 %v2561, %v2642
    %2644 = vmatmul.f32.gmra.mxu0 %v2536
    %v2645 = vpop.f32.mrf.mxu0
    %v2646 = vadd.f32 %v2561, %v2645
    %2647 = vmatmul.f32.gmra.mxu0 %v2537
    %v2648 = vpop.f32.mrf.mxu0
    %v2649 = vadd.f32 %v2561, %v2648
    %2650 = vmatmul.f32.gmra.mxu0 %v2538
    %v2651 = vpop.f32.mrf.mxu0
    %v2652 = vadd.f32 %v2561, %v2651
    %2653 = vmatmul.f32.gmra.mxu0 %v2539
    %v2654 = vpop.f32.mrf.mxu0
    %v2655 = vadd.f32 %v2561, %v2654
    %2656 = vmatmul.f32.gmra.mxu0 %v2540
    %v2657 = vpop.f32.mrf.mxu0
    %v2658 = vadd.f32 %v2561, %v2657
    %2659 = vdwg.mxu0
    %2660 = vmatpush.msra.mxu0 0.0
    %2661 = vmatpush.msra.mxu0 0.0
    %2662 = vmatpush.msra.mxu0 0.0
    %2663 = vmatpush.msra.mxu0 0.0
    %2664 = vmatpush.msra.mxu0 0.0
    %2665 = vmatpush.msra.mxu0 0.0
    %2666 = vmatpush.msra.mxu0 0.0
    %2667 = vmatpush.msra.mxu0 0.0
    %2668 = vmatpush.msra.mxu0 0.0
    %2669 = vmatpush.msra.mxu0 0.0
    %2670 = vmatpush.msra.mxu0 0.0
    %2671 = vmatpush.msra.mxu0 0.0
    %2672 = vmatpush.msra.mxu0 0.0
    %2673 = vmatpush.msra.mxu0 0.0
    %2674 = vmatpush.msra.mxu0 %v2558
    %2675 = vmatpush.msra.mxu0 %v2557
    %2676 = vmatmul.f32.gmra.mxu0 %v2563
    %v2677 = vpop.f32.mrf.mxu0
    %v2678 = vadd.f32 %v2613, %v2677
    %2679 = vmatmul.f32.gmra.mxu0 %v2565
    %v2680 = vpop.f32.mrf.mxu0
    %v2681 = vadd.f32 %v2616, %v2680
    %2682 = vmatmul.f32.gmra.mxu0 %v2567
    %v2683 = vpop.f32.mrf.mxu0
    %v2684 = vadd.f32 %v2619, %v2683
    %2685 = vmatmul.f32.gmra.mxu0 %v2569
    %v2686 = vpop.f32.mrf.mxu0
    %v2687 = vadd.f32 %v2622, %v2686
    %2688 = vmatmul.f32.gmra.mxu0 %v2571
    %v2689 = vpop.f32.mrf.mxu0
    %v2690 = vadd.f32 %v2625, %v2689
    %2691 = vmatmul.f32.gmra.mxu0 %v2573
    %v2692 = vpop.f32.mrf.mxu0
    %v2693 = vadd.f32 %v2628, %v2692
    %2694 = vmatmul.f32.gmra.mxu0 %v2575
    %v2695 = vpop.f32.mrf.mxu0
    %v2696 = vadd.f32 %v2631, %v2695
    %2697 = vmatmul.f32.gmra.mxu0 %v2577
    %v2698 = vpop.f32.mrf.mxu0
    %v2699 = vadd.f32 %v2634, %v2698
    %2700 = vmatmul.f32.gmra.mxu0 %v2579
    %v2701 = vpop.f32.mrf.mxu0
    %v2702 = vadd.f32 %v2637, %v2701
    %2703 = vmatmul.f32.gmra.mxu0 %v2581
    %v2704 = vpop.f32.mrf.mxu0
    %v2705 = vadd.f32 %v2640, %v2704
    %2706 = vmatmul.f32.gmra.mxu0 %v2583
    %v2707 = vpop.f32.mrf.mxu0
    %v2708 = vadd.f32 %v2643, %v2707
    %2709 = vmatmul.f32.gmra.mxu0 %v2585
    %v2710 = vpop.f32.mrf.mxu0
    %v2711 = vadd.f32 %v2646, %v2710
    %2712 = vmatmul.f32.gmra.mxu0 %v2587
    %v2713 = vpop.f32.mrf.mxu0
    %v2714 = vadd.f32 %v2649, %v2713
    %2715 = vmatmul.f32.gmra.mxu0 %v2589
    %v2716 = vpop.f32.mrf.mxu0
    %v2717 = vadd.f32 %v2652, %v2716
    %2718 = vmatmul.f32.gmra.mxu0 %v2591
    %v2719 = vpop.f32.mrf.mxu0
    %v2720 = vadd.f32 %v2655, %v2719
    %2721 = vmatmul.f32.gmra.mxu0 %v2593
    %v2722 = vpop.f32.mrf.mxu0
    %v2723 = vadd.f32 %v2658, %v2722
    %2724 = vdwg.mxu0
    %v2725 = vmax.f32 %v2678, 0.0
    %v2726 = vmax.f32 %v2681, 0.0
    %v2727 = vmax.f32 %v2684, 0.0
    %v2728 = vmax.f32 %v2687, 0.0
    %v2729 = vmax.f32 %v2690, 0.0
    %v2730 = vmax.f32 %v2693, 0.0
    %v2731 = vmax.f32 %v2696, 0.0
    %v2732 = vmax.f32 %v2699, 0.0
    %v2733 = vmax.f32 %v2702, 0.0
    %v2734 = vmax.f32 %v2705, 0.0
    %v2735 = vmax.f32 %v2708, 0.0
    %v2736 = vmax.f32 %v2711, 0.0
    %v2737 = vmax.f32 %v2714, 0.0
    %v2738 = vmax.f32 %v2717, 0.0
    %v2739 = vmax.f32 %v2720, 0.0
    %v2740 = vmax.f32 %v2723, 0.0
    %v2757 = vrot.slane %v2725, 1
    %v2758 = vrot.slane %v2725, 2
    %v2759 = vrot.slane %v2725, 3
    %v2760 = vrot.slane %v2725, 4
    %v2761 = vrot.slane %v2725, 5
    %v2762 = vrot.slane %v2725, 6
    %v2763 = vrot.slane %v2725, 7
    %v2764 = vrot.slane %v2726, 1
    %v2765 = vrot.slane %v2726, 2
    %v2766 = vrot.slane %v2726, 3
    %v2767 = vrot.slane %v2726, 4
    %v2768 = vrot.slane %v2726, 5
    %v2769 = vrot.slane %v2726, 6
    %v2770 = vrot.slane %v2726, 7
    %v2771 = vrot.slane %v2727, 1
    %v2772 = vrot.slane %v2727, 2
    %v2773 = vrot.slane %v2727, 3
    %v2774 = vrot.slane %v2727, 4
    %v2775 = vrot.slane %v2727, 5
    %v2776 = vrot.slane %v2727, 6
    %v2777 = vrot.slane %v2727, 7
    %v2778 = vrot.slane %v2728, 1
    %v2779 = vrot.slane %v2728, 2
    %v2780 = vrot.slane %v2728, 3
    %v2781 = vrot.slane %v2728, 4
    %v2782 = vrot.slane %v2728, 5
    %v2783 = vrot.slane %v2728, 6
    %v2784 = vrot.slane %v2728, 7
    %v2785 = vrot.slane %v2729, 1
    %v2786 = vrot.slane %v2729, 2
    %v2787 = vrot.slane %v2729, 3
    %v2788 = vrot.slane %v2729, 4
    %v2789 = vrot.slane %v2729, 5
    %v2790 = vrot.slane %v2729, 6
    %v2791 = vrot.slane %v2729, 7
    %v2792 = vrot.slane %v2730, 1
    %v2793 = vrot.slane %v2730, 2
    %v2794 = vrot.slane %v2730, 3
    %v2795 = vrot.slane %v2730, 4
    %v2796 = vrot.slane %v2730, 5
    %v2797 = vrot.slane %v2730, 6
    %v2798 = vrot.slane %v2730, 7
    %v2799 = vrot.slane %v2731, 1
    %v2800 = vrot.slane %v2731, 2
    %v2801 = vrot.slane %v2731, 3
    %v2802 = vrot.slane %v2731, 4
    %v2803 = vrot.slane %v2731, 5
    %v2804 = vrot.slane %v2731, 6
    %v2805 = vrot.slane %v2731, 7
    %v2806 = vrot.slane %v2732, 1
    %v2807 = vrot.slane %v2732, 2
    %v2808 = vrot.slane %v2732, 3
    %v2809 = vrot.slane %v2732, 4
    %v2810 = vrot.slane %v2732, 5
    %v2811 = vrot.slane %v2732, 6
    %v2812 = vrot.slane %v2732, 7
    %v2813 = vrot.slane %v2733, 1
    %v2814 = vrot.slane %v2733, 2
    %v2815 = vrot.slane %v2733, 3
    %v2816 = vrot.slane %v2733, 4
    %v2817 = vrot.slane %v2733, 5
    %v2818 = vrot.slane %v2733, 6
    %v2819 = vrot.slane %v2733, 7
    %v2820 = vrot.slane %v2734, 1
    %v2821 = vrot.slane %v2734, 2
    %v2822 = vrot.slane %v2734, 3
    %v2823 = vrot.slane %v2734, 4
    %v2824 = vrot.slane %v2734, 5
    %v2825 = vrot.slane %v2734, 6
    %v2826 = vrot.slane %v2734, 7
    %v2827 = vrot.slane %v2735, 1
    %v2828 = vrot.slane %v2735, 2
    %v2829 = vrot.slane %v2735, 3
    %v2830 = vrot.slane %v2735, 4
    %v2831 = vrot.slane %v2735, 5
    %v2832 = vrot.slane %v2735, 6
    %v2833 = vrot.slane %v2735, 7
    %v2834 = vrot.slane %v2736, 1
    %v2835 = vrot.slane %v2736, 2
    %v2836 = vrot.slane %v2736, 3
    %v2837 = vrot.slane %v2736, 4
    %v2838 = vrot.slane %v2736, 5
    %v2839 = vrot.slane %v2736, 6
    %v2840 = vrot.slane %v2736, 7
    %v2841 = vrot.slane %v2737, 1
    %v2842 = vrot.slane %v2737, 2
    %v2843 = vrot.slane %v2737, 3
    %v2844 = vrot.slane %v2737, 4
    %v2845 = vrot.slane %v2737, 5
    %v2846 = vrot.slane %v2737, 6
    %v2847 = vrot.slane %v2737, 7
    %v2848 = vrot.slane %v2738, 1
    %v2849 = vrot.slane %v2738, 2
    %v2850 = vrot.slane %v2738, 3
    %v2851 = vrot.slane %v2738, 4
    %v2852 = vrot.slane %v2738, 5
    %v2853 = vrot.slane %v2738, 6
    %v2854 = vrot.slane %v2738, 7
    %v2855 = vrot.slane %v2739, 1
    %v2856 = vrot.slane %v2739, 2
    %v2857 = vrot.slane %v2739, 3
    %v2858 = vrot.slane %v2739, 4
    %v2859 = vrot.slane %v2739, 5
    %v2860 = vrot.slane %v2739, 6
    %v2861 = vrot.slane %v2739, 7
    %v2862 = vrot.slane %v2740, 1
    %v2863 = vrot.slane %v2740, 2
    %v2864 = vrot.slane %v2740, 3
    %v2865 = vrot.slane %v2740, 4
    %v2866 = vrot.slane %v2740, 5
    %v2867 = vrot.slane %v2740, 6
    %v2868 = vrot.slane %v2740, 7
    %v2981 = vperm.slane %v2725, 0
    %v2982 = vperm.slane %v2757, 0
    %v2983 = vperm.slane %v2758, 0
    %v2984 = vperm.slane %v2759, 0
    %v2985 = vperm.slane %v2760, 0
    %v2986 = vperm.slane %v2761, 0
    %v2987 = vperm.slane %v2762, 0
    %v2988 = vperm.slane %v2763, 0
    %v2989 = vperm.slane %v2726, 0
    %v2990 = vperm.slane %v2764, 0
    %v2991 = vperm.slane %v2765, 0
    %v2992 = vperm.slane %v2766, 0
    %v2993 = vperm.slane %v2767, 0
    %v2994 = vperm.slane %v2768, 0
    %v2995 = vperm.slane %v2769, 0
    %v2996 = vperm.slane %v2770, 0
    %v2997 = vperm.slane %v2727, 0
    %v2998 = vperm.slane %v2771, 0
    %v2999 = vperm.slane %v2772, 0
    %v3000 = vperm.slane %v2773, 0
    %v3001 = vperm.slane %v2774, 0
    %v3002 = vperm.slane %v2775, 0
    %v3003 = vperm.slane %v2776, 0
    %v3004 = vperm.slane %v2777, 0
    %v3005 = vperm.slane %v2728, 0
    %v3006 = vperm.slane %v2778, 0
    %v3007 = vperm.slane %v2779, 0
    %v3008 = vperm.slane %v2780, 0
    %v3009 = vperm.slane %v2781, 0
    %v3010 = vperm.slane %v2782, 0
    %v3011 = vperm.slane %v2783, 0
    %v3012 = vperm.slane %v2784, 0
    %v3013 = vperm.slane %v2729, 0
    %v3014 = vperm.slane %v2785, 0
    %v3015 = vperm.slane %v2786, 0
    %v3016 = vperm.slane %v2787, 0
    %v3017 = vperm.slane %v2788, 0
    %v3018 = vperm.slane %v2789, 0
    %v3019 = vperm.slane %v2790, 0
    %v3020 = vperm.slane %v2791, 0
    %v3021 = vperm.slane %v2730, 0
    %v3022 = vperm.slane %v2792, 0
    %v3023 = vperm.slane %v2793, 0
    %v3024 = vperm.slane %v2794, 0
    %v3025 = vperm.slane %v2795, 0
    %v3026 = vperm.slane %v2796, 0
    %v3027 = vperm.slane %v2797, 0
    %v3028 = vperm.slane %v2798, 0
    %v3029 = vperm.slane %v2731, 0
    %v3030 = vperm.slane %v2799, 0
    %v3031 = vperm.slane %v2800, 0
    %v3032 = vperm.slane %v2801, 0
    %v3033 = vperm.slane %v2802, 0
    %v3034 = vperm.slane %v2803, 0
    %v3035 = vperm.slane %v2804, 0
    %v3036 = vperm.slane %v2805, 0
    %v3037 = vperm.slane %v2732, 0
    %v3038 = vperm.slane %v2806, 0
    %v3039 = vperm.slane %v2807, 0
    %v3040 = vperm.slane %v2808, 0
    %v3041 = vperm.slane %v2809, 0
    %v3042 = vperm.slane %v2810, 0
    %v3043 = vperm.slane %v2811, 0
    %v3044 = vperm.slane %v2812, 0
    %v3045 = vperm.slane %v2733, 0
    %v3046 = vperm.slane %v2813, 0
    %v3047 = vperm.slane %v2814, 0
    %v3048 = vperm.slane %v2815, 0
    %v3049 = vperm.slane %v2816, 0
    %v3050 = vperm.slane %v2817, 0
    %v3051 = vperm.slane %v2818, 0
    %v3052 = vperm.slane %v2819, 0
    %v3053 = vperm.slane %v2734, 0
    %v3054 = vperm.slane %v2820, 0
    %v3055 = vperm.slane %v2821, 0
    %v3056 = vperm.slane %v2822, 0
    %v3057 = vperm.slane %v2823, 0
    %v3058 = vperm.slane %v2824, 0
    %v3059 = vperm.slane %v2825, 0
    %v3060 = vperm.slane %v2826, 0
    %v3061 = vperm.slane %v2735, 0
    %v3062 = vperm.slane %v2827, 0
    %v3063 = vperm.slane %v2828, 0
    %v3064 = vperm.slane %v2829, 0
    %v3065 = vperm.slane %v2830, 0
    %v3066 = vperm.slane %v2831, 0
    %v3067 = vperm.slane %v2832, 0
    %v3068 = vperm.slane %v2833, 0
    %v3069 = vperm.slane %v2736, 0
    %v3070 = vperm.slane %v2834, 0
    %v3071 = vperm.slane %v2835, 0
    %v3072 = vperm.slane %v2836, 0
    %v3073 = vperm.slane %v2837, 0
    %v3074 = vperm.slane %v2838, 0
    %v3075 = vperm.slane %v2839, 0
    %v3076 = vperm.slane %v2840, 0
    %v3077 = vperm.slane %v2737, 0
    %v3078 = vperm.slane %v2841, 0
    %v3079 = vperm.slane %v2842, 0
    %v3080 = vperm.slane %v2843, 0
    %v3081 = vperm.slane %v2844, 0
    %v3082 = vperm.slane %v2845, 0
    %v3083 = vperm.slane %v2846, 0
    %v3084 = vperm.slane %v2847, 0
    %v3085 = vperm.slane %v2738, 0
    %v3086 = vperm.slane %v2848, 0
    %v3087 = vperm.slane %v2849, 0
    %v3088 = vperm.slane %v2850, 0
    %v3089 = vperm.slane %v2851, 0
    %v3090 = vperm.slane %v2852, 0
    %v3091 = vperm.slane %v2853, 0
    %v3092 = vperm.slane %v2854, 0
    %v3093 = vperm.slane %v2739, 0
    %v3094 = vperm.slane %v2855, 0
    %v3095 = vperm.slane %v2856, 0
    %v3096 = vperm.slane %v2857, 0
    %v3097 = vperm.slane %v2858, 0
    %v3098 = vperm.slane %v2859, 0
    %v3099 = vperm.slane %v2860, 0
    %v3100 = vperm.slane %v2861, 0
    %v3101 = vperm.slane %v2740, 0
    %v3102 = vperm.slane %v2862, 0
    %v3103 = vperm.slane %v2863, 0
    %v3104 = vperm.slane %v2864, 0
    %v3105 = vperm.slane %v2865, 0
    %v3106 = vperm.slane %v2866, 0
    %v3107 = vperm.slane %v2867, 0
    %v3108 = vperm.slane %v2868, 0
    %3109 = vrot.lane.b32.xlu0 %v2981, 120
    %v3110 = vpop.permute.xlu0 %3109
    %3111 = vrot.lane.b32.xlu0 %v2982, 120
    %v3112 = vpop.permute.xlu0 %3111
    %3113 = vrot.lane.b32.xlu0 %v2983, 120
    %v3114 = vpop.permute.xlu0 %3113
    %3115 = vrot.lane.b32.xlu0 %v2984, 120
    %v3116 = vpop.permute.xlu0 %3115
    %3117 = vrot.lane.b32.xlu0 %v2985, 120
    %v3118 = vpop.permute.xlu0 %3117
    %3119 = vrot.lane.b32.xlu0 %v2986, 120
    %v3120 = vpop.permute.xlu0 %3119
    %3121 = vrot.lane.b32.xlu0 %v2987, 120
    %v3122 = vpop.permute.xlu0 %3121
    %3123 = vrot.lane.b32.xlu0 %v2988, 120
    %v3124 = vpop.permute.xlu0 %3123
    %3125 = vrot.lane.b32.xlu0 %v2989, 120
    %v3126 = vpop.permute.xlu0 %3125
    %3127 = vrot.lane.b32.xlu0 %v2990, 120
    %v3128 = vpop.permute.xlu0 %3127
    %3129 = vrot.lane.b32.xlu0 %v2991, 120
    %v3130 = vpop.permute.xlu0 %3129
    %3131 = vrot.lane.b32.xlu0 %v2992, 120
    %v3132 = vpop.permute.xlu0 %3131
    %3133 = vrot.lane.b32.xlu0 %v2993, 120
    %v3134 = vpop.permute.xlu0 %3133
    %3135 = vrot.lane.b32.xlu0 %v2994, 120
    %v3136 = vpop.permute.xlu0 %3135
    %3137 = vrot.lane.b32.xlu0 %v2995, 120
    %v3138 = vpop.permute.xlu0 %3137
    %3139 = vrot.lane.b32.xlu0 %v2996, 120
    %v3140 = vpop.permute.xlu0 %3139
    %3141 = vrot.lane.b32.xlu0 %v2997, 120
    %v3142 = vpop.permute.xlu0 %3141
    %3143 = vrot.lane.b32.xlu0 %v2998, 120
    %v3144 = vpop.permute.xlu0 %3143
    %3145 = vrot.lane.b32.xlu0 %v2999, 120
    %v3146 = vpop.permute.xlu0 %3145
    %3147 = vrot.lane.b32.xlu0 %v3000, 120
    %v3148 = vpop.permute.xlu0 %3147
    %3149 = vrot.lane.b32.xlu0 %v3001, 120
    %v3150 = vpop.permute.xlu0 %3149
    %3151 = vrot.lane.b32.xlu0 %v3002, 120
    %v3152 = vpop.permute.xlu0 %3151
    %3153 = vrot.lane.b32.xlu0 %v3003, 120
    %v3154 = vpop.permute.xlu0 %3153
    %3155 = vrot.lane.b32.xlu0 %v3004, 120
    %v3156 = vpop.permute.xlu0 %3155
    %3157 = vrot.lane.b32.xlu0 %v3005, 120
    %v3158 = vpop.permute.xlu0 %3157
    %3159 = vrot.lane.b32.xlu0 %v3006, 120
    %v3160 = vpop.permute.xlu0 %3159
    %3161 = vrot.lane.b32.xlu0 %v3007, 120
    %v3162 = vpop.permute.xlu0 %3161
    %3163 = vrot.lane.b32.xlu0 %v3008, 120
    %v3164 = vpop.permute.xlu0 %3163
    %3165 = vrot.lane.b32.xlu0 %v3009, 120
    %v3166 = vpop.permute.xlu0 %3165
    %3167 = vrot.lane.b32.xlu0 %v3010, 120
    %v3168 = vpop.permute.xlu0 %3167
    %3169 = vrot.lane.b32.xlu0 %v3011, 120
    %v3170 = vpop.permute.xlu0 %3169
    %3171 = vrot.lane.b32.xlu0 %v3012, 120
    %v3172 = vpop.permute.xlu0 %3171
    %3173 = vrot.lane.b32.xlu0 %v3013, 120
    %v3174 = vpop.permute.xlu0 %3173
    %3175 = vrot.lane.b32.xlu0 %v3014, 120
    %v3176 = vpop.permute.xlu0 %3175
    %3177 = vrot.lane.b32.xlu0 %v3015, 120
    %v3178 = vpop.permute.xlu0 %3177
    %3179 = vrot.lane.b32.xlu0 %v3016, 120
    %v3180 = vpop.permute.xlu0 %3179
    %3181 = vrot.lane.b32.xlu0 %v3017, 120
    %v3182 = vpop.permute.xlu0 %3181
    %3183 = vrot.lane.b32.xlu0 %v3018, 120
    %v3184 = vpop.permute.xlu0 %3183
    %3185 = vrot.lane.b32.xlu0 %v3019, 120
    %v3186 = vpop.permute.xlu0 %3185
    %3187 = vrot.lane.b32.xlu0 %v3020, 120
    %v3188 = vpop.permute.xlu0 %3187
    %3189 = vrot.lane.b32.xlu0 %v3021, 120
    %v3190 = vpop.permute.xlu0 %3189
    %3191 = vrot.lane.b32.xlu0 %v3022, 120
    %v3192 = vpop.permute.xlu0 %3191
    %3193 = vrot.lane.b32.xlu0 %v3023, 120
    %v3194 = vpop.permute.xlu0 %3193
    %3195 = vrot.lane.b32.xlu0 %v3024, 120
    %v3196 = vpop.permute.xlu0 %3195
    %3197 = vrot.lane.b32.xlu0 %v3025, 120
    %v3198 = vpop.permute.xlu0 %3197
    %3199 = vrot.lane.b32.xlu0 %v3026, 120
    %v3200 = vpop.permute.xlu0 %3199
    %3201 = vrot.lane.b32.xlu0 %v3027, 120
    %v3202 = vpop.permute.xlu0 %3201
    %3203 = vrot.lane.b32.xlu0 %v3028, 120
    %v3204 = vpop.permute.xlu0 %3203
    %3205 = vrot.lane.b32.xlu0 %v3029, 120
    %v3206 = vpop.permute.xlu0 %3205
    %3207 = vrot.lane.b32.xlu0 %v3030, 120
    %v3208 = vpop.permute.xlu0 %3207
    %3209 = vrot.lane.b32.xlu0 %v3031, 120
    %v3210 = vpop.permute.xlu0 %3209
    %3211 = vrot.lane.b32.xlu0 %v3032, 120
    %v3212 = vpop.permute.xlu0 %3211
    %3213 = vrot.lane.b32.xlu0 %v3033, 120
    %v3214 = vpop.permute.xlu0 %3213
    %3215 = vrot.lane.b32.xlu0 %v3034, 120
    %v3216 = vpop.permute.xlu0 %3215
    %3217 = vrot.lane.b32.xlu0 %v3035, 120
    %v3218 = vpop.permute.xlu0 %3217
    %3219 = vrot.lane.b32.xlu0 %v3036, 120
    %v3220 = vpop.permute.xlu0 %3219
    %3221 = vrot.lane.b32.xlu0 %v3037, 120
    %v3222 = vpop.permute.xlu0 %3221
    %3223 = vrot.lane.b32.xlu0 %v3038, 120
    %v3224 = vpop.permute.xlu0 %3223
    %3225 = vrot.lane.b32.xlu0 %v3039, 120
    %v3226 = vpop.permute.xlu0 %3225
    %3227 = vrot.lane.b32.xlu0 %v3040, 120
    %v3228 = vpop.permute.xlu0 %3227
    %3229 = vrot.lane.b32.xlu0 %v3041, 120
    %v3230 = vpop.permute.xlu0 %3229
    %3231 = vrot.lane.b32.xlu0 %v3042, 120
    %v3232 = vpop.permute.xlu0 %3231
    %3233 = vrot.lane.b32.xlu0 %v3043, 120
    %v3234 = vpop.permute.xlu0 %3233
    %3235 = vrot.lane.b32.xlu0 %v3044, 120
    %v3236 = vpop.permute.xlu0 %3235
    %3237 = vrot.lane.b32.xlu0 %v3045, 120
    %v3238 = vpop.permute.xlu0 %3237
    %3239 = vrot.lane.b32.xlu0 %v3046, 120
    %v3240 = vpop.permute.xlu0 %3239
    %3241 = vrot.lane.b32.xlu0 %v3047, 120
    %v3242 = vpop.permute.xlu0 %3241
    %3243 = vrot.lane.b32.xlu0 %v3048, 120
    %v3244 = vpop.permute.xlu0 %3243
    %3245 = vrot.lane.b32.xlu0 %v3049, 120
    %v3246 = vpop.permute.xlu0 %3245
    %3247 = vrot.lane.b32.xlu0 %v3050, 120
    %v3248 = vpop.permute.xlu0 %3247
    %3249 = vrot.lane.b32.xlu0 %v3051, 120
    %v3250 = vpop.permute.xlu0 %3249
    %3251 = vrot.lane.b32.xlu0 %v3052, 120
    %v3252 = vpop.permute.xlu0 %3251
    %3253 = vrot.lane.b32.xlu0 %v3053, 120
    %v3254 = vpop.permute.xlu0 %3253
    %3255 = vrot.lane.b32.xlu0 %v3054, 120
    %v3256 = vpop.permute.xlu0 %3255
    %3257 = vrot.lane.b32.xlu0 %v3055, 120
    %v3258 = vpop.permute.xlu0 %3257
    %3259 = vrot.lane.b32.xlu0 %v3056, 120
    %v3260 = vpop.permute.xlu0 %3259
    %3261 = vrot.lane.b32.xlu0 %v3057, 120
    %v3262 = vpop.permute.xlu0 %3261
    %3263 = vrot.lane.b32.xlu0 %v3058, 120
    %v3264 = vpop.permute.xlu0 %3263
    %3265 = vrot.lane.b32.xlu0 %v3059, 120
    %v3266 = vpop.permute.xlu0 %3265
    %3267 = vrot.lane.b32.xlu0 %v3060, 120
    %v3268 = vpop.permute.xlu0 %3267
    %3269 = vrot.lane.b32.xlu0 %v3061, 120
    %v3270 = vpop.permute.xlu0 %3269
    %3271 = vrot.lane.b32.xlu0 %v3062, 120
    %v3272 = vpop.permute.xlu0 %3271
    %3273 = vrot.lane.b32.xlu0 %v3063, 120
    %v3274 = vpop.permute.xlu0 %3273
    %3275 = vrot.lane.b32.xlu0 %v3064, 120
    %v3276 = vpop.permute.xlu0 %3275
    %3277 = vrot.lane.b32.xlu0 %v3065, 120
    %v3278 = vpop.permute.xlu0 %3277
    %3279 = vrot.lane.b32.xlu0 %v3066, 120
    %v3280 = vpop.permute.xlu0 %3279
    %3281 = vrot.lane.b32.xlu0 %v3067, 120
    %v3282 = vpop.permute.xlu0 %3281
    %3283 = vrot.lane.b32.xlu0 %v3068, 120
    %v3284 = vpop.permute.xlu0 %3283
    %3285 = vrot.lane.b32.xlu0 %v3069, 120
    %v3286 = vpop.permute.xlu0 %3285
    %3287 = vrot.lane.b32.xlu0 %v3070, 120
    %v3288 = vpop.permute.xlu0 %3287
    %3289 = vrot.lane.b32.xlu0 %v3071, 120
    %v3290 = vpop.permute.xlu0 %3289
    %3291 = vrot.lane.b32.xlu0 %v3072, 120
    %v3292 = vpop.permute.xlu0 %3291
    %3293 = vrot.lane.b32.xlu0 %v3073, 120
    %v3294 = vpop.permute.xlu0 %3293
    %3295 = vrot.lane.b32.xlu0 %v3074, 120
    %v3296 = vpop.permute.xlu0 %3295
    %3297 = vrot.lane.b32.xlu0 %v3075, 120
    %v3298 = vpop.permute.xlu0 %3297
    %3299 = vrot.lane.b32.xlu0 %v3076, 120
    %v3300 = vpop.permute.xlu0 %3299
    %3301 = vrot.lane.b32.xlu0 %v3077, 120
    %v3302 = vpop.permute.xlu0 %3301
    %3303 = vrot.lane.b32.xlu0 %v3078, 120
    %v3304 = vpop.permute.xlu0 %3303
    %3305 = vrot.lane.b32.xlu0 %v3079, 120
    %v3306 = vpop.permute.xlu0 %3305
    %3307 = vrot.lane.b32.xlu0 %v3080, 120
    %v3308 = vpop.permute.xlu0 %3307
    %3309 = vrot.lane.b32.xlu0 %v3081, 120
    %v3310 = vpop.permute.xlu0 %3309
    %3311 = vrot.lane.b32.xlu0 %v3082, 120
    %v3312 = vpop.permute.xlu0 %3311
    %3313 = vrot.lane.b32.xlu0 %v3083, 120
    %v3314 = vpop.permute.xlu0 %3313
    %3315 = vrot.lane.b32.xlu0 %v3084, 120
    %v3316 = vpop.permute.xlu0 %3315
    %3317 = vrot.lane.b32.xlu0 %v3085, 120
    %v3318 = vpop.permute.xlu0 %3317
    %3319 = vrot.lane.b32.xlu0 %v3086, 120
    %v3320 = vpop.permute.xlu0 %3319
    %3321 = vrot.lane.b32.xlu0 %v3087, 120
    %v3322 = vpop.permute.xlu0 %3321
    %3323 = vrot.lane.b32.xlu0 %v3088, 120
    %v3324 = vpop.permute.xlu0 %3323
    %3325 = vrot.lane.b32.xlu0 %v3089, 120
    %v3326 = vpop.permute.xlu0 %3325
    %3327 = vrot.lane.b32.xlu0 %v3090, 120
    %v3328 = vpop.permute.xlu0 %3327
    %3329 = vrot.lane.b32.xlu0 %v3091, 120
    %v3330 = vpop.permute.xlu0 %3329
    %3331 = vrot.lane.b32.xlu0 %v3092, 120
    %v3332 = vpop.permute.xlu0 %3331
    %3333 = vrot.lane.b32.xlu0 %v3093, 120
    %v3334 = vpop.permute.xlu0 %3333
    %3335 = vrot.lane.b32.xlu0 %v3094, 120
    %v3336 = vpop.permute.xlu0 %3335
    %3337 = vrot.lane.b32.xlu0 %v3095, 120
    %v3338 = vpop.permute.xlu0 %3337
    %3339 = vrot.lane.b32.xlu0 %v3096, 120
    %v3340 = vpop.permute.xlu0 %3339
    %3341 = vrot.lane.b32.xlu0 %v3097, 120
    %v3342 = vpop.permute.xlu0 %3341
    %3343 = vrot.lane.b32.xlu0 %v3098, 120
    %v3344 = vpop.permute.xlu0 %3343
    %3345 = vrot.lane.b32.xlu0 %v3099, 120
    %v3346 = vpop.permute.xlu0 %3345
    %3347 = vrot.lane.b32.xlu0 %v3100, 120
    %v3348 = vpop.permute.xlu0 %3347
    %3349 = vrot.lane.b32.xlu0 %v3101, 120
    %v3350 = vpop.permute.xlu0 %3349
    %3351 = vrot.lane.b32.xlu0 %v3102, 120
    %v3352 = vpop.permute.xlu0 %3351
    %3353 = vrot.lane.b32.xlu0 %v3103, 120
    %v3354 = vpop.permute.xlu0 %3353
    %3355 = vrot.lane.b32.xlu0 %v3104, 120
    %v3356 = vpop.permute.xlu0 %3355
    %3357 = vrot.lane.b32.xlu0 %v3105, 120
    %v3358 = vpop.permute.xlu0 %3357
    %3359 = vrot.lane.b32.xlu0 %v3106, 120
    %v3360 = vpop.permute.xlu0 %3359
    %3361 = vrot.lane.b32.xlu0 %v3107, 120
    %v3362 = vpop.permute.xlu0 %3361
    %3363 = vrot.lane.b32.xlu0 %v3108, 120
    %v3364 = vpop.permute.xlu0 %3363
    %v3493 = vsel %vm325, %v2725, %v3110
    %v3494 = vsel %vm325, %v2757, %v3112
    %v3495 = vsel %vm325, %v2758, %v3114
    %v3496 = vsel %vm325, %v2759, %v3116
    %v3497 = vsel %vm325, %v2760, %v3118
    %v3498 = vsel %vm325, %v2761, %v3120
    %v3499 = vsel %vm325, %v2762, %v3122
    %v3500 = vsel %vm325, %v2763, %v3124
    %v3501 = vsel %vm325, %v2726, %v3126
    %v3502 = vsel %vm325, %v2764, %v3128
    %v3503 = vsel %vm325, %v2765, %v3130
    %v3504 = vsel %vm325, %v2766, %v3132
    %v3505 = vsel %vm325, %v2767, %v3134
    %v3506 = vsel %vm325, %v2768, %v3136
    %v3507 = vsel %vm325, %v2769, %v3138
    %v3508 = vsel %vm325, %v2770, %v3140
    %v3509 = vsel %vm325, %v2727, %v3142
    %v3510 = vsel %vm325, %v2771, %v3144
    %v3511 = vsel %vm325, %v2772, %v3146
    %v3512 = vsel %vm325, %v2773, %v3148
    %v3513 = vsel %vm325, %v2774, %v3150
    %v3514 = vsel %vm325, %v2775, %v3152
    %v3515 = vsel %vm325, %v2776, %v3154
    %v3516 = vsel %vm325, %v2777, %v3156
    %v3517 = vsel %vm325, %v2728, %v3158
    %v3518 = vsel %vm325, %v2778, %v3160
    %v3519 = vsel %vm325, %v2779, %v3162
    %v3520 = vsel %vm325, %v2780, %v3164
    %v3521 = vsel %vm325, %v2781, %v3166
    %v3522 = vsel %vm325, %v2782, %v3168
    %v3523 = vsel %vm325, %v2783, %v3170
    %v3524 = vsel %vm325, %v2784, %v3172
    %v3525 = vsel %vm325, %v2729, %v3174
    %v3526 = vsel %vm325, %v2785, %v3176
    %v3527 = vsel %vm325, %v2786, %v3178
    %v3528 = vsel %vm325, %v2787, %v3180
    %v3529 = vsel %vm325, %v2788, %v3182
    %v3530 = vsel %vm325, %v2789, %v3184
    %v3531 = vsel %vm325, %v2790, %v3186
    %v3532 = vsel %vm325, %v2791, %v3188
    %v3533 = vsel %vm325, %v2730, %v3190
    %v3534 = vsel %vm325, %v2792, %v3192
    %v3535 = vsel %vm325, %v2793, %v3194
    %v3536 = vsel %vm325, %v2794, %v3196
    %v3537 = vsel %vm325, %v2795, %v3198
    %v3538 = vsel %vm325, %v2796, %v3200
    %v3539 = vsel %vm325, %v2797, %v3202
    %v3540 = vsel %vm325, %v2798, %v3204
    %v3541 = vsel %vm325, %v2731, %v3206
    %v3542 = vsel %vm325, %v2799, %v3208
    %v3543 = vsel %vm325, %v2800, %v3210
    %v3544 = vsel %vm325, %v2801, %v3212
    %v3545 = vsel %vm325, %v2802, %v3214
    %v3546 = vsel %vm325, %v2803, %v3216
    %v3547 = vsel %vm325, %v2804, %v3218
    %v3548 = vsel %vm325, %v2805, %v3220
    %v3549 = vsel %vm325, %v2732, %v3222
    %v3550 = vsel %vm325, %v2806, %v3224
    %v3551 = vsel %vm325, %v2807, %v3226
    %v3552 = vsel %vm325, %v2808, %v3228
    %v3553 = vsel %vm325, %v2809, %v3230
    %v3554 = vsel %vm325, %v2810, %v3232
    %v3555 = vsel %vm325, %v2811, %v3234
    %v3556 = vsel %vm325, %v2812, %v3236
    %v3557 = vsel %vm325, %v2733, %v3238
    %v3558 = vsel %vm325, %v2813, %v3240
    %v3559 = vsel %vm325, %v2814, %v3242
    %v3560 = vsel %vm325, %v2815, %v3244
    %v3561 = vsel %vm325, %v2816, %v3246
    %v3562 = vsel %vm325, %v2817, %v3248
    %v3563 = vsel %vm325, %v2818, %v3250
    %v3564 = vsel %vm325, %v2819, %v3252
    %v3565 = vsel %vm325, %v2734, %v3254
    %v3566 = vsel %vm325, %v2820, %v3256
    %v3567 = vsel %vm325, %v2821, %v3258
    %v3568 = vsel %vm325, %v2822, %v3260
    %v3569 = vsel %vm325, %v2823, %v3262
    %v3570 = vsel %vm325, %v2824, %v3264
    %v3571 = vsel %vm325, %v2825, %v3266
    %v3572 = vsel %vm325, %v2826, %v3268
    %v3573 = vsel %vm325, %v2735, %v3270
    %v3574 = vsel %vm325, %v2827, %v3272
    %v3575 = vsel %vm325, %v2828, %v3274
    %v3576 = vsel %vm325, %v2829, %v3276
    %v3577 = vsel %vm325, %v2830, %v3278
    %v3578 = vsel %vm325, %v2831, %v3280
    %v3579 = vsel %vm325, %v2832, %v3282
    %v3580 = vsel %vm325, %v2833, %v3284
    %v3581 = vsel %vm325, %v2736, %v3286
    %v3582 = vsel %vm325, %v2834, %v3288
    %v3583 = vsel %vm325, %v2835, %v3290
    %v3584 = vsel %vm325, %v2836, %v3292
    %v3585 = vsel %vm325, %v2837, %v3294
    %v3586 = vsel %vm325, %v2838, %v3296
    %v3587 = vsel %vm325, %v2839, %v3298
    %v3588 = vsel %vm325, %v2840, %v3300
    %v3589 = vsel %vm325, %v2737, %v3302
    %v3590 = vsel %vm325, %v2841, %v3304
    %v3591 = vsel %vm325, %v2842, %v3306
    %v3592 = vsel %vm325, %v2843, %v3308
    %v3593 = vsel %vm325, %v2844, %v3310
    %v3594 = vsel %vm325, %v2845, %v3312
    %v3595 = vsel %vm325, %v2846, %v3314
    %v3596 = vsel %vm325, %v2847, %v3316
    %v3597 = vsel %vm325, %v2738, %v3318
    %v3598 = vsel %vm325, %v2848, %v3320
    %v3599 = vsel %vm325, %v2849, %v3322
    %v3600 = vsel %vm325, %v2850, %v3324
    %v3601 = vsel %vm325, %v2851, %v3326
    %v3602 = vsel %vm325, %v2852, %v3328
    %v3603 = vsel %vm325, %v2853, %v3330
    %v3604 = vsel %vm325, %v2854, %v3332
    %v3605 = vsel %vm325, %v2739, %v3334
    %v3606 = vsel %vm325, %v2855, %v3336
    %v3607 = vsel %vm325, %v2856, %v3338
    %v3608 = vsel %vm325, %v2857, %v3340
    %v3609 = vsel %vm325, %v2858, %v3342
    %v3610 = vsel %vm325, %v2859, %v3344
    %v3611 = vsel %vm325, %v2860, %v3346
    %v3612 = vsel %vm325, %v2861, %v3348
    %v3613 = vsel %vm325, %v2740, %v3350
    %v3614 = vsel %vm325, %v2862, %v3352
    %v3615 = vsel %vm325, %v2863, %v3354
    %v3616 = vsel %vm325, %v2864, %v3356
    %v3617 = vsel %vm325, %v2865, %v3358
    %v3618 = vsel %vm325, %v2866, %v3360
    %v3619 = vsel %vm325, %v2867, %v3362
    %v3620 = vsel %vm325, %v2868, %v3364
    %3749 = vrot.lane.b32.xlu0 %v3493, 112
    %v3750 = vpop.permute.xlu0 %3749
    %3751 = vrot.lane.b32.xlu0 %v3494, 112
    %v3752 = vpop.permute.xlu0 %3751
    %3753 = vrot.lane.b32.xlu0 %v3495, 112
    %v3754 = vpop.permute.xlu0 %3753
    %3755 = vrot.lane.b32.xlu0 %v3496, 112
    %v3756 = vpop.permute.xlu0 %3755
    %3757 = vrot.lane.b32.xlu0 %v3497, 112
    %v3758 = vpop.permute.xlu0 %3757
    %3759 = vrot.lane.b32.xlu0 %v3498, 112
    %v3760 = vpop.permute.xlu0 %3759
    %3761 = vrot.lane.b32.xlu0 %v3499, 112
    %v3762 = vpop.permute.xlu0 %3761
    %3763 = vrot.lane.b32.xlu0 %v3500, 112
    %v3764 = vpop.permute.xlu0 %3763
    %3765 = vrot.lane.b32.xlu0 %v3501, 112
    %v3766 = vpop.permute.xlu0 %3765
    %3767 = vrot.lane.b32.xlu0 %v3502, 112
    %v3768 = vpop.permute.xlu0 %3767
    %3769 = vrot.lane.b32.xlu0 %v3503, 112
    %v3770 = vpop.permute.xlu0 %3769
    %3771 = vrot.lane.b32.xlu0 %v3504, 112
    %v3772 = vpop.permute.xlu0 %3771
    %3773 = vrot.lane.b32.xlu0 %v3505, 112
    %v3774 = vpop.permute.xlu0 %3773
    %3775 = vrot.lane.b32.xlu0 %v3506, 112
    %v3776 = vpop.permute.xlu0 %3775
    %3777 = vrot.lane.b32.xlu0 %v3507, 112
    %v3778 = vpop.permute.xlu0 %3777
    %3779 = vrot.lane.b32.xlu0 %v3508, 112
    %v3780 = vpop.permute.xlu0 %3779
    %3781 = vrot.lane.b32.xlu0 %v3509, 112
    %v3782 = vpop.permute.xlu0 %3781
    %3783 = vrot.lane.b32.xlu0 %v3510, 112
    %v3784 = vpop.permute.xlu0 %3783
    %3785 = vrot.lane.b32.xlu0 %v3511, 112
    %v3786 = vpop.permute.xlu0 %3785
    %3787 = vrot.lane.b32.xlu0 %v3512, 112
    %v3788 = vpop.permute.xlu0 %3787
    %3789 = vrot.lane.b32.xlu0 %v3513, 112
    %v3790 = vpop.permute.xlu0 %3789
    %3791 = vrot.lane.b32.xlu0 %v3514, 112
    %v3792 = vpop.permute.xlu0 %3791
    %3793 = vrot.lane.b32.xlu0 %v3515, 112
    %v3794 = vpop.permute.xlu0 %3793
    %3795 = vrot.lane.b32.xlu0 %v3516, 112
    %v3796 = vpop.permute.xlu0 %3795
    %3797 = vrot.lane.b32.xlu0 %v3517, 112
    %v3798 = vpop.permute.xlu0 %3797
    %3799 = vrot.lane.b32.xlu0 %v3518, 112
    %v3800 = vpop.permute.xlu0 %3799
    %3801 = vrot.lane.b32.xlu0 %v3519, 112
    %v3802 = vpop.permute.xlu0 %3801
    %3803 = vrot.lane.b32.xlu0 %v3520, 112
    %v3804 = vpop.permute.xlu0 %3803
    %3805 = vrot.lane.b32.xlu0 %v3521, 112
    %v3806 = vpop.permute.xlu0 %3805
    %3807 = vrot.lane.b32.xlu0 %v3522, 112
    %v3808 = vpop.permute.xlu0 %3807
    %3809 = vrot.lane.b32.xlu0 %v3523, 112
    %v3810 = vpop.permute.xlu0 %3809
    %3811 = vrot.lane.b32.xlu0 %v3524, 112
    %v3812 = vpop.permute.xlu0 %3811
    %3813 = vrot.lane.b32.xlu0 %v3525, 112
    %v3814 = vpop.permute.xlu0 %3813
    %3815 = vrot.lane.b32.xlu0 %v3526, 112
    %v3816 = vpop.permute.xlu0 %3815
    %3817 = vrot.lane.b32.xlu0 %v3527, 112
    %v3818 = vpop.permute.xlu0 %3817
    %3819 = vrot.lane.b32.xlu0 %v3528, 112
    %v3820 = vpop.permute.xlu0 %3819
    %3821 = vrot.lane.b32.xlu0 %v3529, 112
    %v3822 = vpop.permute.xlu0 %3821
    %3823 = vrot.lane.b32.xlu0 %v3530, 112
    %v3824 = vpop.permute.xlu0 %3823
    %3825 = vrot.lane.b32.xlu0 %v3531, 112
    %v3826 = vpop.permute.xlu0 %3825
    %3827 = vrot.lane.b32.xlu0 %v3532, 112
    %v3828 = vpop.permute.xlu0 %3827
    %3829 = vrot.lane.b32.xlu0 %v3533, 112
    %v3830 = vpop.permute.xlu0 %3829
    %3831 = vrot.lane.b32.xlu0 %v3534, 112
    %v3832 = vpop.permute.xlu0 %3831
    %3833 = vrot.lane.b32.xlu0 %v3535, 112
    %v3834 = vpop.permute.xlu0 %3833
    %3835 = vrot.lane.b32.xlu0 %v3536, 112
    %v3836 = vpop.permute.xlu0 %3835
    %3837 = vrot.lane.b32.xlu0 %v3537, 112
    %v3838 = vpop.permute.xlu0 %3837
    %3839 = vrot.lane.b32.xlu0 %v3538, 112
    %v3840 = vpop.permute.xlu0 %3839
    %3841 = vrot.lane.b32.xlu0 %v3539, 112
    %v3842 = vpop.permute.xlu0 %3841
    %3843 = vrot.lane.b32.xlu0 %v3540, 112
    %v3844 = vpop.permute.xlu0 %3843
    %3845 = vrot.lane.b32.xlu0 %v3541, 112
    %v3846 = vpop.permute.xlu0 %3845
    %3847 = vrot.lane.b32.xlu0 %v3542, 112
    %v3848 = vpop.permute.xlu0 %3847
    %3849 = vrot.lane.b32.xlu0 %v3543, 112
    %v3850 = vpop.permute.xlu0 %3849
    %3851 = vrot.lane.b32.xlu0 %v3544, 112
    %v3852 = vpop.permute.xlu0 %3851
    %3853 = vrot.lane.b32.xlu0 %v3545, 112
    %v3854 = vpop.permute.xlu0 %3853
    %3855 = vrot.lane.b32.xlu0 %v3546, 112
    %v3856 = vpop.permute.xlu0 %3855
    %3857 = vrot.lane.b32.xlu0 %v3547, 112
    %v3858 = vpop.permute.xlu0 %3857
    %3859 = vrot.lane.b32.xlu0 %v3548, 112
    %v3860 = vpop.permute.xlu0 %3859
    %3861 = vrot.lane.b32.xlu0 %v3549, 112
    %v3862 = vpop.permute.xlu0 %3861
    %3863 = vrot.lane.b32.xlu0 %v3550, 112
    %v3864 = vpop.permute.xlu0 %3863
    %3865 = vrot.lane.b32.xlu0 %v3551, 112
    %v3866 = vpop.permute.xlu0 %3865
    %3867 = vrot.lane.b32.xlu0 %v3552, 112
    %v3868 = vpop.permute.xlu0 %3867
    %3869 = vrot.lane.b32.xlu0 %v3553, 112
    %v3870 = vpop.permute.xlu0 %3869
    %3871 = vrot.lane.b32.xlu0 %v3554, 112
    %v3872 = vpop.permute.xlu0 %3871
    %3873 = vrot.lane.b32.xlu0 %v3555, 112
    %v3874 = vpop.permute.xlu0 %3873
    %3875 = vrot.lane.b32.xlu0 %v3556, 112
    %v3876 = vpop.permute.xlu0 %3875
    %3877 = vrot.lane.b32.xlu0 %v3557, 112
    %v3878 = vpop.permute.xlu0 %3877
    %3879 = vrot.lane.b32.xlu0 %v3558, 112
    %v3880 = vpop.permute.xlu0 %3879
    %3881 = vrot.lane.b32.xlu0 %v3559, 112
    %v3882 = vpop.permute.xlu0 %3881
    %3883 = vrot.lane.b32.xlu0 %v3560, 112
    %v3884 = vpop.permute.xlu0 %3883
    %3885 = vrot.lane.b32.xlu0 %v3561, 112
    %v3886 = vpop.permute.xlu0 %3885
    %3887 = vrot.lane.b32.xlu0 %v3562, 112
    %v3888 = vpop.permute.xlu0 %3887
    %3889 = vrot.lane.b32.xlu0 %v3563, 112
    %v3890 = vpop.permute.xlu0 %3889
    %3891 = vrot.lane.b32.xlu0 %v3564, 112
    %v3892 = vpop.permute.xlu0 %3891
    %3893 = vrot.lane.b32.xlu0 %v3565, 112
    %v3894 = vpop.permute.xlu0 %3893
    %3895 = vrot.lane.b32.xlu0 %v3566, 112
    %v3896 = vpop.permute.xlu0 %3895
    %3897 = vrot.lane.b32.xlu0 %v3567, 112
    %v3898 = vpop.permute.xlu0 %3897
    %3899 = vrot.lane.b32.xlu0 %v3568, 112
    %v3900 = vpop.permute.xlu0 %3899
    %3901 = vrot.lane.b32.xlu0 %v3569, 112
    %v3902 = vpop.permute.xlu0 %3901
    %3903 = vrot.lane.b32.xlu0 %v3570, 112
    %v3904 = vpop.permute.xlu0 %3903
    %3905 = vrot.lane.b32.xlu0 %v3571, 112
    %v3906 = vpop.permute.xlu0 %3905
    %3907 = vrot.lane.b32.xlu0 %v3572, 112
    %v3908 = vpop.permute.xlu0 %3907
    %3909 = vrot.lane.b32.xlu0 %v3573, 112
    %v3910 = vpop.permute.xlu0 %3909
    %3911 = vrot.lane.b32.xlu0 %v3574, 112
    %v3912 = vpop.permute.xlu0 %3911
    %3913 = vrot.lane.b32.xlu0 %v3575, 112
    %v3914 = vpop.permute.xlu0 %3913
    %3915 = vrot.lane.b32.xlu0 %v3576, 112
    %v3916 = vpop.permute.xlu0 %3915
    %3917 = vrot.lane.b32.xlu0 %v3577, 112
    %v3918 = vpop.permute.xlu0 %3917
    %3919 = vrot.lane.b32.xlu0 %v3578, 112
    %v3920 = vpop.permute.xlu0 %3919
    %3921 = vrot.lane.b32.xlu0 %v3579, 112
    %v3922 = vpop.permute.xlu0 %3921
    %3923 = vrot.lane.b32.xlu0 %v3580, 112
    %v3924 = vpop.permute.xlu0 %3923
    %3925 = vrot.lane.b32.xlu0 %v3581, 112
    %v3926 = vpop.permute.xlu0 %3925
    %3927 = vrot.lane.b32.xlu0 %v3582, 112
    %v3928 = vpop.permute.xlu0 %3927
    %3929 = vrot.lane.b32.xlu0 %v3583, 112
    %v3930 = vpop.permute.xlu0 %3929
    %3931 = vrot.lane.b32.xlu0 %v3584, 112
    %v3932 = vpop.permute.xlu0 %3931
    %3933 = vrot.lane.b32.xlu0 %v3585, 112
    %v3934 = vpop.permute.xlu0 %3933
    %3935 = vrot.lane.b32.xlu0 %v3586, 112
    %v3936 = vpop.permute.xlu0 %3935
    %3937 = vrot.lane.b32.xlu0 %v3587, 112
    %v3938 = vpop.permute.xlu0 %3937
    %3939 = vrot.lane.b32.xlu0 %v3588, 112
    %v3940 = vpop.permute.xlu0 %3939
    %3941 = vrot.lane.b32.xlu0 %v3589, 112
    %v3942 = vpop.permute.xlu0 %3941
    %3943 = vrot.lane.b32.xlu0 %v3590, 112
    %v3944 = vpop.permute.xlu0 %3943
    %3945 = vrot.lane.b32.xlu0 %v3591, 112
    %v3946 = vpop.permute.xlu0 %3945
    %3947 = vrot.lane.b32.xlu0 %v3592, 112
    %v3948 = vpop.permute.xlu0 %3947
    %3949 = vrot.lane.b32.xlu0 %v3593, 112
    %v3950 = vpop.permute.xlu0 %3949
    %3951 = vrot.lane.b32.xlu0 %v3594, 112
    %v3952 = vpop.permute.xlu0 %3951
    %3953 = vrot.lane.b32.xlu0 %v3595, 112
    %v3954 = vpop.permute.xlu0 %3953
    %3955 = vrot.lane.b32.xlu0 %v3596, 112
    %v3956 = vpop.permute.xlu0 %3955
    %3957 = vrot.lane.b32.xlu0 %v3597, 112
    %v3958 = vpop.permute.xlu0 %3957
    %3959 = vrot.lane.b32.xlu0 %v3598, 112
    %v3960 = vpop.permute.xlu0 %3959
    %3961 = vrot.lane.b32.xlu0 %v3599, 112
    %v3962 = vpop.permute.xlu0 %3961
    %3963 = vrot.lane.b32.xlu0 %v3600, 112
    %v3964 = vpop.permute.xlu0 %3963
    %3965 = vrot.lane.b32.xlu0 %v3601, 112
    %v3966 = vpop.permute.xlu0 %3965
    %3967 = vrot.lane.b32.xlu0 %v3602, 112
    %v3968 = vpop.permute.xlu0 %3967
    %3969 = vrot.lane.b32.xlu0 %v3603, 112
    %v3970 = vpop.permute.xlu0 %3969
    %3971 = vrot.lane.b32.xlu0 %v3604, 112
    %v3972 = vpop.permute.xlu0 %3971
    %3973 = vrot.lane.b32.xlu0 %v3605, 112
    %v3974 = vpop.permute.xlu0 %3973
    %3975 = vrot.lane.b32.xlu0 %v3606, 112
    %v3976 = vpop.permute.xlu0 %3975
    %3977 = vrot.lane.b32.xlu0 %v3607, 112
    %v3978 = vpop.permute.xlu0 %3977
    %3979 = vrot.lane.b32.xlu0 %v3608, 112
    %v3980 = vpop.permute.xlu0 %3979
    %3981 = vrot.lane.b32.xlu0 %v3609, 112
    %v3982 = vpop.permute.xlu0 %3981
    %3983 = vrot.lane.b32.xlu0 %v3610, 112
    %v3984 = vpop.permute.xlu0 %3983
    %3985 = vrot.lane.b32.xlu0 %v3611, 112
    %v3986 = vpop.permute.xlu0 %3985
    %3987 = vrot.lane.b32.xlu0 %v3612, 112
    %v3988 = vpop.permute.xlu0 %3987
    %3989 = vrot.lane.b32.xlu0 %v3613, 112
    %v3990 = vpop.permute.xlu0 %3989
    %3991 = vrot.lane.b32.xlu0 %v3614, 112
    %v3992 = vpop.permute.xlu0 %3991
    %3993 = vrot.lane.b32.xlu0 %v3615, 112
    %v3994 = vpop.permute.xlu0 %3993
    %3995 = vrot.lane.b32.xlu0 %v3616, 112
    %v3996 = vpop.permute.xlu0 %3995
    %3997 = vrot.lane.b32.xlu0 %v3617, 112
    %v3998 = vpop.permute.xlu0 %3997
    %3999 = vrot.lane.b32.xlu0 %v3618, 112
    %v4000 = vpop.permute.xlu0 %3999
    %4001 = vrot.lane.b32.xlu0 %v3619, 112
    %v4002 = vpop.permute.xlu0 %4001
    %4003 = vrot.lane.b32.xlu0 %v3620, 112
    %v4004 = vpop.permute.xlu0 %4003
    %vm4005 = vcmask 64512
    %4006 = vst.msk [vmem:[#allocation5] sm:$0xff] %vm4005, 0.0
    %4007 = vst.msk [vmem:[#allocation5 + $0x8] sm:$0xff] %vm4005, 0.0
    %vm4008 = vcmask 58368
    %4009 = vst.msk [vmem:[#allocation5 + $0x10] sm:$0x3] %vm4008, 0.0
    %4010 = vst.msk [vmem:[#allocation5 + $0x1b0] sm:$0xff] %vm4005, 0.0
    %4011 = vst.msk [vmem:[#allocation5 + $0x1b8] sm:$0xff] %vm4005, 0.0
    %4012 = vst.msk [vmem:[#allocation5 + $0x1c0] sm:$0x3] %vm4008, 0.0
    %s4013 = scalar_lea.vmem [#allocation5], 408
    %4014 = vst.msk [vmem:[%s4013] sm:$0xff] %vm4005, 0.0
    %4015 = vst.msk [vmem:[%s4013 + $0x8] sm:$0xff] %vm4005, 0.0
    %4016 = vst.msk [vmem:[%s4013 + $0x10] sm:$0x3] %vm4008, 0.0
    %4017 = vst.msk [vmem:[%s4013 + $0x1b0] sm:$0xff] %vm4005, 0.0
    %4018 = vst.msk [vmem:[%s4013 + $0x1b8] sm:$0xff] %vm4005, 0.0
    %4019 = vst.msk [vmem:[%s4013 + $0x1c0] sm:$0x3] %vm4008, 0.0
    %vm4020 = vcmask 57344
    %4021 = vst.msk [vmem:[#allocation5] sm:$0x1] %vm4020, 0.0
    %4022 = vst.msk [vmem:[#allocation5 + $0x18] sm:$0x1] %vm4020, 0.0
    %4023 = vst.msk [vmem:[#allocation5 + $0x30] sm:$0x1] %vm4020, 0.0
    %4024 = vst.msk [vmem:[#allocation5 + $0x48] sm:$0x1] %vm4020, 0.0
    %4025 = vst.msk [vmem:[#allocation5 + $0x60] sm:$0x1] %vm4020, 0.0
    %4026 = vst.msk [vmem:[#allocation5 + $0x78] sm:$0x1] %vm4020, 0.0
    %4027 = vst.msk [vmem:[#allocation5 + $0x90] sm:$0x1] %vm4020, 0.0
    %4028 = vst.msk [vmem:[#allocation5 + $0xa8] sm:$0x1] %vm4020, 0.0
    %4029 = vst.msk [vmem:[#allocation5 + $0xc0] sm:$0x1] %vm4020, 0.0
    %4030 = vst.msk [vmem:[#allocation5 + $0xd8] sm:$0x1] %vm4020, 0.0
    %4031 = vst.msk [vmem:[#allocation5 + $0xf0] sm:$0x1] %vm4020, 0.0
    %4032 = vst.msk [vmem:[#allocation5 + $0x108] sm:$0x1] %vm4020, 0.0
    %4033 = vst.msk [vmem:[#allocation5 + $0x120] sm:$0x1] %vm4020, 0.0
    %4034 = vst.msk [vmem:[#allocation5 + $0x138] sm:$0x1] %vm4020, 0.0
    %4035 = vst.msk [vmem:[#allocation5 + $0x150] sm:$0x1] %vm4020, 0.0
    %4036 = vst.msk [vmem:[#allocation5 + $0x168] sm:$0x1] %vm4020, 0.0
    %4037 = vst.msk [vmem:[#allocation5 + $0x180] sm:$0x1] %vm4020, 0.0
    %4038 = vst.msk [vmem:[#allocation5 + $0x198] sm:$0x1] %vm4020, 0.0
    %4039 = vst.msk [vmem:[#allocation5 + $0x1b0] sm:$0x1] %vm4020, 0.0
    %4040 = vst.msk [vmem:[#allocation5 + $0x1c8] sm:$0x1] %vm4020, 0.0
    %4041 = vst.msk [vmem:[#allocation5 + $0x1e0] sm:$0x1] %vm4020, 0.0
    %4042 = vst.msk [vmem:[#allocation5 + $0x1f8] sm:$0x1] %vm4020, 0.0
    %4043 = vst.msk [vmem:[#allocation5 + $0x210] sm:$0x1] %vm4020, 0.0
    %4044 = vst.msk [vmem:[#allocation5 + $0x228] sm:$0x1] %vm4020, 0.0
    %4045 = vst.msk [vmem:[#allocation5 + $0x240] sm:$0x1] %vm4020, 0.0
    %4046 = vst.msk [vmem:[#allocation5 + $0x258] sm:$0x1] %vm4020, 0.0
    %4047 = vst.msk [vmem:[#allocation5 + $0x270] sm:$0x1] %vm4020, 0.0
    %4048 = vst.msk [vmem:[#allocation5 + $0x288] sm:$0x1] %vm4020, 0.0
    %4049 = vst.msk [vmem:[#allocation5 + $0x2a0] sm:$0x1] %vm4020, 0.0
    %4050 = vst.msk [vmem:[#allocation5 + $0x2b8] sm:$0x1] %vm4020, 0.0
    %4051 = vst.msk [vmem:[#allocation5 + $0x2d0] sm:$0x1] %vm4020, 0.0
    %4052 = vst.msk [vmem:[#allocation5 + $0x2e8] sm:$0x1] %vm4020, 0.0
    %4053 = vst.msk [vmem:[#allocation5 + $0x300] sm:$0x1] %vm4020, 0.0
    %4054 = vst.msk [vmem:[#allocation5 + $0x318] sm:$0x1] %vm4020, 0.0
    %4055 = vst.msk [vmem:[#allocation5 + $0x330] sm:$0x1] %vm4020, 0.0
    %4056 = vst.msk [vmem:[#allocation5 + $0x348] sm:$0x1] %vm4020, 0.0
    %4057 = vst.msk [vmem:[#allocation5 + $0x11] sm:$0x1] %vm4020, 0.0
    %4058 = vst.msk [vmem:[#allocation5 + $0x29] sm:$0x1] %vm4020, 0.0
    %4059 = vst.msk [vmem:[#allocation5 + $0x41] sm:$0x1] %vm4020, 0.0
    %4060 = vst.msk [vmem:[#allocation5 + $0x59] sm:$0x1] %vm4020, 0.0
    %4061 = vst.msk [vmem:[#allocation5 + $0x71] sm:$0x1] %vm4020, 0.0
    %4062 = vst.msk [vmem:[#allocation5 + $0x89] sm:$0x1] %vm4020, 0.0
    %4063 = vst.msk [vmem:[#allocation5 + $0xa1] sm:$0x1] %vm4020, 0.0
    %4064 = vst.msk [vmem:[#allocation5 + $0xb9] sm:$0x1] %vm4020, 0.0
    %4065 = vst.msk [vmem:[#allocation5 + $0xd1] sm:$0x1] %vm4020, 0.0
    %4066 = vst.msk [vmem:[#allocation5 + $0xe9] sm:$0x1] %vm4020, 0.0
    %4067 = vst.msk [vmem:[#allocation5 + $0x101] sm:$0x1] %vm4020, 0.0
    %4068 = vst.msk [vmem:[#allocation5 + $0x119] sm:$0x1] %vm4020, 0.0
    %4069 = vst.msk [vmem:[#allocation5 + $0x131] sm:$0x1] %vm4020, 0.0
    %4070 = vst.msk [vmem:[#allocation5 + $0x149] sm:$0x1] %vm4020, 0.0
    %4071 = vst.msk [vmem:[#allocation5 + $0x161] sm:$0x1] %vm4020, 0.0
    %4072 = vst.msk [vmem:[#allocation5 + $0x179] sm:$0x1] %vm4020, 0.0
    %4073 = vst.msk [vmem:[#allocation5 + $0x191] sm:$0x1] %vm4020, 0.0
    %4074 = vst.msk [vmem:[#allocation5 + $0x1a9] sm:$0x1] %vm4020, 0.0
    %4075 = vst.msk [vmem:[#allocation5 + $0x1c1] sm:$0x1] %vm4020, 0.0
    %4076 = vst.msk [vmem:[#allocation5 + $0x1d9] sm:$0x1] %vm4020, 0.0
    %4077 = vst.msk [vmem:[#allocation5 + $0x1f1] sm:$0x1] %vm4020, 0.0
    %4078 = vst.msk [vmem:[#allocation5 + $0x209] sm:$0x1] %vm4020, 0.0
    %4079 = vst.msk [vmem:[#allocation5 + $0x221] sm:$0x1] %vm4020, 0.0
    %4080 = vst.msk [vmem:[#allocation5 + $0x239] sm:$0x1] %vm4020, 0.0
    %4081 = vst.msk [vmem:[#allocation5 + $0x251] sm:$0x1] %vm4020, 0.0
    %4082 = vst.msk [vmem:[#allocation5 + $0x269] sm:$0x1] %vm4020, 0.0
    %4083 = vst.msk [vmem:[#allocation5 + $0x281] sm:$0x1] %vm4020, 0.0
    %4084 = vst.msk [vmem:[#allocation5 + $0x299] sm:$0x1] %vm4020, 0.0
    %4085 = vst.msk [vmem:[#allocation5 + $0x2b1] sm:$0x1] %vm4020, 0.0
    %4086 = vst.msk [vmem:[#allocation5 + $0x2c9] sm:$0x1] %vm4020, 0.0
    %4087 = vst.msk [vmem:[#allocation5 + $0x2e1] sm:$0x1] %vm4020, 0.0
    %4088 = vst.msk [vmem:[#allocation5 + $0x2f9] sm:$0x1] %vm4020, 0.0
    %4089 = vst.msk [vmem:[#allocation5 + $0x311] sm:$0x1] %vm4020, 0.0
    %4090 = vst.msk [vmem:[#allocation5 + $0x329] sm:$0x1] %vm4020, 0.0
    %4091 = vst.msk [vmem:[#allocation5 + $0x341] sm:$0x1] %vm4020, 0.0
    %4092 = vst.msk [vmem:[#allocation5 + $0x359] sm:$0x1] %vm4020, 0.0
    %4093 = vst [vmem:[#allocation1] ss:$4 sm:$0xff] %v3493
    %s4094 = scalar_lea.vmem [#allocation1], 1
    %4095 = vst [vmem:[%s4094] ss:$4 sm:$0xff] %v3494
    %s4096 = scalar_lea.vmem [#allocation1], 2
    %4097 = vst [vmem:[%s4096] ss:$4 sm:$0xff] %v3495
    %s4098 = scalar_lea.vmem [#allocation1], 3
    %4099 = vst [vmem:[%s4098] ss:$4 sm:$0xff] %v3496
    %s4100 = scalar_lea.vmem [#allocation1], 32
    %4101 = vst [vmem:[%s4100] ss:$4 sm:$0xff] %v3497
    %s4102 = scalar_lea.vmem [#allocation1], 33
    %4103 = vst [vmem:[%s4102] ss:$4 sm:$0xff] %v3498
    %s4104 = scalar_lea.vmem [#allocation1], 34
    %4105 = vst [vmem:[%s4104] ss:$4 sm:$0xff] %v3499
    %s4106 = scalar_lea.vmem [#allocation1], 35
    %4107 = vst [vmem:[%s4106] ss:$4 sm:$0xff] %v3500
    %v4108 = vld.sshfl [vmem:[#allocation1] sm:$0xff pattern:$0x73625140]
    %v4109 = vld.sshfl [vmem:[#allocation1 + $0x20] sm:$0xff pattern:$0x73625140]
    %4110 = vst [vmem:[#allocation1] ss:$4 sm:$0xff] %v3750
    %4111 = vst [vmem:[%s4094] ss:$4 sm:$0xff] %v3752
    %4112 = vst [vmem:[%s4096] ss:$4 sm:$0xff] %v3754
    %4113 = vst [vmem:[%s4098] ss:$4 sm:$0xff] %v3756
    %4114 = vst [vmem:[%s4100] ss:$4 sm:$0xff] %v3758
    %4115 = vst [vmem:[%s4102] ss:$4 sm:$0xff] %v3760
    %4116 = vst [vmem:[%s4104] ss:$4 sm:$0xff] %v3762
    %4117 = vst [vmem:[%s4106] ss:$4 sm:$0xff] %v3764
    %v4118 = vld.sshfl [vmem:[#allocation1] sm:$0xff pattern:$0x73625140]
    %v4119 = vld.sshfl [vmem:[#allocation1 + $0x20] sm:$0xff pattern:$0x73625140]
    %4120 = vst [vmem:[#allocation1] ss:$4 sm:$0xff] %v3501
    %4121 = vst [vmem:[%s4094] ss:$4 sm:$0xff] %v3502
    %4122 = vst [vmem:[%s4096] ss:$4 sm:$0xff] %v3503
    %4123 = vst [vmem:[%s4098] ss:$4 sm:$0xff] %v3504
    %4124 = vst [vmem:[%s4100] ss:$4 sm:$0xff] %v3505
    %4125 = vst [vmem:[%s4102] ss:$4 sm:$0xff] %v3506
    %4126 = vst [vmem:[%s4104] ss:$4 sm:$0xff] %v3507
    %4127 = vst [vmem:[%s4106] ss:$4 sm:$0xff] %v3508
    %v4128 = vld.sshfl [vmem:[#allocation1] sm:$0xff pattern:$0x73625140]
    %v4129 = vld.sshfl [vmem:[#allocation1 + $0x20] sm:$0xff pattern:$0x73625140]
    %4130 = vst [vmem:[#allocation1] ss:$4 sm:$0xff] %v3766
    %4131 = vst [vmem:[%s4094] ss:$4 sm:$0xff] %v3768
    %4132 = vst [vmem:[%s4096] ss:$4 sm:$0xff] %v3770
    %4133 = vst [vmem:[%s4098] ss:$4 sm:$0xff] %v3772
    %4134 = vst [vmem:[%s4100] ss:$4 sm:$0xff] %v3774
    %4135 = vst [vmem:[%s4102] ss:$4 sm:$0xff] %v3776
    %4136 = vst [vmem:[%s4104] ss:$4 sm:$0xff] %v3778
    %4137 = vst [vmem:[%s4106] ss:$4 sm:$0xff] %v3780
    %v4138 = vld.sshfl [vmem:[#allocation1] sm:$0xff pattern:$0x73625140]
    %v4139 = vld.sshfl [vmem:[#allocation1 + $0x20] sm:$0xff pattern:$0x73625140]
    %4140 = vst [vmem:[#allocation1] ss:$4 sm:$0xff] %v3509
    %4141 = vst [vmem:[%s4094] ss:$4 sm:$0xff] %v3510
    %4142 = vst [vmem:[%s4096] ss:$4 sm:$0xff] %v3511
    %4143 = vst [vmem:[%s4098] ss:$4 sm:$0xff] %v3512
    %4144 = vst [vmem:[%s4100] ss:$4 sm:$0xff] %v3513
    %4145 = vst [vmem:[%s4102] ss:$4 sm:$0xff] %v3514
    %4146 = vst [vmem:[%s4104] ss:$4 sm:$0xff] %v3515
    %4147 = vst [vmem:[%s4106] ss:$4 sm:$0xff] %v3516
    %v4148 = vld.sshfl [vmem:[#allocation1] sm:$0xff pattern:$0x73625140]
    %v4149 = vld.sshfl [vmem:[#allocation1 + $0x20] sm:$0xff pattern:$0x73625140]
    %4150 = vst [vmem:[#allocation1] ss:$4 sm:$0xff] %v3782
    %4151 = vst [vmem:[%s4094] ss:$4 sm:$0xff] %v3784
    %4152 = vst [vmem:[%s4096] ss:$4 sm:$0xff] %v3786
    %4153 = vst [vmem:[%s4098] ss:$4 sm:$0xff] %v3788
    %4154 = vst [vmem:[%s4100] ss:$4 sm:$0xff] %v3790
    %4155 = vst [vmem:[%s4102] ss:$4 sm:$0xff] %v3792
    %4156 = vst [vmem:[%s4104] ss:$4 sm:$0xff] %v3794
    %4157 = vst [vmem:[%s4106] ss:$4 sm:$0xff] %v3796
    %v4158 = vld.sshfl [vmem:[#allocation1] sm:$0xff pattern:$0x73625140]
    %v4159 = vld.sshfl [vmem:[#allocation1 + $0x20] sm:$0xff pattern:$0x73625140]
    %4160 = vst [vmem:[#allocation1] ss:$4 sm:$0xff] %v3517
    %4161 = vst [vmem:[%s4094] ss:$4 sm:$0xff] %v3518
    %4162 = vst [vmem:[%s4096] ss:$4 sm:$0xff] %v3519
    %4163 = vst [vmem:[%s4098] ss:$4 sm:$0xff] %v3520
    %4164 = vst [vmem:[%s4100] ss:$4 sm:$0xff] %v3521
    %4165 = vst [vmem:[%s4102] ss:$4 sm:$0xff] %v3522
    %4166 = vst [vmem:[%s4104] ss:$4 sm:$0xff] %v3523
    %4167 = vst [vmem:[%s4106] ss:$4 sm:$0xff] %v3524
    %v4168 = vld.sshfl [vmem:[#allocation1] sm:$0xff pattern:$0x73625140]
    %v4169 = vld.sshfl [vmem:[#allocation1 + $0x20] sm:$0xff pattern:$0x73625140]
    %4170 = vst [vmem:[#allocation1] ss:$4 sm:$0xff] %v3798
    %4171 = vst [vmem:[%s4094] ss:$4 sm:$0xff] %v3800
    %4172 = vst [vmem:[%s4096] ss:$4 sm:$0xff] %v3802
    %4173 = vst [vmem:[%s4098] ss:$4 sm:$0xff] %v3804
    %4174 = vst [vmem:[%s4100] ss:$4 sm:$0xff] %v3806
    %4175 = vst [vmem:[%s4102] ss:$4 sm:$0xff] %v3808
    %4176 = vst [vmem:[%s4104] ss:$4 sm:$0xff] %v3810
    %4177 = vst [vmem:[%s4106] ss:$4 sm:$0xff] %v3812
    %v4178 = vld.sshfl [vmem:[#allocation1] sm:$0xff pattern:$0x73625140]
    %v4179 = vld.sshfl [vmem:[#allocation1 + $0x20] sm:$0xff pattern:$0x73625140]
    %4180 = vst [vmem:[#allocation1] ss:$4 sm:$0xff] %v3525
    %4181 = vst [vmem:[%s4094] ss:$4 sm:$0xff] %v3526
    %4182 = vst [vmem:[%s4096] ss:$4 sm:$0xff] %v3527
    %4183 = vst [vmem:[%s4098] ss:$4 sm:$0xff] %v3528
    %4184 = vst [vmem:[%s4100] ss:$4 sm:$0xff] %v3529
    %4185 = vst [vmem:[%s4102] ss:$4 sm:$0xff] %v3530
    %4186 = vst [vmem:[%s4104] ss:$4 sm:$0xff] %v3531
    %4187 = vst [vmem:[%s4106] ss:$4 sm:$0xff] %v3532
    %v4188 = vld.sshfl [vmem:[#allocation1] sm:$0xff pattern:$0x73625140]
    %v4189 = vld.sshfl [vmem:[#allocation1 + $0x20] sm:$0xff pattern:$0x73625140]
    %4190 = vst [vmem:[#allocation1] ss:$4 sm:$0xff] %v3814
    %4191 = vst [vmem:[%s4094] ss:$4 sm:$0xff] %v3816
    %4192 = vst [vmem:[%s4096] ss:$4 sm:$0xff] %v3818
    %4193 = vst [vmem:[%s4098] ss:$4 sm:$0xff] %v3820
    %4194 = vst [vmem:[%s4100] ss:$4 sm:$0xff] %v3822
    %4195 = vst [vmem:[%s4102] ss:$4 sm:$0xff] %v3824
    %4196 = vst [vmem:[%s4104] ss:$4 sm:$0xff] %v3826
    %4197 = vst [vmem:[%s4106] ss:$4 sm:$0xff] %v3828
    %v4198 = vld.sshfl [vmem:[#allocation1] sm:$0xff pattern:$0x73625140]
    %v4199 = vld.sshfl [vmem:[#allocation1 + $0x20] sm:$0xff pattern:$0x73625140]
    %4200 = vst [vmem:[#allocation1] ss:$4 sm:$0xff] %v3533
    %4201 = vst [vmem:[%s4094] ss:$4 sm:$0xff] %v3534
    %4202 = vst [vmem:[%s4096] ss:$4 sm:$0xff] %v3535
    %4203 = vst [vmem:[%s4098] ss:$4 sm:$0xff] %v3536
    %4204 = vst [vmem:[%s4100] ss:$4 sm:$0xff] %v3537
    %4205 = vst [vmem:[%s4102] ss:$4 sm:$0xff] %v3538
    %4206 = vst [vmem:[%s4104] ss:$4 sm:$0xff] %v3539
    %4207 = vst [vmem:[%s4106] ss:$4 sm:$0xff] %v3540
    %v4208 = vld.sshfl [vmem:[#allocation1] sm:$0xff pattern:$0x73625140]
    %v4209 = vld.sshfl [vmem:[#allocation1 + $0x20] sm:$0xff pattern:$0x73625140]
    %4210 = vst [vmem:[#allocation1] ss:$4 sm:$0xff] %v3830
    %4211 = vst [vmem:[%s4094] ss:$4 sm:$0xff] %v3832
    %4212 = vst [vmem:[%s4096] ss:$4 sm:$0xff] %v3834
    %4213 = vst [vmem:[%s4098] ss:$4 sm:$0xff] %v3836
    %4214 = vst [vmem:[%s4100] ss:$4 sm:$0xff] %v3838
    %4215 = vst [vmem:[%s4102] ss:$4 sm:$0xff] %v3840
    %4216 = vst [vmem:[%s4104] ss:$4 sm:$0xff] %v3842
    %4217 = vst [vmem:[%s4106] ss:$4 sm:$0xff] %v3844
    %v4218 = vld.sshfl [vmem:[#allocation1] sm:$0xff pattern:$0x73625140]
    %v4219 = vld.sshfl [vmem:[#allocation1 + $0x20] sm:$0xff pattern:$0x73625140]
    %4220 = vst [vmem:[#allocation1] ss:$4 sm:$0xff] %v3541
    %4221 = vst [vmem:[%s4094] ss:$4 sm:$0xff] %v3542
    %4222 = vst [vmem:[%s4096] ss:$4 sm:$0xff] %v3543
    %4223 = vst [vmem:[%s4098] ss:$4 sm:$0xff] %v3544
    %4224 = vst [vmem:[%s4100] ss:$4 sm:$0xff] %v3545
    %4225 = vst [vmem:[%s4102] ss:$4 sm:$0xff] %v3546
    %4226 = vst [vmem:[%s4104] ss:$4 sm:$0xff] %v3547
    %4227 = vst [vmem:[%s4106] ss:$4 sm:$0xff] %v3548
    %v4228 = vld.sshfl [vmem:[#allocation1] sm:$0xff pattern:$0x73625140]
    %v4229 = vld.sshfl [vmem:[#allocation1 + $0x20] sm:$0xff pattern:$0x73625140]
    %4230 = vst [vmem:[#allocation1] ss:$4 sm:$0xff] %v3846
    %4231 = vst [vmem:[%s4094] ss:$4 sm:$0xff] %v3848
    %4232 = vst [vmem:[%s4096] ss:$4 sm:$0xff] %v3850
    %4233 = vst [vmem:[%s4098] ss:$4 sm:$0xff] %v3852
    %4234 = vst [vmem:[%s4100] ss:$4 sm:$0xff] %v3854
    %4235 = vst [vmem:[%s4102] ss:$4 sm:$0xff] %v3856
    %4236 = vst [vmem:[%s4104] ss:$4 sm:$0xff] %v3858
    %4237 = vst [vmem:[%s4106] ss:$4 sm:$0xff] %v3860
    %v4238 = vld.sshfl [vmem:[#allocation1] sm:$0xff pattern:$0x73625140]
    %v4239 = vld.sshfl [vmem:[#allocation1 + $0x20] sm:$0xff pattern:$0x73625140]
    %4240 = vst [vmem:[#allocation1] ss:$4 sm:$0xff] %v3549
    %4241 = vst [vmem:[%s4094] ss:$4 sm:$0xff] %v3550
    %4242 = vst [vmem:[%s4096] ss:$4 sm:$0xff] %v3551
    %4243 = vst [vmem:[%s4098] ss:$4 sm:$0xff] %v3552
    %4244 = vst [vmem:[%s4100] ss:$4 sm:$0xff] %v3553
    %4245 = vst [vmem:[%s4102] ss:$4 sm:$0xff] %v3554
    %4246 = vst [vmem:[%s4104] ss:$4 sm:$0xff] %v3555
    %4247 = vst [vmem:[%s4106] ss:$4 sm:$0xff] %v3556
    %v4248 = vld.sshfl [vmem:[#allocation1] sm:$0xff pattern:$0x73625140]
    %v4249 = vld.sshfl [vmem:[#allocation1 + $0x20] sm:$0xff pattern:$0x73625140]
    %4250 = vst [vmem:[#allocation1] ss:$4 sm:$0xff] %v3862
    %4251 = vst [vmem:[%s4094] ss:$4 sm:$0xff] %v3864
    %4252 = vst [vmem:[%s4096] ss:$4 sm:$0xff] %v3866
    %4253 = vst [vmem:[%s4098] ss:$4 sm:$0xff] %v3868
    %4254 = vst [vmem:[%s4100] ss:$4 sm:$0xff] %v3870
    %4255 = vst [vmem:[%s4102] ss:$4 sm:$0xff] %v3872
    %4256 = vst [vmem:[%s4104] ss:$4 sm:$0xff] %v3874
    %4257 = vst [vmem:[%s4106] ss:$4 sm:$0xff] %v3876
    %v4258 = vld.sshfl [vmem:[#allocation1] sm:$0xff pattern:$0x73625140]
    %v4259 = vld.sshfl [vmem:[#allocation1 + $0x20] sm:$0xff pattern:$0x73625140]
    %4260 = vst [vmem:[#allocation1] ss:$4 sm:$0xff] %v3557
    %4261 = vst [vmem:[%s4094] ss:$4 sm:$0xff] %v3558
    %4262 = vst [vmem:[%s4096] ss:$4 sm:$0xff] %v3559
    %4263 = vst [vmem:[%s4098] ss:$4 sm:$0xff] %v3560
    %4264 = vst [vmem:[%s4100] ss:$4 sm:$0xff] %v3561
    %4265 = vst [vmem:[%s4102] ss:$4 sm:$0xff] %v3562
    %4266 = vst [vmem:[%s4104] ss:$4 sm:$0xff] %v3563
    %4267 = vst [vmem:[%s4106] ss:$4 sm:$0xff] %v3564
    %v4268 = vld.sshfl [vmem:[#allocation1] sm:$0xff pattern:$0x73625140]
    %v4269 = vld.sshfl [vmem:[#allocation1 + $0x20] sm:$0xff pattern:$0x73625140]
    %4270 = vst [vmem:[#allocation1] ss:$4 sm:$0xff] %v3878
    %4271 = vst [vmem:[%s4094] ss:$4 sm:$0xff] %v3880
    %4272 = vst [vmem:[%s4096] ss:$4 sm:$0xff] %v3882
    %4273 = vst [vmem:[%s4098] ss:$4 sm:$0xff] %v3884
    %4274 = vst [vmem:[%s4100] ss:$4 sm:$0xff] %v3886
    %4275 = vst [vmem:[%s4102] ss:$4 sm:$0xff] %v3888
    %4276 = vst [vmem:[%s4104] ss:$4 sm:$0xff] %v3890
    %4277 = vst [vmem:[%s4106] ss:$4 sm:$0xff] %v3892
    %v4278 = vld.sshfl [vmem:[#allocation1] sm:$0xff pattern:$0x73625140]
    %v4279 = vld.sshfl [vmem:[#allocation1 + $0x20] sm:$0xff pattern:$0x73625140]
    %4280 = vst [vmem:[#allocation1] ss:$4 sm:$0xff] %v3565
    %4281 = vst [vmem:[%s4094] ss:$4 sm:$0xff] %v3566
    %4282 = vst [vmem:[%s4096] ss:$4 sm:$0xff] %v3567
    %4283 = vst [vmem:[%s4098] ss:$4 sm:$0xff] %v3568
    %4284 = vst [vmem:[%s4100] ss:$4 sm:$0xff] %v3569
    %4285 = vst [vmem:[%s4102] ss:$4 sm:$0xff] %v3570
    %4286 = vst [vmem:[%s4104] ss:$4 sm:$0xff] %v3571
    %4287 = vst [vmem:[%s4106] ss:$4 sm:$0xff] %v3572
    %v4288 = vld.sshfl [vmem:[#allocation1] sm:$0xff pattern:$0x73625140]
    %v4289 = vld.sshfl [vmem:[#allocation1 + $0x20] sm:$0xff pattern:$0x73625140]
    %4290 = vst [vmem:[#allocation1] ss:$4 sm:$0xff] %v3894
    %4291 = vst [vmem:[%s4094] ss:$4 sm:$0xff] %v3896
    %4292 = vst [vmem:[%s4096] ss:$4 sm:$0xff] %v3898
    %4293 = vst [vmem:[%s4098] ss:$4 sm:$0xff] %v3900
    %4294 = vst [vmem:[%s4100] ss:$4 sm:$0xff] %v3902
    %4295 = vst [vmem:[%s4102] ss:$4 sm:$0xff] %v3904
    %4296 = vst [vmem:[%s4104] ss:$4 sm:$0xff] %v3906
    %4297 = vst [vmem:[%s4106] ss:$4 sm:$0xff] %v3908
    %v4298 = vld.sshfl [vmem:[#allocation1] sm:$0xff pattern:$0x73625140]
    %v4299 = vld.sshfl [vmem:[#allocation1 + $0x20] sm:$0xff pattern:$0x73625140]
    %4300 = vst [vmem:[#allocation1] ss:$4 sm:$0xff] %v3573
    %4301 = vst [vmem:[%s4094] ss:$4 sm:$0xff] %v3574
    %4302 = vst [vmem:[%s4096] ss:$4 sm:$0xff] %v3575
    %4303 = vst [vmem:[%s4098] ss:$4 sm:$0xff] %v3576
    %4304 = vst [vmem:[%s4100] ss:$4 sm:$0xff] %v3577
    %4305 = vst [vmem:[%s4102] ss:$4 sm:$0xff] %v3578
    %4306 = vst [vmem:[%s4104] ss:$4 sm:$0xff] %v3579
    %4307 = vst [vmem:[%s4106] ss:$4 sm:$0xff] %v3580
    %v4308 = vld.sshfl [vmem:[#allocation1] sm:$0xff pattern:$0x73625140]
    %v4309 = vld.sshfl [vmem:[#allocation1 + $0x20] sm:$0xff pattern:$0x73625140]
    %4310 = vst [vmem:[#allocation1] ss:$4 sm:$0xff] %v3910
    %4311 = vst [vmem:[%s4094] ss:$4 sm:$0xff] %v3912
    %4312 = vst [vmem:[%s4096] ss:$4 sm:$0xff] %v3914
    %4313 = vst [vmem:[%s4098] ss:$4 sm:$0xff] %v3916
    %4314 = vst [vmem:[%s4100] ss:$4 sm:$0xff] %v3918
    %4315 = vst [vmem:[%s4102] ss:$4 sm:$0xff] %v3920
    %4316 = vst [vmem:[%s4104] ss:$4 sm:$0xff] %v3922
    %4317 = vst [vmem:[%s4106] ss:$4 sm:$0xff] %v3924
    %v4318 = vld.sshfl [vmem:[#allocation1] sm:$0xff pattern:$0x73625140]
    %v4319 = vld.sshfl [vmem:[#allocation1 + $0x20] sm:$0xff pattern:$0x73625140]
    %4320 = vst [vmem:[#allocation1] ss:$4 sm:$0xff] %v3581
    %4321 = vst [vmem:[%s4094] ss:$4 sm:$0xff] %v3582
    %4322 = vst [vmem:[%s4096] ss:$4 sm:$0xff] %v3583
    %4323 = vst [vmem:[%s4098] ss:$4 sm:$0xff] %v3584
    %4324 = vst [vmem:[%s4100] ss:$4 sm:$0xff] %v3585
    %4325 = vst [vmem:[%s4102] ss:$4 sm:$0xff] %v3586
    %4326 = vst [vmem:[%s4104] ss:$4 sm:$0xff] %v3587
    %4327 = vst [vmem:[%s4106] ss:$4 sm:$0xff] %v3588
    %v4328 = vld.sshfl [vmem:[#allocation1] sm:$0xff pattern:$0x73625140]
    %v4329 = vld.sshfl [vmem:[#allocation1 + $0x20] sm:$0xff pattern:$0x73625140]
    %4330 = vst [vmem:[#allocation1] ss:$4 sm:$0xff] %v3926
    %4331 = vst [vmem:[%s4094] ss:$4 sm:$0xff] %v3928
    %4332 = vst [vmem:[%s4096] ss:$4 sm:$0xff] %v3930
    %4333 = vst [vmem:[%s4098] ss:$4 sm:$0xff] %v3932
    %4334 = vst [vmem:[%s4100] ss:$4 sm:$0xff] %v3934
    %4335 = vst [vmem:[%s4102] ss:$4 sm:$0xff] %v3936
    %4336 = vst [vmem:[%s4104] ss:$4 sm:$0xff] %v3938
    %4337 = vst [vmem:[%s4106] ss:$4 sm:$0xff] %v3940
    %v4338 = vld.sshfl [vmem:[#allocation1] sm:$0xff pattern:$0x73625140]
    %v4339 = vld.sshfl [vmem:[#allocation1 + $0x20] sm:$0xff pattern:$0x73625140]
    %4340 = vst [vmem:[#allocation1] ss:$4 sm:$0xff] %v3589
    %4341 = vst [vmem:[%s4094] ss:$4 sm:$0xff] %v3590
    %4342 = vst [vmem:[%s4096] ss:$4 sm:$0xff] %v3591
    %4343 = vst [vmem:[%s4098] ss:$4 sm:$0xff] %v3592
    %4344 = vst [vmem:[%s4100] ss:$4 sm:$0xff] %v3593
    %4345 = vst [vmem:[%s4102] ss:$4 sm:$0xff] %v3594
    %4346 = vst [vmem:[%s4104] ss:$4 sm:$0xff] %v3595
    %4347 = vst [vmem:[%s4106] ss:$4 sm:$0xff] %v3596
    %v4348 = vld.sshfl [vmem:[#allocation1] sm:$0xff pattern:$0x73625140]
    %v4349 = vld.sshfl [vmem:[#allocation1 + $0x20] sm:$0xff pattern:$0x73625140]
    %4350 = vst [vmem:[#allocation1] ss:$4 sm:$0xff] %v3942
    %4351 = vst [vmem:[%s4094] ss:$4 sm:$0xff] %v3944
    %4352 = vst [vmem:[%s4096] ss:$4 sm:$0xff] %v3946
    %4353 = vst [vmem:[%s4098] ss:$4 sm:$0xff] %v3948
    %4354 = vst [vmem:[%s4100] ss:$4 sm:$0xff] %v3950
    %4355 = vst [vmem:[%s4102] ss:$4 sm:$0xff] %v3952
    %4356 = vst [vmem:[%s4104] ss:$4 sm:$0xff] %v3954
    %4357 = vst [vmem:[%s4106] ss:$4 sm:$0xff] %v3956
    %v4358 = vld.sshfl [vmem:[#allocation1] sm:$0xff pattern:$0x73625140]
    %v4359 = vld.sshfl [vmem:[#allocation1 + $0x20] sm:$0xff pattern:$0x73625140]
    %4360 = vst [vmem:[#allocation1] ss:$4 sm:$0xff] %v3597
    %4361 = vst [vmem:[%s4094] ss:$4 sm:$0xff] %v3598
    %4362 = vst [vmem:[%s4096] ss:$4 sm:$0xff] %v3599
    %4363 = vst [vmem:[%s4098] ss:$4 sm:$0xff] %v3600
    %4364 = vst [vmem:[%s4100] ss:$4 sm:$0xff] %v3601
    %4365 = vst [vmem:[%s4102] ss:$4 sm:$0xff] %v3602
    %4366 = vst [vmem:[%s4104] ss:$4 sm:$0xff] %v3603
    %4367 = vst [vmem:[%s4106] ss:$4 sm:$0xff] %v3604
    %v4368 = vld.sshfl [vmem:[#allocation1] sm:$0xff pattern:$0x73625140]
    %v4369 = vld.sshfl [vmem:[#allocation1 + $0x20] sm:$0xff pattern:$0x73625140]
    %4370 = vst [vmem:[#allocation1] ss:$4 sm:$0xff] %v3958
    %4371 = vst [vmem:[%s4094] ss:$4 sm:$0xff] %v3960
    %4372 = vst [vmem:[%s4096] ss:$4 sm:$0xff] %v3962
    %4373 = vst [vmem:[%s4098] ss:$4 sm:$0xff] %v3964
    %4374 = vst [vmem:[%s4100] ss:$4 sm:$0xff] %v3966
    %4375 = vst [vmem:[%s4102] ss:$4 sm:$0xff] %v3968
    %4376 = vst [vmem:[%s4104] ss:$4 sm:$0xff] %v3970
    %4377 = vst [vmem:[%s4106] ss:$4 sm:$0xff] %v3972
    %v4378 = vld.sshfl [vmem:[#allocation1] sm:$0xff pattern:$0x73625140]
    %v4379 = vld.sshfl [vmem:[#allocation1 + $0x20] sm:$0xff pattern:$0x73625140]
    %4380 = vst [vmem:[#allocation1] ss:$4 sm:$0xff] %v3605
    %4381 = vst [vmem:[%s4094] ss:$4 sm:$0xff] %v3606
    %4382 = vst [vmem:[%s4096] ss:$4 sm:$0xff] %v3607
    %4383 = vst [vmem:[%s4098] ss:$4 sm:$0xff] %v3608
    %4384 = vst [vmem:[%s4100] ss:$4 sm:$0xff] %v3609
    %4385 = vst [vmem:[%s4102] ss:$4 sm:$0xff] %v3610
    %4386 = vst [vmem:[%s4104] ss:$4 sm:$0xff] %v3611
    %4387 = vst [vmem:[%s4106] ss:$4 sm:$0xff] %v3612
    %v4388 = vld.sshfl [vmem:[#allocation1] sm:$0xff pattern:$0x73625140]
    %v4389 = vld.sshfl [vmem:[#allocation1 + $0x20] sm:$0xff pattern:$0x73625140]
    %4390 = vst [vmem:[#allocation1] ss:$4 sm:$0xff] %v3974
    %4391 = vst [vmem:[%s4094] ss:$4 sm:$0xff] %v3976
    %4392 = vst [vmem:[%s4096] ss:$4 sm:$0xff] %v3978
    %4393 = vst [vmem:[%s4098] ss:$4 sm:$0xff] %v3980
    %4394 = vst [vmem:[%s4100] ss:$4 sm:$0xff] %v3982
    %4395 = vst [vmem:[%s4102] ss:$4 sm:$0xff] %v3984
    %4396 = vst [vmem:[%s4104] ss:$4 sm:$0xff] %v3986
    %4397 = vst [vmem:[%s4106] ss:$4 sm:$0xff] %v3988
    %v4398 = vld.sshfl [vmem:[#allocation1] sm:$0xff pattern:$0x73625140]
    %v4399 = vld.sshfl [vmem:[#allocation1 + $0x20] sm:$0xff pattern:$0x73625140]
    %4400 = vst [vmem:[#allocation1] ss:$4 sm:$0xff] %v3613
    %4401 = vst [vmem:[%s4094] ss:$4 sm:$0xff] %v3614
    %4402 = vst [vmem:[%s4096] ss:$4 sm:$0xff] %v3615
    %4403 = vst [vmem:[%s4098] ss:$4 sm:$0xff] %v3616
    %4404 = vst [vmem:[%s4100] ss:$4 sm:$0xff] %v3617
    %4405 = vst [vmem:[%s4102] ss:$4 sm:$0xff] %v3618
    %4406 = vst [vmem:[%s4104] ss:$4 sm:$0xff] %v3619
    %4407 = vst [vmem:[%s4106] ss:$4 sm:$0xff] %v3620
    %v4408 = vld.sshfl [vmem:[#allocation1] sm:$0xff pattern:$0x73625140]
    %v4409 = vld.sshfl [vmem:[#allocation1 + $0x20] sm:$0xff pattern:$0x73625140]
    %4410 = vst [vmem:[#allocation1] ss:$4 sm:$0xff] %v3990
    %4411 = vst [vmem:[%s4094] ss:$4 sm:$0xff] %v3992
    %4412 = vst [vmem:[%s4096] ss:$4 sm:$0xff] %v3994
    %4413 = vst [vmem:[%s4098] ss:$4 sm:$0xff] %v3996
    %4414 = vst [vmem:[%s4100] ss:$4 sm:$0xff] %v3998
    %4415 = vst [vmem:[%s4102] ss:$4 sm:$0xff] %v4000
    %4416 = vst [vmem:[%s4104] ss:$4 sm:$0xff] %v4002
    %4417 = vst [vmem:[%s4106] ss:$4 sm:$0xff] %v4004
    %v4418 = vld.sshfl [vmem:[#allocation1] sm:$0xff pattern:$0x73625140]
    %v4419 = vld.sshfl [vmem:[#allocation1 + $0x20] sm:$0xff pattern:$0x73625140]
    %s4484 = scalar_lea.vmem [#allocation5], 24
    %4485 = vst.msk [vmem:[%s4484 + $0x1] sm:$0xff] %vm4005, %v4108
    %4486 = vst.msk [vmem:[%s4484 + $0x9] sm:$0xff] %vm4005, %v4109
    %4487 = vst.msk [vmem:[%s4484 + $0x19] sm:$0xff] %vm4005, %v4118
    %4488 = vst.msk [vmem:[%s4484 + $0x21] sm:$0xff] %vm4005, %v4119
    %4489 = vst.msk [vmem:[%s4484 + $0x31] sm:$0xff] %vm4005, %v4128
    %4490 = vst.msk [vmem:[%s4484 + $0x39] sm:$0xff] %vm4005, %v4129
    %4491 = vst.msk [vmem:[%s4484 + $0x49] sm:$0xff] %vm4005, %v4138
    %4492 = vst.msk [vmem:[%s4484 + $0x51] sm:$0xff] %vm4005, %v4139
    %4493 = vst.msk [vmem:[%s4484 + $0x61] sm:$0xff] %vm4005, %v4148
    %4494 = vst.msk [vmem:[%s4484 + $0x69] sm:$0xff] %vm4005, %v4149
    %4495 = vst.msk [vmem:[%s4484 + $0x79] sm:$0xff] %vm4005, %v4158
    %4496 = vst.msk [vmem:[%s4484 + $0x81] sm:$0xff] %vm4005, %v4159
    %4497 = vst.msk [vmem:[%s4484 + $0x91] sm:$0xff] %vm4005, %v4168
    %4498 = vst.msk [vmem:[%s4484 + $0x99] sm:$0xff] %vm4005, %v4169
    %4499 = vst.msk [vmem:[%s4484 + $0xa9] sm:$0xff] %vm4005, %v4178
    %4500 = vst.msk [vmem:[%s4484 + $0xb1] sm:$0xff] %vm4005, %v4179
    %4501 = vst.msk [vmem:[%s4484 + $0xc1] sm:$0xff] %vm4005, %v4188
    %4502 = vst.msk [vmem:[%s4484 + $0xc9] sm:$0xff] %vm4005, %v4189
    %4503 = vst.msk [vmem:[%s4484 + $0xd9] sm:$0xff] %vm4005, %v4198
    %4504 = vst.msk [vmem:[%s4484 + $0xe1] sm:$0xff] %vm4005, %v4199
    %4505 = vst.msk [vmem:[%s4484 + $0xf1] sm:$0xff] %vm4005, %v4208
    %4506 = vst.msk [vmem:[%s4484 + $0xf9] sm:$0xff] %vm4005, %v4209
    %4507 = vst.msk [vmem:[%s4484 + $0x109] sm:$0xff] %vm4005, %v4218
    %4508 = vst.msk [vmem:[%s4484 + $0x111] sm:$0xff] %vm4005, %v4219
    %4509 = vst.msk [vmem:[%s4484 + $0x121] sm:$0xff] %vm4005, %v4228
    %4510 = vst.msk [vmem:[%s4484 + $0x129] sm:$0xff] %vm4005, %v4229
    %4511 = vst.msk [vmem:[%s4484 + $0x139] sm:$0xff] %vm4005, %v4238
    %4512 = vst.msk [vmem:[%s4484 + $0x141] sm:$0xff] %vm4005, %v4239
    %4513 = vst.msk [vmem:[%s4484 + $0x151] sm:$0xff] %vm4005, %v4248
    %4514 = vst.msk [vmem:[%s4484 + $0x159] sm:$0xff] %vm4005, %v4249
    %4515 = vst.msk [vmem:[%s4484 + $0x169] sm:$0xff] %vm4005, %v4258
    %4516 = vst.msk [vmem:[%s4484 + $0x171] sm:$0xff] %vm4005, %v4259
    %4517 = vst.msk [vmem:[%s4484 + $0x1b1] sm:$0xff] %vm4005, %v4268
    %4518 = vst.msk [vmem:[%s4484 + $0x1b9] sm:$0xff] %vm4005, %v4269
    %4519 = vst.msk [vmem:[%s4484 + $0x1c9] sm:$0xff] %vm4005, %v4278
    %4520 = vst.msk [vmem:[%s4484 + $0x1d1] sm:$0xff] %vm4005, %v4279
    %4521 = vst.msk [vmem:[%s4484 + $0x1e1] sm:$0xff] %vm4005, %v4288
    %4522 = vst.msk [vmem:[%s4484 + $0x1e9] sm:$0xff] %vm4005, %v4289
    %4523 = vst.msk [vmem:[%s4484 + $0x1f9] sm:$0xff] %vm4005, %v4298
    %4524 = vst.msk [vmem:[%s4484 + $0x201] sm:$0xff] %vm4005, %v4299
    %4525 = vst.msk [vmem:[%s4484 + $0x211] sm:$0xff] %vm4005, %v4308
    %4526 = vst.msk [vmem:[%s4484 + $0x219] sm:$0xff] %vm4005, %v4309
    %4527 = vst.msk [vmem:[%s4484 + $0x229] sm:$0xff] %vm4005, %v4318
    %4528 = vst.msk [vmem:[%s4484 + $0x231] sm:$0xff] %vm4005, %v4319
    %4529 = vst.msk [vmem:[%s4484 + $0x241] sm:$0xff] %vm4005, %v4328
    %4530 = vst.msk [vmem:[%s4484 + $0x249] sm:$0xff] %vm4005, %v4329
    %4531 = vst.msk [vmem:[%s4484 + $0x259] sm:$0xff] %vm4005, %v4338
    %4532 = vst.msk [vmem:[%s4484 + $0x261] sm:$0xff] %vm4005, %v4339
    %4533 = vst.msk [vmem:[%s4484 + $0x271] sm:$0xff] %vm4005, %v4348
    %4534 = vst.msk [vmem:[%s4484 + $0x279] sm:$0xff] %vm4005, %v4349
    %4535 = vst.msk [vmem:[%s4484 + $0x289] sm:$0xff] %vm4005, %v4358
    %4536 = vst.msk [vmem:[%s4484 + $0x291] sm:$0xff] %vm4005, %v4359
    %4537 = vst.msk [vmem:[%s4484 + $0x2a1] sm:$0xff] %vm4005, %v4368
    %4538 = vst.msk [vmem:[%s4484 + $0x2a9] sm:$0xff] %vm4005, %v4369
    %4539 = vst.msk [vmem:[%s4484 + $0x2b9] sm:$0xff] %vm4005, %v4378
    %4540 = vst.msk [vmem:[%s4484 + $0x2c1] sm:$0xff] %vm4005, %v4379
    %4541 = vst.msk [vmem:[%s4484 + $0x2d1] sm:$0xff] %vm4005, %v4388
    %4542 = vst.msk [vmem:[%s4484 + $0x2d9] sm:$0xff] %vm4005, %v4389
    %4543 = vst.msk [vmem:[%s4484 + $0x2e9] sm:$0xff] %vm4005, %v4398
    %4544 = vst.msk [vmem:[%s4484 + $0x2f1] sm:$0xff] %vm4005, %v4399
    %4545 = vst.msk [vmem:[%s4484 + $0x301] sm:$0xff] %vm4005, %v4408
    %4546 = vst.msk [vmem:[%s4484 + $0x309] sm:$0xff] %vm4005, %v4409
    %4547 = vst.msk [vmem:[%s4484 + $0x319] sm:$0xff] %vm4005, %v4418
    %4548 = vst.msk [vmem:[%s4484 + $0x321] sm:$0xff] %vm4005, %v4419
    %v4549 = vld [vmem:[#allocation5] sm:$0xff]
    %v4550 = vld [vmem:[#allocation5 + $0x8] sm:$0xff]
    %v4551 = vld [vmem:[#allocation5 + $0x10] sm:$0x3]
    %v4552 = vld [vmem:[#allocation5 + $0x18] sm:$0xff]
    %v4553 = vld [vmem:[#allocation5 + $0x20] sm:$0xff]
    %v4554 = vld [vmem:[#allocation5 + $0x28] sm:$0x3]
    %v4555 = vld [vmem:[#allocation5 + $0x30] sm:$0xff]
    %v4556 = vld [vmem:[#allocation5 + $0x38] sm:$0xff]
    %v4557 = vld [vmem:[#allocation5 + $0x40] sm:$0x3]
    %v4558 = vld [vmem:[#allocation5 + $0x48] sm:$0xff]
    %v4559 = vld [vmem:[#allocation5 + $0x50] sm:$0xff]
    %v4560 = vld [vmem:[#allocation5 + $0x58] sm:$0x3]
    %v4561 = vld [vmem:[#allocation5 + $0x60] sm:$0xff]
    %v4562 = vld [vmem:[#allocation5 + $0x68] sm:$0xff]
    %v4563 = vld [vmem:[#allocation5 + $0x70] sm:$0x3]
    %v4564 = vld [vmem:[#allocation5 + $0x78] sm:$0xff]
    %v4565 = vld [vmem:[#allocation5 + $0x80] sm:$0xff]
    %v4566 = vld [vmem:[#allocation5 + $0x88] sm:$0x3]
    %v4567 = vld [vmem:[#allocation5 + $0x90] sm:$0xff]
    %v4568 = vld [vmem:[#allocation5 + $0x98] sm:$0xff]
    %v4569 = vld [vmem:[#allocation5 + $0xa0] sm:$0x3]
    %v4570 = vld [vmem:[#allocation5 + $0xa8] sm:$0xff]
    %v4571 = vld [vmem:[#allocation5 + $0xb0] sm:$0xff]
    %v4572 = vld [vmem:[#allocation5 + $0xb8] sm:$0x3]
    %v4573 = vld [vmem:[#allocation5 + $0xc0] sm:$0xff]
    %v4574 = vld [vmem:[#allocation5 + $0xc8] sm:$0xff]
    %v4575 = vld [vmem:[#allocation5 + $0xd0] sm:$0x3]
    %v4576 = vld [vmem:[#allocation5 + $0xd8] sm:$0xff]
    %v4577 = vld [vmem:[#allocation5 + $0xe0] sm:$0xff]
    %v4578 = vld [vmem:[#allocation5 + $0xe8] sm:$0x3]
    %v4579 = vld [vmem:[#allocation5 + $0xf0] sm:$0xff]
    %v4580 = vld [vmem:[#allocation5 + $0xf8] sm:$0xff]
    %v4581 = vld [vmem:[#allocation5 + $0x100] sm:$0x3]
    %v4582 = vld [vmem:[#allocation5 + $0x108] sm:$0xff]
    %v4583 = vld [vmem:[#allocation5 + $0x110] sm:$0xff]
    %v4584 = vld [vmem:[#allocation5 + $0x118] sm:$0x3]
    %v4585 = vld [vmem:[#allocation5 + $0x120] sm:$0xff]
    %v4586 = vld [vmem:[#allocation5 + $0x128] sm:$0xff]
    %v4587 = vld [vmem:[#allocation5 + $0x130] sm:$0x3]
    %v4588 = vld [vmem:[#allocation5 + $0x138] sm:$0xff]
    %v4589 = vld [vmem:[#allocation5 + $0x140] sm:$0xff]
    %v4590 = vld [vmem:[#allocation5 + $0x148] sm:$0x3]
    %v4591 = vld [vmem:[#allocation5 + $0x150] sm:$0xff]
    %v4592 = vld [vmem:[#allocation5 + $0x158] sm:$0xff]
    %v4593 = vld [vmem:[#allocation5 + $0x160] sm:$0x3]
    %v4594 = vld [vmem:[#allocation5 + $0x168] sm:$0xff]
    %v4595 = vld [vmem:[#allocation5 + $0x170] sm:$0xff]
    %v4596 = vld [vmem:[#allocation5 + $0x178] sm:$0x3]
    %v4597 = vld [vmem:[#allocation5 + $0x180] sm:$0xff]
    %v4598 = vld [vmem:[#allocation5 + $0x188] sm:$0xff]
    %v4599 = vld [vmem:[#allocation5 + $0x190] sm:$0x3]
    %v4600 = vld [vmem:[#allocation5 + $0x198] sm:$0xff]
    %v4601 = vld [vmem:[#allocation5 + $0x1a0] sm:$0xff]
    %v4602 = vld [vmem:[#allocation5 + $0x1a8] sm:$0x3]
    %v4603 = vld [vmem:[#allocation5 + $0x1b0] sm:$0xff]
    %v4604 = vld [vmem:[#allocation5 + $0x1b8] sm:$0xff]
    %v4605 = vld [vmem:[#allocation5 + $0x1c0] sm:$0x3]
    %v4606 = vld [vmem:[#allocation5 + $0x1c8] sm:$0xff]
    %v4607 = vld [vmem:[#allocation5 + $0x1d0] sm:$0xff]
    %v4608 = vld [vmem:[#allocation5 + $0x1d8] sm:$0x3]
    %v4609 = vld [vmem:[#allocation5 + $0x1e0] sm:$0xff]
    %v4610 = vld [vmem:[#allocation5 + $0x1e8] sm:$0xff]
    %v4611 = vld [vmem:[#allocation5 + $0x1f0] sm:$0x3]
    %v4612 = vld [vmem:[#allocation5 + $0x1f8] sm:$0xff]
    %v4613 = vld [vmem:[#allocation5 + $0x200] sm:$0xff]
    %v4614 = vld [vmem:[#allocation5 + $0x208] sm:$0x3]
    %v4615 = vld [vmem:[#allocation5 + $0x210] sm:$0xff]
    %v4616 = vld [vmem:[#allocation5 + $0x218] sm:$0xff]
    %v4617 = vld [vmem:[#allocation5 + $0x220] sm:$0x3]
    %v4618 = vld [vmem:[#allocation5 + $0x228] sm:$0xff]
    %v4619 = vld [vmem:[#allocation5 + $0x230] sm:$0xff]
    %v4620 = vld [vmem:[#allocation5 + $0x238] sm:$0x3]
    %v4621 = vld [vmem:[#allocation5 + $0x240] sm:$0xff]
    %v4622 = vld [vmem:[#allocation5 + $0x248] sm:$0xff]
    %v4623 = vld [vmem:[#allocation5 + $0x250] sm:$0x3]
    %v4624 = vld [vmem:[#allocation5 + $0x258] sm:$0xff]
    %v4625 = vld [vmem:[#allocation5 + $0x260] sm:$0xff]
    %v4626 = vld [vmem:[#allocation5 + $0x268] sm:$0x3]
    %v4627 = vld [vmem:[#allocation5 + $0x270] sm:$0xff]
    %v4628 = vld [vmem:[#allocation5 + $0x278] sm:$0xff]
    %v4629 = vld [vmem:[#allocation5 + $0x280] sm:$0x3]
    %v4630 = vld [vmem:[#allocation5 + $0x288] sm:$0xff]
    %v4631 = vld [vmem:[#allocation5 + $0x290] sm:$0xff]
    %v4632 = vld [vmem:[#allocation5 + $0x298] sm:$0x3]
    %v4633 = vld [vmem:[#allocation5 + $0x2a0] sm:$0xff]
    %v4634 = vld [vmem:[#allocation5 + $0x2a8] sm:$0xff]
    %v4635 = vld [vmem:[#allocation5 + $0x2b0] sm:$0x3]
    %v4636 = vld [vmem:[#allocation5 + $0x2b8] sm:$0xff]
    %v4637 = vld [vmem:[#allocation5 + $0x2c0] sm:$0xff]
    %v4638 = vld [vmem:[#allocation5 + $0x2c8] sm:$0x3]
    %v4639 = vld [vmem:[#allocation5 + $0x2d0] sm:$0xff]
    %v4640 = vld [vmem:[#allocation5 + $0x2d8] sm:$0xff]
    %v4641 = vld [vmem:[#allocation5 + $0x2e0] sm:$0x3]
    %v4642 = vld [vmem:[#allocation5 + $0x2e8] sm:$0xff]
    %v4643 = vld [vmem:[#allocation5 + $0x2f0] sm:$0xff]
    %v4644 = vld [vmem:[#allocation5 + $0x2f8] sm:$0x3]
    %v4645 = vld [vmem:[#allocation5 + $0x300] sm:$0xff]
    %v4646 = vld [vmem:[#allocation5 + $0x308] sm:$0xff]
    %v4647 = vld [vmem:[#allocation5 + $0x310] sm:$0x3]
    %v4648 = vld [vmem:[#allocation5 + $0x318] sm:$0xff]
    %v4649 = vld [vmem:[#allocation5 + $0x320] sm:$0xff]
    %v4650 = vld [vmem:[#allocation5 + $0x328] sm:$0x3]
    %v4651 = vld [vmem:[#allocation5 + $0x330] sm:$0xff]
    %v4652 = vld [vmem:[#allocation5 + $0x338] sm:$0xff]
    %v4653 = vld [vmem:[#allocation5 + $0x340] sm:$0x3]
    %v4654 = vld [vmem:[#allocation5 + $0x348] sm:$0xff]
    %v4655 = vld [vmem:[#allocation5 + $0x350] sm:$0xff]
    %v4656 = vld [vmem:[#allocation5 + $0x358] sm:$0x3]
    %v4753 = vrot.slane %v4549, 1
    %v4754 = vrot.slane %v4550, 1
    %v4755 = vsel %vm1960, %v4753, %v4754
    %v4756 = vrot.slane %v4551, 1
    %v4757 = vsel %vm1960, %v4754, %v4756
    %v4758 = vrot.slane %v4552, 1
    %v4759 = vrot.slane %v4553, 1
    %v4760 = vsel %vm1960, %v4758, %v4759
    %v4761 = vrot.slane %v4554, 1
    %v4762 = vsel %vm1960, %v4759, %v4761
    %v4763 = vrot.slane %v4555, 1
    %v4764 = vrot.slane %v4556, 1
    %v4765 = vsel %vm1960, %v4763, %v4764
    %v4766 = vrot.slane %v4557, 1
    %v4767 = vsel %vm1960, %v4764, %v4766
    %v4768 = vrot.slane %v4558, 1
    %v4769 = vrot.slane %v4559, 1
    %v4770 = vsel %vm1960, %v4768, %v4769
    %v4771 = vrot.slane %v4560, 1
    %v4772 = vsel %vm1960, %v4769, %v4771
    %v4773 = vrot.slane %v4561, 1
    %v4774 = vrot.slane %v4562, 1
    %v4775 = vsel %vm1960, %v4773, %v4774
    %v4776 = vrot.slane %v4563, 1
    %v4777 = vsel %vm1960, %v4774, %v4776
    %v4778 = vrot.slane %v4564, 1
    %v4779 = vrot.slane %v4565, 1
    %v4780 = vsel %vm1960, %v4778, %v4779
    %v4781 = vrot.slane %v4566, 1
    %v4782 = vsel %vm1960, %v4779, %v4781
    %v4783 = vrot.slane %v4567, 1
    %v4784 = vrot.slane %v4568, 1
    %v4785 = vsel %vm1960, %v4783, %v4784
    %v4786 = vrot.slane %v4569, 1
    %v4787 = vsel %vm1960, %v4784, %v4786
    %v4788 = vrot.slane %v4570, 1
    %v4789 = vrot.slane %v4571, 1
    %v4790 = vsel %vm1960, %v4788, %v4789
    %v4791 = vrot.slane %v4572, 1
    %v4792 = vsel %vm1960, %v4789, %v4791
    %v4793 = vrot.slane %v4573, 1
    %v4794 = vrot.slane %v4574, 1
    %v4795 = vsel %vm1960, %v4793, %v4794
    %v4796 = vrot.slane %v4575, 1
    %v4797 = vsel %vm1960, %v4794, %v4796
    %v4798 = vrot.slane %v4576, 1
    %v4799 = vrot.slane %v4577, 1
    %v4800 = vsel %vm1960, %v4798, %v4799
    %v4801 = vrot.slane %v4578, 1
    %v4802 = vsel %vm1960, %v4799, %v4801
    %v4803 = vrot.slane %v4579, 1
    %v4804 = vrot.slane %v4580, 1
    %v4805 = vsel %vm1960, %v4803, %v4804
    %v4806 = vrot.slane %v4581, 1
    %v4807 = vsel %vm1960, %v4804, %v4806
    %v4808 = vrot.slane %v4582, 1
    %v4809 = vrot.slane %v4583, 1
    %v4810 = vsel %vm1960, %v4808, %v4809
    %v4811 = vrot.slane %v4584, 1
    %v4812 = vsel %vm1960, %v4809, %v4811
    %v4813 = vrot.slane %v4585, 1
    %v4814 = vrot.slane %v4586, 1
    %v4815 = vsel %vm1960, %v4813, %v4814
    %v4816 = vrot.slane %v4587, 1
    %v4817 = vsel %vm1960, %v4814, %v4816
    %v4818 = vrot.slane %v4588, 1
    %v4819 = vrot.slane %v4589, 1
    %v4820 = vsel %vm1960, %v4818, %v4819
    %v4821 = vrot.slane %v4590, 1
    %v4822 = vsel %vm1960, %v4819, %v4821
    %v4823 = vrot.slane %v4591, 1
    %v4824 = vrot.slane %v4592, 1
    %v4825 = vsel %vm1960, %v4823, %v4824
    %v4826 = vrot.slane %v4593, 1
    %v4827 = vsel %vm1960, %v4824, %v4826
    %v4828 = vrot.slane %v4594, 1
    %v4829 = vrot.slane %v4595, 1
    %v4830 = vsel %vm1960, %v4828, %v4829
    %v4831 = vrot.slane %v4596, 1
    %v4832 = vsel %vm1960, %v4829, %v4831
    %v4833 = vrot.slane %v4603, 1
    %v4834 = vrot.slane %v4604, 1
    %v4835 = vsel %vm1960, %v4833, %v4834
    %v4836 = vrot.slane %v4605, 1
    %v4837 = vsel %vm1960, %v4834, %v4836
    %v4838 = vrot.slane %v4606, 1
    %v4839 = vrot.slane %v4607, 1
    %v4840 = vsel %vm1960, %v4838, %v4839
    %v4841 = vrot.slane %v4608, 1
    %v4842 = vsel %vm1960, %v4839, %v4841
    %v4843 = vrot.slane %v4609, 1
    %v4844 = vrot.slane %v4610, 1
    %v4845 = vsel %vm1960, %v4843, %v4844
    %v4846 = vrot.slane %v4611, 1
    %v4847 = vsel %vm1960, %v4844, %v4846
    %v4848 = vrot.slane %v4612, 1
    %v4849 = vrot.slane %v4613, 1
    %v4850 = vsel %vm1960, %v4848, %v4849
    %v4851 = vrot.slane %v4614, 1
    %v4852 = vsel %vm1960, %v4849, %v4851
    %v4853 = vrot.slane %v4615, 1
    %v4854 = vrot.slane %v4616, 1
    %v4855 = vsel %vm1960, %v4853, %v4854
    %v4856 = vrot.slane %v4617, 1
    %v4857 = vsel %vm1960, %v4854, %v4856
    %v4858 = vrot.slane %v4618, 1
    %v4859 = vrot.slane %v4619, 1
    %v4860 = vsel %vm1960, %v4858, %v4859
    %v4861 = vrot.slane %v4620, 1
    %v4862 = vsel %vm1960, %v4859, %v4861
    %v4863 = vrot.slane %v4621, 1
    %v4864 = vrot.slane %v4622, 1
    %v4865 = vsel %vm1960, %v4863, %v4864
    %v4866 = vrot.slane %v4623, 1
    %v4867 = vsel %vm1960, %v4864, %v4866
    %v4868 = vrot.slane %v4624, 1
    %v4869 = vrot.slane %v4625, 1
    %v4870 = vsel %vm1960, %v4868, %v4869
    %v4871 = vrot.slane %v4626, 1
    %v4872 = vsel %vm1960, %v4869, %v4871
    %v4873 = vrot.slane %v4627, 1
    %v4874 = vrot.slane %v4628, 1
    %v4875 = vsel %vm1960, %v4873, %v4874
    %v4876 = vrot.slane %v4629, 1
    %v4877 = vsel %vm1960, %v4874, %v4876
    %v4878 = vrot.slane %v4630, 1
    %v4879 = vrot.slane %v4631, 1
    %v4880 = vsel %vm1960, %v4878, %v4879
    %v4881 = vrot.slane %v4632, 1
    %v4882 = vsel %vm1960, %v4879, %v4881
    %v4883 = vrot.slane %v4633, 1
    %v4884 = vrot.slane %v4634, 1
    %v4885 = vsel %vm1960, %v4883, %v4884
    %v4886 = vrot.slane %v4635, 1
    %v4887 = vsel %vm1960, %v4884, %v4886
    %v4888 = vrot.slane %v4636, 1
    %v4889 = vrot.slane %v4637, 1
    %v4890 = vsel %vm1960, %v4888, %v4889
    %v4891 = vrot.slane %v4638, 1
    %v4892 = vsel %vm1960, %v4889, %v4891
    %v4893 = vrot.slane %v4639, 1
    %v4894 = vrot.slane %v4640, 1
    %v4895 = vsel %vm1960, %v4893, %v4894
    %v4896 = vrot.slane %v4641, 1
    %v4897 = vsel %vm1960, %v4894, %v4896
    %v4898 = vrot.slane %v4642, 1
    %v4899 = vrot.slane %v4643, 1
    %v4900 = vsel %vm1960, %v4898, %v4899
    %v4901 = vrot.slane %v4644, 1
    %v4902 = vsel %vm1960, %v4899, %v4901
    %v4903 = vrot.slane %v4645, 1
    %v4904 = vrot.slane %v4646, 1
    %v4905 = vsel %vm1960, %v4903, %v4904
    %v4906 = vrot.slane %v4647, 1
    %v4907 = vsel %vm1960, %v4904, %v4906
    %v4908 = vrot.slane %v4648, 1
    %v4909 = vrot.slane %v4649, 1
    %v4910 = vsel %vm1960, %v4908, %v4909
    %v4911 = vrot.slane %v4650, 1
    %v4912 = vsel %vm1960, %v4909, %v4911
    %4913 = vrot.lane.b32.xlu0 %v4755, 8
    %v4914 = vpop.permute.xlu0 %4913
    %4915 = vrot.lane.b32.xlu0 %v4757, 8
    %v4916 = vpop.permute.xlu0 %4915
    %4917 = vrot.lane.b32.xlu0 %v4760, 8
    %v4918 = vpop.permute.xlu0 %4917
    %4919 = vrot.lane.b32.xlu0 %v4762, 8
    %v4920 = vpop.permute.xlu0 %4919
    %4921 = vrot.lane.b32.xlu0 %v4765, 8
    %v4922 = vpop.permute.xlu0 %4921
    %4923 = vrot.lane.b32.xlu0 %v4767, 8
    %v4924 = vpop.permute.xlu0 %4923
    %4925 = vrot.lane.b32.xlu0 %v4770, 8
    %v4926 = vpop.permute.xlu0 %4925
    %4927 = vrot.lane.b32.xlu0 %v4772, 8
    %v4928 = vpop.permute.xlu0 %4927
    %4929 = vrot.lane.b32.xlu0 %v4775, 8
    %v4930 = vpop.permute.xlu0 %4929
    %4931 = vrot.lane.b32.xlu0 %v4777, 8
    %v4932 = vpop.permute.xlu0 %4931
    %4933 = vrot.lane.b32.xlu0 %v4780, 8
    %v4934 = vpop.permute.xlu0 %4933
    %4935 = vrot.lane.b32.xlu0 %v4782, 8
    %v4936 = vpop.permute.xlu0 %4935
    %4937 = vrot.lane.b32.xlu0 %v4785, 8
    %v4938 = vpop.permute.xlu0 %4937
    %4939 = vrot.lane.b32.xlu0 %v4787, 8
    %v4940 = vpop.permute.xlu0 %4939
    %4941 = vrot.lane.b32.xlu0 %v4790, 8
    %v4942 = vpop.permute.xlu0 %4941
    %4943 = vrot.lane.b32.xlu0 %v4792, 8
    %v4944 = vpop.permute.xlu0 %4943
    %4945 = vrot.lane.b32.xlu0 %v4795, 8
    %v4946 = vpop.permute.xlu0 %4945
    %4947 = vrot.lane.b32.xlu0 %v4797, 8
    %v4948 = vpop.permute.xlu0 %4947
    %4949 = vrot.lane.b32.xlu0 %v4800, 8
    %v4950 = vpop.permute.xlu0 %4949
    %4951 = vrot.lane.b32.xlu0 %v4802, 8
    %v4952 = vpop.permute.xlu0 %4951
    %4953 = vrot.lane.b32.xlu0 %v4805, 8
    %v4954 = vpop.permute.xlu0 %4953
    %4955 = vrot.lane.b32.xlu0 %v4807, 8
    %v4956 = vpop.permute.xlu0 %4955
    %4957 = vrot.lane.b32.xlu0 %v4810, 8
    %v4958 = vpop.permute.xlu0 %4957
    %4959 = vrot.lane.b32.xlu0 %v4812, 8
    %v4960 = vpop.permute.xlu0 %4959
    %4961 = vrot.lane.b32.xlu0 %v4815, 8
    %v4962 = vpop.permute.xlu0 %4961
    %4963 = vrot.lane.b32.xlu0 %v4817, 8
    %v4964 = vpop.permute.xlu0 %4963
    %4965 = vrot.lane.b32.xlu0 %v4820, 8
    %v4966 = vpop.permute.xlu0 %4965
    %4967 = vrot.lane.b32.xlu0 %v4822, 8
    %v4968 = vpop.permute.xlu0 %4967
    %4969 = vrot.lane.b32.xlu0 %v4825, 8
    %v4970 = vpop.permute.xlu0 %4969
    %4971 = vrot.lane.b32.xlu0 %v4827, 8
    %v4972 = vpop.permute.xlu0 %4971
    %4973 = vrot.lane.b32.xlu0 %v4830, 8
    %v4974 = vpop.permute.xlu0 %4973
    %4975 = vrot.lane.b32.xlu0 %v4832, 8
    %v4976 = vpop.permute.xlu0 %4975
    %4977 = vrot.lane.b32.xlu0 %v4835, 8
    %v4978 = vpop.permute.xlu0 %4977
    %4979 = vrot.lane.b32.xlu0 %v4837, 8
    %v4980 = vpop.permute.xlu0 %4979
    %4981 = vrot.lane.b32.xlu0 %v4840, 8
    %v4982 = vpop.permute.xlu0 %4981
    %4983 = vrot.lane.b32.xlu0 %v4842, 8
    %v4984 = vpop.permute.xlu0 %4983
    %4985 = vrot.lane.b32.xlu0 %v4845, 8
    %v4986 = vpop.permute.xlu0 %4985
    %4987 = vrot.lane.b32.xlu0 %v4847, 8
    %v4988 = vpop.permute.xlu0 %4987
    %4989 = vrot.lane.b32.xlu0 %v4850, 8
    %v4990 = vpop.permute.xlu0 %4989
    %4991 = vrot.lane.b32.xlu0 %v4852, 8
    %v4992 = vpop.permute.xlu0 %4991
    %4993 = vrot.lane.b32.xlu0 %v4855, 8
    %v4994 = vpop.permute.xlu0 %4993
    %4995 = vrot.lane.b32.xlu0 %v4857, 8
    %v4996 = vpop.permute.xlu0 %4995
    %4997 = vrot.lane.b32.xlu0 %v4860, 8
    %v4998 = vpop.permute.xlu0 %4997
    %4999 = vrot.lane.b32.xlu0 %v4862, 8
    %v5000 = vpop.permute.xlu0 %4999
    %5001 = vrot.lane.b32.xlu0 %v4865, 8
    %v5002 = vpop.permute.xlu0 %5001
    %5003 = vrot.lane.b32.xlu0 %v4867, 8
    %v5004 = vpop.permute.xlu0 %5003
    %5005 = vrot.lane.b32.xlu0 %v4870, 8
    %v5006 = vpop.permute.xlu0 %5005
    %5007 = vrot.lane.b32.xlu0 %v4872, 8
    %v5008 = vpop.permute.xlu0 %5007
    %5009 = vrot.lane.b32.xlu0 %v4875, 8
    %v5010 = vpop.permute.xlu0 %5009
    %5011 = vrot.lane.b32.xlu0 %v4877, 8
    %v5012 = vpop.permute.xlu0 %5011
    %5013 = vrot.lane.b32.xlu0 %v4880, 8
    %v5014 = vpop.permute.xlu0 %5013
    %5015 = vrot.lane.b32.xlu0 %v4882, 8
    %v5016 = vpop.permute.xlu0 %5015
    %5017 = vrot.lane.b32.xlu0 %v4885, 8
    %v5018 = vpop.permute.xlu0 %5017
    %5019 = vrot.lane.b32.xlu0 %v4887, 8
    %v5020 = vpop.permute.xlu0 %5019
    %5021 = vrot.lane.b32.xlu0 %v4890, 8
    %v5022 = vpop.permute.xlu0 %5021
    %5023 = vrot.lane.b32.xlu0 %v4892, 8
    %v5024 = vpop.permute.xlu0 %5023
    %5025 = vrot.lane.b32.xlu0 %v4895, 8
    %v5026 = vpop.permute.xlu0 %5025
    %5027 = vrot.lane.b32.xlu0 %v4897, 8
    %v5028 = vpop.permute.xlu0 %5027
    %5029 = vrot.lane.b32.xlu0 %v4900, 8
    %v5030 = vpop.permute.xlu0 %5029
    %5031 = vrot.lane.b32.xlu0 %v4902, 8
    %v5032 = vpop.permute.xlu0 %5031
    %5033 = vrot.lane.b32.xlu0 %v4905, 8
    %v5034 = vpop.permute.xlu0 %5033
    %5035 = vrot.lane.b32.xlu0 %v4907, 8
    %v5036 = vpop.permute.xlu0 %5035
    %5037 = vrot.lane.b32.xlu0 %v4910, 8
    %v5038 = vpop.permute.xlu0 %5037
    %5039 = vrot.lane.b32.xlu0 %v4912, 8
    %v5040 = vpop.permute.xlu0 %5039
    %v5105 = vrot.slane %v4549, 2
    %v5106 = vrot.slane %v4550, 2
    %v5107 = vsel %vm2057, %v5105, %v5106
    %v5108 = vrot.slane %v4551, 2
    %v5109 = vsel %vm2057, %v5106, %v5108
    %v5110 = vrot.slane %v4552, 2
    %v5111 = vrot.slane %v4553, 2
    %v5112 = vsel %vm2057, %v5110, %v5111
    %v5113 = vrot.slane %v4554, 2
    %v5114 = vsel %vm2057, %v5111, %v5113
    %v5115 = vrot.slane %v4555, 2
    %v5116 = vrot.slane %v4556, 2
    %v5117 = vsel %vm2057, %v5115, %v5116
    %v5118 = vrot.slane %v4557, 2
    %v5119 = vsel %vm2057, %v5116, %v5118
    %v5120 = vrot.slane %v4558, 2
    %v5121 = vrot.slane %v4559, 2
    %v5122 = vsel %vm2057, %v5120, %v5121
    %v5123 = vrot.slane %v4560, 2
    %v5124 = vsel %vm2057, %v5121, %v5123
    %v5125 = vrot.slane %v4561, 2
    %v5126 = vrot.slane %v4562, 2
    %v5127 = vsel %vm2057, %v5125, %v5126
    %v5128 = vrot.slane %v4563, 2
    %v5129 = vsel %vm2057, %v5126, %v5128
    %v5130 = vrot.slane %v4564, 2
    %v5131 = vrot.slane %v4565, 2
    %v5132 = vsel %vm2057, %v5130, %v5131
    %v5133 = vrot.slane %v4566, 2
    %v5134 = vsel %vm2057, %v5131, %v5133
    %v5135 = vrot.slane %v4567, 2
    %v5136 = vrot.slane %v4568, 2
    %v5137 = vsel %vm2057, %v5135, %v5136
    %v5138 = vrot.slane %v4569, 2
    %v5139 = vsel %vm2057, %v5136, %v5138
    %v5140 = vrot.slane %v4570, 2
    %v5141 = vrot.slane %v4571, 2
    %v5142 = vsel %vm2057, %v5140, %v5141
    %v5143 = vrot.slane %v4572, 2
    %v5144 = vsel %vm2057, %v5141, %v5143
    %v5145 = vrot.slane %v4573, 2
    %v5146 = vrot.slane %v4574, 2
    %v5147 = vsel %vm2057, %v5145, %v5146
    %v5148 = vrot.slane %v4575, 2
    %v5149 = vsel %vm2057, %v5146, %v5148
    %v5150 = vrot.slane %v4576, 2
    %v5151 = vrot.slane %v4577, 2
    %v5152 = vsel %vm2057, %v5150, %v5151
    %v5153 = vrot.slane %v4578, 2
    %v5154 = vsel %vm2057, %v5151, %v5153
    %v5155 = vrot.slane %v4579, 2
    %v5156 = vrot.slane %v4580, 2
    %v5157 = vsel %vm2057, %v5155, %v5156
    %v5158 = vrot.slane %v4581, 2
    %v5159 = vsel %vm2057, %v5156, %v5158
    %v5160 = vrot.slane %v4582, 2
    %v5161 = vrot.slane %v4583, 2
    %v5162 = vsel %vm2057, %v5160, %v5161
    %v5163 = vrot.slane %v4584, 2
    %v5164 = vsel %vm2057, %v5161, %v5163
    %v5165 = vrot.slane %v4585, 2
    %v5166 = vrot.slane %v4586, 2
    %v5167 = vsel %vm2057, %v5165, %v5166
    %v5168 = vrot.slane %v4587, 2
    %v5169 = vsel %vm2057, %v5166, %v5168
    %v5170 = vrot.slane %v4588, 2
    %v5171 = vrot.slane %v4589, 2
    %v5172 = vsel %vm2057, %v5170, %v5171
    %v5173 = vrot.slane %v4590, 2
    %v5174 = vsel %vm2057, %v5171, %v5173
    %v5175 = vrot.slane %v4591, 2
    %v5176 = vrot.slane %v4592, 2
    %v5177 = vsel %vm2057, %v5175, %v5176
    %v5178 = vrot.slane %v4593, 2
    %v5179 = vsel %vm2057, %v5176, %v5178
    %v5180 = vrot.slane %v4594, 2
    %v5181 = vrot.slane %v4595, 2
    %v5182 = vsel %vm2057, %v5180, %v5181
    %v5183 = vrot.slane %v4596, 2
    %v5184 = vsel %vm2057, %v5181, %v5183
    %v5185 = vrot.slane %v4603, 2
    %v5186 = vrot.slane %v4604, 2
    %v5187 = vsel %vm2057, %v5185, %v5186
    %v5188 = vrot.slane %v4605, 2
    %v5189 = vsel %vm2057, %v5186, %v5188
    %v5190 = vrot.slane %v4606, 2
    %v5191 = vrot.slane %v4607, 2
    %v5192 = vsel %vm2057, %v5190, %v5191
    %v5193 = vrot.slane %v4608, 2
    %v5194 = vsel %vm2057, %v5191, %v5193
    %v5195 = vrot.slane %v4609, 2
    %v5196 = vrot.slane %v4610, 2
    %v5197 = vsel %vm2057, %v5195, %v5196
    %v5198 = vrot.slane %v4611, 2
    %v5199 = vsel %vm2057, %v5196, %v5198
    %v5200 = vrot.slane %v4612, 2
    %v5201 = vrot.slane %v4613, 2
    %v5202 = vsel %vm2057, %v5200, %v5201
    %v5203 = vrot.slane %v4614, 2
    %v5204 = vsel %vm2057, %v5201, %v5203
    %v5205 = vrot.slane %v4615, 2
    %v5206 = vrot.slane %v4616, 2
    %v5207 = vsel %vm2057, %v5205, %v5206
    %v5208 = vrot.slane %v4617, 2
    %v5209 = vsel %vm2057, %v5206, %v5208
    %v5210 = vrot.slane %v4618, 2
    %v5211 = vrot.slane %v4619, 2
    %v5212 = vsel %vm2057, %v5210, %v5211
    %v5213 = vrot.slane %v4620, 2
    %v5214 = vsel %vm2057, %v5211, %v5213
    %v5215 = vrot.slane %v4621, 2
    %v5216 = vrot.slane %v4622, 2
    %v5217 = vsel %vm2057, %v5215, %v5216
    %v5218 = vrot.slane %v4623, 2
    %v5219 = vsel %vm2057, %v5216, %v5218
    %v5220 = vrot.slane %v4624, 2
    %v5221 = vrot.slane %v4625, 2
    %v5222 = vsel %vm2057, %v5220, %v5221
    %v5223 = vrot.slane %v4626, 2
    %v5224 = vsel %vm2057, %v5221, %v5223
    %v5225 = vrot.slane %v4627, 2
    %v5226 = vrot.slane %v4628, 2
    %v5227 = vsel %vm2057, %v5225, %v5226
    %v5228 = vrot.slane %v4629, 2
    %v5229 = vsel %vm2057, %v5226, %v5228
    %v5230 = vrot.slane %v4630, 2
    %v5231 = vrot.slane %v4631, 2
    %v5232 = vsel %vm2057, %v5230, %v5231
    %v5233 = vrot.slane %v4632, 2
    %v5234 = vsel %vm2057, %v5231, %v5233
    %v5235 = vrot.slane %v4633, 2
    %v5236 = vrot.slane %v4634, 2
    %v5237 = vsel %vm2057, %v5235, %v5236
    %v5238 = vrot.slane %v4635, 2
    %v5239 = vsel %vm2057, %v5236, %v5238
    %v5240 = vrot.slane %v4636, 2
    %v5241 = vrot.slane %v4637, 2
    %v5242 = vsel %vm2057, %v5240, %v5241
    %v5243 = vrot.slane %v4638, 2
    %v5244 = vsel %vm2057, %v5241, %v5243
    %v5245 = vrot.slane %v4639, 2
    %v5246 = vrot.slane %v4640, 2
    %v5247 = vsel %vm2057, %v5245, %v5246
    %v5248 = vrot.slane %v4641, 2
    %v5249 = vsel %vm2057, %v5246, %v5248
    %v5250 = vrot.slane %v4642, 2
    %v5251 = vrot.slane %v4643, 2
    %v5252 = vsel %vm2057, %v5250, %v5251
    %v5253 = vrot.slane %v4644, 2
    %v5254 = vsel %vm2057, %v5251, %v5253
    %v5255 = vrot.slane %v4645, 2
    %v5256 = vrot.slane %v4646, 2
    %v5257 = vsel %vm2057, %v5255, %v5256
    %v5258 = vrot.slane %v4647, 2
    %v5259 = vsel %vm2057, %v5256, %v5258
    %v5260 = vrot.slane %v4648, 2
    %v5261 = vrot.slane %v4649, 2
    %v5262 = vsel %vm2057, %v5260, %v5261
    %v5263 = vrot.slane %v4650, 2
    %v5264 = vsel %vm2057, %v5261, %v5263
    %5265 = vrot.lane.b32.xlu0 %v5107, 16
    %v5266 = vpop.permute.xlu0 %5265
    %5267 = vrot.lane.b32.xlu0 %v5109, 16
    %v5268 = vpop.permute.xlu0 %5267
    %5269 = vrot.lane.b32.xlu0 %v5112, 16
    %v5270 = vpop.permute.xlu0 %5269
    %5271 = vrot.lane.b32.xlu0 %v5114, 16
    %v5272 = vpop.permute.xlu0 %5271
    %5273 = vrot.lane.b32.xlu0 %v5117, 16
    %v5274 = vpop.permute.xlu0 %5273
    %5275 = vrot.lane.b32.xlu0 %v5119, 16
    %v5276 = vpop.permute.xlu0 %5275
    %5277 = vrot.lane.b32.xlu0 %v5122, 16
    %v5278 = vpop.permute.xlu0 %5277
    %5279 = vrot.lane.b32.xlu0 %v5124, 16
    %v5280 = vpop.permute.xlu0 %5279
    %5281 = vrot.lane.b32.xlu0 %v5127, 16
    %v5282 = vpop.permute.xlu0 %5281
    %5283 = vrot.lane.b32.xlu0 %v5129, 16
    %v5284 = vpop.permute.xlu0 %5283
    %5285 = vrot.lane.b32.xlu0 %v5132, 16
    %v5286 = vpop.permute.xlu0 %5285
    %5287 = vrot.lane.b32.xlu0 %v5134, 16
    %v5288 = vpop.permute.xlu0 %5287
    %5289 = vrot.lane.b32.xlu0 %v5137, 16
    %v5290 = vpop.permute.xlu0 %5289
    %5291 = vrot.lane.b32.xlu0 %v5139, 16
    %v5292 = vpop.permute.xlu0 %5291
    %5293 = vrot.lane.b32.xlu0 %v5142, 16
    %v5294 = vpop.permute.xlu0 %5293
    %5295 = vrot.lane.b32.xlu0 %v5144, 16
    %v5296 = vpop.permute.xlu0 %5295
    %5297 = vrot.lane.b32.xlu0 %v5147, 16
    %v5298 = vpop.permute.xlu0 %5297
    %5299 = vrot.lane.b32.xlu0 %v5149, 16
    %v5300 = vpop.permute.xlu0 %5299
    %5301 = vrot.lane.b32.xlu0 %v5152, 16
    %v5302 = vpop.permute.xlu0 %5301
    %5303 = vrot.lane.b32.xlu0 %v5154, 16
    %v5304 = vpop.permute.xlu0 %5303
    %5305 = vrot.lane.b32.xlu0 %v5157, 16
    %v5306 = vpop.permute.xlu0 %5305
    %5307 = vrot.lane.b32.xlu0 %v5159, 16
    %v5308 = vpop.permute.xlu0 %5307
    %5309 = vrot.lane.b32.xlu0 %v5162, 16
    %v5310 = vpop.permute.xlu0 %5309
    %5311 = vrot.lane.b32.xlu0 %v5164, 16
    %v5312 = vpop.permute.xlu0 %5311
    %5313 = vrot.lane.b32.xlu0 %v5167, 16
    %v5314 = vpop.permute.xlu0 %5313
    %5315 = vrot.lane.b32.xlu0 %v5169, 16
    %v5316 = vpop.permute.xlu0 %5315
    %5317 = vrot.lane.b32.xlu0 %v5172, 16
    %v5318 = vpop.permute.xlu0 %5317
    %5319 = vrot.lane.b32.xlu0 %v5174, 16
    %v5320 = vpop.permute.xlu0 %5319
    %5321 = vrot.lane.b32.xlu0 %v5177, 16
    %v5322 = vpop.permute.xlu0 %5321
    %5323 = vrot.lane.b32.xlu0 %v5179, 16
    %v5324 = vpop.permute.xlu0 %5323
    %5325 = vrot.lane.b32.xlu0 %v5182, 16
    %v5326 = vpop.permute.xlu0 %5325
    %5327 = vrot.lane.b32.xlu0 %v5184, 16
    %v5328 = vpop.permute.xlu0 %5327
    %5329 = vrot.lane.b32.xlu0 %v5187, 16
    %v5330 = vpop.permute.xlu0 %5329
    %5331 = vrot.lane.b32.xlu0 %v5189, 16
    %v5332 = vpop.permute.xlu0 %5331
    %5333 = vrot.lane.b32.xlu0 %v5192, 16
    %v5334 = vpop.permute.xlu0 %5333
    %5335 = vrot.lane.b32.xlu0 %v5194, 16
    %v5336 = vpop.permute.xlu0 %5335
    %5337 = vrot.lane.b32.xlu0 %v5197, 16
    %v5338 = vpop.permute.xlu0 %5337
    %5339 = vrot.lane.b32.xlu0 %v5199, 16
    %v5340 = vpop.permute.xlu0 %5339
    %5341 = vrot.lane.b32.xlu0 %v5202, 16
    %v5342 = vpop.permute.xlu0 %5341
    %5343 = vrot.lane.b32.xlu0 %v5204, 16
    %v5344 = vpop.permute.xlu0 %5343
    %5345 = vrot.lane.b32.xlu0 %v5207, 16
    %v5346 = vpop.permute.xlu0 %5345
    %5347 = vrot.lane.b32.xlu0 %v5209, 16
    %v5348 = vpop.permute.xlu0 %5347
    %5349 = vrot.lane.b32.xlu0 %v5212, 16
    %v5350 = vpop.permute.xlu0 %5349
    %5351 = vrot.lane.b32.xlu0 %v5214, 16
    %v5352 = vpop.permute.xlu0 %5351
    %5353 = vrot.lane.b32.xlu0 %v5217, 16
    %v5354 = vpop.permute.xlu0 %5353
    %5355 = vrot.lane.b32.xlu0 %v5219, 16
    %v5356 = vpop.permute.xlu0 %5355
    %5357 = vrot.lane.b32.xlu0 %v5222, 16
    %v5358 = vpop.permute.xlu0 %5357
    %5359 = vrot.lane.b32.xlu0 %v5224, 16
    %v5360 = vpop.permute.xlu0 %5359
    %5361 = vrot.lane.b32.xlu0 %v5227, 16
    %v5362 = vpop.permute.xlu0 %5361
    %5363 = vrot.lane.b32.xlu0 %v5229, 16
    %v5364 = vpop.permute.xlu0 %5363
    %5365 = vrot.lane.b32.xlu0 %v5232, 16
    %v5366 = vpop.permute.xlu0 %5365
    %5367 = vrot.lane.b32.xlu0 %v5234, 16
    %v5368 = vpop.permute.xlu0 %5367
    %5369 = vrot.lane.b32.xlu0 %v5237, 16
    %v5370 = vpop.permute.xlu0 %5369
    %5371 = vrot.lane.b32.xlu0 %v5239, 16
    %v5372 = vpop.permute.xlu0 %5371
    %5373 = vrot.lane.b32.xlu0 %v5242, 16
    %v5374 = vpop.permute.xlu0 %5373
    %5375 = vrot.lane.b32.xlu0 %v5244, 16
    %v5376 = vpop.permute.xlu0 %5375
    %5377 = vrot.lane.b32.xlu0 %v5247, 16
    %v5378 = vpop.permute.xlu0 %5377
    %5379 = vrot.lane.b32.xlu0 %v5249, 16
    %v5380 = vpop.permute.xlu0 %5379
    %5381 = vrot.lane.b32.xlu0 %v5252, 16
    %v5382 = vpop.permute.xlu0 %5381
    %5383 = vrot.lane.b32.xlu0 %v5254, 16
    %v5384 = vpop.permute.xlu0 %5383
    %5385 = vrot.lane.b32.xlu0 %v5257, 16
    %v5386 = vpop.permute.xlu0 %5385
    %5387 = vrot.lane.b32.xlu0 %v5259, 16
    %v5388 = vpop.permute.xlu0 %5387
    %5389 = vrot.lane.b32.xlu0 %v5262, 16
    %v5390 = vpop.permute.xlu0 %5389
    %5391 = vrot.lane.b32.xlu0 %v5264, 16
    %v5392 = vpop.permute.xlu0 %5391
    %5461 = vrot.lane.b32.xlu0 %v4552, 24
    %v5462 = vpop.permute.xlu0 %5461
    %5463 = vrot.lane.b32.xlu0 %v4553, 24
    %v5464 = vpop.permute.xlu0 %5463
    %5465 = vrot.lane.b32.xlu0 %v4555, 24
    %v5466 = vpop.permute.xlu0 %5465
    %5467 = vrot.lane.b32.xlu0 %v4556, 24
    %v5468 = vpop.permute.xlu0 %5467
    %5469 = vrot.lane.b32.xlu0 %v4558, 24
    %v5470 = vpop.permute.xlu0 %5469
    %5471 = vrot.lane.b32.xlu0 %v4559, 24
    %v5472 = vpop.permute.xlu0 %5471
    %5473 = vrot.lane.b32.xlu0 %v4561, 24
    %v5474 = vpop.permute.xlu0 %5473
    %5475 = vrot.lane.b32.xlu0 %v4562, 24
    %v5476 = vpop.permute.xlu0 %5475
    %5477 = vrot.lane.b32.xlu0 %v4564, 24
    %v5478 = vpop.permute.xlu0 %5477
    %5479 = vrot.lane.b32.xlu0 %v4565, 24
    %v5480 = vpop.permute.xlu0 %5479
    %5481 = vrot.lane.b32.xlu0 %v4567, 24
    %v5482 = vpop.permute.xlu0 %5481
    %5483 = vrot.lane.b32.xlu0 %v4568, 24
    %v5484 = vpop.permute.xlu0 %5483
    %5485 = vrot.lane.b32.xlu0 %v4570, 24
    %v5486 = vpop.permute.xlu0 %5485
    %5487 = vrot.lane.b32.xlu0 %v4571, 24
    %v5488 = vpop.permute.xlu0 %5487
    %5489 = vrot.lane.b32.xlu0 %v4573, 24
    %v5490 = vpop.permute.xlu0 %5489
    %5491 = vrot.lane.b32.xlu0 %v4574, 24
    %v5492 = vpop.permute.xlu0 %5491
    %5493 = vrot.lane.b32.xlu0 %v4576, 24
    %v5494 = vpop.permute.xlu0 %5493
    %5495 = vrot.lane.b32.xlu0 %v4577, 24
    %v5496 = vpop.permute.xlu0 %5495
    %5497 = vrot.lane.b32.xlu0 %v4579, 24
    %v5498 = vpop.permute.xlu0 %5497
    %5499 = vrot.lane.b32.xlu0 %v4580, 24
    %v5500 = vpop.permute.xlu0 %5499
    %5501 = vrot.lane.b32.xlu0 %v4582, 24
    %v5502 = vpop.permute.xlu0 %5501
    %5503 = vrot.lane.b32.xlu0 %v4583, 24
    %v5504 = vpop.permute.xlu0 %5503
    %5505 = vrot.lane.b32.xlu0 %v4585, 24
    %v5506 = vpop.permute.xlu0 %5505
    %5507 = vrot.lane.b32.xlu0 %v4586, 24
    %v5508 = vpop.permute.xlu0 %5507
    %5509 = vrot.lane.b32.xlu0 %v4588, 24
    %v5510 = vpop.permute.xlu0 %5509
    %5511 = vrot.lane.b32.xlu0 %v4589, 24
    %v5512 = vpop.permute.xlu0 %5511
    %5513 = vrot.lane.b32.xlu0 %v4591, 24
    %v5514 = vpop.permute.xlu0 %5513
    %5515 = vrot.lane.b32.xlu0 %v4592, 24
    %v5516 = vpop.permute.xlu0 %5515
    %5517 = vrot.lane.b32.xlu0 %v4594, 24
    %v5518 = vpop.permute.xlu0 %5517
    %5519 = vrot.lane.b32.xlu0 %v4595, 24
    %v5520 = vpop.permute.xlu0 %5519
    %5521 = vrot.lane.b32.xlu0 %v4597, 24
    %v5522 = vpop.permute.xlu0 %5521
    %5523 = vrot.lane.b32.xlu0 %v4598, 24
    %v5524 = vpop.permute.xlu0 %5523
    %5525 = vrot.lane.b32.xlu0 %v4606, 24
    %v5526 = vpop.permute.xlu0 %5525
    %5527 = vrot.lane.b32.xlu0 %v4607, 24
    %v5528 = vpop.permute.xlu0 %5527
    %5529 = vrot.lane.b32.xlu0 %v4609, 24
    %v5530 = vpop.permute.xlu0 %5529
    %5531 = vrot.lane.b32.xlu0 %v4610, 24
    %v5532 = vpop.permute.xlu0 %5531
    %5533 = vrot.lane.b32.xlu0 %v4612, 24
    %v5534 = vpop.permute.xlu0 %5533
    %5535 = vrot.lane.b32.xlu0 %v4613, 24
    %v5536 = vpop.permute.xlu0 %5535
    %5537 = vrot.lane.b32.xlu0 %v4615, 24
    %v5538 = vpop.permute.xlu0 %5537
    %5539 = vrot.lane.b32.xlu0 %v4616, 24
    %v5540 = vpop.permute.xlu0 %5539
    %5541 = vrot.lane.b32.xlu0 %v4618, 24
    %v5542 = vpop.permute.xlu0 %5541
    %5543 = vrot.lane.b32.xlu0 %v4619, 24
    %v5544 = vpop.permute.xlu0 %5543
    %5545 = vrot.lane.b32.xlu0 %v4621, 24
    %v5546 = vpop.permute.xlu0 %5545
    %5547 = vrot.lane.b32.xlu0 %v4622, 24
    %v5548 = vpop.permute.xlu0 %5547
    %5549 = vrot.lane.b32.xlu0 %v4624, 24
    %v5550 = vpop.permute.xlu0 %5549
    %5551 = vrot.lane.b32.xlu0 %v4625, 24
    %v5552 = vpop.permute.xlu0 %5551
    %5553 = vrot.lane.b32.xlu0 %v4627, 24
    %v5554 = vpop.permute.xlu0 %5553
    %5555 = vrot.lane.b32.xlu0 %v4628, 24
    %v5556 = vpop.permute.xlu0 %5555
    %5557 = vrot.lane.b32.xlu0 %v4630, 24
    %v5558 = vpop.permute.xlu0 %5557
    %5559 = vrot.lane.b32.xlu0 %v4631, 24
    %v5560 = vpop.permute.xlu0 %5559
    %5561 = vrot.lane.b32.xlu0 %v4633, 24
    %v5562 = vpop.permute.xlu0 %5561
    %5563 = vrot.lane.b32.xlu0 %v4634, 24
    %v5564 = vpop.permute.xlu0 %5563
    %5565 = vrot.lane.b32.xlu0 %v4636, 24
    %v5566 = vpop.permute.xlu0 %5565
    %5567 = vrot.lane.b32.xlu0 %v4637, 24
    %v5568 = vpop.permute.xlu0 %5567
    %5569 = vrot.lane.b32.xlu0 %v4639, 24
    %v5570 = vpop.permute.xlu0 %5569
    %5571 = vrot.lane.b32.xlu0 %v4640, 24
    %v5572 = vpop.permute.xlu0 %5571
    %5573 = vrot.lane.b32.xlu0 %v4642, 24
    %v5574 = vpop.permute.xlu0 %5573
    %5575 = vrot.lane.b32.xlu0 %v4643, 24
    %v5576 = vpop.permute.xlu0 %5575
    %5577 = vrot.lane.b32.xlu0 %v4645, 24
    %v5578 = vpop.permute.xlu0 %5577
    %5579 = vrot.lane.b32.xlu0 %v4646, 24
    %v5580 = vpop.permute.xlu0 %5579
    %5581 = vrot.lane.b32.xlu0 %v4648, 24
    %v5582 = vpop.permute.xlu0 %5581
    %5583 = vrot.lane.b32.xlu0 %v4649, 24
    %v5584 = vpop.permute.xlu0 %5583
    %5585 = vrot.lane.b32.xlu0 %v4651, 24
    %v5586 = vpop.permute.xlu0 %5585
    %5587 = vrot.lane.b32.xlu0 %v4652, 24
    %v5588 = vpop.permute.xlu0 %5587
    %v5655 = vrot.slane %v4597, 1
    %v5656 = vrot.slane %v4598, 1
    %v5657 = vsel %vm1960, %v5655, %v5656
    %v5658 = vrot.slane %v4599, 1
    %v5659 = vsel %vm1960, %v5656, %v5658
    %v5660 = vrot.slane %v4651, 1
    %v5661 = vrot.slane %v4652, 1
    %v5662 = vsel %vm1960, %v5660, %v5661
    %v5663 = vrot.slane %v4653, 1
    %v5664 = vsel %vm1960, %v5661, %v5663
    %5665 = vrot.lane.b32.xlu0 %v4760, 32
    %v5666 = vpop.permute.xlu0 %5665
    %5667 = vrot.lane.b32.xlu0 %v4762, 32
    %v5668 = vpop.permute.xlu0 %5667
    %5669 = vrot.lane.b32.xlu0 %v4765, 32
    %v5670 = vpop.permute.xlu0 %5669
    %5671 = vrot.lane.b32.xlu0 %v4767, 32
    %v5672 = vpop.permute.xlu0 %5671
    %5673 = vrot.lane.b32.xlu0 %v4770, 32
    %v5674 = vpop.permute.xlu0 %5673
    %5675 = vrot.lane.b32.xlu0 %v4772, 32
    %v5676 = vpop.permute.xlu0 %5675
    %5677 = vrot.lane.b32.xlu0 %v4775, 32
    %v5678 = vpop.permute.xlu0 %5677
    %5679 = vrot.lane.b32.xlu0 %v4777, 32
    %v5680 = vpop.permute.xlu0 %5679
    %5681 = vrot.lane.b32.xlu0 %v4780, 32
    %v5682 = vpop.permute.xlu0 %5681
    %5683 = vrot.lane.b32.xlu0 %v4782, 32
    %v5684 = vpop.permute.xlu0 %5683
    %5685 = vrot.lane.b32.xlu0 %v4785, 32
    %v5686 = vpop.permute.xlu0 %5685
    %5687 = vrot.lane.b32.xlu0 %v4787, 32
    %v5688 = vpop.permute.xlu0 %5687
    %5689 = vrot.lane.b32.xlu0 %v4790, 32
    %v5690 = vpop.permute.xlu0 %5689
    %5691 = vrot.lane.b32.xlu0 %v4792, 32
    %v5692 = vpop.permute.xlu0 %5691
    %5693 = vrot.lane.b32.xlu0 %v4795, 32
    %v5694 = vpop.permute.xlu0 %5693
    %5695 = vrot.lane.b32.xlu0 %v4797, 32
    %v5696 = vpop.permute.xlu0 %5695
    %5697 = vrot.lane.b32.xlu0 %v4800, 32
    %v5698 = vpop.permute.xlu0 %5697
    %5699 = vrot.lane.b32.xlu0 %v4802, 32
    %v5700 = vpop.permute.xlu0 %5699
    %5701 = vrot.lane.b32.xlu0 %v4805, 32
    %v5702 = vpop.permute.xlu0 %5701
    %5703 = vrot.lane.b32.xlu0 %v4807, 32
    %v5704 = vpop.permute.xlu0 %5703
    %5705 = vrot.lane.b32.xlu0 %v4810, 32
    %v5706 = vpop.permute.xlu0 %5705
    %5707 = vrot.lane.b32.xlu0 %v4812, 32
    %v5708 = vpop.permute.xlu0 %5707
    %5709 = vrot.lane.b32.xlu0 %v4815, 32
    %v5710 = vpop.permute.xlu0 %5709
    %5711 = vrot.lane.b32.xlu0 %v4817, 32
    %v5712 = vpop.permute.xlu0 %5711
    %5713 = vrot.lane.b32.xlu0 %v4820, 32
    %v5714 = vpop.permute.xlu0 %5713
    %5715 = vrot.lane.b32.xlu0 %v4822, 32
    %v5716 = vpop.permute.xlu0 %5715
    %5717 = vrot.lane.b32.xlu0 %v4825, 32
    %v5718 = vpop.permute.xlu0 %5717
    %5719 = vrot.lane.b32.xlu0 %v4827, 32
    %v5720 = vpop.permute.xlu0 %5719
    %5721 = vrot.lane.b32.xlu0 %v4830, 32
    %v5722 = vpop.permute.xlu0 %5721
    %5723 = vrot.lane.b32.xlu0 %v4832, 32
    %v5724 = vpop.permute.xlu0 %5723
    %5725 = vrot.lane.b32.xlu0 %v5657, 32
    %v5726 = vpop.permute.xlu0 %5725
    %5727 = vrot.lane.b32.xlu0 %v5659, 32
    %v5728 = vpop.permute.xlu0 %5727
    %5729 = vrot.lane.b32.xlu0 %v4840, 32
    %v5730 = vpop.permute.xlu0 %5729
    %5731 = vrot.lane.b32.xlu0 %v4842, 32
    %v5732 = vpop.permute.xlu0 %5731
    %5733 = vrot.lane.b32.xlu0 %v4845, 32
    %v5734 = vpop.permute.xlu0 %5733
    %5735 = vrot.lane.b32.xlu0 %v4847, 32
    %v5736 = vpop.permute.xlu0 %5735
    %5737 = vrot.lane.b32.xlu0 %v4850, 32
    %v5738 = vpop.permute.xlu0 %5737
    %5739 = vrot.lane.b32.xlu0 %v4852, 32
    %v5740 = vpop.permute.xlu0 %5739
    %5741 = vrot.lane.b32.xlu0 %v4855, 32
    %v5742 = vpop.permute.xlu0 %5741
    %5743 = vrot.lane.b32.xlu0 %v4857, 32
    %v5744 = vpop.permute.xlu0 %5743
    %5745 = vrot.lane.b32.xlu0 %v4860, 32
    %v5746 = vpop.permute.xlu0 %5745
    %5747 = vrot.lane.b32.xlu0 %v4862, 32
    %v5748 = vpop.permute.xlu0 %5747
    %5749 = vrot.lane.b32.xlu0 %v4865, 32
    %v5750 = vpop.permute.xlu0 %5749
    %5751 = vrot.lane.b32.xlu0 %v4867, 32
    %v5752 = vpop.permute.xlu0 %5751
    %5753 = vrot.lane.b32.xlu0 %v4870, 32
    %v5754 = vpop.permute.xlu0 %5753
    %5755 = vrot.lane.b32.xlu0 %v4872, 32
    %v5756 = vpop.permute.xlu0 %5755
    %5757 = vrot.lane.b32.xlu0 %v4875, 32
    %v5758 = vpop.permute.xlu0 %5757
    %5759 = vrot.lane.b32.xlu0 %v4877, 32
    %v5760 = vpop.permute.xlu0 %5759
    %5761 = vrot.lane.b32.xlu0 %v4880, 32
    %v5762 = vpop.permute.xlu0 %5761
    %5763 = vrot.lane.b32.xlu0 %v4882, 32
    %v5764 = vpop.permute.xlu0 %5763
    %5765 = vrot.lane.b32.xlu0 %v4885, 32
    %v5766 = vpop.permute.xlu0 %5765
    %5767 = vrot.lane.b32.xlu0 %v4887, 32
    %v5768 = vpop.permute.xlu0 %5767
    %5769 = vrot.lane.b32.xlu0 %v4890, 32
    %v5770 = vpop.permute.xlu0 %5769
    %5771 = vrot.lane.b32.xlu0 %v4892, 32
    %v5772 = vpop.permute.xlu0 %5771
    %5773 = vrot.lane.b32.xlu0 %v4895, 32
    %v5774 = vpop.permute.xlu0 %5773
    %5775 = vrot.lane.b32.xlu0 %v4897, 32
    %v5776 = vpop.permute.xlu0 %5775
    %5777 = vrot.lane.b32.xlu0 %v4900, 32
    %v5778 = vpop.permute.xlu0 %5777
    %5779 = vrot.lane.b32.xlu0 %v4902, 32
    %v5780 = vpop.permute.xlu0 %5779
    %5781 = vrot.lane.b32.xlu0 %v4905, 32
    %v5782 = vpop.permute.xlu0 %5781
    %5783 = vrot.lane.b32.xlu0 %v4907, 32
    %v5784 = vpop.permute.xlu0 %5783
    %5785 = vrot.lane.b32.xlu0 %v4910, 32
    %v5786 = vpop.permute.xlu0 %5785
    %5787 = vrot.lane.b32.xlu0 %v4912, 32
    %v5788 = vpop.permute.xlu0 %5787
    %5789 = vrot.lane.b32.xlu0 %v5662, 32
    %v5790 = vpop.permute.xlu0 %5789
    %5791 = vrot.lane.b32.xlu0 %v5664, 32
    %v5792 = vpop.permute.xlu0 %5791
    %v5857 = vrot.slane %v4597, 2
    %v5858 = vrot.slane %v4598, 2
    %v5859 = vsel %vm2057, %v5857, %v5858
    %v5860 = vrot.slane %v4599, 2
    %v5861 = vsel %vm2057, %v5858, %v5860
    %v5862 = vrot.slane %v4651, 2
    %v5863 = vrot.slane %v4652, 2
    %v5864 = vsel %vm2057, %v5862, %v5863
    %v5865 = vrot.slane %v4653, 2
    %v5866 = vsel %vm2057, %v5863, %v5865
    %5867 = vrot.lane.b32.xlu0 %v5112, 40
    %v5868 = vpop.permute.xlu0 %5867
    %5869 = vrot.lane.b32.xlu0 %v5114, 40
    %v5870 = vpop.permute.xlu0 %5869
    %5871 = vrot.lane.b32.xlu0 %v5117, 40
    %v5872 = vpop.permute.xlu0 %5871
    %5873 = vrot.lane.b32.xlu0 %v5119, 40
    %v5874 = vpop.permute.xlu0 %5873
    %5875 = vrot.lane.b32.xlu0 %v5122, 40
    %v5876 = vpop.permute.xlu0 %5875
    %5877 = vrot.lane.b32.xlu0 %v5124, 40
    %v5878 = vpop.permute.xlu0 %5877
    %5879 = vrot.lane.b32.xlu0 %v5127, 40
    %v5880 = vpop.permute.xlu0 %5879
    %5881 = vrot.lane.b32.xlu0 %v5129, 40
    %v5882 = vpop.permute.xlu0 %5881
    %5883 = vrot.lane.b32.xlu0 %v5132, 40
    %v5884 = vpop.permute.xlu0 %5883
    %5885 = vrot.lane.b32.xlu0 %v5134, 40
    %v5886 = vpop.permute.xlu0 %5885
    %5887 = vrot.lane.b32.xlu0 %v5137, 40
    %v5888 = vpop.permute.xlu0 %5887
    %5889 = vrot.lane.b32.xlu0 %v5139, 40
    %v5890 = vpop.permute.xlu0 %5889
    %5891 = vrot.lane.b32.xlu0 %v5142, 40
    %v5892 = vpop.permute.xlu0 %5891
    %5893 = vrot.lane.b32.xlu0 %v5144, 40
    %v5894 = vpop.permute.xlu0 %5893
    %5895 = vrot.lane.b32.xlu0 %v5147, 40
    %v5896 = vpop.permute.xlu0 %5895
    %5897 = vrot.lane.b32.xlu0 %v5149, 40
    %v5898 = vpop.permute.xlu0 %5897
    %5899 = vrot.lane.b32.xlu0 %v5152, 40
    %v5900 = vpop.permute.xlu0 %5899
    %5901 = vrot.lane.b32.xlu0 %v5154, 40
    %v5902 = vpop.permute.xlu0 %5901
    %5903 = vrot.lane.b32.xlu0 %v5157, 40
    %v5904 = vpop.permute.xlu0 %5903
    %5905 = vrot.lane.b32.xlu0 %v5159, 40
    %v5906 = vpop.permute.xlu0 %5905
    %5907 = vrot.lane.b32.xlu0 %v5162, 40
    %v5908 = vpop.permute.xlu0 %5907
    %5909 = vrot.lane.b32.xlu0 %v5164, 40
    %v5910 = vpop.permute.xlu0 %5909
    %5911 = vrot.lane.b32.xlu0 %v5167, 40
    %v5912 = vpop.permute.xlu0 %5911
    %5913 = vrot.lane.b32.xlu0 %v5169, 40
    %v5914 = vpop.permute.xlu0 %5913
    %5915 = vrot.lane.b32.xlu0 %v5172, 40
    %v5916 = vpop.permute.xlu0 %5915
    %5917 = vrot.lane.b32.xlu0 %v5174, 40
    %v5918 = vpop.permute.xlu0 %5917
    %5919 = vrot.lane.b32.xlu0 %v5177, 40
    %v5920 = vpop.permute.xlu0 %5919
    %5921 = vrot.lane.b32.xlu0 %v5179, 40
    %v5922 = vpop.permute.xlu0 %5921
    %5923 = vrot.lane.b32.xlu0 %v5182, 40
    %v5924 = vpop.permute.xlu0 %5923
    %5925 = vrot.lane.b32.xlu0 %v5184, 40
    %v5926 = vpop.permute.xlu0 %5925
    %5927 = vrot.lane.b32.xlu0 %v5859, 40
    %v5928 = vpop.permute.xlu0 %5927
    %5929 = vrot.lane.b32.xlu0 %v5861, 40
    %v5930 = vpop.permute.xlu0 %5929
    %5931 = vrot.lane.b32.xlu0 %v5192, 40
    %v5932 = vpop.permute.xlu0 %5931
    %5933 = vrot.lane.b32.xlu0 %v5194, 40
    %v5934 = vpop.permute.xlu0 %5933
    %5935 = vrot.lane.b32.xlu0 %v5197, 40
    %v5936 = vpop.permute.xlu0 %5935
    %5937 = vrot.lane.b32.xlu0 %v5199, 40
    %v5938 = vpop.permute.xlu0 %5937
    %5939 = vrot.lane.b32.xlu0 %v5202, 40
    %v5940 = vpop.permute.xlu0 %5939
    %5941 = vrot.lane.b32.xlu0 %v5204, 40
    %v5942 = vpop.permute.xlu0 %5941
    %5943 = vrot.lane.b32.xlu0 %v5207, 40
    %v5944 = vpop.permute.xlu0 %5943
    %5945 = vrot.lane.b32.xlu0 %v5209, 40
    %v5946 = vpop.permute.xlu0 %5945
    %5947 = vrot.lane.b32.xlu0 %v5212, 40
    %v5948 = vpop.permute.xlu0 %5947
    %5949 = vrot.lane.b32.xlu0 %v5214, 40
    %v5950 = vpop.permute.xlu0 %5949
    %5951 = vrot.lane.b32.xlu0 %v5217, 40
    %v5952 = vpop.permute.xlu0 %5951
    %5953 = vrot.lane.b32.xlu0 %v5219, 40
    %v5954 = vpop.permute.xlu0 %5953
    %5955 = vrot.lane.b32.xlu0 %v5222, 40
    %v5956 = vpop.permute.xlu0 %5955
    %5957 = vrot.lane.b32.xlu0 %v5224, 40
    %v5958 = vpop.permute.xlu0 %5957
    %5959 = vrot.lane.b32.xlu0 %v5227, 40
    %v5960 = vpop.permute.xlu0 %5959
    %5961 = vrot.lane.b32.xlu0 %v5229, 40
    %v5962 = vpop.permute.xlu0 %5961
    %5963 = vrot.lane.b32.xlu0 %v5232, 40
    %v5964 = vpop.permute.xlu0 %5963
    %5965 = vrot.lane.b32.xlu0 %v5234, 40
    %v5966 = vpop.permute.xlu0 %5965
    %5967 = vrot.lane.b32.xlu0 %v5237, 40
    %v5968 = vpop.permute.xlu0 %5967
    %5969 = vrot.lane.b32.xlu0 %v5239, 40
    %v5970 = vpop.permute.xlu0 %5969
    %5971 = vrot.lane.b32.xlu0 %v5242, 40
    %v5972 = vpop.permute.xlu0 %5971
    %5973 = vrot.lane.b32.xlu0 %v5244, 40
    %v5974 = vpop.permute.xlu0 %5973
    %5975 = vrot.lane.b32.xlu0 %v5247, 40
    %v5976 = vpop.permute.xlu0 %5975
    %5977 = vrot.lane.b32.xlu0 %v5249, 40
    %v5978 = vpop.permute.xlu0 %5977
    %5979 = vrot.lane.b32.xlu0 %v5252, 40
    %v5980 = vpop.permute.xlu0 %5979
    %5981 = vrot.lane.b32.xlu0 %v5254, 40
    %v5982 = vpop.permute.xlu0 %5981
    %5983 = vrot.lane.b32.xlu0 %v5257, 40
    %v5984 = vpop.permute.xlu0 %5983
    %5985 = vrot.lane.b32.xlu0 %v5259, 40
    %v5986 = vpop.permute.xlu0 %5985
    %5987 = vrot.lane.b32.xlu0 %v5262, 40
    %v5988 = vpop.permute.xlu0 %5987
    %5989 = vrot.lane.b32.xlu0 %v5264, 40
    %v5990 = vpop.permute.xlu0 %5989
    %5991 = vrot.lane.b32.xlu0 %v5864, 40
    %v5992 = vpop.permute.xlu0 %5991
    %5993 = vrot.lane.b32.xlu0 %v5866, 40
    %v5994 = vpop.permute.xlu0 %5993
    %6063 = vrot.lane.b32.xlu0 %v4555, 48
    %v6064 = vpop.permute.xlu0 %6063
    %6065 = vrot.lane.b32.xlu0 %v4556, 48
    %v6066 = vpop.permute.xlu0 %6065
    %6067 = vrot.lane.b32.xlu0 %v4558, 48
    %v6068 = vpop.permute.xlu0 %6067
    %6069 = vrot.lane.b32.xlu0 %v4559, 48
    %v6070 = vpop.permute.xlu0 %6069
    %6071 = vrot.lane.b32.xlu0 %v4561, 48
    %v6072 = vpop.permute.xlu0 %6071
    %6073 = vrot.lane.b32.xlu0 %v4562, 48
    %v6074 = vpop.permute.xlu0 %6073
    %6075 = vrot.lane.b32.xlu0 %v4564, 48
    %v6076 = vpop.permute.xlu0 %6075
    %6077 = vrot.lane.b32.xlu0 %v4565, 48
    %v6078 = vpop.permute.xlu0 %6077
    %6079 = vrot.lane.b32.xlu0 %v4567, 48
    %v6080 = vpop.permute.xlu0 %6079
    %6081 = vrot.lane.b32.xlu0 %v4568, 48
    %v6082 = vpop.permute.xlu0 %6081
    %6083 = vrot.lane.b32.xlu0 %v4570, 48
    %v6084 = vpop.permute.xlu0 %6083
    %6085 = vrot.lane.b32.xlu0 %v4571, 48
    %v6086 = vpop.permute.xlu0 %6085
    %6087 = vrot.lane.b32.xlu0 %v4573, 48
    %v6088 = vpop.permute.xlu0 %6087
    %6089 = vrot.lane.b32.xlu0 %v4574, 48
    %v6090 = vpop.permute.xlu0 %6089
    %6091 = vrot.lane.b32.xlu0 %v4576, 48
    %v6092 = vpop.permute.xlu0 %6091
    %6093 = vrot.lane.b32.xlu0 %v4577, 48
    %v6094 = vpop.permute.xlu0 %6093
    %6095 = vrot.lane.b32.xlu0 %v4579, 48
    %v6096 = vpop.permute.xlu0 %6095
    %6097 = vrot.lane.b32.xlu0 %v4580, 48
    %v6098 = vpop.permute.xlu0 %6097
    %6099 = vrot.lane.b32.xlu0 %v4582, 48
    %v6100 = vpop.permute.xlu0 %6099
    %6101 = vrot.lane.b32.xlu0 %v4583, 48
    %v6102 = vpop.permute.xlu0 %6101
    %6103 = vrot.lane.b32.xlu0 %v4585, 48
    %v6104 = vpop.permute.xlu0 %6103
    %6105 = vrot.lane.b32.xlu0 %v4586, 48
    %v6106 = vpop.permute.xlu0 %6105
    %6107 = vrot.lane.b32.xlu0 %v4588, 48
    %v6108 = vpop.permute.xlu0 %6107
    %6109 = vrot.lane.b32.xlu0 %v4589, 48
    %v6110 = vpop.permute.xlu0 %6109
    %6111 = vrot.lane.b32.xlu0 %v4591, 48
    %v6112 = vpop.permute.xlu0 %6111
    %6113 = vrot.lane.b32.xlu0 %v4592, 48
    %v6114 = vpop.permute.xlu0 %6113
    %6115 = vrot.lane.b32.xlu0 %v4594, 48
    %v6116 = vpop.permute.xlu0 %6115
    %6117 = vrot.lane.b32.xlu0 %v4595, 48
    %v6118 = vpop.permute.xlu0 %6117
    %6119 = vrot.lane.b32.xlu0 %v4597, 48
    %v6120 = vpop.permute.xlu0 %6119
    %6121 = vrot.lane.b32.xlu0 %v4598, 48
    %v6122 = vpop.permute.xlu0 %6121
    %6123 = vrot.lane.b32.xlu0 %v4600, 48
    %v6124 = vpop.permute.xlu0 %6123
    %6125 = vrot.lane.b32.xlu0 %v4601, 48
    %v6126 = vpop.permute.xlu0 %6125
    %6127 = vrot.lane.b32.xlu0 %v4609, 48
    %v6128 = vpop.permute.xlu0 %6127
    %6129 = vrot.lane.b32.xlu0 %v4610, 48
    %v6130 = vpop.permute.xlu0 %6129
    %6131 = vrot.lane.b32.xlu0 %v4612, 48
    %v6132 = vpop.permute.xlu0 %6131
    %6133 = vrot.lane.b32.xlu0 %v4613, 48
    %v6134 = vpop.permute.xlu0 %6133
    %6135 = vrot.lane.b32.xlu0 %v4615, 48
    %v6136 = vpop.permute.xlu0 %6135
    %6137 = vrot.lane.b32.xlu0 %v4616, 48
    %v6138 = vpop.permute.xlu0 %6137
    %6139 = vrot.lane.b32.xlu0 %v4618, 48
    %v6140 = vpop.permute.xlu0 %6139
    %6141 = vrot.lane.b32.xlu0 %v4619, 48
    %v6142 = vpop.permute.xlu0 %6141
    %6143 = vrot.lane.b32.xlu0 %v4621, 48
    %v6144 = vpop.permute.xlu0 %6143
    %6145 = vrot.lane.b32.xlu0 %v4622, 48
    %v6146 = vpop.permute.xlu0 %6145
    %6147 = vrot.lane.b32.xlu0 %v4624, 48
    %v6148 = vpop.permute.xlu0 %6147
    %6149 = vrot.lane.b32.xlu0 %v4625, 48
    %v6150 = vpop.permute.xlu0 %6149
    %6151 = vrot.lane.b32.xlu0 %v4627, 48
    %v6152 = vpop.permute.xlu0 %6151
    %6153 = vrot.lane.b32.xlu0 %v4628, 48
    %v6154 = vpop.permute.xlu0 %6153
    %6155 = vrot.lane.b32.xlu0 %v4630, 48
    %v6156 = vpop.permute.xlu0 %6155
    %6157 = vrot.lane.b32.xlu0 %v4631, 48
    %v6158 = vpop.permute.xlu0 %6157
    %6159 = vrot.lane.b32.xlu0 %v4633, 48
    %v6160 = vpop.permute.xlu0 %6159
    %6161 = vrot.lane.b32.xlu0 %v4634, 48
    %v6162 = vpop.permute.xlu0 %6161
    %6163 = vrot.lane.b32.xlu0 %v4636, 48
    %v6164 = vpop.permute.xlu0 %6163
    %6165 = vrot.lane.b32.xlu0 %v4637, 48
    %v6166 = vpop.permute.xlu0 %6165
    %6167 = vrot.lane.b32.xlu0 %v4639, 48
    %v6168 = vpop.permute.xlu0 %6167
    %6169 = vrot.lane.b32.xlu0 %v4640, 48
    %v6170 = vpop.permute.xlu0 %6169
    %6171 = vrot.lane.b32.xlu0 %v4642, 48
    %v6172 = vpop.permute.xlu0 %6171
    %6173 = vrot.lane.b32.xlu0 %v4643, 48
    %v6174 = vpop.permute.xlu0 %6173
    %6175 = vrot.lane.b32.xlu0 %v4645, 48
    %v6176 = vpop.permute.xlu0 %6175
    %6177 = vrot.lane.b32.xlu0 %v4646, 48
    %v6178 = vpop.permute.xlu0 %6177
    %6179 = vrot.lane.b32.xlu0 %v4648, 48
    %v6180 = vpop.permute.xlu0 %6179
    %6181 = vrot.lane.b32.xlu0 %v4649, 48
    %v6182 = vpop.permute.xlu0 %6181
    %6183 = vrot.lane.b32.xlu0 %v4651, 48
    %v6184 = vpop.permute.xlu0 %6183
    %6185 = vrot.lane.b32.xlu0 %v4652, 48
    %v6186 = vpop.permute.xlu0 %6185
    %6187 = vrot.lane.b32.xlu0 %v4654, 48
    %v6188 = vpop.permute.xlu0 %6187
    %6189 = vrot.lane.b32.xlu0 %v4655, 48
    %v6190 = vpop.permute.xlu0 %6189
    %v6257 = vrot.slane %v4600, 1
    %v6258 = vrot.slane %v4601, 1
    %v6259 = vsel %vm1960, %v6257, %v6258
    %v6260 = vrot.slane %v4602, 1
    %v6261 = vsel %vm1960, %v6258, %v6260
    %v6262 = vrot.slane %v4654, 1
    %v6263 = vrot.slane %v4655, 1
    %v6264 = vsel %vm1960, %v6262, %v6263
    %v6265 = vrot.slane %v4656, 1
    %v6266 = vsel %vm1960, %v6263, %v6265
    %6267 = vrot.lane.b32.xlu0 %v4765, 56
    %v6268 = vpop.permute.xlu0 %6267
    %6269 = vrot.lane.b32.xlu0 %v4767, 56
    %v6270 = vpop.permute.xlu0 %6269
    %6271 = vrot.lane.b32.xlu0 %v4770, 56
    %v6272 = vpop.permute.xlu0 %6271
    %6273 = vrot.lane.b32.xlu0 %v4772, 56
    %v6274 = vpop.permute.xlu0 %6273
    %6275 = vrot.lane.b32.xlu0 %v4775, 56
    %v6276 = vpop.permute.xlu0 %6275
    %6277 = vrot.lane.b32.xlu0 %v4777, 56
    %v6278 = vpop.permute.xlu0 %6277
    %6279 = vrot.lane.b32.xlu0 %v4780, 56
    %v6280 = vpop.permute.xlu0 %6279
    %6281 = vrot.lane.b32.xlu0 %v4782, 56
    %v6282 = vpop.permute.xlu0 %6281
    %6283 = vrot.lane.b32.xlu0 %v4785, 56
    %v6284 = vpop.permute.xlu0 %6283
    %6285 = vrot.lane.b32.xlu0 %v4787, 56
    %v6286 = vpop.permute.xlu0 %6285
    %6287 = vrot.lane.b32.xlu0 %v4790, 56
    %v6288 = vpop.permute.xlu0 %6287
    %6289 = vrot.lane.b32.xlu0 %v4792, 56
    %v6290 = vpop.permute.xlu0 %6289
    %6291 = vrot.lane.b32.xlu0 %v4795, 56
    %v6292 = vpop.permute.xlu0 %6291
    %6293 = vrot.lane.b32.xlu0 %v4797, 56
    %v6294 = vpop.permute.xlu0 %6293
    %6295 = vrot.lane.b32.xlu0 %v4800, 56
    %v6296 = vpop.permute.xlu0 %6295
    %6297 = vrot.lane.b32.xlu0 %v4802, 56
    %v6298 = vpop.permute.xlu0 %6297
    %6299 = vrot.lane.b32.xlu0 %v4805, 56
    %v6300 = vpop.permute.xlu0 %6299
    %6301 = vrot.lane.b32.xlu0 %v4807, 56
    %v6302 = vpop.permute.xlu0 %6301
    %6303 = vrot.lane.b32.xlu0 %v4810, 56
    %v6304 = vpop.permute.xlu0 %6303
    %6305 = vrot.lane.b32.xlu0 %v4812, 56
    %v6306 = vpop.permute.xlu0 %6305
    %6307 = vrot.lane.b32.xlu0 %v4815, 56
    %v6308 = vpop.permute.xlu0 %6307
    %6309 = vrot.lane.b32.xlu0 %v4817, 56
    %v6310 = vpop.permute.xlu0 %6309
    %6311 = vrot.lane.b32.xlu0 %v4820, 56
    %v6312 = vpop.permute.xlu0 %6311
    %6313 = vrot.lane.b32.xlu0 %v4822, 56
    %v6314 = vpop.permute.xlu0 %6313
    %6315 = vrot.lane.b32.xlu0 %v4825, 56
    %v6316 = vpop.permute.xlu0 %6315
    %6317 = vrot.lane.b32.xlu0 %v4827, 56
    %v6318 = vpop.permute.xlu0 %6317
    %6319 = vrot.lane.b32.xlu0 %v4830, 56
    %v6320 = vpop.permute.xlu0 %6319
    %6321 = vrot.lane.b32.xlu0 %v4832, 56
    %v6322 = vpop.permute.xlu0 %6321
    %6323 = vrot.lane.b32.xlu0 %v5657, 56
    %v6324 = vpop.permute.xlu0 %6323
    %6325 = vrot.lane.b32.xlu0 %v5659, 56
    %v6326 = vpop.permute.xlu0 %6325
    %6327 = vrot.lane.b32.xlu0 %v6259, 56
    %v6328 = vpop.permute.xlu0 %6327
    %6329 = vrot.lane.b32.xlu0 %v6261, 56
    %v6330 = vpop.permute.xlu0 %6329
    %6331 = vrot.lane.b32.xlu0 %v4845, 56
    %v6332 = vpop.permute.xlu0 %6331
    %6333 = vrot.lane.b32.xlu0 %v4847, 56
    %v6334 = vpop.permute.xlu0 %6333
    %6335 = vrot.lane.b32.xlu0 %v4850, 56
    %v6336 = vpop.permute.xlu0 %6335
    %6337 = vrot.lane.b32.xlu0 %v4852, 56
    %v6338 = vpop.permute.xlu0 %6337
    %6339 = vrot.lane.b32.xlu0 %v4855, 56
    %v6340 = vpop.permute.xlu0 %6339
    %6341 = vrot.lane.b32.xlu0 %v4857, 56
    %v6342 = vpop.permute.xlu0 %6341
    %6343 = vrot.lane.b32.xlu0 %v4860, 56
    %v6344 = vpop.permute.xlu0 %6343
    %6345 = vrot.lane.b32.xlu0 %v4862, 56
    %v6346 = vpop.permute.xlu0 %6345
    %6347 = vrot.lane.b32.xlu0 %v4865, 56
    %v6348 = vpop.permute.xlu0 %6347
    %6349 = vrot.lane.b32.xlu0 %v4867, 56
    %v6350 = vpop.permute.xlu0 %6349
    %6351 = vrot.lane.b32.xlu0 %v4870, 56
    %v6352 = vpop.permute.xlu0 %6351
    %6353 = vrot.lane.b32.xlu0 %v4872, 56
    %v6354 = vpop.permute.xlu0 %6353
    %6355 = vrot.lane.b32.xlu0 %v4875, 56
    %v6356 = vpop.permute.xlu0 %6355
    %6357 = vrot.lane.b32.xlu0 %v4877, 56
    %v6358 = vpop.permute.xlu0 %6357
    %6359 = vrot.lane.b32.xlu0 %v4880, 56
    %v6360 = vpop.permute.xlu0 %6359
    %6361 = vrot.lane.b32.xlu0 %v4882, 56
    %v6362 = vpop.permute.xlu0 %6361
    %6363 = vrot.lane.b32.xlu0 %v4885, 56
    %v6364 = vpop.permute.xlu0 %6363
    %6365 = vrot.lane.b32.xlu0 %v4887, 56
    %v6366 = vpop.permute.xlu0 %6365
    %6367 = vrot.lane.b32.xlu0 %v4890, 56
    %v6368 = vpop.permute.xlu0 %6367
    %6369 = vrot.lane.b32.xlu0 %v4892, 56
    %v6370 = vpop.permute.xlu0 %6369
    %6371 = vrot.lane.b32.xlu0 %v4895, 56
    %v6372 = vpop.permute.xlu0 %6371
    %6373 = vrot.lane.b32.xlu0 %v4897, 56
    %v6374 = vpop.permute.xlu0 %6373
    %6375 = vrot.lane.b32.xlu0 %v4900, 56
    %v6376 = vpop.permute.xlu0 %6375
    %6377 = vrot.lane.b32.xlu0 %v4902, 56
    %v6378 = vpop.permute.xlu0 %6377
    %6379 = vrot.lane.b32.xlu0 %v4905, 56
    %v6380 = vpop.permute.xlu0 %6379
    %6381 = vrot.lane.b32.xlu0 %v4907, 56
    %v6382 = vpop.permute.xlu0 %6381
    %6383 = vrot.lane.b32.xlu0 %v4910, 56
    %v6384 = vpop.permute.xlu0 %6383
    %6385 = vrot.lane.b32.xlu0 %v4912, 56
    %v6386 = vpop.permute.xlu0 %6385
    %6387 = vrot.lane.b32.xlu0 %v5662, 56
    %v6388 = vpop.permute.xlu0 %6387
    %6389 = vrot.lane.b32.xlu0 %v5664, 56
    %v6390 = vpop.permute.xlu0 %6389
    %6391 = vrot.lane.b32.xlu0 %v6264, 56
    %v6392 = vpop.permute.xlu0 %6391
    %6393 = vrot.lane.b32.xlu0 %v6266, 56
    %v6394 = vpop.permute.xlu0 %6393
    %v6459 = vrot.slane %v4600, 2
    %v6460 = vrot.slane %v4601, 2
    %v6461 = vsel %vm2057, %v6459, %v6460
    %v6462 = vrot.slane %v4602, 2
    %v6463 = vsel %vm2057, %v6460, %v6462
    %v6464 = vrot.slane %v4654, 2
    %v6465 = vrot.slane %v4655, 2
    %v6466 = vsel %vm2057, %v6464, %v6465
    %v6467 = vrot.slane %v4656, 2
    %v6468 = vsel %vm2057, %v6465, %v6467
    %6469 = vrot.lane.b32.xlu0 %v5117, 64
    %v6470 = vpop.permute.xlu0 %6469
    %6471 = vrot.lane.b32.xlu0 %v5119, 64
    %v6472 = vpop.permute.xlu0 %6471
    %6473 = vrot.lane.b32.xlu0 %v5122, 64
    %v6474 = vpop.permute.xlu0 %6473
    %6475 = vrot.lane.b32.xlu0 %v5124, 64
    %v6476 = vpop.permute.xlu0 %6475
    %6477 = vrot.lane.b32.xlu0 %v5127, 64
    %v6478 = vpop.permute.xlu0 %6477
    %6479 = vrot.lane.b32.xlu0 %v5129, 64
    %v6480 = vpop.permute.xlu0 %6479
    %6481 = vrot.lane.b32.xlu0 %v5132, 64
    %v6482 = vpop.permute.xlu0 %6481
    %6483 = vrot.lane.b32.xlu0 %v5134, 64
    %v6484 = vpop.permute.xlu0 %6483
    %6485 = vrot.lane.b32.xlu0 %v5137, 64
    %v6486 = vpop.permute.xlu0 %6485
    %6487 = vrot.lane.b32.xlu0 %v5139, 64
    %v6488 = vpop.permute.xlu0 %6487
    %6489 = vrot.lane.b32.xlu0 %v5142, 64
    %v6490 = vpop.permute.xlu0 %6489
    %6491 = vrot.lane.b32.xlu0 %v5144, 64
    %v6492 = vpop.permute.xlu0 %6491
    %6493 = vrot.lane.b32.xlu0 %v5147, 64
    %v6494 = vpop.permute.xlu0 %6493
    %6495 = vrot.lane.b32.xlu0 %v5149, 64
    %v6496 = vpop.permute.xlu0 %6495
    %6497 = vrot.lane.b32.xlu0 %v5152, 64
    %v6498 = vpop.permute.xlu0 %6497
    %6499 = vrot.lane.b32.xlu0 %v5154, 64
    %v6500 = vpop.permute.xlu0 %6499
    %6501 = vrot.lane.b32.xlu0 %v5157, 64
    %v6502 = vpop.permute.xlu0 %6501
    %6503 = vrot.lane.b32.xlu0 %v5159, 64
    %v6504 = vpop.permute.xlu0 %6503
    %6505 = vrot.lane.b32.xlu0 %v5162, 64
    %v6506 = vpop.permute.xlu0 %6505
    %6507 = vrot.lane.b32.xlu0 %v5164, 64
    %v6508 = vpop.permute.xlu0 %6507
    %6509 = vrot.lane.b32.xlu0 %v5167, 64
    %v6510 = vpop.permute.xlu0 %6509
    %6511 = vrot.lane.b32.xlu0 %v5169, 64
    %v6512 = vpop.permute.xlu0 %6511
    %6513 = vrot.lane.b32.xlu0 %v5172, 64
    %v6514 = vpop.permute.xlu0 %6513
    %6515 = vrot.lane.b32.xlu0 %v5174, 64
    %v6516 = vpop.permute.xlu0 %6515
    %6517 = vrot.lane.b32.xlu0 %v5177, 64
    %v6518 = vpop.permute.xlu0 %6517
    %6519 = vrot.lane.b32.xlu0 %v5179, 64
    %v6520 = vpop.permute.xlu0 %6519
    %6521 = vrot.lane.b32.xlu0 %v5182, 64
    %v6522 = vpop.permute.xlu0 %6521
    %6523 = vrot.lane.b32.xlu0 %v5184, 64
    %v6524 = vpop.permute.xlu0 %6523
    %6525 = vrot.lane.b32.xlu0 %v5859, 64
    %v6526 = vpop.permute.xlu0 %6525
    %6527 = vrot.lane.b32.xlu0 %v5861, 64
    %v6528 = vpop.permute.xlu0 %6527
    %6529 = vrot.lane.b32.xlu0 %v6461, 64
    %v6530 = vpop.permute.xlu0 %6529
    %6531 = vrot.lane.b32.xlu0 %v6463, 64
    %v6532 = vpop.permute.xlu0 %6531
    %6533 = vrot.lane.b32.xlu0 %v5197, 64
    %v6534 = vpop.permute.xlu0 %6533
    %6535 = vrot.lane.b32.xlu0 %v5199, 64
    %v6536 = vpop.permute.xlu0 %6535
    %6537 = vrot.lane.b32.xlu0 %v5202, 64
    %v6538 = vpop.permute.xlu0 %6537
    %6539 = vrot.lane.b32.xlu0 %v5204, 64
    %v6540 = vpop.permute.xlu0 %6539
    %6541 = vrot.lane.b32.xlu0 %v5207, 64
    %v6542 = vpop.permute.xlu0 %6541
    %6543 = vrot.lane.b32.xlu0 %v5209, 64
    %v6544 = vpop.permute.xlu0 %6543
    %6545 = vrot.lane.b32.xlu0 %v5212, 64
    %v6546 = vpop.permute.xlu0 %6545
    %6547 = vrot.lane.b32.xlu0 %v5214, 64
    %v6548 = vpop.permute.xlu0 %6547
    %6549 = vrot.lane.b32.xlu0 %v5217, 64
    %v6550 = vpop.permute.xlu0 %6549
    %6551 = vrot.lane.b32.xlu0 %v5219, 64
    %v6552 = vpop.permute.xlu0 %6551
    %6553 = vrot.lane.b32.xlu0 %v5222, 64
    %v6554 = vpop.permute.xlu0 %6553
    %6555 = vrot.lane.b32.xlu0 %v5224, 64
    %v6556 = vpop.permute.xlu0 %6555
    %6557 = vrot.lane.b32.xlu0 %v5227, 64
    %v6558 = vpop.permute.xlu0 %6557
    %6559 = vrot.lane.b32.xlu0 %v5229, 64
    %v6560 = vpop.permute.xlu0 %6559
    %6561 = vrot.lane.b32.xlu0 %v5232, 64
    %v6562 = vpop.permute.xlu0 %6561
    %6563 = vrot.lane.b32.xlu0 %v5234, 64
    %v6564 = vpop.permute.xlu0 %6563
    %6565 = vrot.lane.b32.xlu0 %v5237, 64
    %v6566 = vpop.permute.xlu0 %6565
    %6567 = vrot.lane.b32.xlu0 %v5239, 64
    %v6568 = vpop.permute.xlu0 %6567
    %6569 = vrot.lane.b32.xlu0 %v5242, 64
    %v6570 = vpop.permute.xlu0 %6569
    %6571 = vrot.lane.b32.xlu0 %v5244, 64
    %v6572 = vpop.permute.xlu0 %6571
    %6573 = vrot.lane.b32.xlu0 %v5247, 64
    %v6574 = vpop.permute.xlu0 %6573
    %6575 = vrot.lane.b32.xlu0 %v5249, 64
    %v6576 = vpop.permute.xlu0 %6575
    %6577 = vrot.lane.b32.xlu0 %v5252, 64
    %v6578 = vpop.permute.xlu0 %6577
    %6579 = vrot.lane.b32.xlu0 %v5254, 64
    %v6580 = vpop.permute.xlu0 %6579
    %6581 = vrot.lane.b32.xlu0 %v5257, 64
    %v6582 = vpop.permute.xlu0 %6581
    %6583 = vrot.lane.b32.xlu0 %v5259, 64
    %v6584 = vpop.permute.xlu0 %6583
    %6585 = vrot.lane.b32.xlu0 %v5262, 64
    %v6586 = vpop.permute.xlu0 %6585
    %6587 = vrot.lane.b32.xlu0 %v5264, 64
    %v6588 = vpop.permute.xlu0 %6587
    %6589 = vrot.lane.b32.xlu0 %v5864, 64
    %v6590 = vpop.permute.xlu0 %6589
    %6591 = vrot.lane.b32.xlu0 %v5866, 64
    %v6592 = vpop.permute.xlu0 %6591
    %6593 = vrot.lane.b32.xlu0 %v6466, 64
    %v6594 = vpop.permute.xlu0 %6593
    %6595 = vrot.lane.b32.xlu0 %v6468, 64
    %v6596 = vpop.permute.xlu0 %6595
    %v6661 = vsel %vm4005, %v4549, %v4914
    %v6662 = vsel %vm4005, %v4550, %v4916
    %v6663 = vsel %vm4005, %v4552, %v4918
    %v6664 = vsel %vm4005, %v4553, %v4920
    %v6665 = vsel %vm4005, %v4555, %v4922
    %v6666 = vsel %vm4005, %v4556, %v4924
    %v6667 = vsel %vm4005, %v4558, %v4926
    %v6668 = vsel %vm4005, %v4559, %v4928
    %v6669 = vsel %vm4005, %v4561, %v4930
    %v6670 = vsel %vm4005, %v4562, %v4932
    %v6671 = vsel %vm4005, %v4564, %v4934
    %v6672 = vsel %vm4005, %v4565, %v4936
    %v6673 = vsel %vm4005, %v4567, %v4938
    %v6674 = vsel %vm4005, %v4568, %v4940
    %v6675 = vsel %vm4005, %v4570, %v4942
    %v6676 = vsel %vm4005, %v4571, %v4944
    %v6677 = vsel %vm4005, %v4573, %v4946
    %v6678 = vsel %vm4005, %v4574, %v4948
    %v6679 = vsel %vm4005, %v4576, %v4950
    %v6680 = vsel %vm4005, %v4577, %v4952
    %v6681 = vsel %vm4005, %v4579, %v4954
    %v6682 = vsel %vm4005, %v4580, %v4956
    %v6683 = vsel %vm4005, %v4582, %v4958
    %v6684 = vsel %vm4005, %v4583, %v4960
    %v6685 = vsel %vm4005, %v4585, %v4962
    %v6686 = vsel %vm4005, %v4586, %v4964
    %v6687 = vsel %vm4005, %v4588, %v4966
    %v6688 = vsel %vm4005, %v4589, %v4968
    %v6689 = vsel %vm4005, %v4591, %v4970
    %v6690 = vsel %vm4005, %v4592, %v4972
    %v6691 = vsel %vm4005, %v4594, %v4974
    %v6692 = vsel %vm4005, %v4595, %v4976
    %v6693 = vsel %vm4005, %v4603, %v4978
    %v6694 = vsel %vm4005, %v4604, %v4980
    %v6695 = vsel %vm4005, %v4606, %v4982
    %v6696 = vsel %vm4005, %v4607, %v4984
    %v6697 = vsel %vm4005, %v4609, %v4986
    %v6698 = vsel %vm4005, %v4610, %v4988
    %v6699 = vsel %vm4005, %v4612, %v4990
    %v6700 = vsel %vm4005, %v4613, %v4992
    %v6701 = vsel %vm4005, %v4615, %v4994
    %v6702 = vsel %vm4005, %v4616, %v4996
    %v6703 = vsel %vm4005, %v4618, %v4998
    %v6704 = vsel %vm4005, %v4619, %v5000
    %v6705 = vsel %vm4005, %v4621, %v5002
    %v6706 = vsel %vm4005, %v4622, %v5004
    %v6707 = vsel %vm4005, %v4624, %v5006
    %v6708 = vsel %vm4005, %v4625, %v5008
    %v6709 = vsel %vm4005, %v4627, %v5010
    %v6710 = vsel %vm4005, %v4628, %v5012
    %v6711 = vsel %vm4005, %v4630, %v5014
    %v6712 = vsel %vm4005, %v4631, %v5016
    %v6713 = vsel %vm4005, %v4633, %v5018
    %v6714 = vsel %vm4005, %v4634, %v5020
    %v6715 = vsel %vm4005, %v4636, %v5022
    %v6716 = vsel %vm4005, %v4637, %v5024
    %v6717 = vsel %vm4005, %v4639, %v5026
    %v6718 = vsel %vm4005, %v4640, %v5028
    %v6719 = vsel %vm4005, %v4642, %v5030
    %v6720 = vsel %vm4005, %v4643, %v5032
    %v6721 = vsel %vm4005, %v4645, %v5034
    %v6722 = vsel %vm4005, %v4646, %v5036
    %v6723 = vsel %vm4005, %v4648, %v5038
    %v6724 = vsel %vm4005, %v4649, %v5040
    %v6725 = vsel %vm1716, %v6661, %v5266
    %v6726 = vsel %vm1716, %v6662, %v5268
    %v6727 = vsel %vm1716, %v6663, %v5270
    %v6728 = vsel %vm1716, %v6664, %v5272
    %v6729 = vsel %vm1716, %v6665, %v5274
    %v6730 = vsel %vm1716, %v6666, %v5276
    %v6731 = vsel %vm1716, %v6667, %v5278
    %v6732 = vsel %vm1716, %v6668, %v5280
    %v6733 = vsel %vm1716, %v6669, %v5282
    %v6734 = vsel %vm1716, %v6670, %v5284
    %v6735 = vsel %vm1716, %v6671, %v5286
    %v6736 = vsel %vm1716, %v6672, %v5288
    %v6737 = vsel %vm1716, %v6673, %v5290
    %v6738 = vsel %vm1716, %v6674, %v5292
    %v6739 = vsel %vm1716, %v6675, %v5294
    %v6740 = vsel %vm1716, %v6676, %v5296
    %v6741 = vsel %vm1716, %v6677, %v5298
    %v6742 = vsel %vm1716, %v6678, %v5300
    %v6743 = vsel %vm1716, %v6679, %v5302
    %v6744 = vsel %vm1716, %v6680, %v5304
    %v6745 = vsel %vm1716, %v6681, %v5306
    %v6746 = vsel %vm1716, %v6682, %v5308
    %v6747 = vsel %vm1716, %v6683, %v5310
    %v6748 = vsel %vm1716, %v6684, %v5312
    %v6749 = vsel %vm1716, %v6685, %v5314
    %v6750 = vsel %vm1716, %v6686, %v5316
    %v6751 = vsel %vm1716, %v6687, %v5318
    %v6752 = vsel %vm1716, %v6688, %v5320
    %v6753 = vsel %vm1716, %v6689, %v5322
    %v6754 = vsel %vm1716, %v6690, %v5324
    %v6755 = vsel %vm1716, %v6691, %v5326
    %v6756 = vsel %vm1716, %v6692, %v5328
    %v6757 = vsel %vm1716, %v6693, %v5330
    %v6758 = vsel %vm1716, %v6694, %v5332
    %v6759 = vsel %vm1716, %v6695, %v5334
    %v6760 = vsel %vm1716, %v6696, %v5336
    %v6761 = vsel %vm1716, %v6697, %v5338
    %v6762 = vsel %vm1716, %v6698, %v5340
    %v6763 = vsel %vm1716, %v6699, %v5342
    %v6764 = vsel %vm1716, %v6700, %v5344
    %v6765 = vsel %vm1716, %v6701, %v5346
    %v6766 = vsel %vm1716, %v6702, %v5348
    %v6767 = vsel %vm1716, %v6703, %v5350
    %v6768 = vsel %vm1716, %v6704, %v5352
    %v6769 = vsel %vm1716, %v6705, %v5354
    %v6770 = vsel %vm1716, %v6706, %v5356
    %v6771 = vsel %vm1716, %v6707, %v5358
    %v6772 = vsel %vm1716, %v6708, %v5360
    %v6773 = vsel %vm1716, %v6709, %v5362
    %v6774 = vsel %vm1716, %v6710, %v5364
    %v6775 = vsel %vm1716, %v6711, %v5366
    %v6776 = vsel %vm1716, %v6712, %v5368
    %v6777 = vsel %vm1716, %v6713, %v5370
    %v6778 = vsel %vm1716, %v6714, %v5372
    %v6779 = vsel %vm1716, %v6715, %v5374
    %v6780 = vsel %vm1716, %v6716, %v5376
    %v6781 = vsel %vm1716, %v6717, %v5378
    %v6782 = vsel %vm1716, %v6718, %v5380
    %v6783 = vsel %vm1716, %v6719, %v5382
    %v6784 = vsel %vm1716, %v6720, %v5384
    %v6785 = vsel %vm1716, %v6721, %v5386
    %v6786 = vsel %vm1716, %v6722, %v5388
    %v6787 = vsel %vm1716, %v6723, %v5390
    %v6788 = vsel %vm1716, %v6724, %v5392
    %vm6789 = vcmask 195584
    %v6790 = vsel %vm6789, %v6725, %v5462
    %v6791 = vsel %vm6789, %v6726, %v5464
    %v6792 = vsel %vm6789, %v6727, %v5466
    %v6793 = vsel %vm6789, %v6728, %v5468
    %v6794 = vsel %vm6789, %v6729, %v5470
    %v6795 = vsel %vm6789, %v6730, %v5472
    %v6796 = vsel %vm6789, %v6731, %v5474
    %v6797 = vsel %vm6789, %v6732, %v5476
    %v6798 = vsel %vm6789, %v6733, %v5478
    %v6799 = vsel %vm6789, %v6734, %v5480
    %v6800 = vsel %vm6789, %v6735, %v5482
    %v6801 = vsel %vm6789, %v6736, %v5484
    %v6802 = vsel %vm6789, %v6737, %v5486
    %v6803 = vsel %vm6789, %v6738, %v5488
    %v6804 = vsel %vm6789, %v6739, %v5490
    %v6805 = vsel %vm6789, %v6740, %v5492
    %v6806 = vsel %vm6789, %v6741, %v5494
    %v6807 = vsel %vm6789, %v6742, %v5496
    %v6808 = vsel %vm6789, %v6743, %v5498
    %v6809 = vsel %vm6789, %v6744, %v5500
    %v6810 = vsel %vm6789, %v6745, %v5502
    %v6811 = vsel %vm6789, %v6746, %v5504
    %v6812 = vsel %vm6789, %v6747, %v5506
    %v6813 = vsel %vm6789, %v6748, %v5508
    %v6814 = vsel %vm6789, %v6749, %v5510
    %v6815 = vsel %vm6789, %v6750, %v5512
    %v6816 = vsel %vm6789, %v6751, %v5514
    %v6817 = vsel %vm6789, %v6752, %v5516
    %v6818 = vsel %vm6789, %v6753, %v5518
    %v6819 = vsel %vm6789, %v6754, %v5520
    %v6820 = vsel %vm6789, %v6755, %v5522
    %v6821 = vsel %vm6789, %v6756, %v5524
    %v6822 = vsel %vm6789, %v6757, %v5526
    %v6823 = vsel %vm6789, %v6758, %v5528
    %v6824 = vsel %vm6789, %v6759, %v5530
    %v6825 = vsel %vm6789, %v6760, %v5532
    %v6826 = vsel %vm6789, %v6761, %v5534
    %v6827 = vsel %vm6789, %v6762, %v5536
    %v6828 = vsel %vm6789, %v6763, %v5538
    %v6829 = vsel %vm6789, %v6764, %v5540
    %v6830 = vsel %vm6789, %v6765, %v5542
    %v6831 = vsel %vm6789, %v6766, %v5544
    %v6832 = vsel %vm6789, %v6767, %v5546
    %v6833 = vsel %vm6789, %v6768, %v5548
    %v6834 = vsel %vm6789, %v6769, %v5550
    %v6835 = vsel %vm6789, %v6770, %v5552
    %v6836 = vsel %vm6789, %v6771, %v5554
    %v6837 = vsel %vm6789, %v6772, %v5556
    %v6838 = vsel %vm6789, %v6773, %v5558
    %v6839 = vsel %vm6789, %v6774, %v5560
    %v6840 = vsel %vm6789, %v6775, %v5562
    %v6841 = vsel %vm6789, %v6776, %v5564
    %v6842 = vsel %vm6789, %v6777, %v5566
    %v6843 = vsel %vm6789, %v6778, %v5568
    %v6844 = vsel %vm6789, %v6779, %v5570
    %v6845 = vsel %vm6789, %v6780, %v5572
    %v6846 = vsel %vm6789, %v6781, %v5574
    %v6847 = vsel %vm6789, %v6782, %v5576
    %v6848 = vsel %vm6789, %v6783, %v5578
    %v6849 = vsel %vm6789, %v6784, %v5580
    %v6850 = vsel %vm6789, %v6785, %v5582
    %v6851 = vsel %vm6789, %v6786, %v5584
    %v6852 = vsel %vm6789, %v6787, %v5586
    %v6853 = vsel %vm6789, %v6788, %v5588
    %v6854 = vsel %vm93, %v6790, %v5666
    %v6855 = vsel %vm93, %v6791, %v5668
    %v6856 = vsel %vm93, %v6792, %v5670
    %v6857 = vsel %vm93, %v6793, %v5672
    %v6858 = vsel %vm93, %v6794, %v5674
    %v6859 = vsel %vm93, %v6795, %v5676
    %v6860 = vsel %vm93, %v6796, %v5678
    %v6861 = vsel %vm93, %v6797, %v5680
    %v6862 = vsel %vm93, %v6798, %v5682
    %v6863 = vsel %vm93, %v6799, %v5684
    %v6864 = vsel %vm93, %v6800, %v5686
    %v6865 = vsel %vm93, %v6801, %v5688
    %v6866 = vsel %vm93, %v6802, %v5690
    %v6867 = vsel %vm93, %v6803, %v5692
    %v6868 = vsel %vm93, %v6804, %v5694
    %v6869 = vsel %vm93, %v6805, %v5696
    %v6870 = vsel %vm93, %v6806, %v5698
    %v6871 = vsel %vm93, %v6807, %v5700
    %v6872 = vsel %vm93, %v6808, %v5702
    %v6873 = vsel %vm93, %v6809, %v5704
    %v6874 = vsel %vm93, %v6810, %v5706
    %v6875 = vsel %vm93, %v6811, %v5708
    %v6876 = vsel %vm93, %v6812, %v5710
    %v6877 = vsel %vm93, %v6813, %v5712
    %v6878 = vsel %vm93, %v6814, %v5714
    %v6879 = vsel %vm93, %v6815, %v5716
    %v6880 = vsel %vm93, %v6816, %v5718
    %v6881 = vsel %vm93, %v6817, %v5720
    %v6882 = vsel %vm93, %v6818, %v5722
    %v6883 = vsel %vm93, %v6819, %v5724
    %v6884 = vsel %vm93, %v6820, %v5726
    %v6885 = vsel %vm93, %v6821, %v5728
    %v6886 = vsel %vm93, %v6822, %v5730
    %v6887 = vsel %vm93, %v6823, %v5732
    %v6888 = vsel %vm93, %v6824, %v5734
    %v6889 = vsel %vm93, %v6825, %v5736
    %v6890 = vsel %vm93, %v6826, %v5738
    %v6891 = vsel %vm93, %v6827, %v5740
    %v6892 = vsel %vm93, %v6828, %v5742
    %v6893 = vsel %vm93, %v6829, %v5744
    %v6894 = vsel %vm93, %v6830, %v5746
    %v6895 = vsel %vm93, %v6831, %v5748
    %v6896 = vsel %vm93, %v6832, %v5750
    %v6897 = vsel %vm93, %v6833, %v5752
    %v6898 = vsel %vm93, %v6834, %v5754
    %v6899 = vsel %vm93, %v6835, %v5756
    %v6900 = vsel %vm93, %v6836, %v5758
    %v6901 = vsel %vm93, %v6837, %v5760
    %v6902 = vsel %vm93, %v6838, %v5762
    %v6903 = vsel %vm93, %v6839, %v5764
    %v6904 = vsel %vm93, %v6840, %v5766
    %v6905 = vsel %vm93, %v6841, %v5768
    %v6906 = vsel %vm93, %v6842, %v5770
    %v6907 = vsel %vm93, %v6843, %v5772
    %v6908 = vsel %vm93, %v6844, %v5774
    %v6909 = vsel %vm93, %v6845, %v5776
    %v6910 = vsel %vm93, %v6846, %v5778
    %v6911 = vsel %vm93, %v6847, %v5780
    %v6912 = vsel %vm93, %v6848, %v5782
    %v6913 = vsel %vm93, %v6849, %v5784
    %v6914 = vsel %vm93, %v6850, %v5786
    %v6915 = vsel %vm93, %v6851, %v5788
    %v6916 = vsel %vm93, %v6852, %v5790
    %v6917 = vsel %vm93, %v6853, %v5792
    %vm6918 = vcmask 326656
    %v6919 = vsel %vm6918, %v6854, %v5868
    %v6920 = vsel %vm6918, %v6855, %v5870
    %v6921 = vsel %vm6918, %v6856, %v5872
    %v6922 = vsel %vm6918, %v6857, %v5874
    %v6923 = vsel %vm6918, %v6858, %v5876
    %v6924 = vsel %vm6918, %v6859, %v5878
    %v6925 = vsel %vm6918, %v6860, %v5880
    %v6926 = vsel %vm6918, %v6861, %v5882
    %v6927 = vsel %vm6918, %v6862, %v5884
    %v6928 = vsel %vm6918, %v6863, %v5886
    %v6929 = vsel %vm6918, %v6864, %v5888
    %v6930 = vsel %vm6918, %v6865, %v5890
    %v6931 = vsel %vm6918, %v6866, %v5892
    %v6932 = vsel %vm6918, %v6867, %v5894
    %v6933 = vsel %vm6918, %v6868, %v5896
    %v6934 = vsel %vm6918, %v6869, %v5898
    %v6935 = vsel %vm6918, %v6870, %v5900
    %v6936 = vsel %vm6918, %v6871, %v5902
    %v6937 = vsel %vm6918, %v6872, %v5904
    %v6938 = vsel %vm6918, %v6873, %v5906
    %v6939 = vsel %vm6918, %v6874, %v5908
    %v6940 = vsel %vm6918, %v6875, %v5910
    %v6941 = vsel %vm6918, %v6876, %v5912
    %v6942 = vsel %vm6918, %v6877, %v5914
    %v6943 = vsel %vm6918, %v6878, %v5916
    %v6944 = vsel %vm6918, %v6879, %v5918
    %v6945 = vsel %vm6918, %v6880, %v5920
    %v6946 = vsel %vm6918, %v6881, %v5922
    %v6947 = vsel %vm6918, %v6882, %v5924
    %v6948 = vsel %vm6918, %v6883, %v5926
    %v6949 = vsel %vm6918, %v6884, %v5928
    %v6950 = vsel %vm6918, %v6885, %v5930
    %v6951 = vsel %vm6918, %v6886, %v5932
    %v6952 = vsel %vm6918, %v6887, %v5934
    %v6953 = vsel %vm6918, %v6888, %v5936
    %v6954 = vsel %vm6918, %v6889, %v5938
    %v6955 = vsel %vm6918, %v6890, %v5940
    %v6956 = vsel %vm6918, %v6891, %v5942
    %v6957 = vsel %vm6918, %v6892, %v5944
    %v6958 = vsel %vm6918, %v6893, %v5946
    %v6959 = vsel %vm6918, %v6894, %v5948
    %v6960 = vsel %vm6918, %v6895, %v5950
    %v6961 = vsel %vm6918, %v6896, %v5952
    %v6962 = vsel %vm6918, %v6897, %v5954
    %v6963 = vsel %vm6918, %v6898, %v5956
    %v6964 = vsel %vm6918, %v6899, %v5958
    %v6965 = vsel %vm6918, %v6900, %v5960
    %v6966 = vsel %vm6918, %v6901, %v5962
    %v6967 = vsel %vm6918, %v6902, %v5964
    %v6968 = vsel %vm6918, %v6903, %v5966
    %v6969 = vsel %vm6918, %v6904, %v5968
    %v6970 = vsel %vm6918, %v6905, %v5970
    %v6971 = vsel %vm6918, %v6906, %v5972
    %v6972 = vsel %vm6918, %v6907, %v5974
    %v6973 = vsel %vm6918, %v6908, %v5976
    %v6974 = vsel %vm6918, %v6909, %v5978
    %v6975 = vsel %vm6918, %v6910, %v5980
    %v6976 = vsel %vm6918, %v6911, %v5982
    %v6977 = vsel %vm6918, %v6912, %v5984
    %v6978 = vsel %vm6918, %v6913, %v5986
    %v6979 = vsel %vm6918, %v6914, %v5988
    %v6980 = vsel %vm6918, %v6915, %v5990
    %v6981 = vsel %vm6918, %v6916, %v5992
    %v6982 = vsel %vm6918, %v6917, %v5994
    %v6983 = vsel %vm2458, %v6919, %v6064
    %v6984 = vsel %vm2458, %v6920, %v6066
    %v6985 = vsel %vm2458, %v6921, %v6068
    %v6986 = vsel %vm2458, %v6922, %v6070
    %v6987 = vsel %vm2458, %v6923, %v6072
    %v6988 = vsel %vm2458, %v6924, %v6074
    %v6989 = vsel %vm2458, %v6925, %v6076
    %v6990 = vsel %vm2458, %v6926, %v6078
    %v6991 = vsel %vm2458, %v6927, %v6080
    %v6992 = vsel %vm2458, %v6928, %v6082
    %v6993 = vsel %vm2458, %v6929, %v6084
    %v6994 = vsel %vm2458, %v6930, %v6086
    %v6995 = vsel %vm2458, %v6931, %v6088
    %v6996 = vsel %vm2458, %v6932, %v6090
    %v6997 = vsel %vm2458, %v6933, %v6092
    %v6998 = vsel %vm2458, %v6934, %v6094
    %v6999 = vsel %vm2458, %v6935, %v6096
    %v7000 = vsel %vm2458, %v6936, %v6098
    %v7001 = vsel %vm2458, %v6937, %v6100
    %v7002 = vsel %vm2458, %v6938, %v6102
    %v7003 = vsel %vm2458, %v6939, %v6104
    %v7004 = vsel %vm2458, %v6940, %v6106
    %v7005 = vsel %vm2458, %v6941, %v6108
    %v7006 = vsel %vm2458, %v6942, %v6110
    %v7007 = vsel %vm2458, %v6943, %v6112
    %v7008 = vsel %vm2458, %v6944, %v6114
    %v7009 = vsel %vm2458, %v6945, %v6116
    %v7010 = vsel %vm2458, %v6946, %v6118
    %v7011 = vsel %vm2458, %v6947, %v6120
    %v7012 = vsel %vm2458, %v6948, %v6122
    %v7013 = vsel %vm2458, %v6949, %v6124
    %v7014 = vsel %vm2458, %v6950, %v6126
    %v7015 = vsel %vm2458, %v6951, %v6128
    %v7016 = vsel %vm2458, %v6952, %v6130
    %v7017 = vsel %vm2458, %v6953, %v6132
    %v7018 = vsel %vm2458, %v6954, %v6134
    %v7019 = vsel %vm2458, %v6955, %v6136
    %v7020 = vsel %vm2458, %v6956, %v6138
    %v7021 = vsel %vm2458, %v6957, %v6140
    %v7022 = vsel %vm2458, %v6958, %v6142
    %v7023 = vsel %vm2458, %v6959, %v6144
    %v7024 = vsel %vm2458, %v6960, %v6146
    %v7025 = vsel %vm2458, %v6961, %v6148
    %v7026 = vsel %vm2458, %v6962, %v6150
    %v7027 = vsel %vm2458, %v6963, %v6152
    %v7028 = vsel %vm2458, %v6964, %v6154
    %v7029 = vsel %vm2458, %v6965, %v6156
    %v7030 = vsel %vm2458, %v6966, %v6158
    %v7031 = vsel %vm2458, %v6967, %v6160
    %v7032 = vsel %vm2458, %v6968, %v6162
    %v7033 = vsel %vm2458, %v6969, %v6164
    %v7034 = vsel %vm2458, %v6970, %v6166
    %v7035 = vsel %vm2458, %v6971, %v6168
    %v7036 = vsel %vm2458, %v6972, %v6170
    %v7037 = vsel %vm2458, %v6973, %v6172
    %v7038 = vsel %vm2458, %v6974, %v6174
    %v7039 = vsel %vm2458, %v6975, %v6176
    %v7040 = vsel %vm2458, %v6976, %v6178
    %v7041 = vsel %vm2458, %v6977, %v6180
    %v7042 = vsel %vm2458, %v6978, %v6182
    %v7043 = vsel %vm2458, %v6979, %v6184
    %v7044 = vsel %vm2458, %v6980, %v6186
    %v7045 = vsel %vm2458, %v6981, %v6188
    %v7046 = vsel %vm2458, %v6982, %v6190
    %vm7047 = vcmask 457728
    %v7048 = vsel %vm7047, %v6983, %v6268
    %v7049 = vsel %vm7047, %v6984, %v6270
    %v7050 = vsel %vm7047, %v6985, %v6272
    %v7051 = vsel %vm7047, %v6986, %v6274
    %v7052 = vsel %vm7047, %v6987, %v6276
    %v7053 = vsel %vm7047, %v6988, %v6278
    %v7054 = vsel %vm7047, %v6989, %v6280
    %v7055 = vsel %vm7047, %v6990, %v6282
    %v7056 = vsel %vm7047, %v6991, %v6284
    %v7057 = vsel %vm7047, %v6992, %v6286
    %v7058 = vsel %vm7047, %v6993, %v6288
    %v7059 = vsel %vm7047, %v6994, %v6290
    %v7060 = vsel %vm7047, %v6995, %v6292
    %v7061 = vsel %vm7047, %v6996, %v6294
    %v7062 = vsel %vm7047, %v6997, %v6296
    %v7063 = vsel %vm7047, %v6998, %v6298
    %v7064 = vsel %vm7047, %v6999, %v6300
    %v7065 = vsel %vm7047, %v7000, %v6302
    %v7066 = vsel %vm7047, %v7001, %v6304
    %v7067 = vsel %vm7047, %v7002, %v6306
    %v7068 = vsel %vm7047, %v7003, %v6308
    %v7069 = vsel %vm7047, %v7004, %v6310
    %v7070 = vsel %vm7047, %v7005, %v6312
    %v7071 = vsel %vm7047, %v7006, %v6314
    %v7072 = vsel %vm7047, %v7007, %v6316
    %v7073 = vsel %vm7047, %v7008, %v6318
    %v7074 = vsel %vm7047, %v7009, %v6320
    %v7075 = vsel %vm7047, %v7010, %v6322
    %v7076 = vsel %vm7047, %v7011, %v6324
    %v7077 = vsel %vm7047, %v7012, %v6326
    %v7078 = vsel %vm7047, %v7013, %v6328
    %v7079 = vsel %vm7047, %v7014, %v6330
    %v7080 = vsel %vm7047, %v7015, %v6332
    %v7081 = vsel %vm7047, %v7016, %v6334
    %v7082 = vsel %vm7047, %v7017, %v6336
    %v7083 = vsel %vm7047, %v7018, %v6338
    %v7084 = vsel %vm7047, %v7019, %v6340
    %v7085 = vsel %vm7047, %v7020, %v6342
    %v7086 = vsel %vm7047, %v7021, %v6344
    %v7087 = vsel %vm7047, %v7022, %v6346
    %v7088 = vsel %vm7047, %v7023, %v6348
    %v7089 = vsel %vm7047, %v7024, %v6350
    %v7090 = vsel %vm7047, %v7025, %v6352
    %v7091 = vsel %vm7047, %v7026, %v6354
    %v7092 = vsel %vm7047, %v7027, %v6356
    %v7093 = vsel %vm7047, %v7028, %v6358
    %v7094 = vsel %vm7047, %v7029, %v6360
    %v7095 = vsel %vm7047, %v7030, %v6362
    %v7096 = vsel %vm7047, %v7031, %v6364
    %v7097 = vsel %vm7047, %v7032, %v6366
    %v7098 = vsel %vm7047, %v7033, %v6368
    %v7099 = vsel %vm7047, %v7034, %v6370
    %v7100 = vsel %vm7047, %v7035, %v6372
    %v7101 = vsel %vm7047, %v7036, %v6374
    %v7102 = vsel %vm7047, %v7037, %v6376
    %v7103 = vsel %vm7047, %v7038, %v6378
    %v7104 = vsel %vm7047, %v7039, %v6380
    %v7105 = vsel %vm7047, %v7040, %v6382
    %v7106 = vsel %vm7047, %v7041, %v6384
    %v7107 = vsel %vm7047, %v7042, %v6386
    %v7108 = vsel %vm7047, %v7043, %v6388
    %v7109 = vsel %vm7047, %v7044, %v6390
    %v7110 = vsel %vm7047, %v7045, %v6392
    %v7111 = vsel %vm7047, %v7046, %v6394
    %v7112 = vsel %vm435, %v7048, %v6470
    %v7113 = vsel %vm435, %v7049, %v6472
    %v7114 = vsel %vm435, %v7050, %v6474
    %v7115 = vsel %vm435, %v7051, %v6476
    %v7116 = vsel %vm435, %v7052, %v6478
    %v7117 = vsel %vm435, %v7053, %v6480
    %v7118 = vsel %vm435, %v7054, %v6482
    %v7119 = vsel %vm435, %v7055, %v6484
    %v7120 = vsel %vm435, %v7056, %v6486
    %v7121 = vsel %vm435, %v7057, %v6488
    %v7122 = vsel %vm435, %v7058, %v6490
    %v7123 = vsel %vm435, %v7059, %v6492
    %v7124 = vsel %vm435, %v7060, %v6494
    %v7125 = vsel %vm435, %v7061, %v6496
    %v7126 = vsel %vm435, %v7062, %v6498
    %v7127 = vsel %vm435, %v7063, %v6500
    %v7128 = vsel %vm435, %v7064, %v6502
    %v7129 = vsel %vm435, %v7065, %v6504
    %v7130 = vsel %vm435, %v7066, %v6506
    %v7131 = vsel %vm435, %v7067, %v6508
    %v7132 = vsel %vm435, %v7068, %v6510
    %v7133 = vsel %vm435, %v7069, %v6512
    %v7134 = vsel %vm435, %v7070, %v6514
    %v7135 = vsel %vm435, %v7071, %v6516
    %v7136 = vsel %vm435, %v7072, %v6518
    %v7137 = vsel %vm435, %v7073, %v6520
    %v7138 = vsel %vm435, %v7074, %v6522
    %v7139 = vsel %vm435, %v7075, %v6524
    %v7140 = vsel %vm435, %v7076, %v6526
    %v7141 = vsel %vm435, %v7077, %v6528
    %v7142 = vsel %vm435, %v7078, %v6530
    %v7143 = vsel %vm435, %v7079, %v6532
    %v7144 = vsel %vm435, %v7080, %v6534
    %v7145 = vsel %vm435, %v7081, %v6536
    %v7146 = vsel %vm435, %v7082, %v6538
    %v7147 = vsel %vm435, %v7083, %v6540
    %v7148 = vsel %vm435, %v7084, %v6542
    %v7149 = vsel %vm435, %v7085, %v6544
    %v7150 = vsel %vm435, %v7086, %v6546
    %v7151 = vsel %vm435, %v7087, %v6548
    %v7152 = vsel %vm435, %v7088, %v6550
    %v7153 = vsel %vm435, %v7089, %v6552
    %v7154 = vsel %vm435, %v7090, %v6554
    %v7155 = vsel %vm435, %v7091, %v6556
    %v7156 = vsel %vm435, %v7092, %v6558
    %v7157 = vsel %vm435, %v7093, %v6560
    %v7158 = vsel %vm435, %v7094, %v6562
    %v7159 = vsel %vm435, %v7095, %v6564
    %v7160 = vsel %vm435, %v7096, %v6566
    %v7161 = vsel %vm435, %v7097, %v6568
    %v7162 = vsel %vm435, %v7098, %v6570
    %v7163 = vsel %vm435, %v7099, %v6572
    %v7164 = vsel %vm435, %v7100, %v6574
    %v7165 = vsel %vm435, %v7101, %v6576
    %v7166 = vsel %vm435, %v7102, %v6578
    %v7167 = vsel %vm435, %v7103, %v6580
    %v7168 = vsel %vm435, %v7104, %v6582
    %v7169 = vsel %vm435, %v7105, %v6584
    %v7170 = vsel %vm435, %v7106, %v6586
    %v7171 = vsel %vm435, %v7107, %v6588
    %v7172 = vsel %vm435, %v7108, %v6590
    %v7173 = vsel %vm435, %v7109, %v6592
    %v7174 = vsel %vm435, %v7110, %v6594
    %v7175 = vsel %vm435, %v7111, %v6596
    %v7176 = vld [vmem:[%s11] sm:$0x1]
    %v7177 = vld [vmem:[#allocation6] sm:$0x1]
    %7179 = vset.pattern.permute.xlu0 0
    %7180 = vperm.xlu0 %7179, %v7177
    %v7181 = vpop.permute.xlu0 %7180
    %v7183 = vperm.slane %v7181, 0
    %vm7184 = vcmask 588800
    %v7186 = vsel %vm7184, %v7176, 0
    %v7189 = vsel %vm7184, %v7112, 0
    %v7192 = vsel %vm7184, %v7113, 0
    %v7195 = vsel %vm7184, %v7114, 0
    %v7198 = vsel %vm7184, %v7115, 0
    %v7201 = vsel %vm7184, %v7116, 0
    %v7204 = vsel %vm7184, %v7117, 0
    %v7207 = vsel %vm7184, %v7118, 0
    %v7210 = vsel %vm7184, %v7119, 0
    %v7213 = vsel %vm7184, %v7120, 0
    %v7216 = vsel %vm7184, %v7121, 0
    %v7219 = vsel %vm7184, %v7122, 0
    %v7222 = vsel %vm7184, %v7123, 0
    %v7225 = vsel %vm7184, %v7124, 0
    %v7228 = vsel %vm7184, %v7125, 0
    %v7231 = vsel %vm7184, %v7126, 0
    %v7234 = vsel %vm7184, %v7127, 0
    %v7237 = vsel %vm7184, %v7128, 0
    %v7240 = vsel %vm7184, %v7129, 0
    %v7243 = vsel %vm7184, %v7130, 0
    %v7246 = vsel %vm7184, %v7131, 0
    %v7249 = vsel %vm7184, %v7132, 0
    %v7252 = vsel %vm7184, %v7133, 0
    %v7255 = vsel %vm7184, %v7134, 0
    %v7258 = vsel %vm7184, %v7135, 0
    %v7261 = vsel %vm7184, %v7136, 0
    %v7264 = vsel %vm7184, %v7137, 0
    %v7267 = vsel %vm7184, %v7138, 0
    %v7270 = vsel %vm7184, %v7139, 0
    %v7273 = vsel %vm7184, %v7140, 0
    %v7276 = vsel %vm7184, %v7141, 0
    %v7279 = vsel %vm7184, %v7142, 0
    %v7282 = vsel %vm7184, %v7143, 0
    %v7285 = vsel %vm7184, %v7144, 0
    %v7288 = vsel %vm7184, %v7145, 0
    %v7291 = vsel %vm7184, %v7146, 0
    %v7294 = vsel %vm7184, %v7147, 0
    %v7297 = vsel %vm7184, %v7148, 0
    %v7300 = vsel %vm7184, %v7149, 0
    %v7303 = vsel %vm7184, %v7150, 0
    %v7306 = vsel %vm7184, %v7151, 0
    %v7309 = vsel %vm7184, %v7152, 0
    %v7312 = vsel %vm7184, %v7153, 0
    %v7315 = vsel %vm7184, %v7154, 0
    %v7318 = vsel %vm7184, %v7155, 0
    %v7321 = vsel %vm7184, %v7156, 0
    %v7324 = vsel %vm7184, %v7157, 0
    %v7327 = vsel %vm7184, %v7158, 0
    %v7330 = vsel %vm7184, %v7159, 0
    %v7333 = vsel %vm7184, %v7160, 0
    %v7336 = vsel %vm7184, %v7161, 0
    %v7339 = vsel %vm7184, %v7162, 0
    %v7342 = vsel %vm7184, %v7163, 0
    %v7345 = vsel %vm7184, %v7164, 0
    %v7348 = vsel %vm7184, %v7165, 0
    %v7351 = vsel %vm7184, %v7166, 0
    %v7354 = vsel %vm7184, %v7167, 0
    %v7357 = vsel %vm7184, %v7168, 0
    %v7360 = vsel %vm7184, %v7169, 0
    %v7363 = vsel %vm7184, %v7170, 0
    %v7366 = vsel %vm7184, %v7171, 0
    %v7369 = vsel %vm7184, %v7172, 0
    %v7372 = vsel %vm7184, %v7173, 0
    %v7375 = vsel %vm7184, %v7174, 0
    %v7378 = vsel %vm7184, %v7175, 0
    %7380 = vmatpush.xpose.msra.mxu0 %v7234
    %7381 = vmatpush.xpose.msra.mxu0 %v7231
    %7382 = vmatpush.xpose.msra.mxu0 %v7228
    %7383 = vmatpush.xpose.msra.mxu0 %v7225
    %7384 = vmatpush.xpose.msra.mxu0 %v7222
    %7385 = vmatpush.xpose.msra.mxu0 %v7219
    %7386 = vmatpush.xpose.msra.mxu0 %v7216
    %7387 = vmatpush.xpose.msra.mxu0 %v7213
    %7388 = vmatpush.xpose.msra.mxu0 %v7210
    %7389 = vmatpush.xpose.msra.mxu0 %v7207
    %7390 = vmatpush.xpose.msra.mxu0 %v7204
    %7391 = vmatpush.xpose.msra.mxu0 %v7201
    %7392 = vmatpush.xpose.msra.mxu0 %v7198
    %7393 = vmatpush.xpose.msra.mxu0 %v7195
    %7394 = vmatpush.xpose.msra.mxu0 %v7192
    %7395 = vmatpush.xpose.msra.mxu0 %v7189
    %7396 = vmatmul.f32.gmra.mxu0 %v7186
    %v7397 = vpop.f32.mrf.mxu0
    %v7398 = vadd.f32 %v7183, %v7397
    %7399 = vdwg.mxu0
    %7400 = vmatpush.xpose.msra.mxu0 %v7282
    %7401 = vmatpush.xpose.msra.mxu0 %v7279
    %7402 = vmatpush.xpose.msra.mxu0 %v7276
    %7403 = vmatpush.xpose.msra.mxu0 %v7273
    %7404 = vmatpush.xpose.msra.mxu0 %v7270
    %7405 = vmatpush.xpose.msra.mxu0 %v7267
    %7406 = vmatpush.xpose.msra.mxu0 %v7264
    %7407 = vmatpush.xpose.msra.mxu0 %v7261
    %7408 = vmatpush.xpose.msra.mxu0 %v7258
    %7409 = vmatpush.xpose.msra.mxu0 %v7255
    %7410 = vmatpush.xpose.msra.mxu0 %v7252
    %7411 = vmatpush.xpose.msra.mxu0 %v7249
    %7412 = vmatpush.xpose.msra.mxu0 %v7246
    %7413 = vmatpush.xpose.msra.mxu0 %v7243
    %7414 = vmatpush.xpose.msra.mxu0 %v7240
    %7415 = vmatpush.xpose.msra.mxu0 %v7237
    %7416 = vmatmul.f32.gmra.mxu0 %v7186
    %v7417 = vpop.f32.mrf.mxu0
    %v7418 = vadd.f32 %v7183, %v7417
    %7419 = vdwg.mxu0
    %7420 = vmatpush.xpose.msra.mxu0 %v7330
    %7421 = vmatpush.xpose.msra.mxu0 %v7327
    %7422 = vmatpush.xpose.msra.mxu0 %v7324
    %7423 = vmatpush.xpose.msra.mxu0 %v7321
    %7424 = vmatpush.xpose.msra.mxu0 %v7318
    %7425 = vmatpush.xpose.msra.mxu0 %v7315
    %7426 = vmatpush.xpose.msra.mxu0 %v7312
    %7427 = vmatpush.xpose.msra.mxu0 %v7309
    %7428 = vmatpush.xpose.msra.mxu0 %v7306
    %7429 = vmatpush.xpose.msra.mxu0 %v7303
    %7430 = vmatpush.xpose.msra.mxu0 %v7300
    %7431 = vmatpush.xpose.msra.mxu0 %v7297
    %7432 = vmatpush.xpose.msra.mxu0 %v7294
    %7433 = vmatpush.xpose.msra.mxu0 %v7291
    %7434 = vmatpush.xpose.msra.mxu0 %v7288
    %7435 = vmatpush.xpose.msra.mxu0 %v7285
    %7436 = vmatmul.f32.gmra.mxu0 %v7186
    %v7437 = vpop.f32.mrf.mxu0
    %v7438 = vadd.f32 %v7183, %v7437
    %7439 = vdwg.mxu0
    %7440 = vmatpush.xpose.msra.mxu0 %v7378
    %7441 = vmatpush.xpose.msra.mxu0 %v7375
    %7442 = vmatpush.xpose.msra.mxu0 %v7372
    %7443 = vmatpush.xpose.msra.mxu0 %v7369
    %7444 = vmatpush.xpose.msra.mxu0 %v7366
    %7445 = vmatpush.xpose.msra.mxu0 %v7363
    %7446 = vmatpush.xpose.msra.mxu0 %v7360
    %7447 = vmatpush.xpose.msra.mxu0 %v7357
    %7448 = vmatpush.xpose.msra.mxu0 %v7354
    %7449 = vmatpush.xpose.msra.mxu0 %v7351
    %7450 = vmatpush.xpose.msra.mxu0 %v7348
    %7451 = vmatpush.xpose.msra.mxu0 %v7345
    %7452 = vmatpush.xpose.msra.mxu0 %v7342
    %7453 = vmatpush.xpose.msra.mxu0 %v7339
    %7454 = vmatpush.xpose.msra.mxu0 %v7336
    %7455 = vmatpush.xpose.msra.mxu0 %v7333
    %7456 = vmatmul.f32.gmra.mxu0 %v7186
    %v7457 = vpop.f32.mrf.mxu0
    %v7458 = vadd.f32 %v7183, %v7457
    %7459 = vdwg.mxu0
    %v7460 = vtanh.pop %v7398
    %v7461 = vtanh.pop %v7418
    %v7462 = vtanh.pop %v7438
    %v7463 = vtanh.pop %v7458
    %v7468 = vrot.slane %v7461, 7
    %v7469 = vrot.slane %v7462, 6
    %v7470 = vrot.slane %v7463, 5
    %v7471 = vsel %vm325, %v7460, %v7468
    %v7472 = vsel %vm714, %v7469, %v7470
    %v7473 = vsel %vm480, %v7471, %v7472
    %v7475 = vlaneseq
    %vm7476 = vcmp.ge.s32.totalorder %v7475, 0
    %vm7477 = vcmp.lt.s32.totalorder %v7475, 512
    %vm7478 = vmand %vm7476, %vm7477
    %7479 = vst.msk [vmem:[%s13] sm:$0xf] %vm7478, %v7473
    // Predicated region
    $region62: #{decoder_apply.1} parent=1 // pred_check
      _
    $region63: #{decoder_apply.1} parent=1 // pred_check_branch
      %7481 = sbr.rel (0) target = $region65
    $region64: #{decoder_apply.1} parent=1 // pred_region
      _
    $region65: #{decoder_apply.1} parent=1 // pred_fallthru
      _
    // Predicated region
    $region66: #{decoder_apply.1} parent=1 // pred_check
      _
    $region67: #{decoder_apply.1} parent=1 // pred_check_branch
      %7483 = sbr.rel (0) target = $region69
    $region68: #{decoder_apply.1} parent=1 // pred_region
      _
    $region69: #{decoder_apply.1} parent=1 // pred_fallthru
      _
    %7484 = vsyncpa [#allocation8], 1
    %7485 = vsyncpa [#allocation10], 1

</llo_original>
